<compile_context>
chip_gen: v6e
topology: v6e:2x2x1
jax: 0.10.0
libtpu: 0.0.40
codegen_flags: <defaults>
</compile_context>

<pallas_src>
import functools

import jax
import jax.numpy as jnp
from jax.experimental import pallas as pl
from jax.experimental.pallas import tpu as pltpu

# ---- small, consistent hyper-parameters (scaled-down module __init__) ----------------
EMB_DIM = 32          # emb_dim == out_emb_dim          (original default 256)
NUM_HEADS = 4         # num_heads                       (original default 4)
NUM_CHANNELS = 4      # image channels / K-V in-features (original default 32)
FF_D1, FF_D2 = 16, 8  # FF hidden widths                (original 128, 64)
LN_EPS = 1e-5         # torch.nn.LayerNorm default eps
OUT_LANES = 128       # lane-dense combined output slab width


# ---------------------------------------------------------------------------------------
# Pallas kernel: one grid step == `batch_block` batch elements, everything resident in VMEM.
# ---------------------------------------------------------------------------------------
def rasa_kernel(img_ref, pe_ref, kvc_ref, w_ref, out_ref, *,
                batch_block, num_heads, emb_dim, num_channels, hw, ff_d1, ff_d2, offs):
    E, C, NH, BB = emb_dim, num_channels, num_heads, batch_block
    HE = NH * E
    Np = pe_ref.shape[1]
    BN = BB * Np
    f32, bf16 = jnp.float32, jnp.bfloat16
    dn_t = (((1,), (1,)), ((), ()))      # contract last dims of both operands: lhs @ rhs^T

    # ---- unpack weights (every segment 16-row aligned AND lane-0 aligned) ----
    wq = w_ref[offs['wq']:offs['wq'] + E, :]                     # (E, HE) bf16, pre-scaled
    bq = w_ref[offs['bq']:offs['bq'] + 1, :].astype(f32)         # (1, HE), pre-scaled
    bo = w_ref[offs['bo']:offs['bo'] + 1, 0:E].astype(f32)       # (1, E)
    w1 = w_ref[offs['w1']:offs['w1'] + E, 0:ff_d1]               # (E, D1) bf16
    ff1 = w_ref[offs['ff1']:offs['ff1'] + 3, 0:ff_d1].astype(f32)
    w2 = w_ref[offs['w2']:offs['w2'] + ff_d1, 0:ff_d2]           # (D1, D2) bf16
    ff2 = w_ref[offs['ff2']:offs['ff2'] + 3, 0:ff_d2].astype(f32)
    w3 = w_ref[offs['w3']:offs['w3'] + ff_d2, 0:1]               # (D2, 1) bf16
    b3 = w_ref[offs['b3']:offs['b3'] + 1, 0:1].astype(f32)       # (1, 1)
    b1, g1, be1 = ff1[0:1], ff1[1:2], ff1[2:3]
    b2, g2, be2 = ff2[0:1], ff2[1:2], ff2[2:3]

    img = img_ref[...]                      # (C, BB*HW) bf16, lane-stacked over the sub-batch
    pe_stk = pe_ref[...].reshape(BN, E)     # (BB*Np, E) f32, batch-stacked point embeddings

    # Batch-stacked Q projection for all heads at once (1/sqrt(E) folded into wq/bq).
    q_all = jnp.dot(pe_stk.astype(bf16), wq, preferred_element_type=f32) + bq   # (BN, HE) f32

    # Residual + output-projection bias; heads accumulate into it (no lane concat of heads).
    out_emb = pe_stk + bo                   # (BN, E) f32

    for h in range(NH):                     # static unroll over heads
        q_h = q_all[:, h * E:(h + 1) * E]                                        # (BN, E)
        wkv_h = w_ref[offs['wkv'] + 2 * E * h:offs['wkv'] + 2 * E * (h + 1), 0:C]  # (2E, C)
        wo_h = w_ref[offs['wo'] + E * h:offs['wo'] + E * (h + 1), 0:E]           # (E, E)
        kvc_h = kvc_ref[2 * E * h:2 * E * (h + 1), :].astype(f32)                # (2E, HW)

        rows = []
        for bb in range(BB):                # static unroll over the sub-batch
            img_b = img[:, bb * hw:(bb + 1) * hw]                                # (C, HW)
            # K and V for this (head, batch) from ONE shallow matmul; K bias and the
            # V bias + positional-noise term come from the precomputed constant kvc.
            kv = jnp.dot(wkv_h, img_b, preferred_element_type=f32) + kvc_h       # (2E, HW) f32
            k_t = kv[0:E, :]                                                     # (E, HW)
            v_t = kv[E:2 * E, :]                                                 # (E, HW)
            q_b = q_h[bb * Np:(bb + 1) * Np, :]                                  # (Np, E)
            s = jnp.dot(q_b, k_t, preferred_element_type=f32)                    # (Np, HW)
            s = s - jnp.max(s, axis=-1, keepdims=True)
            p = jnp.exp(s)
            p = p * pl.reciprocal(jnp.sum(p, axis=-1, keepdims=True), approx=True)
            # attended = P @ V : contract the shared (last) HW axis of both operands.
            rows.append(jax.lax.dot_general(p, v_t, dn_t, preferred_element_type=f32))
        head_stk = jnp.concatenate(rows, axis=0)                                 # (BN, E)
        out_emb = out_emb + jnp.dot(head_stk.astype(bf16), wo_h,
                                    preferred_element_type=f32)

    # FF head (batch-stacked): Linear-ReLU-LayerNorm-Linear-ReLU-LayerNorm-Linear-Sigmoid.
    def layer_norm(x, g, b):
        mu = jnp.mean(x, axis=-1, keepdims=True)
        var = jnp.mean((x - mu) ** 2, axis=-1, keepdims=True)
        return (x - mu) * jax.lax.rsqrt(var + LN_EPS) * g + b

    h1 = layer_norm(jnp.maximum(
        jnp.dot(out_emb.astype(bf16), w1, preferred_element_type=f32) + b1, 0.0), g1, be1)
    h2 = layer_norm(jnp.maximum(
        jnp.dot(h1.astype(bf16), w2, preferred_element_type=f32) + b2, 0.0), g2, be2)
    act = jax.nn.sigmoid(jnp.dot(h2.astype(bf16), w3, preferred_element_type=f32) + b3)  # (BN,1)

    # Lane-dense combined output: lanes [0,E) = embedding, lanes [E,128) = activation
    # (broadcast so the store is one full-width unmasked write).
    slab = jnp.concatenate([out_emb, jnp.broadcast_to(act, (BN, OUT_LANES - E))], axis=-1)
    out_ref[...] = slab.reshape(BB, Np, OUT_LANES)


# ---------------------------------------------------------------------------------------
# One-time weight packing / constant precompute (hoisted out of the forward path).
# ---------------------------------------------------------------------------------------
def prepare_constants(params):
    E, C, NH = EMB_DIM, NUM_CHANNELS, NUM_HEADS
    HE = NH * E
    hw = params['pos'].shape[0]
    scale = 1.0 / (EMB_DIM ** 0.5)
    assert HE <= 128

    # Fused per-head Q weights/bias (head-major columns), score scale folded in.
    wq = jnp.transpose(params['wq'], (1, 0, 2)).reshape(E, HE) * scale        # (E, HE)
    bq = params['bq'].reshape(1, HE) * scale                                  # (1, HE)

    # Head-interleaved, pre-transposed K/V weights: rows [Wk_h^T ; Wv_h^T] per head.
    wkv = jnp.concatenate(
        [jnp.concatenate([params['wk'][h].T, params['wv'][h].T], axis=0) for h in range(NH)],
        axis=0)                                                                # (2*HE, C)

    # Additive K/V constant (same head interleaving): K rows get bk broadcast over HW,
    # V rows get Wv^T @ pos^T + bv (positional-noise term folded out of the kernel).
    pos_t = params['pos'].T                                                    # (C, HW)
    kvc = jnp.concatenate(
        [jnp.concatenate(
            [jnp.broadcast_to(params['bk'][h].reshape(E, 1), (E, hw)),
             params['wv'][h].T @ pos_t + params['bv'][h].reshape(E, 1)], axis=0)
         for h in range(NH)], axis=0)                                          # (2*HE, HW)

    ff1 = jnp.concatenate([params['b1'], params['g1'], params['be1']], axis=0)  # (3, D1)
    ff2 = jnp.concatenate([params['b2'], params['g2'], params['be2']], axis=0)  # (3, D2)

    segs = [('wq', wq), ('bq', bq), ('wkv', wkv), ('wo', params['wo']), ('bo', params['bo']),
            ('w1', params['w1']), ('ff1', ff1), ('w2', params['w2']), ('ff2', ff2),
            ('w3', params['w3']), ('b3', params['b3'])]
    offs, blocks, r = {}, [], 0
    for name, a in segs:
        nr, nc = a.shape
        pr = (-nr) % 16                                  # 16-row align (bf16 sublane packing)
        blocks.append(jnp.pad(a.astype(jnp.float32), ((0, pr), (0, 128 - nc))))
        offs[name] = r
        r += nr + pr
    w_packed = jnp.concatenate(blocks, axis=0).astype(jnp.bfloat16)
    return w_packed, offs, kvc.astype(jnp.bfloat16)


# ---------------------------------------------------------------------------------------
# Grid policy: one step on single-TC chips, one step per TensorCore on 2-TC chips.
# ---------------------------------------------------------------------------------------
def _num_tensorcores():
    try:
        kind = jax.devices()[0].device_kind.lower()
    except Exception:
        return 1
    return 2 if any(t in kind for t in ("v4", "v5p", "v7")) else 1


def _choose_batch_block(batch):
    steps = _num_tensorcores()
    if batch % steps != 0:
        steps = 1
    while batch // steps > 8 and batch % (steps * 2) == 0:   # cap the static unroll
        steps *= 2
    return batch // steps


# ---------------------------------------------------------------------------------------
# Forward wrapper factory (jitted; weight packing is NOT part of the per-call path).
# ---------------------------------------------------------------------------------------
def make_rasa_forward(offs, *, batch_block):
    @jax.jit
    def forward(img_emb, point_emb, w_packed, kvc):
        B, C, Hs, Ws = img_emb.shape
        HW = Hs * Ws
        _, Np, E = point_emb.shape
        assert C == NUM_CHANNELS and E == EMB_DIM and B % batch_block == 0
        grid_b = B // batch_block
        HE = NUM_HEADS * EMB_DIM

        # Lane-stacked image (C, B*HW) in bf16: each grid step consumes a lane-dense
        # (C, batch_block*HW) tile with no in-kernel transposes.
        img_stk = jnp.transpose(img_emb.reshape(B, C, HW), (1, 0, 2)).reshape(C, B * HW)
        img_stk = img_stk.astype(jnp.bfloat16)
        pe = point_emb.astype(jnp.float32)          # residual / accumulator path stays f32

        kernel = functools.partial(
            rasa_kernel, batch_block=batch_block, num_heads=NUM_HEADS, emb_dim=EMB_DIM,
            num_channels=NUM_CHANNELS, hw=HW, ff_d1=FF_D1, ff_d2=FF_D2, offs=offs)

        out_slab = pl.pallas_call(
            kernel,
            grid=(grid_b,),
            in_specs=[
                pl.BlockSpec((C, batch_block * HW), lambda b: (0, b)),     # image (per step)
                pl.BlockSpec((batch_block, Np, E), lambda b: (b, 0, 0)),   # point embeddings
                pl.BlockSpec((2 * HE, HW), lambda b: (0, 0)),              # K/V additive const
                pl.BlockSpec(w_packed.shape, lambda b: (0, 0)),            # packed weights
            ],
            out_specs=pl.BlockSpec((batch_block, Np, OUT_LANES), lambda b: (b, 0, 0)),
            out_shape=jax.ShapeDtypeStruct((B, Np, OUT_LANES), jnp.float32),
            compiler_params=pltpu.CompilerParams(dimension_semantics=("parallel",)),
        )(img_stk, pe, kvc, w_packed)

        emb = out_slab[:, :, :EMB_DIM]               # point_spatial_embedding
        act = out_slab[:, :, EMB_DIM:EMB_DIM + 1]    # activations
        return act, emb

    return forward


# ---------------------------------------------------------------------------------------
# Deterministic parameter construction (shapes implied by the module __init__).
# ---------------------------------------------------------------------------------------
def make_params(key, hw):
    keys = jax.random.split(key, 20)
    s = 0.1
    return {
        'pos': s * jax.random.normal(keys[0], (hw, NUM_CHANNELS), jnp.float32),
        'wq': s * jax.random.normal(keys[1], (NUM_HEADS, EMB_DIM, EMB_DIM), jnp.float32),
        'bq': s * jax.random.normal(keys[2], (NUM_HEADS, 1, EMB_DIM), jnp.float32),
        'wk': s * jax.random.normal(keys[3], (NUM_HEADS, NUM_CHANNELS, EMB_DIM), jnp.float32),
        'bk': s * jax.random.normal(keys[4], (NUM_HEADS, 1, EMB_DIM), jnp.float32),
        'wv': s * jax.random.normal(keys[5], (NUM_HEADS, NUM_CHANNELS, EMB_DIM), jnp.float32),
        'bv': s * jax.random.normal(keys[6], (NUM_HEADS, 1, EMB_DIM), jnp.float32),
        'wo': s * jax.random.normal(keys[7], (NUM_HEADS * EMB_DIM, EMB_DIM), jnp.float32),
        'bo': s * jax.random.normal(keys[8], (1, EMB_DIM), jnp.float32),
        'w1': s * jax.random.normal(keys[9], (EMB_DIM, FF_D1), jnp.float32),
        'b1': s * jax.random.normal(keys[10], (1, FF_D1), jnp.float32),
        'g1': jnp.ones((1, FF_D1), jnp.float32),
        'be1': jnp.zeros((1, FF_D1), jnp.float32),
        'w2': s * jax.random.normal(keys[11], (FF_D1, FF_D2), jnp.float32),
        'b2': s * jax.random.normal(keys[12], (1, FF_D2), jnp.float32),
        'g2': jnp.ones((1, FF_D2), jnp.float32),
        'be2': jnp.zeros((1, FF_D2), jnp.float32),
        'w3': s * jax.random.normal(keys[13], (FF_D2, 1), jnp.float32),
        'b3': s * jax.random.normal(keys[14], (1, 1), jnp.float32),
    }


# ---------------------------------------------------------------------------------------
# Pure-JAX reference (mirrors the PyTorch forward) for a correctness check.
# ---------------------------------------------------------------------------------------
def rasa_reference(img_emb, point_emb, params):
    B = img_emb.shape[0]
    img_tok = jnp.transpose(img_emb, (0, 2, 3, 1)).reshape(B, -1, img_emb.shape[1])
    img_pos = img_tok + params['pos'][None]
    heads = []
    for h in range(NUM_HEADS):
        q = point_emb @ params['wq'][h] + params['bq'][h]
        k = img_tok @ params['wk'][h] + params['bk'][h]
        v = img_pos @ params['wv'][h] + params['bv'][h]
        s = jnp.einsum('bqe,bke->bqk', q, k) / (EMB_DIM ** 0.5)
        a = jax.nn.softmax(s, axis=-1)
        heads.append(jnp.einsum('bqk,bke->bqe', a, v))
    cat = jnp.concatenate(heads, axis=-1)
    out = cat @ params['wo'] + params['bo'] + point_emb

    def ln(x, g, b):
        mu = x.mean(-1, keepdims=True)
        var = ((x - mu) ** 2).mean(-1, keepdims=True)
        return (x - mu) / jnp.sqrt(var + LN_EPS) * g + b

    h1 = ln(jax.nn.relu(out @ params['w1'] + params['b1']), params['g1'], params['be1'])
    h2 = ln(jax.nn.relu(h1 @ params['w2'] + params['b2']), params['g2'], params['be2'])
    act = jax.nn.sigmoid(h2 @ params['w3'] + params['b3'])
    return act, out


if __name__ == "__main__":
    B, Hs, Ws = 4, 16, 16          # img_emb: (B, NUM_CHANNELS, H, W) NCHW
    NUM_POINTS = 16                # perfect square (grid 4x4), required by _reshape_tensor

    key = jax.random.PRNGKey(0)
    k_img, k_pt, k_par = jax.random.split(key, 3)
    img_emb = jax.random.normal(k_img, (B, NUM_CHANNELS, Hs, Ws), jnp.float32)
    point_emb = jax.random.normal(k_pt, (B, NUM_POINTS, EMB_DIM), jnp.float32)
    params = make_params(k_par, Hs * Ws)

    # One-time preparation per parameter set (not part of the forward path).
    w_packed, offs, kvc = prepare_constants(params)
    w_packed, kvc = jax.block_until_ready((w_packed, kvc))

    batch_block = _choose_batch_block(B)
    forward = make_rasa_forward(offs, batch_block=batch_block)

    act, emb = forward(img_emb, point_emb, w_packed, kvc)
    act, emb = jax.block_until_ready((act, emb))

    act_ref, emb_ref = rasa_reference(img_emb, point_emb, params)
    assert act.shape == (B, NUM_POINTS, 1) and emb.shape == (B, NUM_POINTS, EMB_DIM)
    # Tolerance covers bf16-stored operands, default (single-pass bf16) MXU precision and
    # the EUP approximate reciprocal in the softmax, versus the f32 JAX reference.
    assert jnp.allclose(act, act_ref, atol=2e-2, rtol=2e-2), "activation mismatch"
    assert jnp.allclose(emb, emb_ref, atol=2e-2, rtol=2e-2), "embedding mismatch"

    print("KERNEL_OK")
</pallas_src>

<mosaic_0001>
module attributes {stable_mosaic.version = 11 : i64} {
  func.func @rasa_kernel(%arg0: i32, %arg1: memref<4x1024xbf16, #tpu.memory_space<vmem>>, %arg2: memref<4x16x32xf32, #tpu.memory_space<vmem>>, %arg3: memref<256x256xbf16, #tpu.memory_space<vmem>>, %arg4: memref<560x128xbf16, #tpu.memory_space<vmem>>, %arg5: memref<4x16x128xf32, #tpu.memory_space<vmem>>) attributes {dimension_semantics = [#tpu.dimension_semantics<parallel>], iteration_bounds = array<i64: 1>, scalar_prefetch = 0 : i64, scratch_operands = 0 : i64, tpu.core_type = #tpu.core_type<tc>, window_params = [{transform_indices = @transform_0, window_bounds = array<i64: 4, 1024>}, {transform_indices = @transform_1, window_bounds = array<i64: 4, 16, 32>}, {pipeline_mode = #tpu.pipeline_mode<synchronous>, transform_indices = @transform_2, window_bounds = array<i64: 256, 256>}, {pipeline_mode = #tpu.pipeline_mode<synchronous>, transform_indices = @transform_3, window_bounds = array<i64: 560, 128>}, {transform_indices = @transform_4, window_bounds = array<i64: 4, 16, 128>}]} {
    %c0 = arith.constant 0 : index
    %c0_0 = arith.constant 0 : index
    %0 = vector.load %arg4[%c0, %c0_0] : memref<560x128xbf16, #tpu.memory_space<vmem>>, vector<32x128xbf16>
    %c32 = arith.constant 32 : index
    %c0_1 = arith.constant 0 : index
    %1 = vector.load %arg4[%c32, %c0_1] : memref<560x128xbf16, #tpu.memory_space<vmem>>, vector<1x128xbf16>
    %2 = arith.extf %1 : vector<1x128xbf16> to vector<1x128xf32>
    %c432 = arith.constant 432 : index
    %c0_2 = arith.constant 0 : index
    %3 = vector.load %arg4[%c432, %c0_2] : memref<560x128xbf16, #tpu.memory_space<vmem>>, vector<1x32xbf16>
    %4 = arith.extf %3 : vector<1x32xbf16> to vector<1x32xf32>
    %c448 = arith.constant 448 : index
    %c0_3 = arith.constant 0 : index
    %5 = vector.load %arg4[%c448, %c0_3] : memref<560x128xbf16, #tpu.memory_space<vmem>>, vector<32x16xbf16>
    %c480 = arith.constant 480 : index
    %c0_4 = arith.constant 0 : index
    %6 = vector.load %arg4[%c480, %c0_4] : memref<560x128xbf16, #tpu.memory_space<vmem>>, vector<3x16xbf16>
    %7 = arith.extf %6 : vector<3x16xbf16> to vector<3x16xf32>
    %c496 = arith.constant 496 : index
    %c0_5 = arith.constant 0 : index
    %8 = vector.load %arg4[%c496, %c0_5] : memref<560x128xbf16, #tpu.memory_space<vmem>>, vector<16x8xbf16>
    %c512 = arith.constant 512 : index
    %c0_6 = arith.constant 0 : index
    %9 = vector.load %arg4[%c512, %c0_6] : memref<560x128xbf16, #tpu.memory_space<vmem>>, vector<3x8xbf16>
    %10 = arith.extf %9 : vector<3x8xbf16> to vector<3x8xf32>
    %c528 = arith.constant 528 : index
    %c0_7 = arith.constant 0 : index
    %11 = vector.load %arg4[%c528, %c0_7] : memref<560x128xbf16, #tpu.memory_space<vmem>>, vector<8x1xbf16>
    %c544 = arith.constant 544 : index
    %c0_8 = arith.constant 0 : index
    %12 = vector.load %arg4[%c544, %c0_8] : memref<560x128xbf16, #tpu.memory_space<vmem>>, vector<1x1xbf16>
    %13 = arith.extf %12 : vector<1x1xbf16> to vector<1x1xf32>
    %14 = vector.extract_strided_slice %7 {offsets = [0, 0], sizes = [1, 16], strides = [1, 1]} : vector<3x16xf32> to vector<1x16xf32>
    %15 = vector.extract_strided_slice %7 {offsets = [1, 0], sizes = [1, 16], strides = [1, 1]} : vector<3x16xf32> to vector<1x16xf32>
    %16 = vector.extract_strided_slice %7 {offsets = [2, 0], sizes = [1, 16], strides = [1, 1]} : vector<3x16xf32> to vector<1x16xf32>
    %17 = vector.extract_strided_slice %10 {offsets = [0, 0], sizes = [1, 8], strides = [1, 1]} : vector<3x8xf32> to vector<1x8xf32>
    %18 = vector.extract_strided_slice %10 {offsets = [1, 0], sizes = [1, 8], strides = [1, 1]} : vector<3x8xf32> to vector<1x8xf32>
    %19 = vector.extract_strided_slice %10 {offsets = [2, 0], sizes = [1, 8], strides = [1, 1]} : vector<3x8xf32> to vector<1x8xf32>
    %c0_9 = arith.constant 0 : index
    %c0_10 = arith.constant 0 : index
    %20 = vector.load %arg1[%c0_9, %c0_10] : memref<4x1024xbf16, #tpu.memory_space<vmem>>, vector<4x1024xbf16>
    %c0_11 = arith.constant 0 : index
    %c0_12 = arith.constant 0 : index
    %c0_13 = arith.constant 0 : index
    %21 = vector.load %arg2[%c0_11, %c0_12, %c0_13] : memref<4x16x32xf32, #tpu.memory_space<vmem>>, vector<4x16x32xf32>
    %22 = vector.shape_cast %21 : vector<4x16x32xf32> to vector<64x32xf32>
    %23 = arith.truncf %22 : vector<64x32xf32> to vector<64x32xbf16>
    %cst = arith.constant dense<0.000000e+00> : vector<64x128xf32>
    %24 = tpu.matmul %23, %0, %cst {dimension_numbers = #tpu.dot_dimension_numbers<[1], [0], [0], [1], [0, 0, 1, 1], [], []>} : vector<64x32xbf16>, vector<32x128xbf16>, vector<64x128xf32> -> vector<64x128xf32>
    %25 = vector.broadcast %2 : vector<1x128xf32> to vector<64x128xf32>
    %26 = arith.addf %24, %25 : vector<64x128xf32>
    %27 = vector.broadcast %4 : vector<1x32xf32> to vector<64x32xf32>
    %28 = arith.addf %22, %27 : vector<64x32xf32>
    %29 = vector.extract_strided_slice %26 {offsets = [0, 0], sizes = [64, 32], strides = [1, 1]} : vector<64x128xf32> to vector<64x32xf32>
    %c48 = arith.constant 48 : index
    %c0_14 = arith.constant 0 : index
    %30 = vector.load %arg4[%c48, %c0_14] : memref<560x128xbf16, #tpu.memory_space<vmem>>, vector<64x4xbf16>
    %c304 = arith.constant 304 : index
    %c0_15 = arith.constant 0 : index
    %31 = vector.load %arg4[%c304, %c0_15] : memref<560x128xbf16, #tpu.memory_space<vmem>>, vector<32x32xbf16>
    %c0_16 = arith.constant 0 : index
    %c0_17 = arith.constant 0 : index
    %32 = vector.load %arg3[%c0_16, %c0_17] : memref<256x256xbf16, #tpu.memory_space<vmem>>, vector<64x256xbf16>
    %33 = arith.extf %32 : vector<64x256xbf16> to vector<64x256xf32>
    %34 = vector.extract_strided_slice %20 {offsets = [0, 0], sizes = [4, 256], strides = [1, 1]} : vector<4x1024xbf16> to vector<4x256xbf16>
    %cst_18 = arith.constant dense<0.000000e+00> : vector<64x256xf32>
    %35 = tpu.matmul %30, %34, %cst_18 {dimension_numbers = #tpu.dot_dimension_numbers<[1], [0], [0], [1], [0, 0, 1, 1], [], []>} : vector<64x4xbf16>, vector<4x256xbf16>, vector<64x256xf32> -> vector<64x256xf32>
    %36 = arith.addf %35, %33 : vector<64x256xf32>
    %37 = vector.extract_strided_slice %36 {offsets = [0, 0], sizes = [32, 256], strides = [1, 1]} : vector<64x256xf32> to vector<32x256xf32>
    %38 = vector.extract_strided_slice %36 {offsets = [32, 0], sizes = [32, 256], strides = [1, 1]} : vector<64x256xf32> to vector<32x256xf32>
    %39 = vector.extract_strided_slice %29 {offsets = [0, 0], sizes = [16, 32], strides = [1, 1]} : vector<64x32xf32> to vector<16x32xf32>
    %cst_19 = arith.constant dense<0.000000e+00> : vector<16x256xf32>
    %40 = tpu.matmul %39, %37, %cst_19 {dimension_numbers = #tpu.dot_dimension_numbers<[1], [0], [0], [1], [0, 0, 1, 1], [], []>} : vector<16x32xf32>, vector<32x256xf32>, vector<16x256xf32> -> vector<16x256xf32>
    %cst_20 = arith.constant dense<0xFF800000> : vector<16xf32>
    %41 = vector.multi_reduction <maximumf>, %40, %cst_20 [1] : vector<16x256xf32> to vector<16xf32>
    %42 = vector.shape_cast %41 : vector<16xf32> to vector<16x1xf32>
    %43 = vector.broadcast %42 : vector<16x1xf32> to vector<16x256xf32>
    %44 = arith.subf %40, %43 : vector<16x256xf32>
    %45 = math.exp %44 : vector<16x256xf32>
    %cst_21 = arith.constant dense<0.000000e+00> : vector<16xf32>
    %46 = vector.multi_reduction <add>, %45, %cst_21 [1] : vector<16x256xf32> to vector<16xf32>
    %47 = vector.shape_cast %46 : vector<16xf32> to vector<16x1xf32>
    %48 = tpu.reciprocal %47 {approx = true} : vector<16x1xf32> -> vector<16x1xf32>
    %49 = vector.broadcast %48 : vector<16x1xf32> to vector<16x256xf32>
    %50 = arith.mulf %45, %49 : vector<16x256xf32>
    %cst_22 = arith.constant dense<0.000000e+00> : vector<16x32xf32>
    %51 = tpu.matmul %50, %38, %cst_22 {dimension_numbers = #tpu.dot_dimension_numbers<[1], [1], [0], [0], [0, 0, 1, 0], [], []>} : vector<16x256xf32>, vector<32x256xf32>, vector<16x32xf32> -> vector<16x32xf32>
    %52 = vector.extract_strided_slice %20 {offsets = [0, 256], sizes = [4, 256], strides = [1, 1]} : vector<4x1024xbf16> to vector<4x256xbf16>
    %cst_23 = arith.constant dense<0.000000e+00> : vector<64x256xf32>
    %53 = tpu.matmul %30, %52, %cst_23 {dimension_numbers = #tpu.dot_dimension_numbers<[1], [0], [0], [1], [0, 0, 1, 1], [], []>} : vector<64x4xbf16>, vector<4x256xbf16>, vector<64x256xf32> -> vector<64x256xf32>
    %54 = arith.addf %53, %33 : vector<64x256xf32>
    %55 = vector.extract_strided_slice %54 {offsets = [0, 0], sizes = [32, 256], strides = [1, 1]} : vector<64x256xf32> to vector<32x256xf32>
    %56 = vector.extract_strided_slice %54 {offsets = [32, 0], sizes = [32, 256], strides = [1, 1]} : vector<64x256xf32> to vector<32x256xf32>
    %57 = vector.extract_strided_slice %29 {offsets = [16, 0], sizes = [16, 32], strides = [1, 1]} : vector<64x32xf32> to vector<16x32xf32>
    %cst_24 = arith.constant dense<0.000000e+00> : vector<16x256xf32>
    %58 = tpu.matmul %57, %55, %cst_24 {dimension_numbers = #tpu.dot_dimension_numbers<[1], [0], [0], [1], [0, 0, 1, 1], [], []>} : vector<16x32xf32>, vector<32x256xf32>, vector<16x256xf32> -> vector<16x256xf32>
    %cst_25 = arith.constant dense<0xFF800000> : vector<16xf32>
    %59 = vector.multi_reduction <maximumf>, %58, %cst_25 [1] : vector<16x256xf32> to vector<16xf32>
    %60 = vector.shape_cast %59 : vector<16xf32> to vector<16x1xf32>
    %61 = vector.broadcast %60 : vector<16x1xf32> to vector<16x256xf32>
    %62 = arith.subf %58, %61 : vector<16x256xf32>
    %63 = math.exp %62 : vector<16x256xf32>
    %cst_26 = arith.constant dense<0.000000e+00> : vector<16xf32>
    %64 = vector.multi_reduction <add>, %63, %cst_26 [1] : vector<16x256xf32> to vector<16xf32>
    %65 = vector.shape_cast %64 : vector<16xf32> to vector<16x1xf32>
    %66 = tpu.reciprocal %65 {approx = true} : vector<16x1xf32> -> vector<16x1xf32>
    %67 = vector.broadcast %66 : vector<16x1xf32> to vector<16x256xf32>
    %68 = arith.mulf %63, %67 : vector<16x256xf32>
    %cst_27 = arith.constant dense<0.000000e+00> : vector<16x32xf32>
    %69 = tpu.matmul %68, %56, %cst_27 {dimension_numbers = #tpu.dot_dimension_numbers<[1], [1], [0], [0], [0, 0, 1, 0], [], []>} : vector<16x256xf32>, vector<32x256xf32>, vector<16x32xf32> -> vector<16x32xf32>
    %70 = vector.extract_strided_slice %20 {offsets = [0, 512], sizes = [4, 256], strides = [1, 1]} : vector<4x1024xbf16> to vector<4x256xbf16>
    %cst_28 = arith.constant dense<0.000000e+00> : vector<64x256xf32>
    %71 = tpu.matmul %30, %70, %cst_28 {dimension_numbers = #tpu.dot_dimension_numbers<[1], [0], [0], [1], [0, 0, 1, 1], [], []>} : vector<64x4xbf16>, vector<4x256xbf16>, vector<64x256xf32> -> vector<64x256xf32>
    %72 = arith.addf %71, %33 : vector<64x256xf32>
    %73 = vector.extract_strided_slice %72 {offsets = [0, 0], sizes = [32, 256], strides = [1, 1]} : vector<64x256xf32> to vector<32x256xf32>
    %74 = vector.extract_strided_slice %72 {offsets = [32, 0], sizes = [32, 256], strides = [1, 1]} : vector<64x256xf32> to vector<32x256xf32>
    %75 = vector.extract_strided_slice %29 {offsets = [32, 0], sizes = [16, 32], strides = [1, 1]} : vector<64x32xf32> to vector<16x32xf32>
    %cst_29 = arith.constant dense<0.000000e+00> : vector<16x256xf32>
    %76 = tpu.matmul %75, %73, %cst_29 {dimension_numbers = #tpu.dot_dimension_numbers<[1], [0], [0], [1], [0, 0, 1, 1], [], []>} : vector<16x32xf32>, vector<32x256xf32>, vector<16x256xf32> -> vector<16x256xf32>
    %cst_30 = arith.constant dense<0xFF800000> : vector<16xf32>
    %77 = vector.multi_reduction <maximumf>, %76, %cst_30 [1] : vector<16x256xf32> to vector<16xf32>
    %78 = vector.shape_cast %77 : vector<16xf32> to vector<16x1xf32>
    %79 = vector.broadcast %78 : vector<16x1xf32> to vector<16x256xf32>
    %80 = arith.subf %76, %79 : vector<16x256xf32>
    %81 = math.exp %80 : vector<16x256xf32>
    %cst_31 = arith.constant dense<0.000000e+00> : vector<16xf32>
    %82 = vector.multi_reduction <add>, %81, %cst_31 [1] : vector<16x256xf32> to vector<16xf32>
    %83 = vector.shape_cast %82 : vector<16xf32> to vector<16x1xf32>
    %84 = tpu.reciprocal %83 {approx = true} : vector<16x1xf32> -> vector<16x1xf32>
    %85 = vector.broadcast %84 : vector<16x1xf32> to vector<16x256xf32>
    %86 = arith.mulf %81, %85 : vector<16x256xf32>
    %cst_32 = arith.constant dense<0.000000e+00> : vector<16x32xf32>
    %87 = tpu.matmul %86, %74, %cst_32 {dimension_numbers = #tpu.dot_dimension_numbers<[1], [1], [0], [0], [0, 0, 1, 0], [], []>} : vector<16x256xf32>, vector<32x256xf32>, vector<16x32xf32> -> vector<16x32xf32>
    %88 = vector.extract_strided_slice %20 {offsets = [0, 768], sizes = [4, 256], strides = [1, 1]} : vector<4x1024xbf16> to vector<4x256xbf16>
    %cst_33 = arith.constant dense<0.000000e+00> : vector<64x256xf32>
    %89 = tpu.matmul %30, %88, %cst_33 {dimension_numbers = #tpu.dot_dimension_numbers<[1], [0], [0], [1], [0, 0, 1, 1], [], []>} : vector<64x4xbf16>, vector<4x256xbf16>, vector<64x256xf32> -> vector<64x256xf32>
    %90 = arith.addf %89, %33 : vector<64x256xf32>
    %91 = vector.extract_strided_slice %90 {offsets = [0, 0], sizes = [32, 256], strides = [1, 1]} : vector<64x256xf32> to vector<32x256xf32>
    %92 = vector.extract_strided_slice %90 {offsets = [32, 0], sizes = [32, 256], strides = [1, 1]} : vector<64x256xf32> to vector<32x256xf32>
    %93 = vector.extract_strided_slice %29 {offsets = [48, 0], sizes = [16, 32], strides = [1, 1]} : vector<64x32xf32> to vector<16x32xf32>
    %cst_34 = arith.constant dense<0.000000e+00> : vector<16x256xf32>
    %94 = tpu.matmul %93, %91, %cst_34 {dimension_numbers = #tpu.dot_dimension_numbers<[1], [0], [0], [1], [0, 0, 1, 1], [], []>} : vector<16x32xf32>, vector<32x256xf32>, vector<16x256xf32> -> vector<16x256xf32>
    %cst_35 = arith.constant dense<0xFF800000> : vector<16xf32>
    %95 = vector.multi_reduction <maximumf>, %94, %cst_35 [1] : vector<16x256xf32> to vector<16xf32>
    %96 = vector.shape_cast %95 : vector<16xf32> to vector<16x1xf32>
    %97 = vector.broadcast %96 : vector<16x1xf32> to vector<16x256xf32>
    %98 = arith.subf %94, %97 : vector<16x256xf32>
    %99 = math.exp %98 : vector<16x256xf32>
    %cst_36 = arith.constant dense<0.000000e+00> : vector<16xf32>
    %100 = vector.multi_reduction <add>, %99, %cst_36 [1] : vector<16x256xf32> to vector<16xf32>
    %101 = vector.shape_cast %100 : vector<16xf32> to vector<16x1xf32>
    %102 = tpu.reciprocal %101 {approx = true} : vector<16x1xf32> -> vector<16x1xf32>
    %103 = vector.broadcast %102 : vector<16x1xf32> to vector<16x256xf32>
    %104 = arith.mulf %99, %103 : vector<16x256xf32>
    %cst_37 = arith.constant dense<0.000000e+00> : vector<16x32xf32>
    %105 = tpu.matmul %104, %92, %cst_37 {dimension_numbers = #tpu.dot_dimension_numbers<[1], [1], [0], [0], [0, 0, 1, 0], [], []>} : vector<16x256xf32>, vector<32x256xf32>, vector<16x32xf32> -> vector<16x32xf32>
    %106 = tpu.concatenate %51, %69, %87, %105 in 0 : vector<16x32xf32>, vector<16x32xf32>, vector<16x32xf32>, vector<16x32xf32> -> vector<64x32xf32>
    %107 = arith.truncf %106 : vector<64x32xf32> to vector<64x32xbf16>
    %cst_38 = arith.constant dense<0.000000e+00> : vector<64x32xf32>
    %108 = tpu.matmul %107, %31, %cst_38 {dimension_numbers = #tpu.dot_dimension_numbers<[1], [0], [0], [1], [0, 0, 1, 1], [], []>} : vector<64x32xbf16>, vector<32x32xbf16>, vector<64x32xf32> -> vector<64x32xf32>
    %109 = arith.addf %28, %108 : vector<64x32xf32>
    %110 = vector.extract_strided_slice %26 {offsets = [0, 32], sizes = [64, 32], strides = [1, 1]} : vector<64x128xf32> to vector<64x32xf32>
    %c112 = arith.constant 112 : index
    %c0_39 = arith.constant 0 : index
    %111 = vector.load %arg4[%c112, %c0_39] : memref<560x128xbf16, #tpu.memory_space<vmem>>, vector<64x4xbf16>
    %c336 = arith.constant 336 : index
    %c0_40 = arith.constant 0 : index
    %112 = vector.load %arg4[%c336, %c0_40] : memref<560x128xbf16, #tpu.memory_space<vmem>>, vector<32x32xbf16>
    %c64 = arith.constant 64 : index
    %c0_41 = arith.constant 0 : index
    %113 = vector.load %arg3[%c64, %c0_41] : memref<256x256xbf16, #tpu.memory_space<vmem>>, vector<64x256xbf16>
    %114 = arith.extf %113 : vector<64x256xbf16> to vector<64x256xf32>
    %115 = vector.extract_strided_slice %20 {offsets = [0, 0], sizes = [4, 256], strides = [1, 1]} : vector<4x1024xbf16> to vector<4x256xbf16>
    %cst_42 = arith.constant dense<0.000000e+00> : vector<64x256xf32>
    %116 = tpu.matmul %111, %115, %cst_42 {dimension_numbers = #tpu.dot_dimension_numbers<[1], [0], [0], [1], [0, 0, 1, 1], [], []>} : vector<64x4xbf16>, vector<4x256xbf16>, vector<64x256xf32> -> vector<64x256xf32>
    %117 = arith.addf %116, %114 : vector<64x256xf32>
    %118 = vector.extract_strided_slice %117 {offsets = [0, 0], sizes = [32, 256], strides = [1, 1]} : vector<64x256xf32> to vector<32x256xf32>
    %119 = vector.extract_strided_slice %117 {offsets = [32, 0], sizes = [32, 256], strides = [1, 1]} : vector<64x256xf32> to vector<32x256xf32>
    %120 = vector.extract_strided_slice %110 {offsets = [0, 0], sizes = [16, 32], strides = [1, 1]} : vector<64x32xf32> to vector<16x32xf32>
    %cst_43 = arith.constant dense<0.000000e+00> : vector<16x256xf32>
    %121 = tpu.matmul %120, %118, %cst_43 {dimension_numbers = #tpu.dot_dimension_numbers<[1], [0], [0], [1], [0, 0, 1, 1], [], []>} : vector<16x32xf32>, vector<32x256xf32>, vector<16x256xf32> -> vector<16x256xf32>
    %cst_44 = arith.constant dense<0xFF800000> : vector<16xf32>
    %122 = vector.multi_reduction <maximumf>, %121, %cst_44 [1] : vector<16x256xf32> to vector<16xf32>
    %123 = vector.shape_cast %122 : vector<16xf32> to vector<16x1xf32>
    %124 = vector.broadcast %123 : vector<16x1xf32> to vector<16x256xf32>
    %125 = arith.subf %121, %124 : vector<16x256xf32>
    %126 = math.exp %125 : vector<16x256xf32>
    %cst_45 = arith.constant dense<0.000000e+00> : vector<16xf32>
    %127 = vector.multi_reduction <add>, %126, %cst_45 [1] : vector<16x256xf32> to vector<16xf32>
    %128 = vector.shape_cast %127 : vector<16xf32> to vector<16x1xf32>
    %129 = tpu.reciprocal %128 {approx = true} : vector<16x1xf32> -> vector<16x1xf32>
    %130 = vector.broadcast %129 : vector<16x1xf32> to vector<16x256xf32>
    %131 = arith.mulf %126, %130 : vector<16x256xf32>
    %cst_46 = arith.constant dense<0.000000e+00> : vector<16x32xf32>
    %132 = tpu.matmul %131, %119, %cst_46 {dimension_numbers = #tpu.dot_dimension_numbers<[1], [1], [0], [0], [0, 0, 1, 0], [], []>} : vector<16x256xf32>, vector<32x256xf32>, vector<16x32xf32> -> vector<16x32xf32>
    %133 = vector.extract_strided_slice %20 {offsets = [0, 256], sizes = [4, 256], strides = [1, 1]} : vector<4x1024xbf16> to vector<4x256xbf16>
    %cst_47 = arith.constant dense<0.000000e+00> : vector<64x256xf32>
    %134 = tpu.matmul %111, %133, %cst_47 {dimension_numbers = #tpu.dot_dimension_numbers<[1], [0], [0], [1], [0, 0, 1, 1], [], []>} : vector<64x4xbf16>, vector<4x256xbf16>, vector<64x256xf32> -> vector<64x256xf32>
    %135 = arith.addf %134, %114 : vector<64x256xf32>
    %136 = vector.extract_strided_slice %135 {offsets = [0, 0], sizes = [32, 256], strides = [1, 1]} : vector<64x256xf32> to vector<32x256xf32>
    %137 = vector.extract_strided_slice %135 {offsets = [32, 0], sizes = [32, 256], strides = [1, 1]} : vector<64x256xf32> to vector<32x256xf32>
    %138 = vector.extract_strided_slice %110 {offsets = [16, 0], sizes = [16, 32], strides = [1, 1]} : vector<64x32xf32> to vector<16x32xf32>
    %cst_48 = arith.constant dense<0.000000e+00> : vector<16x256xf32>
    %139 = tpu.matmul %138, %136, %cst_48 {dimension_numbers = #tpu.dot_dimension_numbers<[1], [0], [0], [1], [0, 0, 1, 1], [], []>} : vector<16x32xf32>, vector<32x256xf32>, vector<16x256xf32> -> vector<16x256xf32>
    %cst_49 = arith.constant dense<0xFF800000> : vector<16xf32>
    %140 = vector.multi_reduction <maximumf>, %139, %cst_49 [1] : vector<16x256xf32> to vector<16xf32>
    %141 = vector.shape_cast %140 : vector<16xf32> to vector<16x1xf32>
    %142 = vector.broadcast %141 : vector<16x1xf32> to vector<16x256xf32>
    %143 = arith.subf %139, %142 : vector<16x256xf32>
    %144 = math.exp %143 : vector<16x256xf32>
    %cst_50 = arith.constant dense<0.000000e+00> : vector<16xf32>
    %145 = vector.multi_reduction <add>, %144, %cst_50 [1] : vector<16x256xf32> to vector<16xf32>
    %146 = vector.shape_cast %145 : vector<16xf32> to vector<16x1xf32>
    %147 = tpu.reciprocal %146 {approx = true} : vector<16x1xf32> -> vector<16x1xf32>
    %148 = vector.broadcast %147 : vector<16x1xf32> to vector<16x256xf32>
    %149 = arith.mulf %144, %148 : vector<16x256xf32>
    %cst_51 = arith.constant dense<0.000000e+00> : vector<16x32xf32>
    %150 = tpu.matmul %149, %137, %cst_51 {dimension_numbers = #tpu.dot_dimension_numbers<[1], [1], [0], [0], [0, 0, 1, 0], [], []>} : vector<16x256xf32>, vector<32x256xf32>, vector<16x32xf32> -> vector<16x32xf32>
    %151 = vector.extract_strided_slice %20 {offsets = [0, 512], sizes = [4, 256], strides = [1, 1]} : vector<4x1024xbf16> to vector<4x256xbf16>
    %cst_52 = arith.constant dense<0.000000e+00> : vector<64x256xf32>
    %152 = tpu.matmul %111, %151, %cst_52 {dimension_numbers = #tpu.dot_dimension_numbers<[1], [0], [0], [1], [0, 0, 1, 1], [], []>} : vector<64x4xbf16>, vector<4x256xbf16>, vector<64x256xf32> -> vector<64x256xf32>
    %153 = arith.addf %152, %114 : vector<64x256xf32>
    %154 = vector.extract_strided_slice %153 {offsets = [0, 0], sizes = [32, 256], strides = [1, 1]} : vector<64x256xf32> to vector<32x256xf32>
    %155 = vector.extract_strided_slice %153 {offsets = [32, 0], sizes = [32, 256], strides = [1, 1]} : vector<64x256xf32> to vector<32x256xf32>
    %156 = vector.extract_strided_slice %110 {offsets = [32, 0], sizes = [16, 32], strides = [1, 1]} : vector<64x32xf32> to vector<16x32xf32>
    %cst_53 = arith.constant dense<0.000000e+00> : vector<16x256xf32>
    %157 = tpu.matmul %156, %154, %cst_53 {dimension_numbers = #tpu.dot_dimension_numbers<[1], [0], [0], [1], [0, 0, 1, 1], [], []>} : vector<16x32xf32>, vector<32x256xf32>, vector<16x256xf32> -> vector<16x256xf32>
    %cst_54 = arith.constant dense<0xFF800000> : vector<16xf32>
    %158 = vector.multi_reduction <maximumf>, %157, %cst_54 [1] : vector<16x256xf32> to vector<16xf32>
    %159 = vector.shape_cast %158 : vector<16xf32> to vector<16x1xf32>
    %160 = vector.broadcast %159 : vector<16x1xf32> to vector<16x256xf32>
    %161 = arith.subf %157, %160 : vector<16x256xf32>
    %162 = math.exp %161 : vector<16x256xf32>
    %cst_55 = arith.constant dense<0.000000e+00> : vector<16xf32>
    %163 = vector.multi_reduction <add>, %162, %cst_55 [1] : vector<16x256xf32> to vector<16xf32>
    %164 = vector.shape_cast %163 : vector<16xf32> to vector<16x1xf32>
    %165 = tpu.reciprocal %164 {approx = true} : vector<16x1xf32> -> vector<16x1xf32>
    %166 = vector.broadcast %165 : vector<16x1xf32> to vector<16x256xf32>
    %167 = arith.mulf %162, %166 : vector<16x256xf32>
    %cst_56 = arith.constant dense<0.000000e+00> : vector<16x32xf32>
    %168 = tpu.matmul %167, %155, %cst_56 {dimension_numbers = #tpu.dot_dimension_numbers<[1], [1], [0], [0], [0, 0, 1, 0], [], []>} : vector<16x256xf32>, vector<32x256xf32>, vector<16x32xf32> -> vector<16x32xf32>
    %169 = vector.extract_strided_slice %20 {offsets = [0, 768], sizes = [4, 256], strides = [1, 1]} : vector<4x1024xbf16> to vector<4x256xbf16>
    %cst_57 = arith.constant dense<0.000000e+00> : vector<64x256xf32>
    %170 = tpu.matmul %111, %169, %cst_57 {dimension_numbers = #tpu.dot_dimension_numbers<[1], [0], [0], [1], [0, 0, 1, 1], [], []>} : vector<64x4xbf16>, vector<4x256xbf16>, vector<64x256xf32> -> vector<64x256xf32>
    %171 = arith.addf %170, %114 : vector<64x256xf32>
    %172 = vector.extract_strided_slice %171 {offsets = [0, 0], sizes = [32, 256], strides = [1, 1]} : vector<64x256xf32> to vector<32x256xf32>
    %173 = vector.extract_strided_slice %171 {offsets = [32, 0], sizes = [32, 256], strides = [1, 1]} : vector<64x256xf32> to vector<32x256xf32>
    %174 = vector.extract_strided_slice %110 {offsets = [48, 0], sizes = [16, 32], strides = [1, 1]} : vector<64x32xf32> to vector<16x32xf32>
    %cst_58 = arith.constant dense<0.000000e+00> : vector<16x256xf32>
    %175 = tpu.matmul %174, %172, %cst_58 {dimension_numbers = #tpu.dot_dimension_numbers<[1], [0], [0], [1], [0, 0, 1, 1], [], []>} : vector<16x32xf32>, vector<32x256xf32>, vector<16x256xf32> -> vector<16x256xf32>
    %cst_59 = arith.constant dense<0xFF800000> : vector<16xf32>
    %176 = vector.multi_reduction <maximumf>, %175, %cst_59 [1] : vector<16x256xf32> to vector<16xf32>
    %177 = vector.shape_cast %176 : vector<16xf32> to vector<16x1xf32>
    %178 = vector.broadcast %177 : vector<16x1xf32> to vector<16x256xf32>
    %179 = arith.subf %175, %178 : vector<16x256xf32>
    %180 = math.exp %179 : vector<16x256xf32>
    %cst_60 = arith.constant dense<0.000000e+00> : vector<16xf32>
    %181 = vector.multi_reduction <add>, %180, %cst_60 [1] : vector<16x256xf32> to vector<16xf32>
    %182 = vector.shape_cast %181 : vector<16xf32> to vector<16x1xf32>
    %183 = tpu.reciprocal %182 {approx = true} : vector<16x1xf32> -> vector<16x1xf32>
    %184 = vector.broadcast %183 : vector<16x1xf32> to vector<16x256xf32>
    %185 = arith.mulf %180, %184 : vector<16x256xf32>
    %cst_61 = arith.constant dense<0.000000e+00> : vector<16x32xf32>
    %186 = tpu.matmul %185, %173, %cst_61 {dimension_numbers = #tpu.dot_dimension_numbers<[1], [1], [0], [0], [0, 0, 1, 0], [], []>} : vector<16x256xf32>, vector<32x256xf32>, vector<16x32xf32> -> vector<16x32xf32>
    %187 = tpu.concatenate %132, %150, %168, %186 in 0 : vector<16x32xf32>, vector<16x32xf32>, vector<16x32xf32>, vector<16x32xf32> -> vector<64x32xf32>
    %188 = arith.truncf %187 : vector<64x32xf32> to vector<64x32xbf16>
    %cst_62 = arith.constant dense<0.000000e+00> : vector<64x32xf32>
    %189 = tpu.matmul %188, %112, %cst_62 {dimension_numbers = #tpu.dot_dimension_numbers<[1], [0], [0], [1], [0, 0, 1, 1], [], []>} : vector<64x32xbf16>, vector<32x32xbf16>, vector<64x32xf32> -> vector<64x32xf32>
    %190 = arith.addf %109, %189 : vector<64x32xf32>
    %191 = vector.extract_strided_slice %26 {offsets = [0, 64], sizes = [64, 32], strides = [1, 1]} : vector<64x128xf32> to vector<64x32xf32>
    %c176 = arith.constant 176 : index
    %c0_63 = arith.constant 0 : index
    %192 = vector.load %arg4[%c176, %c0_63] : memref<560x128xbf16, #tpu.memory_space<vmem>>, vector<64x4xbf16>
    %c368 = arith.constant 368 : index
    %c0_64 = arith.constant 0 : index
    %193 = vector.load %arg4[%c368, %c0_64] : memref<560x128xbf16, #tpu.memory_space<vmem>>, vector<32x32xbf16>
    %c128 = arith.constant 128 : index
    %c0_65 = arith.constant 0 : index
    %194 = vector.load %arg3[%c128, %c0_65] : memref<256x256xbf16, #tpu.memory_space<vmem>>, vector<64x256xbf16>
    %195 = arith.extf %194 : vector<64x256xbf16> to vector<64x256xf32>
    %196 = vector.extract_strided_slice %20 {offsets = [0, 0], sizes = [4, 256], strides = [1, 1]} : vector<4x1024xbf16> to vector<4x256xbf16>
    %cst_66 = arith.constant dense<0.000000e+00> : vector<64x256xf32>
    %197 = tpu.matmul %192, %196, %cst_66 {dimension_numbers = #tpu.dot_dimension_numbers<[1], [0], [0], [1], [0, 0, 1, 1], [], []>} : vector<64x4xbf16>, vector<4x256xbf16>, vector<64x256xf32> -> vector<64x256xf32>
    %198 = arith.addf %197, %195 : vector<64x256xf32>
    %199 = vector.extract_strided_slice %198 {offsets = [0, 0], sizes = [32, 256], strides = [1, 1]} : vector<64x256xf32> to vector<32x256xf32>
    %200 = vector.extract_strided_slice %198 {offsets = [32, 0], sizes = [32, 256], strides = [1, 1]} : vector<64x256xf32> to vector<32x256xf32>
    %201 = vector.extract_strided_slice %191 {offsets = [0, 0], sizes = [16, 32], strides = [1, 1]} : vector<64x32xf32> to vector<16x32xf32>
    %cst_67 = arith.constant dense<0.000000e+00> : vector<16x256xf32>
    %202 = tpu.matmul %201, %199, %cst_67 {dimension_numbers = #tpu.dot_dimension_numbers<[1], [0], [0], [1], [0, 0, 1, 1], [], []>} : vector<16x32xf32>, vector<32x256xf32>, vector<16x256xf32> -> vector<16x256xf32>
    %cst_68 = arith.constant dense<0xFF800000> : vector<16xf32>
    %203 = vector.multi_reduction <maximumf>, %202, %cst_68 [1] : vector<16x256xf32> to vector<16xf32>
    %204 = vector.shape_cast %203 : vector<16xf32> to vector<16x1xf32>
    %205 = vector.broadcast %204 : vector<16x1xf32> to vector<16x256xf32>
    %206 = arith.subf %202, %205 : vector<16x256xf32>
    %207 = math.exp %206 : vector<16x256xf32>
    %cst_69 = arith.constant dense<0.000000e+00> : vector<16xf32>
    %208 = vector.multi_reduction <add>, %207, %cst_69 [1] : vector<16x256xf32> to vector<16xf32>
    %209 = vector.shape_cast %208 : vector<16xf32> to vector<16x1xf32>
    %210 = tpu.reciprocal %209 {approx = true} : vector<16x1xf32> -> vector<16x1xf32>
    %211 = vector.broadcast %210 : vector<16x1xf32> to vector<16x256xf32>
    %212 = arith.mulf %207, %211 : vector<16x256xf32>
    %cst_70 = arith.constant dense<0.000000e+00> : vector<16x32xf32>
    %213 = tpu.matmul %212, %200, %cst_70 {dimension_numbers = #tpu.dot_dimension_numbers<[1], [1], [0], [0], [0, 0, 1, 0], [], []>} : vector<16x256xf32>, vector<32x256xf32>, vector<16x32xf32> -> vector<16x32xf32>
    %214 = vector.extract_strided_slice %20 {offsets = [0, 256], sizes = [4, 256], strides = [1, 1]} : vector<4x1024xbf16> to vector<4x256xbf16>
    %cst_71 = arith.constant dense<0.000000e+00> : vector<64x256xf32>
    %215 = tpu.matmul %192, %214, %cst_71 {dimension_numbers = #tpu.dot_dimension_numbers<[1], [0], [0], [1], [0, 0, 1, 1], [], []>} : vector<64x4xbf16>, vector<4x256xbf16>, vector<64x256xf32> -> vector<64x256xf32>
    %216 = arith.addf %215, %195 : vector<64x256xf32>
    %217 = vector.extract_strided_slice %216 {offsets = [0, 0], sizes = [32, 256], strides = [1, 1]} : vector<64x256xf32> to vector<32x256xf32>
    %218 = vector.extract_strided_slice %216 {offsets = [32, 0], sizes = [32, 256], strides = [1, 1]} : vector<64x256xf32> to vector<32x256xf32>
    %219 = vector.extract_strided_slice %191 {offsets = [16, 0], sizes = [16, 32], strides = [1, 1]} : vector<64x32xf32> to vector<16x32xf32>
    %cst_72 = arith.constant dense<0.000000e+00> : vector<16x256xf32>
    %220 = tpu.matmul %219, %217, %cst_72 {dimension_numbers = #tpu.dot_dimension_numbers<[1], [0], [0], [1], [0, 0, 1, 1], [], []>} : vector<16x32xf32>, vector<32x256xf32>, vector<16x256xf32> -> vector<16x256xf32>
    %cst_73 = arith.constant dense<0xFF800000> : vector<16xf32>
    %221 = vector.multi_reduction <maximumf>, %220, %cst_73 [1] : vector<16x256xf32> to vector<16xf32>
    %222 = vector.shape_cast %221 : vector<16xf32> to vector<16x1xf32>
    %223 = vector.broadcast %222 : vector<16x1xf32> to vector<16x256xf32>
    %224 = arith.subf %220, %223 : vector<16x256xf32>
    %225 = math.exp %224 : vector<16x256xf32>
    %cst_74 = arith.constant dense<0.000000e+00> : vector<16xf32>
    %226 = vector.multi_reduction <add>, %225, %cst_74 [1] : vector<16x256xf32> to vector<16xf32>
    %227 = vector.shape_cast %226 : vector<16xf32> to vector<16x1xf32>
    %228 = tpu.reciprocal %227 {approx = true} : vector<16x1xf32> -> vector<16x1xf32>
    %229 = vector.broadcast %228 : vector<16x1xf32> to vector<16x256xf32>
    %230 = arith.mulf %225, %229 : vector<16x256xf32>
    %cst_75 = arith.constant dense<0.000000e+00> : vector<16x32xf32>
    %231 = tpu.matmul %230, %218, %cst_75 {dimension_numbers = #tpu.dot_dimension_numbers<[1], [1], [0], [0], [0, 0, 1, 0], [], []>} : vector<16x256xf32>, vector<32x256xf32>, vector<16x32xf32> -> vector<16x32xf32>
    %232 = vector.extract_strided_slice %20 {offsets = [0, 512], sizes = [4, 256], strides = [1, 1]} : vector<4x1024xbf16> to vector<4x256xbf16>
    %cst_76 = arith.constant dense<0.000000e+00> : vector<64x256xf32>
    %233 = tpu.matmul %192, %232, %cst_76 {dimension_numbers = #tpu.dot_dimension_numbers<[1], [0], [0], [1], [0, 0, 1, 1], [], []>} : vector<64x4xbf16>, vector<4x256xbf16>, vector<64x256xf32> -> vector<64x256xf32>
    %234 = arith.addf %233, %195 : vector<64x256xf32>
    %235 = vector.extract_strided_slice %234 {offsets = [0, 0], sizes = [32, 256], strides = [1, 1]} : vector<64x256xf32> to vector<32x256xf32>
    %236 = vector.extract_strided_slice %234 {offsets = [32, 0], sizes = [32, 256], strides = [1, 1]} : vector<64x256xf32> to vector<32x256xf32>
    %237 = vector.extract_strided_slice %191 {offsets = [32, 0], sizes = [16, 32], strides = [1, 1]} : vector<64x32xf32> to vector<16x32xf32>
    %cst_77 = arith.constant dense<0.000000e+00> : vector<16x256xf32>
    %238 = tpu.matmul %237, %235, %cst_77 {dimension_numbers = #tpu.dot_dimension_numbers<[1], [0], [0], [1], [0, 0, 1, 1], [], []>} : vector<16x32xf32>, vector<32x256xf32>, vector<16x256xf32> -> vector<16x256xf32>
    %cst_78 = arith.constant dense<0xFF800000> : vector<16xf32>
    %239 = vector.multi_reduction <maximumf>, %238, %cst_78 [1] : vector<16x256xf32> to vector<16xf32>
    %240 = vector.shape_cast %239 : vector<16xf32> to vector<16x1xf32>
    %241 = vector.broadcast %240 : vector<16x1xf32> to vector<16x256xf32>
    %242 = arith.subf %238, %241 : vector<16x256xf32>
    %243 = math.exp %242 : vector<16x256xf32>
    %cst_79 = arith.constant dense<0.000000e+00> : vector<16xf32>
    %244 = vector.multi_reduction <add>, %243, %cst_79 [1] : vector<16x256xf32> to vector<16xf32>
    %245 = vector.shape_cast %244 : vector<16xf32> to vector<16x1xf32>
    %246 = tpu.reciprocal %245 {approx = true} : vector<16x1xf32> -> vector<16x1xf32>
    %247 = vector.broadcast %246 : vector<16x1xf32> to vector<16x256xf32>
    %248 = arith.mulf %243, %247 : vector<16x256xf32>
    %cst_80 = arith.constant dense<0.000000e+00> : vector<16x32xf32>
    %249 = tpu.matmul %248, %236, %cst_80 {dimension_numbers = #tpu.dot_dimension_numbers<[1], [1], [0], [0], [0, 0, 1, 0], [], []>} : vector<16x256xf32>, vector<32x256xf32>, vector<16x32xf32> -> vector<16x32xf32>
    %250 = vector.extract_strided_slice %20 {offsets = [0, 768], sizes = [4, 256], strides = [1, 1]} : vector<4x1024xbf16> to vector<4x256xbf16>
    %cst_81 = arith.constant dense<0.000000e+00> : vector<64x256xf32>
    %251 = tpu.matmul %192, %250, %cst_81 {dimension_numbers = #tpu.dot_dimension_numbers<[1], [0], [0], [1], [0, 0, 1, 1], [], []>} : vector<64x4xbf16>, vector<4x256xbf16>, vector<64x256xf32> -> vector<64x256xf32>
    %252 = arith.addf %251, %195 : vector<64x256xf32>
    %253 = vector.extract_strided_slice %252 {offsets = [0, 0], sizes = [32, 256], strides = [1, 1]} : vector<64x256xf32> to vector<32x256xf32>
    %254 = vector.extract_strided_slice %252 {offsets = [32, 0], sizes = [32, 256], strides = [1, 1]} : vector<64x256xf32> to vector<32x256xf32>
    %255 = vector.extract_strided_slice %191 {offsets = [48, 0], sizes = [16, 32], strides = [1, 1]} : vector<64x32xf32> to vector<16x32xf32>
    %cst_82 = arith.constant dense<0.000000e+00> : vector<16x256xf32>
    %256 = tpu.matmul %255, %253, %cst_82 {dimension_numbers = #tpu.dot_dimension_numbers<[1], [0], [0], [1], [0, 0, 1, 1], [], []>} : vector<16x32xf32>, vector<32x256xf32>, vector<16x256xf32> -> vector<16x256xf32>
    %cst_83 = arith.constant dense<0xFF800000> : vector<16xf32>
    %257 = vector.multi_reduction <maximumf>, %256, %cst_83 [1] : vector<16x256xf32> to vector<16xf32>
    %258 = vector.shape_cast %257 : vector<16xf32> to vector<16x1xf32>
    %259 = vector.broadcast %258 : vector<16x1xf32> to vector<16x256xf32>
    %260 = arith.subf %256, %259 : vector<16x256xf32>
    %261 = math.exp %260 : vector<16x256xf32>
    %cst_84 = arith.constant dense<0.000000e+00> : vector<16xf32>
    %262 = vector.multi_reduction <add>, %261, %cst_84 [1] : vector<16x256xf32> to vector<16xf32>
    %263 = vector.shape_cast %262 : vector<16xf32> to vector<16x1xf32>
    %264 = tpu.reciprocal %263 {approx = true} : vector<16x1xf32> -> vector<16x1xf32>
    %265 = vector.broadcast %264 : vector<16x1xf32> to vector<16x256xf32>
    %266 = arith.mulf %261, %265 : vector<16x256xf32>
    %cst_85 = arith.constant dense<0.000000e+00> : vector<16x32xf32>
    %267 = tpu.matmul %266, %254, %cst_85 {dimension_numbers = #tpu.dot_dimension_numbers<[1], [1], [0], [0], [0, 0, 1, 0], [], []>} : vector<16x256xf32>, vector<32x256xf32>, vector<16x32xf32> -> vector<16x32xf32>
    %268 = tpu.concatenate %213, %231, %249, %267 in 0 : vector<16x32xf32>, vector<16x32xf32>, vector<16x32xf32>, vector<16x32xf32> -> vector<64x32xf32>
    %269 = arith.truncf %268 : vector<64x32xf32> to vector<64x32xbf16>
    %cst_86 = arith.constant dense<0.000000e+00> : vector<64x32xf32>
    %270 = tpu.matmul %269, %193, %cst_86 {dimension_numbers = #tpu.dot_dimension_numbers<[1], [0], [0], [1], [0, 0, 1, 1], [], []>} : vector<64x32xbf16>, vector<32x32xbf16>, vector<64x32xf32> -> vector<64x32xf32>
    %271 = arith.addf %190, %270 : vector<64x32xf32>
    %272 = vector.extract_strided_slice %26 {offsets = [0, 96], sizes = [64, 32], strides = [1, 1]} : vector<64x128xf32> to vector<64x32xf32>
    %c240 = arith.constant 240 : index
    %c0_87 = arith.constant 0 : index
    %273 = vector.load %arg4[%c240, %c0_87] : memref<560x128xbf16, #tpu.memory_space<vmem>>, vector<64x4xbf16>
    %c400 = arith.constant 400 : index
    %c0_88 = arith.constant 0 : index
    %274 = vector.load %arg4[%c400, %c0_88] : memref<560x128xbf16, #tpu.memory_space<vmem>>, vector<32x32xbf16>
    %c192 = arith.constant 192 : index
    %c0_89 = arith.constant 0 : index
    %275 = vector.load %arg3[%c192, %c0_89] : memref<256x256xbf16, #tpu.memory_space<vmem>>, vector<64x256xbf16>
    %276 = arith.extf %275 : vector<64x256xbf16> to vector<64x256xf32>
    %277 = vector.extract_strided_slice %20 {offsets = [0, 0], sizes = [4, 256], strides = [1, 1]} : vector<4x1024xbf16> to vector<4x256xbf16>
    %cst_90 = arith.constant dense<0.000000e+00> : vector<64x256xf32>
    %278 = tpu.matmul %273, %277, %cst_90 {dimension_numbers = #tpu.dot_dimension_numbers<[1], [0], [0], [1], [0, 0, 1, 1], [], []>} : vector<64x4xbf16>, vector<4x256xbf16>, vector<64x256xf32> -> vector<64x256xf32>
    %279 = arith.addf %278, %276 : vector<64x256xf32>
    %280 = vector.extract_strided_slice %279 {offsets = [0, 0], sizes = [32, 256], strides = [1, 1]} : vector<64x256xf32> to vector<32x256xf32>
    %281 = vector.extract_strided_slice %279 {offsets = [32, 0], sizes = [32, 256], strides = [1, 1]} : vector<64x256xf32> to vector<32x256xf32>
    %282 = vector.extract_strided_slice %272 {offsets = [0, 0], sizes = [16, 32], strides = [1, 1]} : vector<64x32xf32> to vector<16x32xf32>
    %cst_91 = arith.constant dense<0.000000e+00> : vector<16x256xf32>
    %283 = tpu.matmul %282, %280, %cst_91 {dimension_numbers = #tpu.dot_dimension_numbers<[1], [0], [0], [1], [0, 0, 1, 1], [], []>} : vector<16x32xf32>, vector<32x256xf32>, vector<16x256xf32> -> vector<16x256xf32>
    %cst_92 = arith.constant dense<0xFF800000> : vector<16xf32>
    %284 = vector.multi_reduction <maximumf>, %283, %cst_92 [1] : vector<16x256xf32> to vector<16xf32>
    %285 = vector.shape_cast %284 : vector<16xf32> to vector<16x1xf32>
    %286 = vector.broadcast %285 : vector<16x1xf32> to vector<16x256xf32>
    %287 = arith.subf %283, %286 : vector<16x256xf32>
    %288 = math.exp %287 : vector<16x256xf32>
    %cst_93 = arith.constant dense<0.000000e+00> : vector<16xf32>
    %289 = vector.multi_reduction <add>, %288, %cst_93 [1] : vector<16x256xf32> to vector<16xf32>
    %290 = vector.shape_cast %289 : vector<16xf32> to vector<16x1xf32>
    %291 = tpu.reciprocal %290 {approx = true} : vector<16x1xf32> -> vector<16x1xf32>
    %292 = vector.broadcast %291 : vector<16x1xf32> to vector<16x256xf32>
    %293 = arith.mulf %288, %292 : vector<16x256xf32>
    %cst_94 = arith.constant dense<0.000000e+00> : vector<16x32xf32>
    %294 = tpu.matmul %293, %281, %cst_94 {dimension_numbers = #tpu.dot_dimension_numbers<[1], [1], [0], [0], [0, 0, 1, 0], [], []>} : vector<16x256xf32>, vector<32x256xf32>, vector<16x32xf32> -> vector<16x32xf32>
    %295 = vector.extract_strided_slice %20 {offsets = [0, 256], sizes = [4, 256], strides = [1, 1]} : vector<4x1024xbf16> to vector<4x256xbf16>
    %cst_95 = arith.constant dense<0.000000e+00> : vector<64x256xf32>
    %296 = tpu.matmul %273, %295, %cst_95 {dimension_numbers = #tpu.dot_dimension_numbers<[1], [0], [0], [1], [0, 0, 1, 1], [], []>} : vector<64x4xbf16>, vector<4x256xbf16>, vector<64x256xf32> -> vector<64x256xf32>
    %297 = arith.addf %296, %276 : vector<64x256xf32>
    %298 = vector.extract_strided_slice %297 {offsets = [0, 0], sizes = [32, 256], strides = [1, 1]} : vector<64x256xf32> to vector<32x256xf32>
    %299 = vector.extract_strided_slice %297 {offsets = [32, 0], sizes = [32, 256], strides = [1, 1]} : vector<64x256xf32> to vector<32x256xf32>
    %300 = vector.extract_strided_slice %272 {offsets = [16, 0], sizes = [16, 32], strides = [1, 1]} : vector<64x32xf32> to vector<16x32xf32>
    %cst_96 = arith.constant dense<0.000000e+00> : vector<16x256xf32>
    %301 = tpu.matmul %300, %298, %cst_96 {dimension_numbers = #tpu.dot_dimension_numbers<[1], [0], [0], [1], [0, 0, 1, 1], [], []>} : vector<16x32xf32>, vector<32x256xf32>, vector<16x256xf32> -> vector<16x256xf32>
    %cst_97 = arith.constant dense<0xFF800000> : vector<16xf32>
    %302 = vector.multi_reduction <maximumf>, %301, %cst_97 [1] : vector<16x256xf32> to vector<16xf32>
    %303 = vector.shape_cast %302 : vector<16xf32> to vector<16x1xf32>
    %304 = vector.broadcast %303 : vector<16x1xf32> to vector<16x256xf32>
    %305 = arith.subf %301, %304 : vector<16x256xf32>
    %306 = math.exp %305 : vector<16x256xf32>
    %cst_98 = arith.constant dense<0.000000e+00> : vector<16xf32>
    %307 = vector.multi_reduction <add>, %306, %cst_98 [1] : vector<16x256xf32> to vector<16xf32>
    %308 = vector.shape_cast %307 : vector<16xf32> to vector<16x1xf32>
    %309 = tpu.reciprocal %308 {approx = true} : vector<16x1xf32> -> vector<16x1xf32>
    %310 = vector.broadcast %309 : vector<16x1xf32> to vector<16x256xf32>
    %311 = arith.mulf %306, %310 : vector<16x256xf32>
    %cst_99 = arith.constant dense<0.000000e+00> : vector<16x32xf32>
    %312 = tpu.matmul %311, %299, %cst_99 {dimension_numbers = #tpu.dot_dimension_numbers<[1], [1], [0], [0], [0, 0, 1, 0], [], []>} : vector<16x256xf32>, vector<32x256xf32>, vector<16x32xf32> -> vector<16x32xf32>
    %313 = vector.extract_strided_slice %20 {offsets = [0, 512], sizes = [4, 256], strides = [1, 1]} : vector<4x1024xbf16> to vector<4x256xbf16>
    %cst_100 = arith.constant dense<0.000000e+00> : vector<64x256xf32>
    %314 = tpu.matmul %273, %313, %cst_100 {dimension_numbers = #tpu.dot_dimension_numbers<[1], [0], [0], [1], [0, 0, 1, 1], [], []>} : vector<64x4xbf16>, vector<4x256xbf16>, vector<64x256xf32> -> vector<64x256xf32>
    %315 = arith.addf %314, %276 : vector<64x256xf32>
    %316 = vector.extract_strided_slice %315 {offsets = [0, 0], sizes = [32, 256], strides = [1, 1]} : vector<64x256xf32> to vector<32x256xf32>
    %317 = vector.extract_strided_slice %315 {offsets = [32, 0], sizes = [32, 256], strides = [1, 1]} : vector<64x256xf32> to vector<32x256xf32>
    %318 = vector.extract_strided_slice %272 {offsets = [32, 0], sizes = [16, 32], strides = [1, 1]} : vector<64x32xf32> to vector<16x32xf32>
    %cst_101 = arith.constant dense<0.000000e+00> : vector<16x256xf32>
    %319 = tpu.matmul %318, %316, %cst_101 {dimension_numbers = #tpu.dot_dimension_numbers<[1], [0], [0], [1], [0, 0, 1, 1], [], []>} : vector<16x32xf32>, vector<32x256xf32>, vector<16x256xf32> -> vector<16x256xf32>
    %cst_102 = arith.constant dense<0xFF800000> : vector<16xf32>
    %320 = vector.multi_reduction <maximumf>, %319, %cst_102 [1] : vector<16x256xf32> to vector<16xf32>
    %321 = vector.shape_cast %320 : vector<16xf32> to vector<16x1xf32>
    %322 = vector.broadcast %321 : vector<16x1xf32> to vector<16x256xf32>
    %323 = arith.subf %319, %322 : vector<16x256xf32>
    %324 = math.exp %323 : vector<16x256xf32>
    %cst_103 = arith.constant dense<0.000000e+00> : vector<16xf32>
    %325 = vector.multi_reduction <add>, %324, %cst_103 [1] : vector<16x256xf32> to vector<16xf32>
    %326 = vector.shape_cast %325 : vector<16xf32> to vector<16x1xf32>
    %327 = tpu.reciprocal %326 {approx = true} : vector<16x1xf32> -> vector<16x1xf32>
    %328 = vector.broadcast %327 : vector<16x1xf32> to vector<16x256xf32>
    %329 = arith.mulf %324, %328 : vector<16x256xf32>
    %cst_104 = arith.constant dense<0.000000e+00> : vector<16x32xf32>
    %330 = tpu.matmul %329, %317, %cst_104 {dimension_numbers = #tpu.dot_dimension_numbers<[1], [1], [0], [0], [0, 0, 1, 0], [], []>} : vector<16x256xf32>, vector<32x256xf32>, vector<16x32xf32> -> vector<16x32xf32>
    %331 = vector.extract_strided_slice %20 {offsets = [0, 768], sizes = [4, 256], strides = [1, 1]} : vector<4x1024xbf16> to vector<4x256xbf16>
    %cst_105 = arith.constant dense<0.000000e+00> : vector<64x256xf32>
    %332 = tpu.matmul %273, %331, %cst_105 {dimension_numbers = #tpu.dot_dimension_numbers<[1], [0], [0], [1], [0, 0, 1, 1], [], []>} : vector<64x4xbf16>, vector<4x256xbf16>, vector<64x256xf32> -> vector<64x256xf32>
    %333 = arith.addf %332, %276 : vector<64x256xf32>
    %334 = vector.extract_strided_slice %333 {offsets = [0, 0], sizes = [32, 256], strides = [1, 1]} : vector<64x256xf32> to vector<32x256xf32>
    %335 = vector.extract_strided_slice %333 {offsets = [32, 0], sizes = [32, 256], strides = [1, 1]} : vector<64x256xf32> to vector<32x256xf32>
    %336 = vector.extract_strided_slice %272 {offsets = [48, 0], sizes = [16, 32], strides = [1, 1]} : vector<64x32xf32> to vector<16x32xf32>
    %cst_106 = arith.constant dense<0.000000e+00> : vector<16x256xf32>
    %337 = tpu.matmul %336, %334, %cst_106 {dimension_numbers = #tpu.dot_dimension_numbers<[1], [0], [0], [1], [0, 0, 1, 1], [], []>} : vector<16x32xf32>, vector<32x256xf32>, vector<16x256xf32> -> vector<16x256xf32>
    %cst_107 = arith.constant dense<0xFF800000> : vector<16xf32>
    %338 = vector.multi_reduction <maximumf>, %337, %cst_107 [1] : vector<16x256xf32> to vector<16xf32>
    %339 = vector.shape_cast %338 : vector<16xf32> to vector<16x1xf32>
    %340 = vector.broadcast %339 : vector<16x1xf32> to vector<16x256xf32>
    %341 = arith.subf %337, %340 : vector<16x256xf32>
    %342 = math.exp %341 : vector<16x256xf32>
    %cst_108 = arith.constant dense<0.000000e+00> : vector<16xf32>
    %343 = vector.multi_reduction <add>, %342, %cst_108 [1] : vector<16x256xf32> to vector<16xf32>
    %344 = vector.shape_cast %343 : vector<16xf32> to vector<16x1xf32>
    %345 = tpu.reciprocal %344 {approx = true} : vector<16x1xf32> -> vector<16x1xf32>
    %346 = vector.broadcast %345 : vector<16x1xf32> to vector<16x256xf32>
    %347 = arith.mulf %342, %346 : vector<16x256xf32>
    %cst_109 = arith.constant dense<0.000000e+00> : vector<16x32xf32>
    %348 = tpu.matmul %347, %335, %cst_109 {dimension_numbers = #tpu.dot_dimension_numbers<[1], [1], [0], [0], [0, 0, 1, 0], [], []>} : vector<16x256xf32>, vector<32x256xf32>, vector<16x32xf32> -> vector<16x32xf32>
    %349 = tpu.concatenate %294, %312, %330, %348 in 0 : vector<16x32xf32>, vector<16x32xf32>, vector<16x32xf32>, vector<16x32xf32> -> vector<64x32xf32>
    %350 = arith.truncf %349 : vector<64x32xf32> to vector<64x32xbf16>
    %cst_110 = arith.constant dense<0.000000e+00> : vector<64x32xf32>
    %351 = tpu.matmul %350, %274, %cst_110 {dimension_numbers = #tpu.dot_dimension_numbers<[1], [0], [0], [1], [0, 0, 1, 1], [], []>} : vector<64x32xbf16>, vector<32x32xbf16>, vector<64x32xf32> -> vector<64x32xf32>
    %352 = arith.addf %271, %351 : vector<64x32xf32>
    %353 = arith.truncf %352 : vector<64x32xf32> to vector<64x32xbf16>
    %cst_111 = arith.constant dense<0.000000e+00> : vector<64x16xf32>
    %354 = tpu.matmul %353, %5, %cst_111 {dimension_numbers = #tpu.dot_dimension_numbers<[1], [0], [0], [1], [0, 0, 1, 1], [], []>} : vector<64x32xbf16>, vector<32x16xbf16>, vector<64x16xf32> -> vector<64x16xf32>
    %355 = vector.broadcast %14 : vector<1x16xf32> to vector<64x16xf32>
    %356 = arith.addf %354, %355 : vector<64x16xf32>
    %cst_112 = arith.constant 0.000000e+00 : f32
    %357 = vector.broadcast %cst_112 : f32 to vector<64x16xf32>
    %358 = arith.maximumf %356, %357 : vector<64x16xf32>
    %cst_113 = arith.constant dense<0.000000e+00> : vector<64xf32>
    %359 = vector.multi_reduction <add>, %358, %cst_113 [1] : vector<64x16xf32> to vector<64xf32>
    %360 = vector.shape_cast %359 : vector<64xf32> to vector<64x1xf32>
    %cst_114 = arith.constant 1.600000e+01 : f32
    %361 = vector.broadcast %cst_114 : f32 to vector<64x1xf32>
    %362 = arith.divf %360, %361 : vector<64x1xf32>
    %363 = vector.broadcast %362 : vector<64x1xf32> to vector<64x16xf32>
    %364 = arith.subf %358, %363 : vector<64x16xf32>
    %365 = arith.mulf %364, %364 : vector<64x16xf32>
    %cst_115 = arith.constant dense<0.000000e+00> : vector<64xf32>
    %366 = vector.multi_reduction <add>, %365, %cst_115 [1] : vector<64x16xf32> to vector<64xf32>
    %367 = vector.shape_cast %366 : vector<64xf32> to vector<64x1xf32>
    %cst_116 = arith.constant 1.600000e+01 : f32
    %368 = vector.broadcast %cst_116 : f32 to vector<64x1xf32>
    %369 = arith.divf %367, %368 : vector<64x1xf32>
    %370 = vector.broadcast %362 : vector<64x1xf32> to vector<64x16xf32>
    %371 = arith.subf %358, %370 : vector<64x16xf32>
    %cst_117 = arith.constant 9.99999974E-6 : f32
    %372 = vector.broadcast %cst_117 : f32 to vector<64x1xf32>
    %373 = arith.addf %369, %372 : vector<64x1xf32>
    %374 = math.rsqrt %373 : vector<64x1xf32>
    %375 = vector.broadcast %374 : vector<64x1xf32> to vector<64x16xf32>
    %376 = arith.mulf %371, %375 : vector<64x16xf32>
    %377 = vector.broadcast %15 : vector<1x16xf32> to vector<64x16xf32>
    %378 = arith.mulf %376, %377 : vector<64x16xf32>
    %379 = vector.broadcast %16 : vector<1x16xf32> to vector<64x16xf32>
    %380 = arith.addf %378, %379 : vector<64x16xf32>
    %381 = arith.truncf %380 : vector<64x16xf32> to vector<64x16xbf16>
    %cst_118 = arith.constant dense<0.000000e+00> : vector<64x8xf32>
    %382 = tpu.matmul %381, %8, %cst_118 {dimension_numbers = #tpu.dot_dimension_numbers<[1], [0], [0], [1], [0, 0, 1, 1], [], []>} : vector<64x16xbf16>, vector<16x8xbf16>, vector<64x8xf32> -> vector<64x8xf32>
    %383 = vector.broadcast %17 : vector<1x8xf32> to vector<64x8xf32>
    %384 = arith.addf %382, %383 : vector<64x8xf32>
    %cst_119 = arith.constant 0.000000e+00 : f32
    %385 = vector.broadcast %cst_119 : f32 to vector<64x8xf32>
    %386 = arith.maximumf %384, %385 : vector<64x8xf32>
    %cst_120 = arith.constant dense<0.000000e+00> : vector<64xf32>
    %387 = vector.multi_reduction <add>, %386, %cst_120 [1] : vector<64x8xf32> to vector<64xf32>
    %388 = vector.shape_cast %387 : vector<64xf32> to vector<64x1xf32>
    %cst_121 = arith.constant 8.000000e+00 : f32
    %389 = vector.broadcast %cst_121 : f32 to vector<64x1xf32>
    %390 = arith.divf %388, %389 : vector<64x1xf32>
    %391 = vector.broadcast %390 : vector<64x1xf32> to vector<64x8xf32>
    %392 = arith.subf %386, %391 : vector<64x8xf32>
    %393 = arith.mulf %392, %392 : vector<64x8xf32>
    %cst_122 = arith.constant dense<0.000000e+00> : vector<64xf32>
    %394 = vector.multi_reduction <add>, %393, %cst_122 [1] : vector<64x8xf32> to vector<64xf32>
    %395 = vector.shape_cast %394 : vector<64xf32> to vector<64x1xf32>
    %cst_123 = arith.constant 8.000000e+00 : f32
    %396 = vector.broadcast %cst_123 : f32 to vector<64x1xf32>
    %397 = arith.divf %395, %396 : vector<64x1xf32>
    %398 = vector.broadcast %390 : vector<64x1xf32> to vector<64x8xf32>
    %399 = arith.subf %386, %398 : vector<64x8xf32>
    %cst_124 = arith.constant 9.99999974E-6 : f32
    %400 = vector.broadcast %cst_124 : f32 to vector<64x1xf32>
    %401 = arith.addf %397, %400 : vector<64x1xf32>
    %402 = math.rsqrt %401 : vector<64x1xf32>
    %403 = vector.broadcast %402 : vector<64x1xf32> to vector<64x8xf32>
    %404 = arith.mulf %399, %403 : vector<64x8xf32>
    %405 = vector.broadcast %18 : vector<1x8xf32> to vector<64x8xf32>
    %406 = arith.mulf %404, %405 : vector<64x8xf32>
    %407 = vector.broadcast %19 : vector<1x8xf32> to vector<64x8xf32>
    %408 = arith.addf %406, %407 : vector<64x8xf32>
    %409 = arith.truncf %408 : vector<64x8xf32> to vector<64x8xbf16>
    %cst_125 = arith.constant dense<0.000000e+00> : vector<64x1xf32>
    %410 = tpu.matmul %409, %11, %cst_125 {dimension_numbers = #tpu.dot_dimension_numbers<[1], [0], [0], [1], [0, 0, 1, 1], [], []>} : vector<64x8xbf16>, vector<8x1xbf16>, vector<64x1xf32> -> vector<64x1xf32>
    %411 = vector.broadcast %13 : vector<1x1xf32> to vector<64x1xf32>
    %412 = arith.addf %410, %411 : vector<64x1xf32>
    %413 = arith.negf %412 : vector<64x1xf32>
    %414 = math.exp %413 : vector<64x1xf32>
    %cst_126 = arith.constant 1.000000e+00 : f32
    %415 = vector.broadcast %cst_126 : f32 to vector<64x1xf32>
    %416 = arith.addf %415, %414 : vector<64x1xf32>
    %417 = arith.divf %415, %416 : vector<64x1xf32>
    %418 = vector.shape_cast %417 : vector<64x1xf32> to vector<64x1xf32>
    %419 = vector.broadcast %418 : vector<64x1xf32> to vector<64x96xf32>
    %420 = tpu.concatenate %352, %419 in 1 : vector<64x32xf32>, vector<64x96xf32> -> vector<64x128xf32>
    %421 = vector.shape_cast %420 : vector<64x128xf32> to vector<4x16x128xf32>
    %c0_127 = arith.constant 0 : index
    %c0_128 = arith.constant 0 : index
    %c0_129 = arith.constant 0 : index
    %422 = vector.load %arg5[%c0_127, %c0_128, %c0_129] : memref<4x16x128xf32, #tpu.memory_space<vmem>>, vector<4x16x128xf32>
    tpu.vector_store %arg5[%c0_127, %c0_128, %c0_129], %421 {strides = array<i32>} : memref<4x16x128xf32, #tpu.memory_space<vmem>>, vector<4x16x128xf32>,
    return
  }
  func.func @transform_0(%arg0: i32) -> (i32, i32) {
    %c0_i32 = arith.constant 0 : i32
    %c0_i32_0 = arith.constant 0 : i32
    return %c0_i32, %arg0 : i32, i32
  }
  func.func @transform_1(%arg0: i32) -> (i32, i32, i32) {
    %c0_i32 = arith.constant 0 : i32
    %c0_i32_0 = arith.constant 0 : i32
    %c0_i32_1 = arith.constant 0 : i32
    return %arg0, %c0_i32, %c0_i32_0 : i32, i32, i32
  }
  func.func @transform_2(%arg0: i32) -> (i32, i32) {
    %c0_i32 = arith.constant 0 : i32
    %c0_i32_0 = arith.constant 0 : i32
    %c0_i32_1 = arith.constant 0 : i32
    return %c0_i32, %c0_i32_0 : i32, i32
  }
  func.func @transform_3(%arg0: i32) -> (i32, i32) {
    %c0_i32 = arith.constant 0 : i32
    %c0_i32_0 = arith.constant 0 : i32
    %c0_i32_1 = arith.constant 0 : i32
    return %c0_i32, %c0_i32_0 : i32, i32
  }
  func.func @transform_4(%arg0: i32) -> (i32, i32, i32) {
    %c0_i32 = arith.constant 0 : i32
    %c0_i32_0 = arith.constant 0 : i32
    %c0_i32_1 = arith.constant 0 : i32
    return %arg0, %c0_i32, %c0_i32_0 : i32, i32, i32
  }
}

</mosaic_0001>

<llo_original>
// kernel: forward.1
$region0: #{forward.1}
  #allocation0 [shape = 'u32[]', space=smem, size = 0x4, offset = 0x4, fixed_abs, tag = 'smem constant byte address 0x4 - core index']
  #allocation1 [shape = 'u32[144,128]{1,0:T(1,128)}', space=vmem, size = 0x12000, scoped, tag = 'internal scratch']
  %s0 = inlined_call_operand.vmem [shape: bf16[4,1024], index: 0, kind: input, shape index: {}]
  %s1 = inlined_call_operand.hbm [shape: f32[4,16,32], index: 1, kind: input, shape index: {}]
  %s2 = inlined_call_operand.vmem [shape: bf16[256,256], index: 2, kind: input, shape index: {}]
  %s3 = inlined_call_operand.vmem [shape: bf16[560,128], index: 3, kind: input, shape index: {}]
  %s4 = inlined_call_operand.vmem [shape: f32[4,16,128], index: 4, kind: output, shape index: {}]
  %s5 = sld [smem:[#allocation0]]
  $region30: #{forward.1} parent=0
    _
  %s7 = ssub.s32 1, %s5
  %s8 = scalar_select 0, %s7, %s5
  $region1: #{forward.1} parent=0
    #allocation2 [shape = 'u8[32768]{0}', space=vmem, size = 0x8000, scoped, tag = 'input window, operand 1, single buffered']
    #allocation3 [shape = 's32[1]{0}', space=sflag, size = 0x4, scoped, tag = 'scoped memory for forward.1']
    %9 = vsyncpa [#allocation3], 0
    // Predicated region
    $region2: #{forward.1} parent=1 // pred_check
      _
    $region3: #{forward.1} parent=1 // pred_check_branch
      %11 = sbr.rel (0) target = $region5
    $region4: #{forward.1} parent=1 // pred_region
      _
    $region5: #{forward.1} parent=1 // pred_fallthru
      _
    // Predicated region
    $region6: #{forward.1} parent=1 // pred_check
      _
    $region7: #{forward.1} parent=1 // pred_check_branch
      %13 = sbr.rel (0) target = $region9
    $region8: #{forward.1} parent=1 // pred_region
      %s15 = ssub.s32 1024, 1024
      %16 = vsyncadd [#allocation3], %s15
      %s17 = sshll.u32 [#allocation2], 4
      %s18 = int_to_ptr.vmem [resolvable:$true] %s17
      %23 = dma.hbm_to_vmem [thread:$0]  %s1, 1024, %s18, [#allocation3], 128, 128, 8
    $region9: #{forward.1} parent=1 // pred_fallthru
      _
    // Predicated region
    $region10: #{forward.1} parent=1 // pred_check
      _
    $region11: #{forward.1} parent=1 // pred_check_branch
      %25 = sbr.rel (0) target = $region13
    $region12: #{forward.1} parent=1 // pred_region
      _
    $region13: #{forward.1} parent=1 // pred_fallthru
      _
    // Predicated region
    $region14: #{forward.1} parent=1 // pred_check
      _
    $region15: #{forward.1} parent=1 // pred_check_branch
      %27 = sbr.rel (0) target = $region17
    $region16: #{forward.1} parent=1 // pred_region
      _
    $region17: #{forward.1} parent=1 // pred_fallthru
      _
    // Predicated region
    $region18: #{forward.1} parent=1 // pred_check
      _
    $region19: #{forward.1} parent=1 // pred_check_branch
      %29 = sbr.rel (0) target = $region21
    $region20: #{forward.1} parent=1 // pred_region
      %30 = dma.done [#allocation3], 1024
    $region21: #{forward.1} parent=1 // pred_fallthru
      _
    %v32 = vld [vmem:[%s3] sm:$0xf]
    %v33 = vld [vmem:[%s3 + $0x4] sm:$0xf]
    %v34 = vld [vmem:[%s3 + $0x8] sm:$0xf]
    %v35 = vld [vmem:[%s3 + $0xc] sm:$0xf]
    %v36 = vld [vmem:[%s3 + $0x10] sm:$0x1]
    %v37 = vunpack.c.l.bf16 %v36
    %v38 = vld [vmem:[%s3 + $0xd8] sm:$0x1]
    %v39 = vunpack.c.l.bf16 %v38
    %v40 = vld [vmem:[%s3 + $0xe0] sm:$0xf]
    %v41 = vld [vmem:[%s3 + $0xe4] sm:$0xf]
    %v42 = vld [vmem:[%s3 + $0xe8] sm:$0xf]
    %v43 = vld [vmem:[%s3 + $0xec] sm:$0xf]
    %v44 = vld [vmem:[%s3 + $0xf0] sm:$0x3]
    %v45 = vunpack.c.l.bf16 %v44
    %v46 = vld [vmem:[%s3 + $0xf8] sm:$0xf]
    %v47 = vld [vmem:[%s3 + $0xfc] sm:$0xf]
    %v48 = vld [vmem:[%s3 + $0x100] sm:$0x3]
    %v49 = vunpack.c.l.bf16 %v48
    %v50 = vld [vmem:[%s3 + $0x108] sm:$0xf]
    %v51 = vld [vmem:[%s3 + $0x110] sm:$0x1]
    %v52 = vunpack.c.l.bf16 %v51
    %v53 = vld [vmem:[%s0] sm:$0xff]
    %v54 = vld [vmem:[%s0 + $0x8] sm:$0xff]
    %v55 = vld [vmem:[#allocation2] sm:$0xff]
    %v56 = vld [vmem:[#allocation2 + $0x8] sm:$0xff]
    %v57 = vld [vmem:[#allocation2 + $0x10] sm:$0xff]
    %v58 = vld [vmem:[#allocation2 + $0x18] sm:$0xff]
    %v59 = vld [vmem:[#allocation2 + $0x20] sm:$0xff]
    %v60 = vld [vmem:[#allocation2 + $0x28] sm:$0xff]
    %v61 = vld [vmem:[#allocation2 + $0x30] sm:$0xff]
    %v62 = vld [vmem:[#allocation2 + $0x38] sm:$0xff]
    %v63 = vpack.c.bf16 %v56, %v55
    %v64 = vpack.c.bf16 %v58, %v57
    %v65 = vpack.c.bf16 %v60, %v59
    %v66 = vpack.c.bf16 %v62, %v61
    %v67 = vlaneseq
    %v68 = vshrl.u32 %v67, 7
    %v69 = vsub.s32 0, %v68
    %v70 = vrot.slane %v37, %v69
    %v75 = vunpack.c.l.b16 %v32
    %v76 = vunpack.c.l.b16 %v33
    %v77 = vunpack.c.l.b16 %v34
    %v78 = vunpack.c.l.b16 %v35
    %v79 = vpack.c.b16 %v76, %v75
    %v80 = vpack.c.b16 %v78, %v77
    %vm83 = vcmask 261120
    %v85 = vsel %vm83, %v63, 0
    %v88 = vsel %vm83, %v64, 0
    %v91 = vsel %vm83, %v65, 0
    %v94 = vsel %vm83, %v66, 0
    %96 = vmatprep.subr.bf16.mxu0 0
    %97 = vmatpush1.bf16.msra.mxu0 0
    %98 = vmatprep.subr.bf16.mxu0 0
    %99 = vmatpush1.bf16.msra.mxu0 0
    %100 = vmatprep.subr.bf16.mxu0 0
    %101 = vmatpush1.bf16.msra.mxu0 0
    %102 = vmatprep.subr.bf16.mxu0 0
    %103 = vmatpush1.bf16.msra.mxu0 0
    %104 = vmatprep.subr.bf16.mxu0 0
    %105 = vmatpush1.bf16.msra.mxu0 0
    %106 = vmatprep.subr.bf16.mxu0 0
    %107 = vmatpush1.bf16.msra.mxu0 0
    %108 = vmatprep.subr.bf16.mxu0 0
    %109 = vmatpush1.bf16.msra.mxu0 %v80
    %110 = vmatprep.subr.bf16.mxu0 0
    %111 = vmatpush1.bf16.msra.mxu0 %v79
    %112 = vmatprep.subr.bf16.mxu0 0
    %113 = vmatpush2.bf16.msra.mxu0 0
    %114 = vmatprep.subr.bf16.mxu0 0
    %115 = vmatpush2.bf16.msra.mxu0 0
    %116 = vmatprep.subr.bf16.mxu0 0
    %117 = vmatpush2.bf16.msra.mxu0 0
    %118 = vmatprep.subr.bf16.mxu0 0
    %119 = vmatpush2.bf16.msra.mxu0 0
    %120 = vmatprep.subr.bf16.mxu0 0
    %121 = vmatpush2.bf16.msra.mxu0 0
    %122 = vmatprep.subr.bf16.mxu0 0
    %123 = vmatpush2.bf16.msra.mxu0 0
    %124 = vmatprep.subr.bf16.mxu0 0
    %125 = vmatpush2.bf16.msra.mxu0 0
    %126 = vmatprep.subr.bf16.mxu0 0
    %127 = vmatpush2.bf16.msra.mxu0 0
    %128 = vmatprep.mubr.bf16.mxu0 0
    %129 = vmatmul.mubr.bf16.gmra.mxu0 %v85
    %v130 = vpop.f32.mrf.mxu0
    %v131 = vadd.f32 %v70, %v130
    %v132 = vpop.f32.mrf.mxu0
    %v133 = vpop.f32.mrf.mxu0
    %v134 = vadd.f32 %v70, %v133
    %v135 = vpop.f32.mrf.mxu0
    %136 = vmatprep.mubr.bf16.mxu0 0
    %137 = vmatmul.mubr.bf16.gmra.mxu0 %v88
    %v138 = vpop.f32.mrf.mxu0
    %v139 = vadd.f32 %v70, %v138
    %v140 = vpop.f32.mrf.mxu0
    %v141 = vpop.f32.mrf.mxu0
    %v142 = vadd.f32 %v70, %v141
    %v143 = vpop.f32.mrf.mxu0
    %144 = vmatprep.mubr.bf16.mxu0 0
    %145 = vmatmul.mubr.bf16.gmra.mxu0 %v91
    %v146 = vpop.f32.mrf.mxu0
    %v147 = vadd.f32 %v70, %v146
    %v148 = vpop.f32.mrf.mxu0
    %v149 = vpop.f32.mrf.mxu0
    %v150 = vadd.f32 %v70, %v149
    %v151 = vpop.f32.mrf.mxu0
    %152 = vmatprep.mubr.bf16.mxu0 0
    %153 = vmatmul.mubr.bf16.gmra.mxu0 %v94
    %v154 = vpop.f32.mrf.mxu0
    %v155 = vadd.f32 %v70, %v154
    %v156 = vpop.f32.mrf.mxu0
    %v157 = vpop.f32.mrf.mxu0
    %v158 = vadd.f32 %v70, %v157
    %v159 = vpop.f32.mrf.mxu0
    %160 = vdwg.mxu0
    %v161 = vlaneseq
    %v162 = vshrl.u32 %v161, 7
    %v163 = vsub.s32 0, %v162
    %v164 = vrot.slane %v39, %v163
    %v165 = vadd.f32 %v55, %v164
    %v166 = vadd.f32 %v56, %v164
    %v167 = vadd.f32 %v57, %v164
    %v168 = vadd.f32 %v58, %v164
    %v169 = vadd.f32 %v59, %v164
    %v170 = vadd.f32 %v60, %v164
    %v171 = vadd.f32 %v61, %v164
    %v172 = vadd.f32 %v62, %v164
    %v173 = vld [vmem:[%s3 + $0x18] sm:$0xf]
    %v174 = vld [vmem:[%s3 + $0x1c] sm:$0xf]
    %v175 = vld [vmem:[%s3 + $0x20] sm:$0xf]
    %v176 = vld [vmem:[%s3 + $0x24] sm:$0xf]
    %v177 = vld [vmem:[%s3 + $0x28] sm:$0xf]
    %v178 = vld [vmem:[%s3 + $0x2c] sm:$0xf]
    %v179 = vld [vmem:[%s3 + $0x30] sm:$0xf]
    %v180 = vld [vmem:[%s3 + $0x34] sm:$0xf]
    %v181 = vld [vmem:[%s3 + $0x98] sm:$0xf]
    %v182 = vld [vmem:[%s3 + $0x9c] sm:$0xf]
    %v183 = vld [vmem:[%s3 + $0xa0] sm:$0xf]
    %v184 = vld [vmem:[%s3 + $0xa4] sm:$0xf]
    %v185 = vld [vmem:[%s2] sm:$0xff]
    %v186 = vld [vmem:[%s2 + $0x8] sm:$0xff]
    %v187 = vld [vmem:[%s2 + $0x10] sm:$0xff]
    %v188 = vld [vmem:[%s2 + $0x18] sm:$0xff]
    %v189 = vld [vmem:[%s2 + $0x20] sm:$0xff]
    %v190 = vld [vmem:[%s2 + $0x28] sm:$0xff]
    %v191 = vld [vmem:[%s2 + $0x30] sm:$0xff]
    %v192 = vld [vmem:[%s2 + $0x38] sm:$0xff]
    %v193 = vunpack.c.l.bf16 %v185
    %v194 = vunpack.c.h.bf16 %v185
    %v195 = vunpack.c.l.bf16 %v186
    %v196 = vunpack.c.h.bf16 %v186
    %v197 = vunpack.c.l.bf16 %v187
    %v198 = vunpack.c.h.bf16 %v187
    %v199 = vunpack.c.l.bf16 %v188
    %v200 = vunpack.c.h.bf16 %v188
    %v201 = vunpack.c.l.bf16 %v189
    %v202 = vunpack.c.h.bf16 %v189
    %v203 = vunpack.c.l.bf16 %v190
    %v204 = vunpack.c.h.bf16 %v190
    %v205 = vunpack.c.l.bf16 %v191
    %v206 = vunpack.c.h.bf16 %v191
    %v207 = vunpack.c.l.bf16 %v192
    %v208 = vunpack.c.h.bf16 %v192
    %v217 = vunpack.c.l.b16 %v173
    %v218 = vunpack.c.l.b16 %v174
    %v219 = vunpack.c.l.b16 %v175
    %v220 = vunpack.c.l.b16 %v176
    %v221 = vunpack.c.l.b16 %v177
    %v222 = vunpack.c.l.b16 %v178
    %v223 = vunpack.c.l.b16 %v179
    %v224 = vunpack.c.l.b16 %v180
    %v225 = vpack.c.b16 %v218, %v217
    %v226 = vpack.c.b16 %v220, %v219
    %v227 = vpack.c.b16 %v222, %v221
    %v228 = vpack.c.b16 %v224, %v223
    %v231 = vunpack.c.l.s4 1983009808
    %v232 = vunpack.c.0.s8 %v231
    %v233 = vlaneseq
    %v234 = vshrl.u32 %v233, 7
    %v235 = vsub.s32 %v232, %v234
    %v236 = vrot.slane %v53, %v235
    %v237 = vcombine.high %v236, %v236
    %vm238 = vcmask 31744
    %v240 = vsel %vm238, %v225, 0
    %v243 = vsel %vm238, %v226, 0
    %v246 = vsel %vm238, %v227, 0
    %v249 = vsel %vm238, %v228, 0
    %vm251 = vcmask 1041408
    %v253 = vsel %vm251, %v236, 0
    %v256 = vsel %vm251, %v237, 0
    %258 = vmatprep.subr.bf16.mxu0 0
    %259 = vmatpush1.bf16.msra.mxu0 0
    %260 = vmatprep.subr.bf16.mxu0 0
    %261 = vmatpush1.bf16.msra.mxu0 0
    %262 = vmatprep.subr.bf16.mxu0 0
    %263 = vmatpush1.bf16.msra.mxu0 0
    %264 = vmatprep.subr.bf16.mxu0 0
    %265 = vmatpush1.bf16.msra.mxu0 0
    %266 = vmatprep.subr.bf16.mxu0 0
    %267 = vmatpush1.bf16.msra.mxu0 0
    %268 = vmatprep.subr.bf16.mxu0 0
    %269 = vmatpush1.bf16.msra.mxu0 0
    %270 = vmatprep.subr.bf16.mxu0 0
    %271 = vmatpush1.bf16.msra.mxu0 0
    %272 = vmatprep.subr.bf16.mxu0 %v256
    %273 = vmatpush1.bf16.msra.mxu0 %v253
    %274 = vmatprep.subr.bf16.mxu0 0
    %275 = vmatpush2.bf16.msra.mxu0 0
    %276 = vmatprep.subr.bf16.mxu0 0
    %277 = vmatpush2.bf16.msra.mxu0 0
    %278 = vmatprep.subr.bf16.mxu0 0
    %279 = vmatpush2.bf16.msra.mxu0 0
    %280 = vmatprep.subr.bf16.mxu0 0
    %281 = vmatpush2.bf16.msra.mxu0 0
    %282 = vmatprep.subr.bf16.mxu0 0
    %283 = vmatpush2.bf16.msra.mxu0 0
    %284 = vmatprep.subr.bf16.mxu0 0
    %285 = vmatpush2.bf16.msra.mxu0 0
    %286 = vmatprep.subr.bf16.mxu0 0
    %287 = vmatpush2.bf16.msra.mxu0 0
    %288 = vmatprep.subr.bf16.mxu0 0
    %289 = vmatpush2.bf16.msra.mxu0 0
    %290 = vmatprep.mubr.bf16.mxu0 0
    %291 = vmatmul.mubr.bf16.gmra.mxu0 %v240
    %v292 = vpop.f32.mrf.mxu0
    %v293 = vadd.f32 %v193, %v292
    %v294 = vpop.f32.mrf.mxu0
    %v295 = vadd.f32 %v194, %v294
    %v296 = vpop.f32.mrf.mxu0
    %v297 = vadd.f32 %v195, %v296
    %v298 = vpop.f32.mrf.mxu0
    %v299 = vadd.f32 %v196, %v298
    %300 = vmatprep.mubr.bf16.mxu0 0
    %301 = vmatmul.mubr.bf16.gmra.mxu0 %v243
    %v302 = vpop.f32.mrf.mxu0
    %v303 = vadd.f32 %v197, %v302
    %v304 = vpop.f32.mrf.mxu0
    %v305 = vadd.f32 %v198, %v304
    %v306 = vpop.f32.mrf.mxu0
    %v307 = vadd.f32 %v199, %v306
    %v308 = vpop.f32.mrf.mxu0
    %v309 = vadd.f32 %v200, %v308
    %310 = vmatprep.mubr.bf16.mxu0 0
    %311 = vmatmul.mubr.bf16.gmra.mxu0 %v246
    %v312 = vpop.f32.mrf.mxu0
    %v313 = vadd.f32 %v201, %v312
    %v314 = vpop.f32.mrf.mxu0
    %v315 = vadd.f32 %v202, %v314
    %v316 = vpop.f32.mrf.mxu0
    %v317 = vadd.f32 %v203, %v316
    %v318 = vpop.f32.mrf.mxu0
    %v319 = vadd.f32 %v204, %v318
    %320 = vmatprep.mubr.bf16.mxu0 0
    %321 = vmatmul.mubr.bf16.gmra.mxu0 %v249
    %v322 = vpop.f32.mrf.mxu0
    %v323 = vadd.f32 %v205, %v322
    %v324 = vpop.f32.mrf.mxu0
    %v325 = vadd.f32 %v206, %v324
    %v326 = vpop.f32.mrf.mxu0
    %v327 = vadd.f32 %v207, %v326
    %v328 = vpop.f32.mrf.mxu0
    %v329 = vadd.f32 %v208, %v328
    %330 = vdwg.mxu0
    %v332 = vsel %vm83, %v131, 0
    %v335 = vsel %vm83, %v134, 0
    %337 = vmatprep.subr.mxu0 0.0
    %338 = vmatpush1.msra.mxu0 0.0
    %339 = vmatprep.subr.mxu0 0.0
    %340 = vmatpush1.msra.mxu0 0.0
    %341 = vmatprep.subr.mxu0 0.0
    %342 = vmatpush1.msra.mxu0 0.0
    %343 = vmatprep.subr.mxu0 0.0
    %344 = vmatpush1.msra.mxu0 0.0
    %345 = vmatprep.subr.mxu0 0.0
    %346 = vmatpush1.msra.mxu0 0.0
    %347 = vmatprep.subr.mxu0 0.0
    %348 = vmatpush1.msra.mxu0 0.0
    %349 = vmatprep.subr.mxu0 0.0
    %350 = vmatpush1.msra.mxu0 0.0
    %351 = vmatprep.subr.mxu0 0.0
    %352 = vmatpush1.msra.mxu0 0.0
    %353 = vmatprep.subr.mxu0 0.0
    %354 = vmatpush1.msra.mxu0 0.0
    %355 = vmatprep.subr.mxu0 0.0
    %356 = vmatpush1.msra.mxu0 0.0
    %357 = vmatprep.subr.mxu0 0.0
    %358 = vmatpush1.msra.mxu0 0.0
    %359 = vmatprep.subr.mxu0 0.0
    %360 = vmatpush1.msra.mxu0 0.0
    %361 = vmatprep.subr.mxu0 %v309
    %362 = vmatpush1.msra.mxu0 %v307
    %363 = vmatprep.subr.mxu0 %v305
    %364 = vmatpush1.msra.mxu0 %v303
    %365 = vmatprep.subr.mxu0 %v299
    %366 = vmatpush1.msra.mxu0 %v297
    %367 = vmatprep.subr.mxu0 %v295
    %368 = vmatpush1.msra.mxu0 %v293
    %369 = vmatprep.subr.mxu0 0.0
    %370 = vmatpush2.msra.mxu0 0.0
    %371 = vmatprep.subr.mxu0 0.0
    %372 = vmatpush2.msra.mxu0 0.0
    %373 = vmatprep.subr.mxu0 0.0
    %374 = vmatpush2.msra.mxu0 0.0
    %375 = vmatprep.subr.mxu0 0.0
    %376 = vmatpush2.msra.mxu0 0.0
    %377 = vmatprep.subr.mxu0 0.0
    %378 = vmatpush2.msra.mxu0 0.0
    %379 = vmatprep.subr.mxu0 0.0
    %380 = vmatpush2.msra.mxu0 0.0
    %381 = vmatprep.subr.mxu0 0.0
    %382 = vmatpush2.msra.mxu0 0.0
    %383 = vmatprep.subr.mxu0 0.0
    %384 = vmatpush2.msra.mxu0 0.0
    %385 = vmatprep.subr.mxu0 0.0
    %386 = vmatpush2.msra.mxu0 0.0
    %387 = vmatprep.subr.mxu0 0.0
    %388 = vmatpush2.msra.mxu0 0.0
    %389 = vmatprep.subr.mxu0 0.0
    %390 = vmatpush2.msra.mxu0 0.0
    %391 = vmatprep.subr.mxu0 0.0
    %392 = vmatpush2.msra.mxu0 0.0
    %393 = vmatprep.subr.mxu0 0.0
    %394 = vmatpush2.msra.mxu0 0.0
    %395 = vmatprep.subr.mxu0 0.0
    %396 = vmatpush2.msra.mxu0 0.0
    %397 = vmatprep.subr.mxu0 0.0
    %398 = vmatpush2.msra.mxu0 0.0
    %399 = vmatprep.subr.mxu0 0.0
    %400 = vmatpush2.msra.mxu0 0.0
    %401 = vmatprep.mubr.f32.mxu0 0.0
    %402 = vmatmul.mubr.f32.gmra.mxu0 %v332
    %v403 = vpop.f32.mrf.mxu0
    %v404 = vadd.f32 0.0, %v403
    %v405 = vpop.f32.mrf.mxu0
    %v406 = vadd.f32 0.0, %v405
    %407 = vmatprep.mubr.f32.mxu0 0.0
    %408 = vmatmul.mubr.f32.gmra.mxu0 %v335
    %v409 = vpop.f32.mrf.mxu0
    %v410 = vadd.f32 0.0, %v409
    %v411 = vpop.f32.mrf.mxu0
    %v412 = vadd.f32 0.0, %v411
    %413 = vdwg.mxu0
    %v414 = vmax.f32 %v404, %v406
    %415 = vmax.xlane.f32.xlu0 %v414
    %v416 = vpop.xlane.xlu0 %415
    %v417 = vmax.f32 %v410, %v412
    %418 = vmax.xlane.f32.xlu0 %v417
    %v419 = vpop.xlane.xlu0 %418
    %v420 = vsub.f32 %v404, %v416
    %v421 = vsub.f32 %v406, %v416
    %v422 = vsub.f32 %v410, %v419
    %v423 = vsub.f32 %v412, %v419
    %v424 = vmul.f32 %v420, 1.442695
    %v425 = vpow.pop %v424
    %v426 = vmul.f32 %v421, 1.442695
    %v427 = vpow.pop %v426
    %v428 = vmul.f32 %v422, 1.442695
    %v429 = vpow.pop %v428
    %v430 = vmul.f32 %v423, 1.442695
    %v431 = vpow.pop %v430
    %v432 = vadd.f32 %v425, %v427
    %433 = vadd.xlane.f32.xlu0 %v432
    %v434 = vpop.xlane.xlu0 %433
    %v435 = vadd.f32 %v429, %v431
    %436 = vadd.xlane.f32.xlu0 %v435
    %v437 = vpop.xlane.xlu0 %436
    %v438 = vrcp.pop %v434
    %v439 = vrcp.pop %v437
    %v440 = vmul.f32 %v425, %v438
    %v441 = vmul.f32 %v427, %v438
    %v442 = vmul.f32 %v429, %v439
    %v443 = vmul.f32 %v431, %v439
    %444 = vmatprep.subr.mxu0 0.0
    %445 = vmatpush1.xpose.msra.mxu0 0.0
    %446 = vmatprep.subr.mxu0 0.0
    %447 = vmatpush1.xpose.msra.mxu0 0.0
    %448 = vmatprep.subr.mxu0 0.0
    %449 = vmatpush1.xpose.msra.mxu0 0.0
    %450 = vmatprep.subr.mxu0 0.0
    %451 = vmatpush1.xpose.msra.mxu0 0.0
    %452 = vmatprep.subr.mxu0 0.0
    %453 = vmatpush1.xpose.msra.mxu0 0.0
    %454 = vmatprep.subr.mxu0 0.0
    %455 = vmatpush1.xpose.msra.mxu0 0.0
    %456 = vmatprep.subr.mxu0 0.0
    %457 = vmatpush1.xpose.msra.mxu0 0.0
    %458 = vmatprep.subr.mxu0 0.0
    %459 = vmatpush1.xpose.msra.mxu0 0.0
    %460 = vmatprep.subr.mxu0 0.0
    %461 = vmatpush1.xpose.msra.mxu0 0.0
    %462 = vmatprep.subr.mxu0 0.0
    %463 = vmatpush1.xpose.msra.mxu0 0.0
    %464 = vmatprep.subr.mxu0 0.0
    %465 = vmatpush1.xpose.msra.mxu0 0.0
    %466 = vmatprep.subr.mxu0 0.0
    %467 = vmatpush1.xpose.msra.mxu0 0.0
    %468 = vmatprep.subr.mxu0 %v329
    %469 = vmatpush1.xpose.msra.mxu0 %v327
    %470 = vmatprep.subr.mxu0 %v325
    %471 = vmatpush1.xpose.msra.mxu0 %v323
    %472 = vmatprep.subr.mxu0 %v319
    %473 = vmatpush1.xpose.msra.mxu0 %v317
    %474 = vmatprep.subr.mxu0 %v315
    %475 = vmatpush1.xpose.msra.mxu0 %v313
    %476 = vmatprep.subr.mxu0 0.0
    %477 = vmatpush2.xpose.msra.mxu0 0.0
    %478 = vmatprep.subr.mxu0 0.0
    %479 = vmatpush2.xpose.msra.mxu0 0.0
    %480 = vmatprep.subr.mxu0 0.0
    %481 = vmatpush2.xpose.msra.mxu0 0.0
    %482 = vmatprep.subr.mxu0 0.0
    %483 = vmatpush2.xpose.msra.mxu0 0.0
    %484 = vmatprep.subr.mxu0 0.0
    %485 = vmatpush2.xpose.msra.mxu0 0.0
    %486 = vmatprep.subr.mxu0 0.0
    %487 = vmatpush2.xpose.msra.mxu0 0.0
    %488 = vmatprep.subr.mxu0 0.0
    %489 = vmatpush2.xpose.msra.mxu0 0.0
    %490 = vmatprep.subr.mxu0 0.0
    %491 = vmatpush2.xpose.msra.mxu0 0.0
    %492 = vmatprep.subr.mxu0 0.0
    %493 = vmatpush2.xpose.msra.mxu0 0.0
    %494 = vmatprep.subr.mxu0 0.0
    %495 = vmatpush2.xpose.msra.mxu0 0.0
    %496 = vmatprep.subr.mxu0 0.0
    %497 = vmatpush2.xpose.msra.mxu0 0.0
    %498 = vmatprep.subr.mxu0 0.0
    %499 = vmatpush2.xpose.msra.mxu0 0.0
    %500 = vmatprep.subr.mxu0 0.0
    %501 = vmatpush2.xpose.msra.mxu0 0.0
    %502 = vmatprep.subr.mxu0 0.0
    %503 = vmatpush2.xpose.msra.mxu0 0.0
    %504 = vmatprep.subr.mxu0 0.0
    %505 = vmatpush2.xpose.msra.mxu0 0.0
    %506 = vmatprep.subr.mxu0 0.0
    %507 = vmatpush2.xpose.msra.mxu0 0.0
    %508 = vmatprep.mubr.f32.mxu0 %v441
    %509 = vmatmul.mubr.f32.gmra.mxu0 %v440
    %v510 = vpop.f32.mrf.mxu0
    %v511 = vadd.f32 0.0, %v510
    %v512 = vpop.f32.mrf.mxu0
    %513 = vmatprep.mubr.f32.mxu0 %v443
    %514 = vmatmul.mubr.f32.gmra.mxu0 %v442
    %v515 = vpop.f32.mrf.mxu0
    %v516 = vadd.f32 0.0, %v515
    %v517 = vpop.f32.mrf.mxu0
    %518 = vdwg.mxu0
    %v519 = vcombine.high %v53, %v53
    %v521 = vunpack.c.l.s4 1983009808
    %v522 = vunpack.c.0.s8 %v521
    %v523 = vlaneseq
    %v524 = vshrl.u32 %v523, 7
    %v525 = vsub.s32 %v522, %v524
    %v526 = vrot.slane %v519, %v525
    %v527 = vcombine.high %v526, %v526
    %v529 = vsel %vm251, %v526, 0
    %v532 = vsel %vm251, %v527, 0
    %534 = vmatprep.subr.bf16.mxu0 0
    %535 = vmatpush1.bf16.msra.mxu0 0
    %536 = vmatprep.subr.bf16.mxu0 0
    %537 = vmatpush1.bf16.msra.mxu0 0
    %538 = vmatprep.subr.bf16.mxu0 0
    %539 = vmatpush1.bf16.msra.mxu0 0
    %540 = vmatprep.subr.bf16.mxu0 0
    %541 = vmatpush1.bf16.msra.mxu0 0
    %542 = vmatprep.subr.bf16.mxu0 0
    %543 = vmatpush1.bf16.msra.mxu0 0
    %544 = vmatprep.subr.bf16.mxu0 0
    %545 = vmatpush1.bf16.msra.mxu0 0
    %546 = vmatprep.subr.bf16.mxu0 0
    %547 = vmatpush1.bf16.msra.mxu0 0
    %548 = vmatprep.subr.bf16.mxu0 %v532
    %549 = vmatpush1.bf16.msra.mxu0 %v529
    %550 = vmatprep.subr.bf16.mxu0 0
    %551 = vmatpush2.bf16.msra.mxu0 0
    %552 = vmatprep.subr.bf16.mxu0 0
    %553 = vmatpush2.bf16.msra.mxu0 0
    %554 = vmatprep.subr.bf16.mxu0 0
    %555 = vmatpush2.bf16.msra.mxu0 0
    %556 = vmatprep.subr.bf16.mxu0 0
    %557 = vmatpush2.bf16.msra.mxu0 0
    %558 = vmatprep.subr.bf16.mxu0 0
    %559 = vmatpush2.bf16.msra.mxu0 0
    %560 = vmatprep.subr.bf16.mxu0 0
    %561 = vmatpush2.bf16.msra.mxu0 0
    %562 = vmatprep.subr.bf16.mxu0 0
    %563 = vmatpush2.bf16.msra.mxu0 0
    %564 = vmatprep.subr.bf16.mxu0 0
    %565 = vmatpush2.bf16.msra.mxu0 0
    %566 = vmatprep.mubr.bf16.mxu0 0
    %567 = vmatmul.mubr.bf16.gmra.mxu0 %v240
    %v568 = vpop.f32.mrf.mxu0
    %v569 = vadd.f32 %v193, %v568
    %v570 = vpop.f32.mrf.mxu0
    %v571 = vadd.f32 %v194, %v570
    %v572 = vpop.f32.mrf.mxu0
    %v573 = vadd.f32 %v195, %v572
    %v574 = vpop.f32.mrf.mxu0
    %v575 = vadd.f32 %v196, %v574
    %576 = vmatprep.mubr.bf16.mxu0 0
    %577 = vmatmul.mubr.bf16.gmra.mxu0 %v243
    %v578 = vpop.f32.mrf.mxu0
    %v579 = vadd.f32 %v197, %v578
    %v580 = vpop.f32.mrf.mxu0
    %v581 = vadd.f32 %v198, %v580
    %v582 = vpop.f32.mrf.mxu0
    %v583 = vadd.f32 %v199, %v582
    %v584 = vpop.f32.mrf.mxu0
    %v585 = vadd.f32 %v200, %v584
    %586 = vmatprep.mubr.bf16.mxu0 0
    %587 = vmatmul.mubr.bf16.gmra.mxu0 %v246
    %v588 = vpop.f32.mrf.mxu0
    %v589 = vadd.f32 %v201, %v588
    %v590 = vpop.f32.mrf.mxu0
    %v591 = vadd.f32 %v202, %v590
    %v592 = vpop.f32.mrf.mxu0
    %v593 = vadd.f32 %v203, %v592
    %v594 = vpop.f32.mrf.mxu0
    %v595 = vadd.f32 %v204, %v594
    %596 = vmatprep.mubr.bf16.mxu0 0
    %597 = vmatmul.mubr.bf16.gmra.mxu0 %v249
    %v598 = vpop.f32.mrf.mxu0
    %v599 = vadd.f32 %v205, %v598
    %v600 = vpop.f32.mrf.mxu0
    %v601 = vadd.f32 %v206, %v600
    %v602 = vpop.f32.mrf.mxu0
    %v603 = vadd.f32 %v207, %v602
    %v604 = vpop.f32.mrf.mxu0
    %v605 = vadd.f32 %v208, %v604
    %606 = vdwg.mxu0
    %v608 = vsel %vm83, %v139, 0
    %v611 = vsel %vm83, %v142, 0
    %613 = vmatprep.subr.mxu0 0.0
    %614 = vmatpush1.msra.mxu0 0.0
    %615 = vmatprep.subr.mxu0 0.0
    %616 = vmatpush1.msra.mxu0 0.0
    %617 = vmatprep.subr.mxu0 0.0
    %618 = vmatpush1.msra.mxu0 0.0
    %619 = vmatprep.subr.mxu0 0.0
    %620 = vmatpush1.msra.mxu0 0.0
    %621 = vmatprep.subr.mxu0 0.0
    %622 = vmatpush1.msra.mxu0 0.0
    %623 = vmatprep.subr.mxu0 0.0
    %624 = vmatpush1.msra.mxu0 0.0
    %625 = vmatprep.subr.mxu0 0.0
    %626 = vmatpush1.msra.mxu0 0.0
    %627 = vmatprep.subr.mxu0 0.0
    %628 = vmatpush1.msra.mxu0 0.0
    %629 = vmatprep.subr.mxu0 0.0
    %630 = vmatpush1.msra.mxu0 0.0
    %631 = vmatprep.subr.mxu0 0.0
    %632 = vmatpush1.msra.mxu0 0.0
    %633 = vmatprep.subr.mxu0 0.0
    %634 = vmatpush1.msra.mxu0 0.0
    %635 = vmatprep.subr.mxu0 0.0
    %636 = vmatpush1.msra.mxu0 0.0
    %637 = vmatprep.subr.mxu0 %v585
    %638 = vmatpush1.msra.mxu0 %v583
    %639 = vmatprep.subr.mxu0 %v581
    %640 = vmatpush1.msra.mxu0 %v579
    %641 = vmatprep.subr.mxu0 %v575
    %642 = vmatpush1.msra.mxu0 %v573
    %643 = vmatprep.subr.mxu0 %v571
    %644 = vmatpush1.msra.mxu0 %v569
    %645 = vmatprep.subr.mxu0 0.0
    %646 = vmatpush2.msra.mxu0 0.0
    %647 = vmatprep.subr.mxu0 0.0
    %648 = vmatpush2.msra.mxu0 0.0
    %649 = vmatprep.subr.mxu0 0.0
    %650 = vmatpush2.msra.mxu0 0.0
    %651 = vmatprep.subr.mxu0 0.0
    %652 = vmatpush2.msra.mxu0 0.0
    %653 = vmatprep.subr.mxu0 0.0
    %654 = vmatpush2.msra.mxu0 0.0
    %655 = vmatprep.subr.mxu0 0.0
    %656 = vmatpush2.msra.mxu0 0.0
    %657 = vmatprep.subr.mxu0 0.0
    %658 = vmatpush2.msra.mxu0 0.0
    %659 = vmatprep.subr.mxu0 0.0
    %660 = vmatpush2.msra.mxu0 0.0
    %661 = vmatprep.subr.mxu0 0.0
    %662 = vmatpush2.msra.mxu0 0.0
    %663 = vmatprep.subr.mxu0 0.0
    %664 = vmatpush2.msra.mxu0 0.0
    %665 = vmatprep.subr.mxu0 0.0
    %666 = vmatpush2.msra.mxu0 0.0
    %667 = vmatprep.subr.mxu0 0.0
    %668 = vmatpush2.msra.mxu0 0.0
    %669 = vmatprep.subr.mxu0 0.0
    %670 = vmatpush2.msra.mxu0 0.0
    %671 = vmatprep.subr.mxu0 0.0
    %672 = vmatpush2.msra.mxu0 0.0
    %673 = vmatprep.subr.mxu0 0.0
    %674 = vmatpush2.msra.mxu0 0.0
    %675 = vmatprep.subr.mxu0 0.0
    %676 = vmatpush2.msra.mxu0 0.0
    %677 = vmatprep.mubr.f32.mxu0 0.0
    %678 = vmatmul.mubr.f32.gmra.mxu0 %v608
    %v679 = vpop.f32.mrf.mxu0
    %v680 = vadd.f32 0.0, %v679
    %v681 = vpop.f32.mrf.mxu0
    %v682 = vadd.f32 0.0, %v681
    %683 = vmatprep.mubr.f32.mxu0 0.0
    %684 = vmatmul.mubr.f32.gmra.mxu0 %v611
    %v685 = vpop.f32.mrf.mxu0
    %v686 = vadd.f32 0.0, %v685
    %v687 = vpop.f32.mrf.mxu0
    %v688 = vadd.f32 0.0, %v687
    %689 = vdwg.mxu0
    %v690 = vmax.f32 %v680, %v682
    %691 = vmax.xlane.f32.xlu0 %v690
    %v692 = vpop.xlane.xlu0 %691
    %v693 = vmax.f32 %v686, %v688
    %694 = vmax.xlane.f32.xlu0 %v693
    %v695 = vpop.xlane.xlu0 %694
    %v696 = vsub.f32 %v680, %v692
    %v697 = vsub.f32 %v682, %v692
    %v698 = vsub.f32 %v686, %v695
    %v699 = vsub.f32 %v688, %v695
    %v700 = vmul.f32 %v696, 1.442695
    %v701 = vpow.pop %v700
    %v702 = vmul.f32 %v697, 1.442695
    %v703 = vpow.pop %v702
    %v704 = vmul.f32 %v698, 1.442695
    %v705 = vpow.pop %v704
    %v706 = vmul.f32 %v699, 1.442695
    %v707 = vpow.pop %v706
    %v708 = vadd.f32 %v701, %v703
    %709 = vadd.xlane.f32.xlu0 %v708
    %v710 = vpop.xlane.xlu0 %709
    %v711 = vadd.f32 %v705, %v707
    %712 = vadd.xlane.f32.xlu0 %v711
    %v713 = vpop.xlane.xlu0 %712
    %v714 = vrcp.pop %v710
    %v715 = vrcp.pop %v713
    %v716 = vmul.f32 %v701, %v714
    %v717 = vmul.f32 %v703, %v714
    %v718 = vmul.f32 %v705, %v715
    %v719 = vmul.f32 %v707, %v715
    %720 = vmatprep.subr.mxu0 0.0
    %721 = vmatpush1.xpose.msra.mxu0 0.0
    %722 = vmatprep.subr.mxu0 0.0
    %723 = vmatpush1.xpose.msra.mxu0 0.0
    %724 = vmatprep.subr.mxu0 0.0
    %725 = vmatpush1.xpose.msra.mxu0 0.0
    %726 = vmatprep.subr.mxu0 0.0
    %727 = vmatpush1.xpose.msra.mxu0 0.0
    %728 = vmatprep.subr.mxu0 0.0
    %729 = vmatpush1.xpose.msra.mxu0 0.0
    %730 = vmatprep.subr.mxu0 0.0
    %731 = vmatpush1.xpose.msra.mxu0 0.0
    %732 = vmatprep.subr.mxu0 0.0
    %733 = vmatpush1.xpose.msra.mxu0 0.0
    %734 = vmatprep.subr.mxu0 0.0
    %735 = vmatpush1.xpose.msra.mxu0 0.0
    %736 = vmatprep.subr.mxu0 0.0
    %737 = vmatpush1.xpose.msra.mxu0 0.0
    %738 = vmatprep.subr.mxu0 0.0
    %739 = vmatpush1.xpose.msra.mxu0 0.0
    %740 = vmatprep.subr.mxu0 0.0
    %741 = vmatpush1.xpose.msra.mxu0 0.0
    %742 = vmatprep.subr.mxu0 0.0
    %743 = vmatpush1.xpose.msra.mxu0 0.0
    %744 = vmatprep.subr.mxu0 %v605
    %745 = vmatpush1.xpose.msra.mxu0 %v603
    %746 = vmatprep.subr.mxu0 %v601
    %747 = vmatpush1.xpose.msra.mxu0 %v599
    %748 = vmatprep.subr.mxu0 %v595
    %749 = vmatpush1.xpose.msra.mxu0 %v593
    %750 = vmatprep.subr.mxu0 %v591
    %751 = vmatpush1.xpose.msra.mxu0 %v589
    %752 = vmatprep.subr.mxu0 0.0
    %753 = vmatpush2.xpose.msra.mxu0 0.0
    %754 = vmatprep.subr.mxu0 0.0
    %755 = vmatpush2.xpose.msra.mxu0 0.0
    %756 = vmatprep.subr.mxu0 0.0
    %757 = vmatpush2.xpose.msra.mxu0 0.0
    %758 = vmatprep.subr.mxu0 0.0
    %759 = vmatpush2.xpose.msra.mxu0 0.0
    %760 = vmatprep.subr.mxu0 0.0
    %761 = vmatpush2.xpose.msra.mxu0 0.0
    %762 = vmatprep.subr.mxu0 0.0
    %763 = vmatpush2.xpose.msra.mxu0 0.0
    %764 = vmatprep.subr.mxu0 0.0
    %765 = vmatpush2.xpose.msra.mxu0 0.0
    %766 = vmatprep.subr.mxu0 0.0
    %767 = vmatpush2.xpose.msra.mxu0 0.0
    %768 = vmatprep.subr.mxu0 0.0
    %769 = vmatpush2.xpose.msra.mxu0 0.0
    %770 = vmatprep.subr.mxu0 0.0
    %771 = vmatpush2.xpose.msra.mxu0 0.0
    %772 = vmatprep.subr.mxu0 0.0
    %773 = vmatpush2.xpose.msra.mxu0 0.0
    %774 = vmatprep.subr.mxu0 0.0
    %775 = vmatpush2.xpose.msra.mxu0 0.0
    %776 = vmatprep.subr.mxu0 0.0
    %777 = vmatpush2.xpose.msra.mxu0 0.0
    %778 = vmatprep.subr.mxu0 0.0
    %779 = vmatpush2.xpose.msra.mxu0 0.0
    %780 = vmatprep.subr.mxu0 0.0
    %781 = vmatpush2.xpose.msra.mxu0 0.0
    %782 = vmatprep.subr.mxu0 0.0
    %783 = vmatpush2.xpose.msra.mxu0 0.0
    %784 = vmatprep.mubr.f32.mxu0 %v717
    %785 = vmatmul.mubr.f32.gmra.mxu0 %v716
    %v786 = vpop.f32.mrf.mxu0
    %v787 = vadd.f32 0.0, %v786
    %v788 = vpop.f32.mrf.mxu0
    %789 = vmatprep.mubr.f32.mxu0 %v719
    %790 = vmatmul.mubr.f32.gmra.mxu0 %v718
    %v791 = vpop.f32.mrf.mxu0
    %v792 = vadd.f32 0.0, %v791
    %v793 = vpop.f32.mrf.mxu0
    %794 = vdwg.mxu0
    %v797 = vunpack.c.l.s4 1983009808
    %v798 = vunpack.c.0.s8 %v797
    %v799 = vlaneseq
    %v800 = vshrl.u32 %v799, 7
    %v801 = vsub.s32 %v798, %v800
    %v802 = vrot.slane %v54, %v801
    %v803 = vcombine.high %v802, %v802
    %v805 = vsel %vm251, %v802, 0
    %v808 = vsel %vm251, %v803, 0
    %810 = vmatprep.subr.bf16.mxu0 0
    %811 = vmatpush1.bf16.msra.mxu0 0
    %812 = vmatprep.subr.bf16.mxu0 0
    %813 = vmatpush1.bf16.msra.mxu0 0
    %814 = vmatprep.subr.bf16.mxu0 0
    %815 = vmatpush1.bf16.msra.mxu0 0
    %816 = vmatprep.subr.bf16.mxu0 0
    %817 = vmatpush1.bf16.msra.mxu0 0
    %818 = vmatprep.subr.bf16.mxu0 0
    %819 = vmatpush1.bf16.msra.mxu0 0
    %820 = vmatprep.subr.bf16.mxu0 0
    %821 = vmatpush1.bf16.msra.mxu0 0
    %822 = vmatprep.subr.bf16.mxu0 0
    %823 = vmatpush1.bf16.msra.mxu0 0
    %824 = vmatprep.subr.bf16.mxu0 %v808
    %825 = vmatpush1.bf16.msra.mxu0 %v805
    %826 = vmatprep.subr.bf16.mxu0 0
    %827 = vmatpush2.bf16.msra.mxu0 0
    %828 = vmatprep.subr.bf16.mxu0 0
    %829 = vmatpush2.bf16.msra.mxu0 0
    %830 = vmatprep.subr.bf16.mxu0 0
    %831 = vmatpush2.bf16.msra.mxu0 0
    %832 = vmatprep.subr.bf16.mxu0 0
    %833 = vmatpush2.bf16.msra.mxu0 0
    %834 = vmatprep.subr.bf16.mxu0 0
    %835 = vmatpush2.bf16.msra.mxu0 0
    %836 = vmatprep.subr.bf16.mxu0 0
    %837 = vmatpush2.bf16.msra.mxu0 0
    %838 = vmatprep.subr.bf16.mxu0 0
    %839 = vmatpush2.bf16.msra.mxu0 0
    %840 = vmatprep.subr.bf16.mxu0 0
    %841 = vmatpush2.bf16.msra.mxu0 0
    %842 = vmatprep.mubr.bf16.mxu0 0
    %843 = vmatmul.mubr.bf16.gmra.mxu0 %v240
    %v844 = vpop.f32.mrf.mxu0
    %v845 = vadd.f32 %v193, %v844
    %v846 = vpop.f32.mrf.mxu0
    %v847 = vadd.f32 %v194, %v846
    %v848 = vpop.f32.mrf.mxu0
    %v849 = vadd.f32 %v195, %v848
    %v850 = vpop.f32.mrf.mxu0
    %v851 = vadd.f32 %v196, %v850
    %852 = vmatprep.mubr.bf16.mxu0 0
    %853 = vmatmul.mubr.bf16.gmra.mxu0 %v243
    %v854 = vpop.f32.mrf.mxu0
    %v855 = vadd.f32 %v197, %v854
    %v856 = vpop.f32.mrf.mxu0
    %v857 = vadd.f32 %v198, %v856
    %v858 = vpop.f32.mrf.mxu0
    %v859 = vadd.f32 %v199, %v858
    %v860 = vpop.f32.mrf.mxu0
    %v861 = vadd.f32 %v200, %v860
    %862 = vmatprep.mubr.bf16.mxu0 0
    %863 = vmatmul.mubr.bf16.gmra.mxu0 %v246
    %v864 = vpop.f32.mrf.mxu0
    %v865 = vadd.f32 %v201, %v864
    %v866 = vpop.f32.mrf.mxu0
    %v867 = vadd.f32 %v202, %v866
    %v868 = vpop.f32.mrf.mxu0
    %v869 = vadd.f32 %v203, %v868
    %v870 = vpop.f32.mrf.mxu0
    %v871 = vadd.f32 %v204, %v870
    %872 = vmatprep.mubr.bf16.mxu0 0
    %873 = vmatmul.mubr.bf16.gmra.mxu0 %v249
    %v874 = vpop.f32.mrf.mxu0
    %v875 = vadd.f32 %v205, %v874
    %v876 = vpop.f32.mrf.mxu0
    %v877 = vadd.f32 %v206, %v876
    %v878 = vpop.f32.mrf.mxu0
    %v879 = vadd.f32 %v207, %v878
    %v880 = vpop.f32.mrf.mxu0
    %v881 = vadd.f32 %v208, %v880
    %882 = vdwg.mxu0
    %v884 = vsel %vm83, %v147, 0
    %v887 = vsel %vm83, %v150, 0
    %889 = vmatprep.subr.mxu0 0.0
    %890 = vmatpush1.msra.mxu0 0.0
    %891 = vmatprep.subr.mxu0 0.0
    %892 = vmatpush1.msra.mxu0 0.0
    %893 = vmatprep.subr.mxu0 0.0
    %894 = vmatpush1.msra.mxu0 0.0
    %895 = vmatprep.subr.mxu0 0.0
    %896 = vmatpush1.msra.mxu0 0.0
    %897 = vmatprep.subr.mxu0 0.0
    %898 = vmatpush1.msra.mxu0 0.0
    %899 = vmatprep.subr.mxu0 0.0
    %900 = vmatpush1.msra.mxu0 0.0
    %901 = vmatprep.subr.mxu0 0.0
    %902 = vmatpush1.msra.mxu0 0.0
    %903 = vmatprep.subr.mxu0 0.0
    %904 = vmatpush1.msra.mxu0 0.0
    %905 = vmatprep.subr.mxu0 0.0
    %906 = vmatpush1.msra.mxu0 0.0
    %907 = vmatprep.subr.mxu0 0.0
    %908 = vmatpush1.msra.mxu0 0.0
    %909 = vmatprep.subr.mxu0 0.0
    %910 = vmatpush1.msra.mxu0 0.0
    %911 = vmatprep.subr.mxu0 0.0
    %912 = vmatpush1.msra.mxu0 0.0
    %913 = vmatprep.subr.mxu0 %v861
    %914 = vmatpush1.msra.mxu0 %v859
    %915 = vmatprep.subr.mxu0 %v857
    %916 = vmatpush1.msra.mxu0 %v855
    %917 = vmatprep.subr.mxu0 %v851
    %918 = vmatpush1.msra.mxu0 %v849
    %919 = vmatprep.subr.mxu0 %v847
    %920 = vmatpush1.msra.mxu0 %v845
    %921 = vmatprep.subr.mxu0 0.0
    %922 = vmatpush2.msra.mxu0 0.0
    %923 = vmatprep.subr.mxu0 0.0
    %924 = vmatpush2.msra.mxu0 0.0
    %925 = vmatprep.subr.mxu0 0.0
    %926 = vmatpush2.msra.mxu0 0.0
    %927 = vmatprep.subr.mxu0 0.0
    %928 = vmatpush2.msra.mxu0 0.0
    %929 = vmatprep.subr.mxu0 0.0
    %930 = vmatpush2.msra.mxu0 0.0
    %931 = vmatprep.subr.mxu0 0.0
    %932 = vmatpush2.msra.mxu0 0.0
    %933 = vmatprep.subr.mxu0 0.0
    %934 = vmatpush2.msra.mxu0 0.0
    %935 = vmatprep.subr.mxu0 0.0
    %936 = vmatpush2.msra.mxu0 0.0
    %937 = vmatprep.subr.mxu0 0.0
    %938 = vmatpush2.msra.mxu0 0.0
    %939 = vmatprep.subr.mxu0 0.0
    %940 = vmatpush2.msra.mxu0 0.0
    %941 = vmatprep.subr.mxu0 0.0
    %942 = vmatpush2.msra.mxu0 0.0
    %943 = vmatprep.subr.mxu0 0.0
    %944 = vmatpush2.msra.mxu0 0.0
    %945 = vmatprep.subr.mxu0 0.0
    %946 = vmatpush2.msra.mxu0 0.0
    %947 = vmatprep.subr.mxu0 0.0
    %948 = vmatpush2.msra.mxu0 0.0
    %949 = vmatprep.subr.mxu0 0.0
    %950 = vmatpush2.msra.mxu0 0.0
    %951 = vmatprep.subr.mxu0 0.0
    %952 = vmatpush2.msra.mxu0 0.0
    %953 = vmatprep.mubr.f32.mxu0 0.0
    %954 = vmatmul.mubr.f32.gmra.mxu0 %v884
    %v955 = vpop.f32.mrf.mxu0
    %v956 = vadd.f32 0.0, %v955
    %v957 = vpop.f32.mrf.mxu0
    %v958 = vadd.f32 0.0, %v957
    %959 = vmatprep.mubr.f32.mxu0 0.0
    %960 = vmatmul.mubr.f32.gmra.mxu0 %v887
    %v961 = vpop.f32.mrf.mxu0
    %v962 = vadd.f32 0.0, %v961
    %v963 = vpop.f32.mrf.mxu0
    %v964 = vadd.f32 0.0, %v963
    %965 = vdwg.mxu0
    %v966 = vmax.f32 %v956, %v958
    %967 = vmax.xlane.f32.xlu0 %v966
    %v968 = vpop.xlane.xlu0 %967
    %v969 = vmax.f32 %v962, %v964
    %970 = vmax.xlane.f32.xlu0 %v969
    %v971 = vpop.xlane.xlu0 %970
    %v972 = vsub.f32 %v956, %v968
    %v973 = vsub.f32 %v958, %v968
    %v974 = vsub.f32 %v962, %v971
    %v975 = vsub.f32 %v964, %v971
    %v976 = vmul.f32 %v972, 1.442695
    %v977 = vpow.pop %v976
    %v978 = vmul.f32 %v973, 1.442695
    %v979 = vpow.pop %v978
    %v980 = vmul.f32 %v974, 1.442695
    %v981 = vpow.pop %v980
    %v982 = vmul.f32 %v975, 1.442695
    %v983 = vpow.pop %v982
    %v984 = vadd.f32 %v977, %v979
    %985 = vadd.xlane.f32.xlu0 %v984
    %v986 = vpop.xlane.xlu0 %985
    %v987 = vadd.f32 %v981, %v983
    %988 = vadd.xlane.f32.xlu0 %v987
    %v989 = vpop.xlane.xlu0 %988
    %v990 = vrcp.pop %v986
    %v991 = vrcp.pop %v989
    %v992 = vmul.f32 %v977, %v990
    %v993 = vmul.f32 %v979, %v990
    %v994 = vmul.f32 %v981, %v991
    %v995 = vmul.f32 %v983, %v991
    %996 = vmatprep.subr.mxu0 0.0
    %997 = vmatpush1.xpose.msra.mxu0 0.0
    %998 = vmatprep.subr.mxu0 0.0
    %999 = vmatpush1.xpose.msra.mxu0 0.0
    %1000 = vmatprep.subr.mxu0 0.0
    %1001 = vmatpush1.xpose.msra.mxu0 0.0
    %1002 = vmatprep.subr.mxu0 0.0
    %1003 = vmatpush1.xpose.msra.mxu0 0.0
    %1004 = vmatprep.subr.mxu0 0.0
    %1005 = vmatpush1.xpose.msra.mxu0 0.0
    %1006 = vmatprep.subr.mxu0 0.0
    %1007 = vmatpush1.xpose.msra.mxu0 0.0
    %1008 = vmatprep.subr.mxu0 0.0
    %1009 = vmatpush1.xpose.msra.mxu0 0.0
    %1010 = vmatprep.subr.mxu0 0.0
    %1011 = vmatpush1.xpose.msra.mxu0 0.0
    %1012 = vmatprep.subr.mxu0 0.0
    %1013 = vmatpush1.xpose.msra.mxu0 0.0
    %1014 = vmatprep.subr.mxu0 0.0
    %1015 = vmatpush1.xpose.msra.mxu0 0.0
    %1016 = vmatprep.subr.mxu0 0.0
    %1017 = vmatpush1.xpose.msra.mxu0 0.0
    %1018 = vmatprep.subr.mxu0 0.0
    %1019 = vmatpush1.xpose.msra.mxu0 0.0
    %1020 = vmatprep.subr.mxu0 %v881
    %1021 = vmatpush1.xpose.msra.mxu0 %v879
    %1022 = vmatprep.subr.mxu0 %v877
    %1023 = vmatpush1.xpose.msra.mxu0 %v875
    %1024 = vmatprep.subr.mxu0 %v871
    %1025 = vmatpush1.xpose.msra.mxu0 %v869
    %1026 = vmatprep.subr.mxu0 %v867
    %1027 = vmatpush1.xpose.msra.mxu0 %v865
    %1028 = vmatprep.subr.mxu0 0.0
    %1029 = vmatpush2.xpose.msra.mxu0 0.0
    %1030 = vmatprep.subr.mxu0 0.0
    %1031 = vmatpush2.xpose.msra.mxu0 0.0
    %1032 = vmatprep.subr.mxu0 0.0
    %1033 = vmatpush2.xpose.msra.mxu0 0.0
    %1034 = vmatprep.subr.mxu0 0.0
    %1035 = vmatpush2.xpose.msra.mxu0 0.0
    %1036 = vmatprep.subr.mxu0 0.0
    %1037 = vmatpush2.xpose.msra.mxu0 0.0
    %1038 = vmatprep.subr.mxu0 0.0
    %1039 = vmatpush2.xpose.msra.mxu0 0.0
    %1040 = vmatprep.subr.mxu0 0.0
    %1041 = vmatpush2.xpose.msra.mxu0 0.0
    %1042 = vmatprep.subr.mxu0 0.0
    %1043 = vmatpush2.xpose.msra.mxu0 0.0
    %1044 = vmatprep.subr.mxu0 0.0
    %1045 = vmatpush2.xpose.msra.mxu0 0.0
    %1046 = vmatprep.subr.mxu0 0.0
    %1047 = vmatpush2.xpose.msra.mxu0 0.0
    %1048 = vmatprep.subr.mxu0 0.0
    %1049 = vmatpush2.xpose.msra.mxu0 0.0
    %1050 = vmatprep.subr.mxu0 0.0
    %1051 = vmatpush2.xpose.msra.mxu0 0.0
    %1052 = vmatprep.subr.mxu0 0.0
    %1053 = vmatpush2.xpose.msra.mxu0 0.0
    %1054 = vmatprep.subr.mxu0 0.0
    %1055 = vmatpush2.xpose.msra.mxu0 0.0
    %1056 = vmatprep.subr.mxu0 0.0
    %1057 = vmatpush2.xpose.msra.mxu0 0.0
    %1058 = vmatprep.subr.mxu0 0.0
    %1059 = vmatpush2.xpose.msra.mxu0 0.0
    %1060 = vmatprep.mubr.f32.mxu0 %v993
    %1061 = vmatmul.mubr.f32.gmra.mxu0 %v992
    %v1062 = vpop.f32.mrf.mxu0
    %v1063 = vadd.f32 0.0, %v1062
    %v1064 = vpop.f32.mrf.mxu0
    %1065 = vmatprep.mubr.f32.mxu0 %v995
    %1066 = vmatmul.mubr.f32.gmra.mxu0 %v994
    %v1067 = vpop.f32.mrf.mxu0
    %v1068 = vadd.f32 0.0, %v1067
    %v1069 = vpop.f32.mrf.mxu0
    %1070 = vdwg.mxu0
    %v1071 = vcombine.high %v54, %v54
    %v1073 = vunpack.c.l.s4 1983009808
    %v1074 = vunpack.c.0.s8 %v1073
    %v1075 = vlaneseq
    %v1076 = vshrl.u32 %v1075, 7
    %v1077 = vsub.s32 %v1074, %v1076
    %v1078 = vrot.slane %v1071, %v1077
    %v1079 = vcombine.high %v1078, %v1078
    %v1081 = vsel %vm251, %v1078, 0
    %v1084 = vsel %vm251, %v1079, 0
    %1086 = vmatprep.subr.bf16.mxu0 0
    %1087 = vmatpush1.bf16.msra.mxu0 0
    %1088 = vmatprep.subr.bf16.mxu0 0
    %1089 = vmatpush1.bf16.msra.mxu0 0
    %1090 = vmatprep.subr.bf16.mxu0 0
    %1091 = vmatpush1.bf16.msra.mxu0 0
    %1092 = vmatprep.subr.bf16.mxu0 0
    %1093 = vmatpush1.bf16.msra.mxu0 0
    %1094 = vmatprep.subr.bf16.mxu0 0
    %1095 = vmatpush1.bf16.msra.mxu0 0
    %1096 = vmatprep.subr.bf16.mxu0 0
    %1097 = vmatpush1.bf16.msra.mxu0 0
    %1098 = vmatprep.subr.bf16.mxu0 0
    %1099 = vmatpush1.bf16.msra.mxu0 0
    %1100 = vmatprep.subr.bf16.mxu0 %v1084
    %1101 = vmatpush1.bf16.msra.mxu0 %v1081
    %1102 = vmatprep.subr.bf16.mxu0 0
    %1103 = vmatpush2.bf16.msra.mxu0 0
    %1104 = vmatprep.subr.bf16.mxu0 0
    %1105 = vmatpush2.bf16.msra.mxu0 0
    %1106 = vmatprep.subr.bf16.mxu0 0
    %1107 = vmatpush2.bf16.msra.mxu0 0
    %1108 = vmatprep.subr.bf16.mxu0 0
    %1109 = vmatpush2.bf16.msra.mxu0 0
    %1110 = vmatprep.subr.bf16.mxu0 0
    %1111 = vmatpush2.bf16.msra.mxu0 0
    %1112 = vmatprep.subr.bf16.mxu0 0
    %1113 = vmatpush2.bf16.msra.mxu0 0
    %1114 = vmatprep.subr.bf16.mxu0 0
    %1115 = vmatpush2.bf16.msra.mxu0 0
    %1116 = vmatprep.subr.bf16.mxu0 0
    %1117 = vmatpush2.bf16.msra.mxu0 0
    %1118 = vmatprep.mubr.bf16.mxu0 0
    %1119 = vmatmul.mubr.bf16.gmra.mxu0 %v240
    %v1120 = vpop.f32.mrf.mxu0
    %v1121 = vadd.f32 %v193, %v1120
    %v1122 = vpop.f32.mrf.mxu0
    %v1123 = vadd.f32 %v194, %v1122
    %v1124 = vpop.f32.mrf.mxu0
    %v1125 = vadd.f32 %v195, %v1124
    %v1126 = vpop.f32.mrf.mxu0
    %v1127 = vadd.f32 %v196, %v1126
    %1128 = vmatprep.mubr.bf16.mxu0 0
    %1129 = vmatmul.mubr.bf16.gmra.mxu0 %v243
    %v1130 = vpop.f32.mrf.mxu0
    %v1131 = vadd.f32 %v197, %v1130
    %v1132 = vpop.f32.mrf.mxu0
    %v1133 = vadd.f32 %v198, %v1132
    %v1134 = vpop.f32.mrf.mxu0
    %v1135 = vadd.f32 %v199, %v1134
    %v1136 = vpop.f32.mrf.mxu0
    %v1137 = vadd.f32 %v200, %v1136
    %1138 = vmatprep.mubr.bf16.mxu0 0
    %1139 = vmatmul.mubr.bf16.gmra.mxu0 %v246
    %v1140 = vpop.f32.mrf.mxu0
    %v1141 = vadd.f32 %v201, %v1140
    %v1142 = vpop.f32.mrf.mxu0
    %v1143 = vadd.f32 %v202, %v1142
    %v1144 = vpop.f32.mrf.mxu0
    %v1145 = vadd.f32 %v203, %v1144
    %v1146 = vpop.f32.mrf.mxu0
    %v1147 = vadd.f32 %v204, %v1146
    %1148 = vmatprep.mubr.bf16.mxu0 0
    %1149 = vmatmul.mubr.bf16.gmra.mxu0 %v249
    %v1150 = vpop.f32.mrf.mxu0
    %v1151 = vadd.f32 %v205, %v1150
    %v1152 = vpop.f32.mrf.mxu0
    %v1153 = vadd.f32 %v206, %v1152
    %v1154 = vpop.f32.mrf.mxu0
    %v1155 = vadd.f32 %v207, %v1154
    %v1156 = vpop.f32.mrf.mxu0
    %v1157 = vadd.f32 %v208, %v1156
    %1158 = vdwg.mxu0
    %v1160 = vsel %vm83, %v155, 0
    %v1163 = vsel %vm83, %v158, 0
    %1165 = vmatprep.subr.mxu0 0.0
    %1166 = vmatpush1.msra.mxu0 0.0
    %1167 = vmatprep.subr.mxu0 0.0
    %1168 = vmatpush1.msra.mxu0 0.0
    %1169 = vmatprep.subr.mxu0 0.0
    %1170 = vmatpush1.msra.mxu0 0.0
    %1171 = vmatprep.subr.mxu0 0.0
    %1172 = vmatpush1.msra.mxu0 0.0
    %1173 = vmatprep.subr.mxu0 0.0
    %1174 = vmatpush1.msra.mxu0 0.0
    %1175 = vmatprep.subr.mxu0 0.0
    %1176 = vmatpush1.msra.mxu0 0.0
    %1177 = vmatprep.subr.mxu0 0.0
    %1178 = vmatpush1.msra.mxu0 0.0
    %1179 = vmatprep.subr.mxu0 0.0
    %1180 = vmatpush1.msra.mxu0 0.0
    %1181 = vmatprep.subr.mxu0 0.0
    %1182 = vmatpush1.msra.mxu0 0.0
    %1183 = vmatprep.subr.mxu0 0.0
    %1184 = vmatpush1.msra.mxu0 0.0
    %1185 = vmatprep.subr.mxu0 0.0
    %1186 = vmatpush1.msra.mxu0 0.0
    %1187 = vmatprep.subr.mxu0 0.0
    %1188 = vmatpush1.msra.mxu0 0.0
    %1189 = vmatprep.subr.mxu0 %v1137
    %1190 = vmatpush1.msra.mxu0 %v1135
    %1191 = vmatprep.subr.mxu0 %v1133
    %1192 = vmatpush1.msra.mxu0 %v1131
    %1193 = vmatprep.subr.mxu0 %v1127
    %1194 = vmatpush1.msra.mxu0 %v1125
    %1195 = vmatprep.subr.mxu0 %v1123
    %1196 = vmatpush1.msra.mxu0 %v1121
    %1197 = vmatprep.subr.mxu0 0.0
    %1198 = vmatpush2.msra.mxu0 0.0
    %1199 = vmatprep.subr.mxu0 0.0
    %1200 = vmatpush2.msra.mxu0 0.0
    %1201 = vmatprep.subr.mxu0 0.0
    %1202 = vmatpush2.msra.mxu0 0.0
    %1203 = vmatprep.subr.mxu0 0.0
    %1204 = vmatpush2.msra.mxu0 0.0
    %1205 = vmatprep.subr.mxu0 0.0
    %1206 = vmatpush2.msra.mxu0 0.0
    %1207 = vmatprep.subr.mxu0 0.0
    %1208 = vmatpush2.msra.mxu0 0.0
    %1209 = vmatprep.subr.mxu0 0.0
    %1210 = vmatpush2.msra.mxu0 0.0
    %1211 = vmatprep.subr.mxu0 0.0
    %1212 = vmatpush2.msra.mxu0 0.0
    %1213 = vmatprep.subr.mxu0 0.0
    %1214 = vmatpush2.msra.mxu0 0.0
    %1215 = vmatprep.subr.mxu0 0.0
    %1216 = vmatpush2.msra.mxu0 0.0
    %1217 = vmatprep.subr.mxu0 0.0
    %1218 = vmatpush2.msra.mxu0 0.0
    %1219 = vmatprep.subr.mxu0 0.0
    %1220 = vmatpush2.msra.mxu0 0.0
    %1221 = vmatprep.subr.mxu0 0.0
    %1222 = vmatpush2.msra.mxu0 0.0
    %1223 = vmatprep.subr.mxu0 0.0
    %1224 = vmatpush2.msra.mxu0 0.0
    %1225 = vmatprep.subr.mxu0 0.0
    %1226 = vmatpush2.msra.mxu0 0.0
    %1227 = vmatprep.subr.mxu0 0.0
    %1228 = vmatpush2.msra.mxu0 0.0
    %1229 = vmatprep.mubr.f32.mxu0 0.0
    %1230 = vmatmul.mubr.f32.gmra.mxu0 %v1160
    %v1231 = vpop.f32.mrf.mxu0
    %v1232 = vadd.f32 0.0, %v1231
    %v1233 = vpop.f32.mrf.mxu0
    %v1234 = vadd.f32 0.0, %v1233
    %1235 = vmatprep.mubr.f32.mxu0 0.0
    %1236 = vmatmul.mubr.f32.gmra.mxu0 %v1163
    %v1237 = vpop.f32.mrf.mxu0
    %v1238 = vadd.f32 0.0, %v1237
    %v1239 = vpop.f32.mrf.mxu0
    %v1240 = vadd.f32 0.0, %v1239
    %1241 = vdwg.mxu0
    %v1242 = vmax.f32 %v1232, %v1234
    %1243 = vmax.xlane.f32.xlu0 %v1242
    %v1244 = vpop.xlane.xlu0 %1243
    %v1245 = vmax.f32 %v1238, %v1240
    %1246 = vmax.xlane.f32.xlu0 %v1245
    %v1247 = vpop.xlane.xlu0 %1246
    %v1248 = vsub.f32 %v1232, %v1244
    %v1249 = vsub.f32 %v1234, %v1244
    %v1250 = vsub.f32 %v1238, %v1247
    %v1251 = vsub.f32 %v1240, %v1247
    %v1252 = vmul.f32 %v1248, 1.442695
    %v1253 = vpow.pop %v1252
    %v1254 = vmul.f32 %v1249, 1.442695
    %v1255 = vpow.pop %v1254
    %v1256 = vmul.f32 %v1250, 1.442695
    %v1257 = vpow.pop %v1256
    %v1258 = vmul.f32 %v1251, 1.442695
    %v1259 = vpow.pop %v1258
    %v1260 = vadd.f32 %v1253, %v1255
    %1261 = vadd.xlane.f32.xlu0 %v1260
    %v1262 = vpop.xlane.xlu0 %1261
    %v1263 = vadd.f32 %v1257, %v1259
    %1264 = vadd.xlane.f32.xlu0 %v1263
    %v1265 = vpop.xlane.xlu0 %1264
    %v1266 = vrcp.pop %v1262
    %v1267 = vrcp.pop %v1265
    %v1268 = vmul.f32 %v1253, %v1266
    %v1269 = vmul.f32 %v1255, %v1266
    %v1270 = vmul.f32 %v1257, %v1267
    %v1271 = vmul.f32 %v1259, %v1267
    %1272 = vmatprep.subr.mxu0 0.0
    %1273 = vmatpush1.xpose.msra.mxu0 0.0
    %1274 = vmatprep.subr.mxu0 0.0
    %1275 = vmatpush1.xpose.msra.mxu0 0.0
    %1276 = vmatprep.subr.mxu0 0.0
    %1277 = vmatpush1.xpose.msra.mxu0 0.0
    %1278 = vmatprep.subr.mxu0 0.0
    %1279 = vmatpush1.xpose.msra.mxu0 0.0
    %1280 = vmatprep.subr.mxu0 0.0
    %1281 = vmatpush1.xpose.msra.mxu0 0.0
    %1282 = vmatprep.subr.mxu0 0.0
    %1283 = vmatpush1.xpose.msra.mxu0 0.0
    %1284 = vmatprep.subr.mxu0 0.0
    %1285 = vmatpush1.xpose.msra.mxu0 0.0
    %1286 = vmatprep.subr.mxu0 0.0
    %1287 = vmatpush1.xpose.msra.mxu0 0.0
    %1288 = vmatprep.subr.mxu0 0.0
    %1289 = vmatpush1.xpose.msra.mxu0 0.0
    %1290 = vmatprep.subr.mxu0 0.0
    %1291 = vmatpush1.xpose.msra.mxu0 0.0
    %1292 = vmatprep.subr.mxu0 0.0
    %1293 = vmatpush1.xpose.msra.mxu0 0.0
    %1294 = vmatprep.subr.mxu0 0.0
    %1295 = vmatpush1.xpose.msra.mxu0 0.0
    %1296 = vmatprep.subr.mxu0 %v1157
    %1297 = vmatpush1.xpose.msra.mxu0 %v1155
    %1298 = vmatprep.subr.mxu0 %v1153
    %1299 = vmatpush1.xpose.msra.mxu0 %v1151
    %1300 = vmatprep.subr.mxu0 %v1147
    %1301 = vmatpush1.xpose.msra.mxu0 %v1145
    %1302 = vmatprep.subr.mxu0 %v1143
    %1303 = vmatpush1.xpose.msra.mxu0 %v1141
    %1304 = vmatprep.subr.mxu0 0.0
    %1305 = vmatpush2.xpose.msra.mxu0 0.0
    %1306 = vmatprep.subr.mxu0 0.0
    %1307 = vmatpush2.xpose.msra.mxu0 0.0
    %1308 = vmatprep.subr.mxu0 0.0
    %1309 = vmatpush2.xpose.msra.mxu0 0.0
    %1310 = vmatprep.subr.mxu0 0.0
    %1311 = vmatpush2.xpose.msra.mxu0 0.0
    %1312 = vmatprep.subr.mxu0 0.0
    %1313 = vmatpush2.xpose.msra.mxu0 0.0
    %1314 = vmatprep.subr.mxu0 0.0
    %1315 = vmatpush2.xpose.msra.mxu0 0.0
    %1316 = vmatprep.subr.mxu0 0.0
    %1317 = vmatpush2.xpose.msra.mxu0 0.0
    %1318 = vmatprep.subr.mxu0 0.0
    %1319 = vmatpush2.xpose.msra.mxu0 0.0
    %1320 = vmatprep.subr.mxu0 0.0
    %1321 = vmatpush2.xpose.msra.mxu0 0.0
    %1322 = vmatprep.subr.mxu0 0.0
    %1323 = vmatpush2.xpose.msra.mxu0 0.0
    %1324 = vmatprep.subr.mxu0 0.0
    %1325 = vmatpush2.xpose.msra.mxu0 0.0
    %1326 = vmatprep.subr.mxu0 0.0
    %1327 = vmatpush2.xpose.msra.mxu0 0.0
    %1328 = vmatprep.subr.mxu0 0.0
    %1329 = vmatpush2.xpose.msra.mxu0 0.0
    %1330 = vmatprep.subr.mxu0 0.0
    %1331 = vmatpush2.xpose.msra.mxu0 0.0
    %1332 = vmatprep.subr.mxu0 0.0
    %1333 = vmatpush2.xpose.msra.mxu0 0.0
    %1334 = vmatprep.subr.mxu0 0.0
    %1335 = vmatpush2.xpose.msra.mxu0 0.0
    %1336 = vmatprep.mubr.f32.mxu0 %v1269
    %1337 = vmatmul.mubr.f32.gmra.mxu0 %v1268
    %v1338 = vpop.f32.mrf.mxu0
    %v1339 = vadd.f32 0.0, %v1338
    %v1340 = vpop.f32.mrf.mxu0
    %1341 = vmatprep.mubr.f32.mxu0 %v1271
    %1342 = vmatmul.mubr.f32.gmra.mxu0 %v1270
    %v1343 = vpop.f32.mrf.mxu0
    %v1344 = vadd.f32 0.0, %v1343
    %v1345 = vpop.f32.mrf.mxu0
    %1346 = vdwg.mxu0
    %v1347 = vpack.c.bf16 %v516, %v511
    %v1348 = vpack.c.bf16 %v792, %v787
    %v1349 = vpack.c.bf16 %v1068, %v1063
    %v1350 = vpack.c.bf16 %v1344, %v1339
    %v1355 = vunpack.c.l.b16 %v181
    %v1356 = vunpack.c.l.b16 %v182
    %v1357 = vunpack.c.l.b16 %v183
    %v1358 = vunpack.c.l.b16 %v184
    %v1359 = vpack.c.b16 %v1356, %v1355
    %v1360 = vpack.c.b16 %v1358, %v1357
    %v1364 = vsel %vm83, %v1347, 0
    %v1367 = vsel %vm83, %v1348, 0
    %v1370 = vsel %vm83, %v1349, 0
    %v1373 = vsel %vm83, %v1350, 0
    %1375 = vmatprep.subr.bf16.mxu0 0
    %1376 = vmatpush1.bf16.msra.mxu0 0
    %1377 = vmatprep.subr.bf16.mxu0 0
    %1378 = vmatpush1.bf16.msra.mxu0 0
    %1379 = vmatprep.subr.bf16.mxu0 0
    %1380 = vmatpush1.bf16.msra.mxu0 0
    %1381 = vmatprep.subr.bf16.mxu0 0
    %1382 = vmatpush1.bf16.msra.mxu0 0
    %1383 = vmatprep.subr.bf16.mxu0 0
    %1384 = vmatpush1.bf16.msra.mxu0 0
    %1385 = vmatprep.subr.bf16.mxu0 0
    %1386 = vmatpush1.bf16.msra.mxu0 0
    %1387 = vmatprep.subr.bf16.mxu0 0
    %1388 = vmatpush1.bf16.msra.mxu0 %v1360
    %1389 = vmatprep.subr.bf16.mxu0 0
    %1390 = vmatpush1.bf16.msra.mxu0 %v1359
    %1391 = vmatprep.subr.bf16.mxu0 0
    %1392 = vmatpush2.bf16.msra.mxu0 0
    %1393 = vmatprep.subr.bf16.mxu0 0
    %1394 = vmatpush2.bf16.msra.mxu0 0
    %1395 = vmatprep.subr.bf16.mxu0 0
    %1396 = vmatpush2.bf16.msra.mxu0 0
    %1397 = vmatprep.subr.bf16.mxu0 0
    %1398 = vmatpush2.bf16.msra.mxu0 0
    %1399 = vmatprep.subr.bf16.mxu0 0
    %1400 = vmatpush2.bf16.msra.mxu0 0
    %1401 = vmatprep.subr.bf16.mxu0 0
    %1402 = vmatpush2.bf16.msra.mxu0 0
    %1403 = vmatprep.subr.bf16.mxu0 0
    %1404 = vmatpush2.bf16.msra.mxu0 0
    %1405 = vmatprep.subr.bf16.mxu0 0
    %1406 = vmatpush2.bf16.msra.mxu0 0
    %1407 = vmatprep.mubr.bf16.mxu0 0
    %1408 = vmatmul.mubr.bf16.gmra.mxu0 %v1364
    %v1409 = vpop.f32.mrf.mxu0
    %v1410 = vadd.f32 0.0, %v1409
    %v1411 = vpop.f32.mrf.mxu0
    %v1412 = vpop.f32.mrf.mxu0
    %v1413 = vadd.f32 0.0, %v1412
    %v1414 = vpop.f32.mrf.mxu0
    %1415 = vmatprep.mubr.bf16.mxu0 0
    %1416 = vmatmul.mubr.bf16.gmra.mxu0 %v1367
    %v1417 = vpop.f32.mrf.mxu0
    %v1418 = vadd.f32 0.0, %v1417
    %v1419 = vpop.f32.mrf.mxu0
    %v1420 = vpop.f32.mrf.mxu0
    %v1421 = vadd.f32 0.0, %v1420
    %v1422 = vpop.f32.mrf.mxu0
    %1423 = vmatprep.mubr.bf16.mxu0 0
    %1424 = vmatmul.mubr.bf16.gmra.mxu0 %v1370
    %v1425 = vpop.f32.mrf.mxu0
    %v1426 = vadd.f32 0.0, %v1425
    %v1427 = vpop.f32.mrf.mxu0
    %v1428 = vpop.f32.mrf.mxu0
    %v1429 = vadd.f32 0.0, %v1428
    %v1430 = vpop.f32.mrf.mxu0
    %1431 = vmatprep.mubr.bf16.mxu0 0
    %1432 = vmatmul.mubr.bf16.gmra.mxu0 %v1373
    %v1433 = vpop.f32.mrf.mxu0
    %v1434 = vadd.f32 0.0, %v1433
    %v1435 = vpop.f32.mrf.mxu0
    %v1436 = vpop.f32.mrf.mxu0
    %v1437 = vadd.f32 0.0, %v1436
    %v1438 = vpop.f32.mrf.mxu0
    %1439 = vdwg.mxu0
    %v1440 = vadd.f32 %v165, %v1410
    %v1441 = vadd.f32 %v166, %v1413
    %v1442 = vadd.f32 %v167, %v1418
    %v1443 = vadd.f32 %v168, %v1421
    %v1444 = vadd.f32 %v169, %v1426
    %v1445 = vadd.f32 %v170, %v1429
    %v1446 = vadd.f32 %v171, %v1434
    %v1447 = vadd.f32 %v172, %v1437
    %v1448 = vld [vmem:[%s3 + $0x38] sm:$0xf]
    %v1449 = vld [vmem:[%s3 + $0x3c] sm:$0xf]
    %v1450 = vld [vmem:[%s3 + $0x40] sm:$0xf]
    %v1451 = vld [vmem:[%s3 + $0x44] sm:$0xf]
    %v1452 = vld [vmem:[%s3 + $0x48] sm:$0xf]
    %v1453 = vld [vmem:[%s3 + $0x4c] sm:$0xf]
    %v1454 = vld [vmem:[%s3 + $0x50] sm:$0xf]
    %v1455 = vld [vmem:[%s3 + $0x54] sm:$0xf]
    %v1456 = vld [vmem:[%s3 + $0xa8] sm:$0xf]
    %v1457 = vld [vmem:[%s3 + $0xac] sm:$0xf]
    %v1458 = vld [vmem:[%s3 + $0xb0] sm:$0xf]
    %v1459 = vld [vmem:[%s3 + $0xb4] sm:$0xf]
    %v1460 = vld [vmem:[%s2 + $0x40] sm:$0xff]
    %v1461 = vld [vmem:[%s2 + $0x48] sm:$0xff]
    %v1462 = vld [vmem:[%s2 + $0x50] sm:$0xff]
    %v1463 = vld [vmem:[%s2 + $0x58] sm:$0xff]
    %v1464 = vld [vmem:[%s2 + $0x60] sm:$0xff]
    %v1465 = vld [vmem:[%s2 + $0x68] sm:$0xff]
    %v1466 = vld [vmem:[%s2 + $0x70] sm:$0xff]
    %v1467 = vld [vmem:[%s2 + $0x78] sm:$0xff]
    %v1468 = vunpack.c.l.bf16 %v1460
    %v1469 = vunpack.c.h.bf16 %v1460
    %v1470 = vunpack.c.l.bf16 %v1461
    %v1471 = vunpack.c.h.bf16 %v1461
    %v1472 = vunpack.c.l.bf16 %v1462
    %v1473 = vunpack.c.h.bf16 %v1462
    %v1474 = vunpack.c.l.bf16 %v1463
    %v1475 = vunpack.c.h.bf16 %v1463
    %v1476 = vunpack.c.l.bf16 %v1464
    %v1477 = vunpack.c.h.bf16 %v1464
    %v1478 = vunpack.c.l.bf16 %v1465
    %v1479 = vunpack.c.h.bf16 %v1465
    %v1480 = vunpack.c.l.bf16 %v1466
    %v1481 = vunpack.c.h.bf16 %v1466
    %v1482 = vunpack.c.l.bf16 %v1467
    %v1483 = vunpack.c.h.bf16 %v1467
    %v1492 = vunpack.c.l.b16 %v1448
    %v1493 = vunpack.c.l.b16 %v1449
    %v1494 = vunpack.c.l.b16 %v1450
    %v1495 = vunpack.c.l.b16 %v1451
    %v1496 = vunpack.c.l.b16 %v1452
    %v1497 = vunpack.c.l.b16 %v1453
    %v1498 = vunpack.c.l.b16 %v1454
    %v1499 = vunpack.c.l.b16 %v1455
    %v1500 = vpack.c.b16 %v1493, %v1492
    %v1501 = vpack.c.b16 %v1495, %v1494
    %v1502 = vpack.c.b16 %v1497, %v1496
    %v1503 = vpack.c.b16 %v1499, %v1498
    %v1505 = vsel %vm238, %v1500, 0
    %v1508 = vsel %vm238, %v1501, 0
    %v1511 = vsel %vm238, %v1502, 0
    %v1514 = vsel %vm238, %v1503, 0
    %1516 = vmatprep.subr.bf16.mxu0 0
    %1517 = vmatpush1.bf16.msra.mxu0 0
    %1518 = vmatprep.subr.bf16.mxu0 0
    %1519 = vmatpush1.bf16.msra.mxu0 0
    %1520 = vmatprep.subr.bf16.mxu0 0
    %1521 = vmatpush1.bf16.msra.mxu0 0
    %1522 = vmatprep.subr.bf16.mxu0 0
    %1523 = vmatpush1.bf16.msra.mxu0 0
    %1524 = vmatprep.subr.bf16.mxu0 0
    %1525 = vmatpush1.bf16.msra.mxu0 0
    %1526 = vmatprep.subr.bf16.mxu0 0
    %1527 = vmatpush1.bf16.msra.mxu0 0
    %1528 = vmatprep.subr.bf16.mxu0 0
    %1529 = vmatpush1.bf16.msra.mxu0 0
    %1530 = vmatprep.subr.bf16.mxu0 %v256
    %1531 = vmatpush1.bf16.msra.mxu0 %v253
    %1532 = vmatprep.subr.bf16.mxu0 0
    %1533 = vmatpush2.bf16.msra.mxu0 0
    %1534 = vmatprep.subr.bf16.mxu0 0
    %1535 = vmatpush2.bf16.msra.mxu0 0
    %1536 = vmatprep.subr.bf16.mxu0 0
    %1537 = vmatpush2.bf16.msra.mxu0 0
    %1538 = vmatprep.subr.bf16.mxu0 0
    %1539 = vmatpush2.bf16.msra.mxu0 0
    %1540 = vmatprep.subr.bf16.mxu0 0
    %1541 = vmatpush2.bf16.msra.mxu0 0
    %1542 = vmatprep.subr.bf16.mxu0 0
    %1543 = vmatpush2.bf16.msra.mxu0 0
    %1544 = vmatprep.subr.bf16.mxu0 0
    %1545 = vmatpush2.bf16.msra.mxu0 0
    %1546 = vmatprep.subr.bf16.mxu0 0
    %1547 = vmatpush2.bf16.msra.mxu0 0
    %1548 = vmatprep.mubr.bf16.mxu0 0
    %1549 = vmatmul.mubr.bf16.gmra.mxu0 %v1505
    %v1550 = vpop.f32.mrf.mxu0
    %v1551 = vadd.f32 %v1468, %v1550
    %v1552 = vpop.f32.mrf.mxu0
    %v1553 = vadd.f32 %v1469, %v1552
    %v1554 = vpop.f32.mrf.mxu0
    %v1555 = vadd.f32 %v1470, %v1554
    %v1556 = vpop.f32.mrf.mxu0
    %v1557 = vadd.f32 %v1471, %v1556
    %1558 = vmatprep.mubr.bf16.mxu0 0
    %1559 = vmatmul.mubr.bf16.gmra.mxu0 %v1508
    %v1560 = vpop.f32.mrf.mxu0
    %v1561 = vadd.f32 %v1472, %v1560
    %v1562 = vpop.f32.mrf.mxu0
    %v1563 = vadd.f32 %v1473, %v1562
    %v1564 = vpop.f32.mrf.mxu0
    %v1565 = vadd.f32 %v1474, %v1564
    %v1566 = vpop.f32.mrf.mxu0
    %v1567 = vadd.f32 %v1475, %v1566
    %1568 = vmatprep.mubr.bf16.mxu0 0
    %1569 = vmatmul.mubr.bf16.gmra.mxu0 %v1511
    %v1570 = vpop.f32.mrf.mxu0
    %v1571 = vadd.f32 %v1476, %v1570
    %v1572 = vpop.f32.mrf.mxu0
    %v1573 = vadd.f32 %v1477, %v1572
    %v1574 = vpop.f32.mrf.mxu0
    %v1575 = vadd.f32 %v1478, %v1574
    %v1576 = vpop.f32.mrf.mxu0
    %v1577 = vadd.f32 %v1479, %v1576
    %1578 = vmatprep.mubr.bf16.mxu0 0
    %1579 = vmatmul.mubr.bf16.gmra.mxu0 %v1514
    %v1580 = vpop.f32.mrf.mxu0
    %v1581 = vadd.f32 %v1480, %v1580
    %v1582 = vpop.f32.mrf.mxu0
    %v1583 = vadd.f32 %v1481, %v1582
    %v1584 = vpop.f32.mrf.mxu0
    %v1585 = vadd.f32 %v1482, %v1584
    %v1586 = vpop.f32.mrf.mxu0
    %v1587 = vadd.f32 %v1483, %v1586
    %1588 = vdwg.mxu0
    %1589 = vrot.lane.b32.xlu0 %v131, 96
    %v1590 = vpop.permute.xlu0 %1589
    %1591 = vrot.lane.b32.xlu0 %v134, 96
    %v1592 = vpop.permute.xlu0 %1591
    %v1593 = vsel %vm83, %v1590, 0
    %v1595 = vsel %vm83, %v1592, 0
    %1597 = vmatprep.subr.mxu0 0.0
    %1598 = vmatpush1.msra.mxu0 0.0
    %1599 = vmatprep.subr.mxu0 0.0
    %1600 = vmatpush1.msra.mxu0 0.0
    %1601 = vmatprep.subr.mxu0 0.0
    %1602 = vmatpush1.msra.mxu0 0.0
    %1603 = vmatprep.subr.mxu0 0.0
    %1604 = vmatpush1.msra.mxu0 0.0
    %1605 = vmatprep.subr.mxu0 0.0
    %1606 = vmatpush1.msra.mxu0 0.0
    %1607 = vmatprep.subr.mxu0 0.0
    %1608 = vmatpush1.msra.mxu0 0.0
    %1609 = vmatprep.subr.mxu0 0.0
    %1610 = vmatpush1.msra.mxu0 0.0
    %1611 = vmatprep.subr.mxu0 0.0
    %1612 = vmatpush1.msra.mxu0 0.0
    %1613 = vmatprep.subr.mxu0 0.0
    %1614 = vmatpush1.msra.mxu0 0.0
    %1615 = vmatprep.subr.mxu0 0.0
    %1616 = vmatpush1.msra.mxu0 0.0
    %1617 = vmatprep.subr.mxu0 0.0
    %1618 = vmatpush1.msra.mxu0 0.0
    %1619 = vmatprep.subr.mxu0 0.0
    %1620 = vmatpush1.msra.mxu0 0.0
    %1621 = vmatprep.subr.mxu0 %v1567
    %1622 = vmatpush1.msra.mxu0 %v1565
    %1623 = vmatprep.subr.mxu0 %v1563
    %1624 = vmatpush1.msra.mxu0 %v1561
    %1625 = vmatprep.subr.mxu0 %v1557
    %1626 = vmatpush1.msra.mxu0 %v1555
    %1627 = vmatprep.subr.mxu0 %v1553
    %1628 = vmatpush1.msra.mxu0 %v1551
    %1629 = vmatprep.subr.mxu0 0.0
    %1630 = vmatpush2.msra.mxu0 0.0
    %1631 = vmatprep.subr.mxu0 0.0
    %1632 = vmatpush2.msra.mxu0 0.0
    %1633 = vmatprep.subr.mxu0 0.0
    %1634 = vmatpush2.msra.mxu0 0.0
    %1635 = vmatprep.subr.mxu0 0.0
    %1636 = vmatpush2.msra.mxu0 0.0
    %1637 = vmatprep.subr.mxu0 0.0
    %1638 = vmatpush2.msra.mxu0 0.0
    %1639 = vmatprep.subr.mxu0 0.0
    %1640 = vmatpush2.msra.mxu0 0.0
    %1641 = vmatprep.subr.mxu0 0.0
    %1642 = vmatpush2.msra.mxu0 0.0
    %1643 = vmatprep.subr.mxu0 0.0
    %1644 = vmatpush2.msra.mxu0 0.0
    %1645 = vmatprep.subr.mxu0 0.0
    %1646 = vmatpush2.msra.mxu0 0.0
    %1647 = vmatprep.subr.mxu0 0.0
    %1648 = vmatpush2.msra.mxu0 0.0
    %1649 = vmatprep.subr.mxu0 0.0
    %1650 = vmatpush2.msra.mxu0 0.0
    %1651 = vmatprep.subr.mxu0 0.0
    %1652 = vmatpush2.msra.mxu0 0.0
    %1653 = vmatprep.subr.mxu0 0.0
    %1654 = vmatpush2.msra.mxu0 0.0
    %1655 = vmatprep.subr.mxu0 0.0
    %1656 = vmatpush2.msra.mxu0 0.0
    %1657 = vmatprep.subr.mxu0 0.0
    %1658 = vmatpush2.msra.mxu0 0.0
    %1659 = vmatprep.subr.mxu0 0.0
    %1660 = vmatpush2.msra.mxu0 0.0
    %1661 = vmatprep.mubr.f32.mxu0 0.0
    %1662 = vmatmul.mubr.f32.gmra.mxu0 %v1593
    %v1663 = vpop.f32.mrf.mxu0
    %v1664 = vadd.f32 0.0, %v1663
    %v1665 = vpop.f32.mrf.mxu0
    %v1666 = vadd.f32 0.0, %v1665
    %1667 = vmatprep.mubr.f32.mxu0 0.0
    %1668 = vmatmul.mubr.f32.gmra.mxu0 %v1595
    %v1669 = vpop.f32.mrf.mxu0
    %v1670 = vadd.f32 0.0, %v1669
    %v1671 = vpop.f32.mrf.mxu0
    %v1672 = vadd.f32 0.0, %v1671
    %1673 = vdwg.mxu0
    %v1674 = vmax.f32 %v1664, %v1666
    %1675 = vmax.xlane.f32.xlu0 %v1674
    %v1676 = vpop.xlane.xlu0 %1675
    %v1677 = vmax.f32 %v1670, %v1672
    %1678 = vmax.xlane.f32.xlu0 %v1677
    %v1679 = vpop.xlane.xlu0 %1678
    %v1680 = vsub.f32 %v1664, %v1676
    %v1681 = vsub.f32 %v1666, %v1676
    %v1682 = vsub.f32 %v1670, %v1679
    %v1683 = vsub.f32 %v1672, %v1679
    %v1684 = vmul.f32 %v1680, 1.442695
    %v1685 = vpow.pop %v1684
    %v1686 = vmul.f32 %v1681, 1.442695
    %v1687 = vpow.pop %v1686
    %v1688 = vmul.f32 %v1682, 1.442695
    %v1689 = vpow.pop %v1688
    %v1690 = vmul.f32 %v1683, 1.442695
    %v1691 = vpow.pop %v1690
    %v1692 = vadd.f32 %v1685, %v1687
    %1693 = vadd.xlane.f32.xlu0 %v1692
    %v1694 = vpop.xlane.xlu0 %1693
    %v1695 = vadd.f32 %v1689, %v1691
    %1696 = vadd.xlane.f32.xlu0 %v1695
    %v1697 = vpop.xlane.xlu0 %1696
    %v1698 = vrcp.pop %v1694
    %v1699 = vrcp.pop %v1697
    %v1700 = vmul.f32 %v1685, %v1698
    %v1701 = vmul.f32 %v1687, %v1698
    %v1702 = vmul.f32 %v1689, %v1699
    %v1703 = vmul.f32 %v1691, %v1699
    %1704 = vmatprep.subr.mxu0 0.0
    %1705 = vmatpush1.xpose.msra.mxu0 0.0
    %1706 = vmatprep.subr.mxu0 0.0
    %1707 = vmatpush1.xpose.msra.mxu0 0.0
    %1708 = vmatprep.subr.mxu0 0.0
    %1709 = vmatpush1.xpose.msra.mxu0 0.0
    %1710 = vmatprep.subr.mxu0 0.0
    %1711 = vmatpush1.xpose.msra.mxu0 0.0
    %1712 = vmatprep.subr.mxu0 0.0
    %1713 = vmatpush1.xpose.msra.mxu0 0.0
    %1714 = vmatprep.subr.mxu0 0.0
    %1715 = vmatpush1.xpose.msra.mxu0 0.0
    %1716 = vmatprep.subr.mxu0 0.0
    %1717 = vmatpush1.xpose.msra.mxu0 0.0
    %1718 = vmatprep.subr.mxu0 0.0
    %1719 = vmatpush1.xpose.msra.mxu0 0.0
    %1720 = vmatprep.subr.mxu0 0.0
    %1721 = vmatpush1.xpose.msra.mxu0 0.0
    %1722 = vmatprep.subr.mxu0 0.0
    %1723 = vmatpush1.xpose.msra.mxu0 0.0
    %1724 = vmatprep.subr.mxu0 0.0
    %1725 = vmatpush1.xpose.msra.mxu0 0.0
    %1726 = vmatprep.subr.mxu0 0.0
    %1727 = vmatpush1.xpose.msra.mxu0 0.0
    %1728 = vmatprep.subr.mxu0 %v1587
    %1729 = vmatpush1.xpose.msra.mxu0 %v1585
    %1730 = vmatprep.subr.mxu0 %v1583
    %1731 = vmatpush1.xpose.msra.mxu0 %v1581
    %1732 = vmatprep.subr.mxu0 %v1577
    %1733 = vmatpush1.xpose.msra.mxu0 %v1575
    %1734 = vmatprep.subr.mxu0 %v1573
    %1735 = vmatpush1.xpose.msra.mxu0 %v1571
    %1736 = vmatprep.subr.mxu0 0.0
    %1737 = vmatpush2.xpose.msra.mxu0 0.0
    %1738 = vmatprep.subr.mxu0 0.0
    %1739 = vmatpush2.xpose.msra.mxu0 0.0
    %1740 = vmatprep.subr.mxu0 0.0
    %1741 = vmatpush2.xpose.msra.mxu0 0.0
    %1742 = vmatprep.subr.mxu0 0.0
    %1743 = vmatpush2.xpose.msra.mxu0 0.0
    %1744 = vmatprep.subr.mxu0 0.0
    %1745 = vmatpush2.xpose.msra.mxu0 0.0
    %1746 = vmatprep.subr.mxu0 0.0
    %1747 = vmatpush2.xpose.msra.mxu0 0.0
    %1748 = vmatprep.subr.mxu0 0.0
    %1749 = vmatpush2.xpose.msra.mxu0 0.0
    %1750 = vmatprep.subr.mxu0 0.0
    %1751 = vmatpush2.xpose.msra.mxu0 0.0
    %1752 = vmatprep.subr.mxu0 0.0
    %1753 = vmatpush2.xpose.msra.mxu0 0.0
    %1754 = vmatprep.subr.mxu0 0.0
    %1755 = vmatpush2.xpose.msra.mxu0 0.0
    %1756 = vmatprep.subr.mxu0 0.0
    %1757 = vmatpush2.xpose.msra.mxu0 0.0
    %1758 = vmatprep.subr.mxu0 0.0
    %1759 = vmatpush2.xpose.msra.mxu0 0.0
    %1760 = vmatprep.subr.mxu0 0.0
    %1761 = vmatpush2.xpose.msra.mxu0 0.0
    %1762 = vmatprep.subr.mxu0 0.0
    %1763 = vmatpush2.xpose.msra.mxu0 0.0
    %1764 = vmatprep.subr.mxu0 0.0
    %1765 = vmatpush2.xpose.msra.mxu0 0.0
    %1766 = vmatprep.subr.mxu0 0.0
    %1767 = vmatpush2.xpose.msra.mxu0 0.0
    %1768 = vmatprep.mubr.f32.mxu0 %v1701
    %1769 = vmatmul.mubr.f32.gmra.mxu0 %v1700
    %v1770 = vpop.f32.mrf.mxu0
    %v1771 = vadd.f32 0.0, %v1770
    %v1772 = vpop.f32.mrf.mxu0
    %1773 = vmatprep.mubr.f32.mxu0 %v1703
    %1774 = vmatmul.mubr.f32.gmra.mxu0 %v1702
    %v1775 = vpop.f32.mrf.mxu0
    %v1776 = vadd.f32 0.0, %v1775
    %v1777 = vpop.f32.mrf.mxu0
    %1778 = vdwg.mxu0
    %1779 = vmatprep.subr.bf16.mxu0 0
    %1780 = vmatpush1.bf16.msra.mxu0 0
    %1781 = vmatprep.subr.bf16.mxu0 0
    %1782 = vmatpush1.bf16.msra.mxu0 0
    %1783 = vmatprep.subr.bf16.mxu0 0
    %1784 = vmatpush1.bf16.msra.mxu0 0
    %1785 = vmatprep.subr.bf16.mxu0 0
    %1786 = vmatpush1.bf16.msra.mxu0 0
    %1787 = vmatprep.subr.bf16.mxu0 0
    %1788 = vmatpush1.bf16.msra.mxu0 0
    %1789 = vmatprep.subr.bf16.mxu0 0
    %1790 = vmatpush1.bf16.msra.mxu0 0
    %1791 = vmatprep.subr.bf16.mxu0 0
    %1792 = vmatpush1.bf16.msra.mxu0 0
    %1793 = vmatprep.subr.bf16.mxu0 %v532
    %1794 = vmatpush1.bf16.msra.mxu0 %v529
    %1795 = vmatprep.subr.bf16.mxu0 0
    %1796 = vmatpush2.bf16.msra.mxu0 0
    %1797 = vmatprep.subr.bf16.mxu0 0
    %1798 = vmatpush2.bf16.msra.mxu0 0
    %1799 = vmatprep.subr.bf16.mxu0 0
    %1800 = vmatpush2.bf16.msra.mxu0 0
    %1801 = vmatprep.subr.bf16.mxu0 0
    %1802 = vmatpush2.bf16.msra.mxu0 0
    %1803 = vmatprep.subr.bf16.mxu0 0
    %1804 = vmatpush2.bf16.msra.mxu0 0
    %1805 = vmatprep.subr.bf16.mxu0 0
    %1806 = vmatpush2.bf16.msra.mxu0 0
    %1807 = vmatprep.subr.bf16.mxu0 0
    %1808 = vmatpush2.bf16.msra.mxu0 0
    %1809 = vmatprep.subr.bf16.mxu0 0
    %1810 = vmatpush2.bf16.msra.mxu0 0
    %1811 = vmatprep.mubr.bf16.mxu0 0
    %1812 = vmatmul.mubr.bf16.gmra.mxu0 %v1505
    %v1813 = vpop.f32.mrf.mxu0
    %v1814 = vadd.f32 %v1468, %v1813
    %v1815 = vpop.f32.mrf.mxu0
    %v1816 = vadd.f32 %v1469, %v1815
    %v1817 = vpop.f32.mrf.mxu0
    %v1818 = vadd.f32 %v1470, %v1817
    %v1819 = vpop.f32.mrf.mxu0
    %v1820 = vadd.f32 %v1471, %v1819
    %1821 = vmatprep.mubr.bf16.mxu0 0
    %1822 = vmatmul.mubr.bf16.gmra.mxu0 %v1508
    %v1823 = vpop.f32.mrf.mxu0
    %v1824 = vadd.f32 %v1472, %v1823
    %v1825 = vpop.f32.mrf.mxu0
    %v1826 = vadd.f32 %v1473, %v1825
    %v1827 = vpop.f32.mrf.mxu0
    %v1828 = vadd.f32 %v1474, %v1827
    %v1829 = vpop.f32.mrf.mxu0
    %v1830 = vadd.f32 %v1475, %v1829
    %1831 = vmatprep.mubr.bf16.mxu0 0
    %1832 = vmatmul.mubr.bf16.gmra.mxu0 %v1511
    %v1833 = vpop.f32.mrf.mxu0
    %v1834 = vadd.f32 %v1476, %v1833
    %v1835 = vpop.f32.mrf.mxu0
    %v1836 = vadd.f32 %v1477, %v1835
    %v1837 = vpop.f32.mrf.mxu0
    %v1838 = vadd.f32 %v1478, %v1837
    %v1839 = vpop.f32.mrf.mxu0
    %v1840 = vadd.f32 %v1479, %v1839
    %1841 = vmatprep.mubr.bf16.mxu0 0
    %1842 = vmatmul.mubr.bf16.gmra.mxu0 %v1514
    %v1843 = vpop.f32.mrf.mxu0
    %v1844 = vadd.f32 %v1480, %v1843
    %v1845 = vpop.f32.mrf.mxu0
    %v1846 = vadd.f32 %v1481, %v1845
    %v1847 = vpop.f32.mrf.mxu0
    %v1848 = vadd.f32 %v1482, %v1847
    %v1849 = vpop.f32.mrf.mxu0
    %v1850 = vadd.f32 %v1483, %v1849
    %1851 = vdwg.mxu0
    %1852 = vrot.lane.b32.xlu0 %v139, 96
    %v1853 = vpop.permute.xlu0 %1852
    %1854 = vrot.lane.b32.xlu0 %v142, 96
    %v1855 = vpop.permute.xlu0 %1854
    %v1856 = vsel %vm83, %v1853, 0
    %v1858 = vsel %vm83, %v1855, 0
    %1860 = vmatprep.subr.mxu0 0.0
    %1861 = vmatpush1.msra.mxu0 0.0
    %1862 = vmatprep.subr.mxu0 0.0
    %1863 = vmatpush1.msra.mxu0 0.0
    %1864 = vmatprep.subr.mxu0 0.0
    %1865 = vmatpush1.msra.mxu0 0.0
    %1866 = vmatprep.subr.mxu0 0.0
    %1867 = vmatpush1.msra.mxu0 0.0
    %1868 = vmatprep.subr.mxu0 0.0
    %1869 = vmatpush1.msra.mxu0 0.0
    %1870 = vmatprep.subr.mxu0 0.0
    %1871 = vmatpush1.msra.mxu0 0.0
    %1872 = vmatprep.subr.mxu0 0.0
    %1873 = vmatpush1.msra.mxu0 0.0
    %1874 = vmatprep.subr.mxu0 0.0
    %1875 = vmatpush1.msra.mxu0 0.0
    %1876 = vmatprep.subr.mxu0 0.0
    %1877 = vmatpush1.msra.mxu0 0.0
    %1878 = vmatprep.subr.mxu0 0.0
    %1879 = vmatpush1.msra.mxu0 0.0
    %1880 = vmatprep.subr.mxu0 0.0
    %1881 = vmatpush1.msra.mxu0 0.0
    %1882 = vmatprep.subr.mxu0 0.0
    %1883 = vmatpush1.msra.mxu0 0.0
    %1884 = vmatprep.subr.mxu0 %v1830
    %1885 = vmatpush1.msra.mxu0 %v1828
    %1886 = vmatprep.subr.mxu0 %v1826
    %1887 = vmatpush1.msra.mxu0 %v1824
    %1888 = vmatprep.subr.mxu0 %v1820
    %1889 = vmatpush1.msra.mxu0 %v1818
    %1890 = vmatprep.subr.mxu0 %v1816
    %1891 = vmatpush1.msra.mxu0 %v1814
    %1892 = vmatprep.subr.mxu0 0.0
    %1893 = vmatpush2.msra.mxu0 0.0
    %1894 = vmatprep.subr.mxu0 0.0
    %1895 = vmatpush2.msra.mxu0 0.0
    %1896 = vmatprep.subr.mxu0 0.0
    %1897 = vmatpush2.msra.mxu0 0.0
    %1898 = vmatprep.subr.mxu0 0.0
    %1899 = vmatpush2.msra.mxu0 0.0
    %1900 = vmatprep.subr.mxu0 0.0
    %1901 = vmatpush2.msra.mxu0 0.0
    %1902 = vmatprep.subr.mxu0 0.0
    %1903 = vmatpush2.msra.mxu0 0.0
    %1904 = vmatprep.subr.mxu0 0.0
    %1905 = vmatpush2.msra.mxu0 0.0
    %1906 = vmatprep.subr.mxu0 0.0
    %1907 = vmatpush2.msra.mxu0 0.0
    %1908 = vmatprep.subr.mxu0 0.0
    %1909 = vmatpush2.msra.mxu0 0.0
    %1910 = vmatprep.subr.mxu0 0.0
    %1911 = vmatpush2.msra.mxu0 0.0
    %1912 = vmatprep.subr.mxu0 0.0
    %1913 = vmatpush2.msra.mxu0 0.0
    %1914 = vmatprep.subr.mxu0 0.0
    %1915 = vmatpush2.msra.mxu0 0.0
    %1916 = vmatprep.subr.mxu0 0.0
    %1917 = vmatpush2.msra.mxu0 0.0
    %1918 = vmatprep.subr.mxu0 0.0
    %1919 = vmatpush2.msra.mxu0 0.0
    %1920 = vmatprep.subr.mxu0 0.0
    %1921 = vmatpush2.msra.mxu0 0.0
    %1922 = vmatprep.subr.mxu0 0.0
    %1923 = vmatpush2.msra.mxu0 0.0
    %1924 = vmatprep.mubr.f32.mxu0 0.0
    %1925 = vmatmul.mubr.f32.gmra.mxu0 %v1856
    %v1926 = vpop.f32.mrf.mxu0
    %v1927 = vadd.f32 0.0, %v1926
    %v1928 = vpop.f32.mrf.mxu0
    %v1929 = vadd.f32 0.0, %v1928
    %1930 = vmatprep.mubr.f32.mxu0 0.0
    %1931 = vmatmul.mubr.f32.gmra.mxu0 %v1858
    %v1932 = vpop.f32.mrf.mxu0
    %v1933 = vadd.f32 0.0, %v1932
    %v1934 = vpop.f32.mrf.mxu0
    %v1935 = vadd.f32 0.0, %v1934
    %1936 = vdwg.mxu0
    %v1937 = vmax.f32 %v1927, %v1929
    %1938 = vmax.xlane.f32.xlu0 %v1937
    %v1939 = vpop.xlane.xlu0 %1938
    %v1940 = vmax.f32 %v1933, %v1935
    %1941 = vmax.xlane.f32.xlu0 %v1940
    %v1942 = vpop.xlane.xlu0 %1941
    %v1943 = vsub.f32 %v1927, %v1939
    %v1944 = vsub.f32 %v1929, %v1939
    %v1945 = vsub.f32 %v1933, %v1942
    %v1946 = vsub.f32 %v1935, %v1942
    %v1947 = vmul.f32 %v1943, 1.442695
    %v1948 = vpow.pop %v1947
    %v1949 = vmul.f32 %v1944, 1.442695
    %v1950 = vpow.pop %v1949
    %v1951 = vmul.f32 %v1945, 1.442695
    %v1952 = vpow.pop %v1951
    %v1953 = vmul.f32 %v1946, 1.442695
    %v1954 = vpow.pop %v1953
    %v1955 = vadd.f32 %v1948, %v1950
    %1956 = vadd.xlane.f32.xlu0 %v1955
    %v1957 = vpop.xlane.xlu0 %1956
    %v1958 = vadd.f32 %v1952, %v1954
    %1959 = vadd.xlane.f32.xlu0 %v1958
    %v1960 = vpop.xlane.xlu0 %1959
    %v1961 = vrcp.pop %v1957
    %v1962 = vrcp.pop %v1960
    %v1963 = vmul.f32 %v1948, %v1961
    %v1964 = vmul.f32 %v1950, %v1961
    %v1965 = vmul.f32 %v1952, %v1962
    %v1966 = vmul.f32 %v1954, %v1962
    %1967 = vmatprep.subr.mxu0 0.0
    %1968 = vmatpush1.xpose.msra.mxu0 0.0
    %1969 = vmatprep.subr.mxu0 0.0
    %1970 = vmatpush1.xpose.msra.mxu0 0.0
    %1971 = vmatprep.subr.mxu0 0.0
    %1972 = vmatpush1.xpose.msra.mxu0 0.0
    %1973 = vmatprep.subr.mxu0 0.0
    %1974 = vmatpush1.xpose.msra.mxu0 0.0
    %1975 = vmatprep.subr.mxu0 0.0
    %1976 = vmatpush1.xpose.msra.mxu0 0.0
    %1977 = vmatprep.subr.mxu0 0.0
    %1978 = vmatpush1.xpose.msra.mxu0 0.0
    %1979 = vmatprep.subr.mxu0 0.0
    %1980 = vmatpush1.xpose.msra.mxu0 0.0
    %1981 = vmatprep.subr.mxu0 0.0
    %1982 = vmatpush1.xpose.msra.mxu0 0.0
    %1983 = vmatprep.subr.mxu0 0.0
    %1984 = vmatpush1.xpose.msra.mxu0 0.0
    %1985 = vmatprep.subr.mxu0 0.0
    %1986 = vmatpush1.xpose.msra.mxu0 0.0
    %1987 = vmatprep.subr.mxu0 0.0
    %1988 = vmatpush1.xpose.msra.mxu0 0.0
    %1989 = vmatprep.subr.mxu0 0.0
    %1990 = vmatpush1.xpose.msra.mxu0 0.0
    %1991 = vmatprep.subr.mxu0 %v1850
    %1992 = vmatpush1.xpose.msra.mxu0 %v1848
    %1993 = vmatprep.subr.mxu0 %v1846
    %1994 = vmatpush1.xpose.msra.mxu0 %v1844
    %1995 = vmatprep.subr.mxu0 %v1840
    %1996 = vmatpush1.xpose.msra.mxu0 %v1838
    %1997 = vmatprep.subr.mxu0 %v1836
    %1998 = vmatpush1.xpose.msra.mxu0 %v1834
    %1999 = vmatprep.subr.mxu0 0.0
    %2000 = vmatpush2.xpose.msra.mxu0 0.0
    %2001 = vmatprep.subr.mxu0 0.0
    %2002 = vmatpush2.xpose.msra.mxu0 0.0
    %2003 = vmatprep.subr.mxu0 0.0
    %2004 = vmatpush2.xpose.msra.mxu0 0.0
    %2005 = vmatprep.subr.mxu0 0.0
    %2006 = vmatpush2.xpose.msra.mxu0 0.0
    %2007 = vmatprep.subr.mxu0 0.0
    %2008 = vmatpush2.xpose.msra.mxu0 0.0
    %2009 = vmatprep.subr.mxu0 0.0
    %2010 = vmatpush2.xpose.msra.mxu0 0.0
    %2011 = vmatprep.subr.mxu0 0.0
    %2012 = vmatpush2.xpose.msra.mxu0 0.0
    %2013 = vmatprep.subr.mxu0 0.0
    %2014 = vmatpush2.xpose.msra.mxu0 0.0
    %2015 = vmatprep.subr.mxu0 0.0
    %2016 = vmatpush2.xpose.msra.mxu0 0.0
    %2017 = vmatprep.subr.mxu0 0.0
    %2018 = vmatpush2.xpose.msra.mxu0 0.0
    %2019 = vmatprep.subr.mxu0 0.0
    %2020 = vmatpush2.xpose.msra.mxu0 0.0
    %2021 = vmatprep.subr.mxu0 0.0
    %2022 = vmatpush2.xpose.msra.mxu0 0.0
    %2023 = vmatprep.subr.mxu0 0.0
    %2024 = vmatpush2.xpose.msra.mxu0 0.0
    %2025 = vmatprep.subr.mxu0 0.0
    %2026 = vmatpush2.xpose.msra.mxu0 0.0
    %2027 = vmatprep.subr.mxu0 0.0
    %2028 = vmatpush2.xpose.msra.mxu0 0.0
    %2029 = vmatprep.subr.mxu0 0.0
    %2030 = vmatpush2.xpose.msra.mxu0 0.0
    %2031 = vmatprep.mubr.f32.mxu0 %v1964
    %2032 = vmatmul.mubr.f32.gmra.mxu0 %v1963
    %v2033 = vpop.f32.mrf.mxu0
    %v2034 = vadd.f32 0.0, %v2033
    %v2035 = vpop.f32.mrf.mxu0
    %2036 = vmatprep.mubr.f32.mxu0 %v1966
    %2037 = vmatmul.mubr.f32.gmra.mxu0 %v1965
    %v2038 = vpop.f32.mrf.mxu0
    %v2039 = vadd.f32 0.0, %v2038
    %v2040 = vpop.f32.mrf.mxu0
    %2041 = vdwg.mxu0
    %2042 = vmatprep.subr.bf16.mxu0 0
    %2043 = vmatpush1.bf16.msra.mxu0 0
    %2044 = vmatprep.subr.bf16.mxu0 0
    %2045 = vmatpush1.bf16.msra.mxu0 0
    %2046 = vmatprep.subr.bf16.mxu0 0
    %2047 = vmatpush1.bf16.msra.mxu0 0
    %2048 = vmatprep.subr.bf16.mxu0 0
    %2049 = vmatpush1.bf16.msra.mxu0 0
    %2050 = vmatprep.subr.bf16.mxu0 0
    %2051 = vmatpush1.bf16.msra.mxu0 0
    %2052 = vmatprep.subr.bf16.mxu0 0
    %2053 = vmatpush1.bf16.msra.mxu0 0
    %2054 = vmatprep.subr.bf16.mxu0 0
    %2055 = vmatpush1.bf16.msra.mxu0 0
    %2056 = vmatprep.subr.bf16.mxu0 %v808
    %2057 = vmatpush1.bf16.msra.mxu0 %v805
    %2058 = vmatprep.subr.bf16.mxu0 0
    %2059 = vmatpush2.bf16.msra.mxu0 0
    %2060 = vmatprep.subr.bf16.mxu0 0
    %2061 = vmatpush2.bf16.msra.mxu0 0
    %2062 = vmatprep.subr.bf16.mxu0 0
    %2063 = vmatpush2.bf16.msra.mxu0 0
    %2064 = vmatprep.subr.bf16.mxu0 0
    %2065 = vmatpush2.bf16.msra.mxu0 0
    %2066 = vmatprep.subr.bf16.mxu0 0
    %2067 = vmatpush2.bf16.msra.mxu0 0
    %2068 = vmatprep.subr.bf16.mxu0 0
    %2069 = vmatpush2.bf16.msra.mxu0 0
    %2070 = vmatprep.subr.bf16.mxu0 0
    %2071 = vmatpush2.bf16.msra.mxu0 0
    %2072 = vmatprep.subr.bf16.mxu0 0
    %2073 = vmatpush2.bf16.msra.mxu0 0
    %2074 = vmatprep.mubr.bf16.mxu0 0
    %2075 = vmatmul.mubr.bf16.gmra.mxu0 %v1505
    %v2076 = vpop.f32.mrf.mxu0
    %v2077 = vadd.f32 %v1468, %v2076
    %v2078 = vpop.f32.mrf.mxu0
    %v2079 = vadd.f32 %v1469, %v2078
    %v2080 = vpop.f32.mrf.mxu0
    %v2081 = vadd.f32 %v1470, %v2080
    %v2082 = vpop.f32.mrf.mxu0
    %v2083 = vadd.f32 %v1471, %v2082
    %2084 = vmatprep.mubr.bf16.mxu0 0
    %2085 = vmatmul.mubr.bf16.gmra.mxu0 %v1508
    %v2086 = vpop.f32.mrf.mxu0
    %v2087 = vadd.f32 %v1472, %v2086
    %v2088 = vpop.f32.mrf.mxu0
    %v2089 = vadd.f32 %v1473, %v2088
    %v2090 = vpop.f32.mrf.mxu0
    %v2091 = vadd.f32 %v1474, %v2090
    %v2092 = vpop.f32.mrf.mxu0
    %v2093 = vadd.f32 %v1475, %v2092
    %2094 = vmatprep.mubr.bf16.mxu0 0
    %2095 = vmatmul.mubr.bf16.gmra.mxu0 %v1511
    %v2096 = vpop.f32.mrf.mxu0
    %v2097 = vadd.f32 %v1476, %v2096
    %v2098 = vpop.f32.mrf.mxu0
    %v2099 = vadd.f32 %v1477, %v2098
    %v2100 = vpop.f32.mrf.mxu0
    %v2101 = vadd.f32 %v1478, %v2100
    %v2102 = vpop.f32.mrf.mxu0
    %v2103 = vadd.f32 %v1479, %v2102
    %2104 = vmatprep.mubr.bf16.mxu0 0
    %2105 = vmatmul.mubr.bf16.gmra.mxu0 %v1514
    %v2106 = vpop.f32.mrf.mxu0
    %v2107 = vadd.f32 %v1480, %v2106
    %v2108 = vpop.f32.mrf.mxu0
    %v2109 = vadd.f32 %v1481, %v2108
    %v2110 = vpop.f32.mrf.mxu0
    %v2111 = vadd.f32 %v1482, %v2110
    %v2112 = vpop.f32.mrf.mxu0
    %v2113 = vadd.f32 %v1483, %v2112
    %2114 = vdwg.mxu0
    %2115 = vrot.lane.b32.xlu0 %v147, 96
    %v2116 = vpop.permute.xlu0 %2115
    %2117 = vrot.lane.b32.xlu0 %v150, 96
    %v2118 = vpop.permute.xlu0 %2117
    %v2119 = vsel %vm83, %v2116, 0
    %v2121 = vsel %vm83, %v2118, 0
    %2123 = vmatprep.subr.mxu0 0.0
    %2124 = vmatpush1.msra.mxu0 0.0
    %2125 = vmatprep.subr.mxu0 0.0
    %2126 = vmatpush1.msra.mxu0 0.0
    %2127 = vmatprep.subr.mxu0 0.0
    %2128 = vmatpush1.msra.mxu0 0.0
    %2129 = vmatprep.subr.mxu0 0.0
    %2130 = vmatpush1.msra.mxu0 0.0
    %2131 = vmatprep.subr.mxu0 0.0
    %2132 = vmatpush1.msra.mxu0 0.0
    %2133 = vmatprep.subr.mxu0 0.0
    %2134 = vmatpush1.msra.mxu0 0.0
    %2135 = vmatprep.subr.mxu0 0.0
    %2136 = vmatpush1.msra.mxu0 0.0
    %2137 = vmatprep.subr.mxu0 0.0
    %2138 = vmatpush1.msra.mxu0 0.0
    %2139 = vmatprep.subr.mxu0 0.0
    %2140 = vmatpush1.msra.mxu0 0.0
    %2141 = vmatprep.subr.mxu0 0.0
    %2142 = vmatpush1.msra.mxu0 0.0
    %2143 = vmatprep.subr.mxu0 0.0
    %2144 = vmatpush1.msra.mxu0 0.0
    %2145 = vmatprep.subr.mxu0 0.0
    %2146 = vmatpush1.msra.mxu0 0.0
    %2147 = vmatprep.subr.mxu0 %v2093
    %2148 = vmatpush1.msra.mxu0 %v2091
    %2149 = vmatprep.subr.mxu0 %v2089
    %2150 = vmatpush1.msra.mxu0 %v2087
    %2151 = vmatprep.subr.mxu0 %v2083
    %2152 = vmatpush1.msra.mxu0 %v2081
    %2153 = vmatprep.subr.mxu0 %v2079
    %2154 = vmatpush1.msra.mxu0 %v2077
    %2155 = vmatprep.subr.mxu0 0.0
    %2156 = vmatpush2.msra.mxu0 0.0
    %2157 = vmatprep.subr.mxu0 0.0
    %2158 = vmatpush2.msra.mxu0 0.0
    %2159 = vmatprep.subr.mxu0 0.0
    %2160 = vmatpush2.msra.mxu0 0.0
    %2161 = vmatprep.subr.mxu0 0.0
    %2162 = vmatpush2.msra.mxu0 0.0
    %2163 = vmatprep.subr.mxu0 0.0
    %2164 = vmatpush2.msra.mxu0 0.0
    %2165 = vmatprep.subr.mxu0 0.0
    %2166 = vmatpush2.msra.mxu0 0.0
    %2167 = vmatprep.subr.mxu0 0.0
    %2168 = vmatpush2.msra.mxu0 0.0
    %2169 = vmatprep.subr.mxu0 0.0
    %2170 = vmatpush2.msra.mxu0 0.0
    %2171 = vmatprep.subr.mxu0 0.0
    %2172 = vmatpush2.msra.mxu0 0.0
    %2173 = vmatprep.subr.mxu0 0.0
    %2174 = vmatpush2.msra.mxu0 0.0
    %2175 = vmatprep.subr.mxu0 0.0
    %2176 = vmatpush2.msra.mxu0 0.0
    %2177 = vmatprep.subr.mxu0 0.0
    %2178 = vmatpush2.msra.mxu0 0.0
    %2179 = vmatprep.subr.mxu0 0.0
    %2180 = vmatpush2.msra.mxu0 0.0
    %2181 = vmatprep.subr.mxu0 0.0
    %2182 = vmatpush2.msra.mxu0 0.0
    %2183 = vmatprep.subr.mxu0 0.0
    %2184 = vmatpush2.msra.mxu0 0.0
    %2185 = vmatprep.subr.mxu0 0.0
    %2186 = vmatpush2.msra.mxu0 0.0
    %2187 = vmatprep.mubr.f32.mxu0 0.0
    %2188 = vmatmul.mubr.f32.gmra.mxu0 %v2119
    %v2189 = vpop.f32.mrf.mxu0
    %v2190 = vadd.f32 0.0, %v2189
    %v2191 = vpop.f32.mrf.mxu0
    %v2192 = vadd.f32 0.0, %v2191
    %2193 = vmatprep.mubr.f32.mxu0 0.0
    %2194 = vmatmul.mubr.f32.gmra.mxu0 %v2121
    %v2195 = vpop.f32.mrf.mxu0
    %v2196 = vadd.f32 0.0, %v2195
    %v2197 = vpop.f32.mrf.mxu0
    %v2198 = vadd.f32 0.0, %v2197
    %2199 = vdwg.mxu0
    %v2200 = vmax.f32 %v2190, %v2192
    %2201 = vmax.xlane.f32.xlu0 %v2200
    %v2202 = vpop.xlane.xlu0 %2201
    %v2203 = vmax.f32 %v2196, %v2198
    %2204 = vmax.xlane.f32.xlu0 %v2203
    %v2205 = vpop.xlane.xlu0 %2204
    %v2206 = vsub.f32 %v2190, %v2202
    %v2207 = vsub.f32 %v2192, %v2202
    %v2208 = vsub.f32 %v2196, %v2205
    %v2209 = vsub.f32 %v2198, %v2205
    %v2210 = vmul.f32 %v2206, 1.442695
    %v2211 = vpow.pop %v2210
    %v2212 = vmul.f32 %v2207, 1.442695
    %v2213 = vpow.pop %v2212
    %v2214 = vmul.f32 %v2208, 1.442695
    %v2215 = vpow.pop %v2214
    %v2216 = vmul.f32 %v2209, 1.442695
    %v2217 = vpow.pop %v2216
    %v2218 = vadd.f32 %v2211, %v2213
    %2219 = vadd.xlane.f32.xlu0 %v2218
    %v2220 = vpop.xlane.xlu0 %2219
    %v2221 = vadd.f32 %v2215, %v2217
    %2222 = vadd.xlane.f32.xlu0 %v2221
    %v2223 = vpop.xlane.xlu0 %2222
    %v2224 = vrcp.pop %v2220
    %v2225 = vrcp.pop %v2223
    %v2226 = vmul.f32 %v2211, %v2224
    %v2227 = vmul.f32 %v2213, %v2224
    %v2228 = vmul.f32 %v2215, %v2225
    %v2229 = vmul.f32 %v2217, %v2225
    %2230 = vmatprep.subr.mxu0 0.0
    %2231 = vmatpush1.xpose.msra.mxu0 0.0
    %2232 = vmatprep.subr.mxu0 0.0
    %2233 = vmatpush1.xpose.msra.mxu0 0.0
    %2234 = vmatprep.subr.mxu0 0.0
    %2235 = vmatpush1.xpose.msra.mxu0 0.0
    %2236 = vmatprep.subr.mxu0 0.0
    %2237 = vmatpush1.xpose.msra.mxu0 0.0
    %2238 = vmatprep.subr.mxu0 0.0
    %2239 = vmatpush1.xpose.msra.mxu0 0.0
    %2240 = vmatprep.subr.mxu0 0.0
    %2241 = vmatpush1.xpose.msra.mxu0 0.0
    %2242 = vmatprep.subr.mxu0 0.0
    %2243 = vmatpush1.xpose.msra.mxu0 0.0
    %2244 = vmatprep.subr.mxu0 0.0
    %2245 = vmatpush1.xpose.msra.mxu0 0.0
    %2246 = vmatprep.subr.mxu0 0.0
    %2247 = vmatpush1.xpose.msra.mxu0 0.0
    %2248 = vmatprep.subr.mxu0 0.0
    %2249 = vmatpush1.xpose.msra.mxu0 0.0
    %2250 = vmatprep.subr.mxu0 0.0
    %2251 = vmatpush1.xpose.msra.mxu0 0.0
    %2252 = vmatprep.subr.mxu0 0.0
    %2253 = vmatpush1.xpose.msra.mxu0 0.0
    %2254 = vmatprep.subr.mxu0 %v2113
    %2255 = vmatpush1.xpose.msra.mxu0 %v2111
    %2256 = vmatprep.subr.mxu0 %v2109
    %2257 = vmatpush1.xpose.msra.mxu0 %v2107
    %2258 = vmatprep.subr.mxu0 %v2103
    %2259 = vmatpush1.xpose.msra.mxu0 %v2101
    %2260 = vmatprep.subr.mxu0 %v2099
    %2261 = vmatpush1.xpose.msra.mxu0 %v2097
    %2262 = vmatprep.subr.mxu0 0.0
    %2263 = vmatpush2.xpose.msra.mxu0 0.0
    %2264 = vmatprep.subr.mxu0 0.0
    %2265 = vmatpush2.xpose.msra.mxu0 0.0
    %2266 = vmatprep.subr.mxu0 0.0
    %2267 = vmatpush2.xpose.msra.mxu0 0.0
    %2268 = vmatprep.subr.mxu0 0.0
    %2269 = vmatpush2.xpose.msra.mxu0 0.0
    %2270 = vmatprep.subr.mxu0 0.0
    %2271 = vmatpush2.xpose.msra.mxu0 0.0
    %2272 = vmatprep.subr.mxu0 0.0
    %2273 = vmatpush2.xpose.msra.mxu0 0.0
    %2274 = vmatprep.subr.mxu0 0.0
    %2275 = vmatpush2.xpose.msra.mxu0 0.0
    %2276 = vmatprep.subr.mxu0 0.0
    %2277 = vmatpush2.xpose.msra.mxu0 0.0
    %2278 = vmatprep.subr.mxu0 0.0
    %2279 = vmatpush2.xpose.msra.mxu0 0.0
    %2280 = vmatprep.subr.mxu0 0.0
    %2281 = vmatpush2.xpose.msra.mxu0 0.0
    %2282 = vmatprep.subr.mxu0 0.0
    %2283 = vmatpush2.xpose.msra.mxu0 0.0
    %2284 = vmatprep.subr.mxu0 0.0
    %2285 = vmatpush2.xpose.msra.mxu0 0.0
    %2286 = vmatprep.subr.mxu0 0.0
    %2287 = vmatpush2.xpose.msra.mxu0 0.0
    %2288 = vmatprep.subr.mxu0 0.0
    %2289 = vmatpush2.xpose.msra.mxu0 0.0
    %2290 = vmatprep.subr.mxu0 0.0
    %2291 = vmatpush2.xpose.msra.mxu0 0.0
    %2292 = vmatprep.subr.mxu0 0.0
    %2293 = vmatpush2.xpose.msra.mxu0 0.0
    %2294 = vmatprep.mubr.f32.mxu0 %v2227
    %2295 = vmatmul.mubr.f32.gmra.mxu0 %v2226
    %v2296 = vpop.f32.mrf.mxu0
    %v2297 = vadd.f32 0.0, %v2296
    %v2298 = vpop.f32.mrf.mxu0
    %2299 = vmatprep.mubr.f32.mxu0 %v2229
    %2300 = vmatmul.mubr.f32.gmra.mxu0 %v2228
    %v2301 = vpop.f32.mrf.mxu0
    %v2302 = vadd.f32 0.0, %v2301
    %v2303 = vpop.f32.mrf.mxu0
    %2304 = vdwg.mxu0
    %2305 = vmatprep.subr.bf16.mxu0 0
    %2306 = vmatpush1.bf16.msra.mxu0 0
    %2307 = vmatprep.subr.bf16.mxu0 0
    %2308 = vmatpush1.bf16.msra.mxu0 0
    %2309 = vmatprep.subr.bf16.mxu0 0
    %2310 = vmatpush1.bf16.msra.mxu0 0
    %2311 = vmatprep.subr.bf16.mxu0 0
    %2312 = vmatpush1.bf16.msra.mxu0 0
    %2313 = vmatprep.subr.bf16.mxu0 0
    %2314 = vmatpush1.bf16.msra.mxu0 0
    %2315 = vmatprep.subr.bf16.mxu0 0
    %2316 = vmatpush1.bf16.msra.mxu0 0
    %2317 = vmatprep.subr.bf16.mxu0 0
    %2318 = vmatpush1.bf16.msra.mxu0 0
    %2319 = vmatprep.subr.bf16.mxu0 %v1084
    %2320 = vmatpush1.bf16.msra.mxu0 %v1081
    %2321 = vmatprep.subr.bf16.mxu0 0
    %2322 = vmatpush2.bf16.msra.mxu0 0
    %2323 = vmatprep.subr.bf16.mxu0 0
    %2324 = vmatpush2.bf16.msra.mxu0 0
    %2325 = vmatprep.subr.bf16.mxu0 0
    %2326 = vmatpush2.bf16.msra.mxu0 0
    %2327 = vmatprep.subr.bf16.mxu0 0
    %2328 = vmatpush2.bf16.msra.mxu0 0
    %2329 = vmatprep.subr.bf16.mxu0 0
    %2330 = vmatpush2.bf16.msra.mxu0 0
    %2331 = vmatprep.subr.bf16.mxu0 0
    %2332 = vmatpush2.bf16.msra.mxu0 0
    %2333 = vmatprep.subr.bf16.mxu0 0
    %2334 = vmatpush2.bf16.msra.mxu0 0
    %2335 = vmatprep.subr.bf16.mxu0 0
    %2336 = vmatpush2.bf16.msra.mxu0 0
    %2337 = vmatprep.mubr.bf16.mxu0 0
    %2338 = vmatmul.mubr.bf16.gmra.mxu0 %v1505
    %v2339 = vpop.f32.mrf.mxu0
    %v2340 = vadd.f32 %v1468, %v2339
    %v2341 = vpop.f32.mrf.mxu0
    %v2342 = vadd.f32 %v1469, %v2341
    %v2343 = vpop.f32.mrf.mxu0
    %v2344 = vadd.f32 %v1470, %v2343
    %v2345 = vpop.f32.mrf.mxu0
    %v2346 = vadd.f32 %v1471, %v2345
    %2347 = vmatprep.mubr.bf16.mxu0 0
    %2348 = vmatmul.mubr.bf16.gmra.mxu0 %v1508
    %v2349 = vpop.f32.mrf.mxu0
    %v2350 = vadd.f32 %v1472, %v2349
    %v2351 = vpop.f32.mrf.mxu0
    %v2352 = vadd.f32 %v1473, %v2351
    %v2353 = vpop.f32.mrf.mxu0
    %v2354 = vadd.f32 %v1474, %v2353
    %v2355 = vpop.f32.mrf.mxu0
    %v2356 = vadd.f32 %v1475, %v2355
    %2357 = vmatprep.mubr.bf16.mxu0 0
    %2358 = vmatmul.mubr.bf16.gmra.mxu0 %v1511
    %v2359 = vpop.f32.mrf.mxu0
    %v2360 = vadd.f32 %v1476, %v2359
    %v2361 = vpop.f32.mrf.mxu0
    %v2362 = vadd.f32 %v1477, %v2361
    %v2363 = vpop.f32.mrf.mxu0
    %v2364 = vadd.f32 %v1478, %v2363
    %v2365 = vpop.f32.mrf.mxu0
    %v2366 = vadd.f32 %v1479, %v2365
    %2367 = vmatprep.mubr.bf16.mxu0 0
    %2368 = vmatmul.mubr.bf16.gmra.mxu0 %v1514
    %v2369 = vpop.f32.mrf.mxu0
    %v2370 = vadd.f32 %v1480, %v2369
    %v2371 = vpop.f32.mrf.mxu0
    %v2372 = vadd.f32 %v1481, %v2371
    %v2373 = vpop.f32.mrf.mxu0
    %v2374 = vadd.f32 %v1482, %v2373
    %v2375 = vpop.f32.mrf.mxu0
    %v2376 = vadd.f32 %v1483, %v2375
    %2377 = vdwg.mxu0
    %2378 = vrot.lane.b32.xlu0 %v155, 96
    %v2379 = vpop.permute.xlu0 %2378
    %2380 = vrot.lane.b32.xlu0 %v158, 96
    %v2381 = vpop.permute.xlu0 %2380
    %v2382 = vsel %vm83, %v2379, 0
    %v2384 = vsel %vm83, %v2381, 0
    %2386 = vmatprep.subr.mxu0 0.0
    %2387 = vmatpush1.msra.mxu0 0.0
    %2388 = vmatprep.subr.mxu0 0.0
    %2389 = vmatpush1.msra.mxu0 0.0
    %2390 = vmatprep.subr.mxu0 0.0
    %2391 = vmatpush1.msra.mxu0 0.0
    %2392 = vmatprep.subr.mxu0 0.0
    %2393 = vmatpush1.msra.mxu0 0.0
    %2394 = vmatprep.subr.mxu0 0.0
    %2395 = vmatpush1.msra.mxu0 0.0
    %2396 = vmatprep.subr.mxu0 0.0
    %2397 = vmatpush1.msra.mxu0 0.0
    %2398 = vmatprep.subr.mxu0 0.0
    %2399 = vmatpush1.msra.mxu0 0.0
    %2400 = vmatprep.subr.mxu0 0.0
    %2401 = vmatpush1.msra.mxu0 0.0
    %2402 = vmatprep.subr.mxu0 0.0
    %2403 = vmatpush1.msra.mxu0 0.0
    %2404 = vmatprep.subr.mxu0 0.0
    %2405 = vmatpush1.msra.mxu0 0.0
    %2406 = vmatprep.subr.mxu0 0.0
    %2407 = vmatpush1.msra.mxu0 0.0
    %2408 = vmatprep.subr.mxu0 0.0
    %2409 = vmatpush1.msra.mxu0 0.0
    %2410 = vmatprep.subr.mxu0 %v2356
    %2411 = vmatpush1.msra.mxu0 %v2354
    %2412 = vmatprep.subr.mxu0 %v2352
    %2413 = vmatpush1.msra.mxu0 %v2350
    %2414 = vmatprep.subr.mxu0 %v2346
    %2415 = vmatpush1.msra.mxu0 %v2344
    %2416 = vmatprep.subr.mxu0 %v2342
    %2417 = vmatpush1.msra.mxu0 %v2340
    %2418 = vmatprep.subr.mxu0 0.0
    %2419 = vmatpush2.msra.mxu0 0.0
    %2420 = vmatprep.subr.mxu0 0.0
    %2421 = vmatpush2.msra.mxu0 0.0
    %2422 = vmatprep.subr.mxu0 0.0
    %2423 = vmatpush2.msra.mxu0 0.0
    %2424 = vmatprep.subr.mxu0 0.0
    %2425 = vmatpush2.msra.mxu0 0.0
    %2426 = vmatprep.subr.mxu0 0.0
    %2427 = vmatpush2.msra.mxu0 0.0
    %2428 = vmatprep.subr.mxu0 0.0
    %2429 = vmatpush2.msra.mxu0 0.0
    %2430 = vmatprep.subr.mxu0 0.0
    %2431 = vmatpush2.msra.mxu0 0.0
    %2432 = vmatprep.subr.mxu0 0.0
    %2433 = vmatpush2.msra.mxu0 0.0
    %2434 = vmatprep.subr.mxu0 0.0
    %2435 = vmatpush2.msra.mxu0 0.0
    %2436 = vmatprep.subr.mxu0 0.0
    %2437 = vmatpush2.msra.mxu0 0.0
    %2438 = vmatprep.subr.mxu0 0.0
    %2439 = vmatpush2.msra.mxu0 0.0
    %2440 = vmatprep.subr.mxu0 0.0
    %2441 = vmatpush2.msra.mxu0 0.0
    %2442 = vmatprep.subr.mxu0 0.0
    %2443 = vmatpush2.msra.mxu0 0.0
    %2444 = vmatprep.subr.mxu0 0.0
    %2445 = vmatpush2.msra.mxu0 0.0
    %2446 = vmatprep.subr.mxu0 0.0
    %2447 = vmatpush2.msra.mxu0 0.0
    %2448 = vmatprep.subr.mxu0 0.0
    %2449 = vmatpush2.msra.mxu0 0.0
    %2450 = vmatprep.mubr.f32.mxu0 0.0
    %2451 = vmatmul.mubr.f32.gmra.mxu0 %v2382
    %v2452 = vpop.f32.mrf.mxu0
    %v2453 = vadd.f32 0.0, %v2452
    %v2454 = vpop.f32.mrf.mxu0
    %v2455 = vadd.f32 0.0, %v2454
    %2456 = vmatprep.mubr.f32.mxu0 0.0
    %2457 = vmatmul.mubr.f32.gmra.mxu0 %v2384
    %v2458 = vpop.f32.mrf.mxu0
    %v2459 = vadd.f32 0.0, %v2458
    %v2460 = vpop.f32.mrf.mxu0
    %v2461 = vadd.f32 0.0, %v2460
    %2462 = vdwg.mxu0
    %v2463 = vmax.f32 %v2453, %v2455
    %2464 = vmax.xlane.f32.xlu0 %v2463
    %v2465 = vpop.xlane.xlu0 %2464
    %v2466 = vmax.f32 %v2459, %v2461
    %2467 = vmax.xlane.f32.xlu0 %v2466
    %v2468 = vpop.xlane.xlu0 %2467
    %v2469 = vsub.f32 %v2453, %v2465
    %v2470 = vsub.f32 %v2455, %v2465
    %v2471 = vsub.f32 %v2459, %v2468
    %v2472 = vsub.f32 %v2461, %v2468
    %v2473 = vmul.f32 %v2469, 1.442695
    %v2474 = vpow.pop %v2473
    %v2475 = vmul.f32 %v2470, 1.442695
    %v2476 = vpow.pop %v2475
    %v2477 = vmul.f32 %v2471, 1.442695
    %v2478 = vpow.pop %v2477
    %v2479 = vmul.f32 %v2472, 1.442695
    %v2480 = vpow.pop %v2479
    %v2481 = vadd.f32 %v2474, %v2476
    %2482 = vadd.xlane.f32.xlu0 %v2481
    %v2483 = vpop.xlane.xlu0 %2482
    %v2484 = vadd.f32 %v2478, %v2480
    %2485 = vadd.xlane.f32.xlu0 %v2484
    %v2486 = vpop.xlane.xlu0 %2485
    %v2487 = vrcp.pop %v2483
    %v2488 = vrcp.pop %v2486
    %v2489 = vmul.f32 %v2474, %v2487
    %v2490 = vmul.f32 %v2476, %v2487
    %v2491 = vmul.f32 %v2478, %v2488
    %v2492 = vmul.f32 %v2480, %v2488
    %2493 = vmatprep.subr.mxu0 0.0
    %2494 = vmatpush1.xpose.msra.mxu0 0.0
    %2495 = vmatprep.subr.mxu0 0.0
    %2496 = vmatpush1.xpose.msra.mxu0 0.0
    %2497 = vmatprep.subr.mxu0 0.0
    %2498 = vmatpush1.xpose.msra.mxu0 0.0
    %2499 = vmatprep.subr.mxu0 0.0
    %2500 = vmatpush1.xpose.msra.mxu0 0.0
    %2501 = vmatprep.subr.mxu0 0.0
    %2502 = vmatpush1.xpose.msra.mxu0 0.0
    %2503 = vmatprep.subr.mxu0 0.0
    %2504 = vmatpush1.xpose.msra.mxu0 0.0
    %2505 = vmatprep.subr.mxu0 0.0
    %2506 = vmatpush1.xpose.msra.mxu0 0.0
    %2507 = vmatprep.subr.mxu0 0.0
    %2508 = vmatpush1.xpose.msra.mxu0 0.0
    %2509 = vmatprep.subr.mxu0 0.0
    %2510 = vmatpush1.xpose.msra.mxu0 0.0
    %2511 = vmatprep.subr.mxu0 0.0
    %2512 = vmatpush1.xpose.msra.mxu0 0.0
    %2513 = vmatprep.subr.mxu0 0.0
    %2514 = vmatpush1.xpose.msra.mxu0 0.0
    %2515 = vmatprep.subr.mxu0 0.0
    %2516 = vmatpush1.xpose.msra.mxu0 0.0
    %2517 = vmatprep.subr.mxu0 %v2376
    %2518 = vmatpush1.xpose.msra.mxu0 %v2374
    %2519 = vmatprep.subr.mxu0 %v2372
    %2520 = vmatpush1.xpose.msra.mxu0 %v2370
    %2521 = vmatprep.subr.mxu0 %v2366
    %2522 = vmatpush1.xpose.msra.mxu0 %v2364
    %2523 = vmatprep.subr.mxu0 %v2362
    %2524 = vmatpush1.xpose.msra.mxu0 %v2360
    %2525 = vmatprep.subr.mxu0 0.0
    %2526 = vmatpush2.xpose.msra.mxu0 0.0
    %2527 = vmatprep.subr.mxu0 0.0
    %2528 = vmatpush2.xpose.msra.mxu0 0.0
    %2529 = vmatprep.subr.mxu0 0.0
    %2530 = vmatpush2.xpose.msra.mxu0 0.0
    %2531 = vmatprep.subr.mxu0 0.0
    %2532 = vmatpush2.xpose.msra.mxu0 0.0
    %2533 = vmatprep.subr.mxu0 0.0
    %2534 = vmatpush2.xpose.msra.mxu0 0.0
    %2535 = vmatprep.subr.mxu0 0.0
    %2536 = vmatpush2.xpose.msra.mxu0 0.0
    %2537 = vmatprep.subr.mxu0 0.0
    %2538 = vmatpush2.xpose.msra.mxu0 0.0
    %2539 = vmatprep.subr.mxu0 0.0
    %2540 = vmatpush2.xpose.msra.mxu0 0.0
    %2541 = vmatprep.subr.mxu0 0.0
    %2542 = vmatpush2.xpose.msra.mxu0 0.0
    %2543 = vmatprep.subr.mxu0 0.0
    %2544 = vmatpush2.xpose.msra.mxu0 0.0
    %2545 = vmatprep.subr.mxu0 0.0
    %2546 = vmatpush2.xpose.msra.mxu0 0.0
    %2547 = vmatprep.subr.mxu0 0.0
    %2548 = vmatpush2.xpose.msra.mxu0 0.0
    %2549 = vmatprep.subr.mxu0 0.0
    %2550 = vmatpush2.xpose.msra.mxu0 0.0
    %2551 = vmatprep.subr.mxu0 0.0
    %2552 = vmatpush2.xpose.msra.mxu0 0.0
    %2553 = vmatprep.subr.mxu0 0.0
    %2554 = vmatpush2.xpose.msra.mxu0 0.0
    %2555 = vmatprep.subr.mxu0 0.0
    %2556 = vmatpush2.xpose.msra.mxu0 0.0
    %2557 = vmatprep.mubr.f32.mxu0 %v2490
    %2558 = vmatmul.mubr.f32.gmra.mxu0 %v2489
    %v2559 = vpop.f32.mrf.mxu0
    %v2560 = vadd.f32 0.0, %v2559
    %v2561 = vpop.f32.mrf.mxu0
    %2562 = vmatprep.mubr.f32.mxu0 %v2492
    %2563 = vmatmul.mubr.f32.gmra.mxu0 %v2491
    %v2564 = vpop.f32.mrf.mxu0
    %v2565 = vadd.f32 0.0, %v2564
    %v2566 = vpop.f32.mrf.mxu0
    %2567 = vdwg.mxu0
    %v2568 = vpack.c.bf16 %v1776, %v1771
    %v2569 = vpack.c.bf16 %v2039, %v2034
    %v2570 = vpack.c.bf16 %v2302, %v2297
    %v2571 = vpack.c.bf16 %v2565, %v2560
    %v2576 = vunpack.c.l.b16 %v1456
    %v2577 = vunpack.c.l.b16 %v1457
    %v2578 = vunpack.c.l.b16 %v1458
    %v2579 = vunpack.c.l.b16 %v1459
    %v2580 = vpack.c.b16 %v2577, %v2576
    %v2581 = vpack.c.b16 %v2579, %v2578
    %v2585 = vsel %vm83, %v2568, 0
    %v2588 = vsel %vm83, %v2569, 0
    %v2591 = vsel %vm83, %v2570, 0
    %v2594 = vsel %vm83, %v2571, 0
    %2596 = vmatprep.subr.bf16.mxu0 0
    %2597 = vmatpush1.bf16.msra.mxu0 0
    %2598 = vmatprep.subr.bf16.mxu0 0
    %2599 = vmatpush1.bf16.msra.mxu0 0
    %2600 = vmatprep.subr.bf16.mxu0 0
    %2601 = vmatpush1.bf16.msra.mxu0 0
    %2602 = vmatprep.subr.bf16.mxu0 0
    %2603 = vmatpush1.bf16.msra.mxu0 0
    %2604 = vmatprep.subr.bf16.mxu0 0
    %2605 = vmatpush1.bf16.msra.mxu0 0
    %2606 = vmatprep.subr.bf16.mxu0 0
    %2607 = vmatpush1.bf16.msra.mxu0 0
    %2608 = vmatprep.subr.bf16.mxu0 0
    %2609 = vmatpush1.bf16.msra.mxu0 %v2581
    %2610 = vmatprep.subr.bf16.mxu0 0
    %2611 = vmatpush1.bf16.msra.mxu0 %v2580
    %2612 = vmatprep.subr.bf16.mxu0 0
    %2613 = vmatpush2.bf16.msra.mxu0 0
    %2614 = vmatprep.subr.bf16.mxu0 0
    %2615 = vmatpush2.bf16.msra.mxu0 0
    %2616 = vmatprep.subr.bf16.mxu0 0
    %2617 = vmatpush2.bf16.msra.mxu0 0
    %2618 = vmatprep.subr.bf16.mxu0 0
    %2619 = vmatpush2.bf16.msra.mxu0 0
    %2620 = vmatprep.subr.bf16.mxu0 0
    %2621 = vmatpush2.bf16.msra.mxu0 0
    %2622 = vmatprep.subr.bf16.mxu0 0
    %2623 = vmatpush2.bf16.msra.mxu0 0
    %2624 = vmatprep.subr.bf16.mxu0 0
    %2625 = vmatpush2.bf16.msra.mxu0 0
    %2626 = vmatprep.subr.bf16.mxu0 0
    %2627 = vmatpush2.bf16.msra.mxu0 0
    %2628 = vmatprep.mubr.bf16.mxu0 0
    %2629 = vmatmul.mubr.bf16.gmra.mxu0 %v2585
    %v2630 = vpop.f32.mrf.mxu0
    %v2631 = vadd.f32 0.0, %v2630
    %v2632 = vpop.f32.mrf.mxu0
    %v2633 = vpop.f32.mrf.mxu0
    %v2634 = vadd.f32 0.0, %v2633
    %v2635 = vpop.f32.mrf.mxu0
    %2636 = vmatprep.mubr.bf16.mxu0 0
    %2637 = vmatmul.mubr.bf16.gmra.mxu0 %v2588
    %v2638 = vpop.f32.mrf.mxu0
    %v2639 = vadd.f32 0.0, %v2638
    %v2640 = vpop.f32.mrf.mxu0
    %v2641 = vpop.f32.mrf.mxu0
    %v2642 = vadd.f32 0.0, %v2641
    %v2643 = vpop.f32.mrf.mxu0
    %2644 = vmatprep.mubr.bf16.mxu0 0
    %2645 = vmatmul.mubr.bf16.gmra.mxu0 %v2591
    %v2646 = vpop.f32.mrf.mxu0
    %v2647 = vadd.f32 0.0, %v2646
    %v2648 = vpop.f32.mrf.mxu0
    %v2649 = vpop.f32.mrf.mxu0
    %v2650 = vadd.f32 0.0, %v2649
    %v2651 = vpop.f32.mrf.mxu0
    %2652 = vmatprep.mubr.bf16.mxu0 0
    %2653 = vmatmul.mubr.bf16.gmra.mxu0 %v2594
    %v2654 = vpop.f32.mrf.mxu0
    %v2655 = vadd.f32 0.0, %v2654
    %v2656 = vpop.f32.mrf.mxu0
    %v2657 = vpop.f32.mrf.mxu0
    %v2658 = vadd.f32 0.0, %v2657
    %v2659 = vpop.f32.mrf.mxu0
    %2660 = vdwg.mxu0
    %v2661 = vadd.f32 %v1440, %v2631
    %v2662 = vadd.f32 %v1441, %v2634
    %v2663 = vadd.f32 %v1442, %v2639
    %v2664 = vadd.f32 %v1443, %v2642
    %v2665 = vadd.f32 %v1444, %v2647
    %v2666 = vadd.f32 %v1445, %v2650
    %v2667 = vadd.f32 %v1446, %v2655
    %v2668 = vadd.f32 %v1447, %v2658
    %v2669 = vld [vmem:[%s3 + $0x58] sm:$0xf]
    %v2670 = vld [vmem:[%s3 + $0x5c] sm:$0xf]
    %v2671 = vld [vmem:[%s3 + $0x60] sm:$0xf]
    %v2672 = vld [vmem:[%s3 + $0x64] sm:$0xf]
    %v2673 = vld [vmem:[%s3 + $0x68] sm:$0xf]
    %v2674 = vld [vmem:[%s3 + $0x6c] sm:$0xf]
    %v2675 = vld [vmem:[%s3 + $0x70] sm:$0xf]
    %v2676 = vld [vmem:[%s3 + $0x74] sm:$0xf]
    %v2677 = vld [vmem:[%s3 + $0xb8] sm:$0xf]
    %v2678 = vld [vmem:[%s3 + $0xbc] sm:$0xf]
    %v2679 = vld [vmem:[%s3 + $0xc0] sm:$0xf]
    %v2680 = vld [vmem:[%s3 + $0xc4] sm:$0xf]
    %v2681 = vld [vmem:[%s2 + $0x80] sm:$0xff]
    %v2682 = vld [vmem:[%s2 + $0x88] sm:$0xff]
    %v2683 = vld [vmem:[%s2 + $0x90] sm:$0xff]
    %v2684 = vld [vmem:[%s2 + $0x98] sm:$0xff]
    %v2685 = vld [vmem:[%s2 + $0xa0] sm:$0xff]
    %v2686 = vld [vmem:[%s2 + $0xa8] sm:$0xff]
    %v2687 = vld [vmem:[%s2 + $0xb0] sm:$0xff]
    %v2688 = vld [vmem:[%s2 + $0xb8] sm:$0xff]
    %v2689 = vunpack.c.l.bf16 %v2681
    %v2690 = vunpack.c.h.bf16 %v2681
    %v2691 = vunpack.c.l.bf16 %v2682
    %v2692 = vunpack.c.h.bf16 %v2682
    %v2693 = vunpack.c.l.bf16 %v2683
    %v2694 = vunpack.c.h.bf16 %v2683
    %v2695 = vunpack.c.l.bf16 %v2684
    %v2696 = vunpack.c.h.bf16 %v2684
    %v2697 = vunpack.c.l.bf16 %v2685
    %v2698 = vunpack.c.h.bf16 %v2685
    %v2699 = vunpack.c.l.bf16 %v2686
    %v2700 = vunpack.c.h.bf16 %v2686
    %v2701 = vunpack.c.l.bf16 %v2687
    %v2702 = vunpack.c.h.bf16 %v2687
    %v2703 = vunpack.c.l.bf16 %v2688
    %v2704 = vunpack.c.h.bf16 %v2688
    %v2713 = vunpack.c.l.b16 %v2669
    %v2714 = vunpack.c.l.b16 %v2670
    %v2715 = vunpack.c.l.b16 %v2671
    %v2716 = vunpack.c.l.b16 %v2672
    %v2717 = vunpack.c.l.b16 %v2673
    %v2718 = vunpack.c.l.b16 %v2674
    %v2719 = vunpack.c.l.b16 %v2675
    %v2720 = vunpack.c.l.b16 %v2676
    %v2721 = vpack.c.b16 %v2714, %v2713
    %v2722 = vpack.c.b16 %v2716, %v2715
    %v2723 = vpack.c.b16 %v2718, %v2717
    %v2724 = vpack.c.b16 %v2720, %v2719
    %v2726 = vsel %vm238, %v2721, 0
    %v2729 = vsel %vm238, %v2722, 0
    %v2732 = vsel %vm238, %v2723, 0
    %v2735 = vsel %vm238, %v2724, 0
    %2737 = vmatprep.subr.bf16.mxu0 0
    %2738 = vmatpush1.bf16.msra.mxu0 0
    %2739 = vmatprep.subr.bf16.mxu0 0
    %2740 = vmatpush1.bf16.msra.mxu0 0
    %2741 = vmatprep.subr.bf16.mxu0 0
    %2742 = vmatpush1.bf16.msra.mxu0 0
    %2743 = vmatprep.subr.bf16.mxu0 0
    %2744 = vmatpush1.bf16.msra.mxu0 0
    %2745 = vmatprep.subr.bf16.mxu0 0
    %2746 = vmatpush1.bf16.msra.mxu0 0
    %2747 = vmatprep.subr.bf16.mxu0 0
    %2748 = vmatpush1.bf16.msra.mxu0 0
    %2749 = vmatprep.subr.bf16.mxu0 0
    %2750 = vmatpush1.bf16.msra.mxu0 0
    %2751 = vmatprep.subr.bf16.mxu0 %v256
    %2752 = vmatpush1.bf16.msra.mxu0 %v253
    %2753 = vmatprep.subr.bf16.mxu0 0
    %2754 = vmatpush2.bf16.msra.mxu0 0
    %2755 = vmatprep.subr.bf16.mxu0 0
    %2756 = vmatpush2.bf16.msra.mxu0 0
    %2757 = vmatprep.subr.bf16.mxu0 0
    %2758 = vmatpush2.bf16.msra.mxu0 0
    %2759 = vmatprep.subr.bf16.mxu0 0
    %2760 = vmatpush2.bf16.msra.mxu0 0
    %2761 = vmatprep.subr.bf16.mxu0 0
    %2762 = vmatpush2.bf16.msra.mxu0 0
    %2763 = vmatprep.subr.bf16.mxu0 0
    %2764 = vmatpush2.bf16.msra.mxu0 0
    %2765 = vmatprep.subr.bf16.mxu0 0
    %2766 = vmatpush2.bf16.msra.mxu0 0
    %2767 = vmatprep.subr.bf16.mxu0 0
    %2768 = vmatpush2.bf16.msra.mxu0 0
    %2769 = vmatprep.mubr.bf16.mxu0 0
    %2770 = vmatmul.mubr.bf16.gmra.mxu0 %v2726
    %v2771 = vpop.f32.mrf.mxu0
    %v2772 = vadd.f32 %v2689, %v2771
    %v2773 = vpop.f32.mrf.mxu0
    %v2774 = vadd.f32 %v2690, %v2773
    %v2775 = vpop.f32.mrf.mxu0
    %v2776 = vadd.f32 %v2691, %v2775
    %v2777 = vpop.f32.mrf.mxu0
    %v2778 = vadd.f32 %v2692, %v2777
    %2779 = vmatprep.mubr.bf16.mxu0 0
    %2780 = vmatmul.mubr.bf16.gmra.mxu0 %v2729
    %v2781 = vpop.f32.mrf.mxu0
    %v2782 = vadd.f32 %v2693, %v2781
    %v2783 = vpop.f32.mrf.mxu0
    %v2784 = vadd.f32 %v2694, %v2783
    %v2785 = vpop.f32.mrf.mxu0
    %v2786 = vadd.f32 %v2695, %v2785
    %v2787 = vpop.f32.mrf.mxu0
    %v2788 = vadd.f32 %v2696, %v2787
    %2789 = vmatprep.mubr.bf16.mxu0 0
    %2790 = vmatmul.mubr.bf16.gmra.mxu0 %v2732
    %v2791 = vpop.f32.mrf.mxu0
    %v2792 = vadd.f32 %v2697, %v2791
    %v2793 = vpop.f32.mrf.mxu0
    %v2794 = vadd.f32 %v2698, %v2793
    %v2795 = vpop.f32.mrf.mxu0
    %v2796 = vadd.f32 %v2699, %v2795
    %v2797 = vpop.f32.mrf.mxu0
    %v2798 = vadd.f32 %v2700, %v2797
    %2799 = vmatprep.mubr.bf16.mxu0 0
    %2800 = vmatmul.mubr.bf16.gmra.mxu0 %v2735
    %v2801 = vpop.f32.mrf.mxu0
    %v2802 = vadd.f32 %v2701, %v2801
    %v2803 = vpop.f32.mrf.mxu0
    %v2804 = vadd.f32 %v2702, %v2803
    %v2805 = vpop.f32.mrf.mxu0
    %v2806 = vadd.f32 %v2703, %v2805
    %v2807 = vpop.f32.mrf.mxu0
    %v2808 = vadd.f32 %v2704, %v2807
    %2809 = vdwg.mxu0
    %2810 = vrot.lane.b32.xlu0 %v131, 64
    %v2811 = vpop.permute.xlu0 %2810
    %2812 = vrot.lane.b32.xlu0 %v134, 64
    %v2813 = vpop.permute.xlu0 %2812
    %v2814 = vsel %vm83, %v2811, 0
    %v2816 = vsel %vm83, %v2813, 0
    %2818 = vmatprep.subr.mxu0 0.0
    %2819 = vmatpush1.msra.mxu0 0.0
    %2820 = vmatprep.subr.mxu0 0.0
    %2821 = vmatpush1.msra.mxu0 0.0
    %2822 = vmatprep.subr.mxu0 0.0
    %2823 = vmatpush1.msra.mxu0 0.0
    %2824 = vmatprep.subr.mxu0 0.0
    %2825 = vmatpush1.msra.mxu0 0.0
    %2826 = vmatprep.subr.mxu0 0.0
    %2827 = vmatpush1.msra.mxu0 0.0
    %2828 = vmatprep.subr.mxu0 0.0
    %2829 = vmatpush1.msra.mxu0 0.0
    %2830 = vmatprep.subr.mxu0 0.0
    %2831 = vmatpush1.msra.mxu0 0.0
    %2832 = vmatprep.subr.mxu0 0.0
    %2833 = vmatpush1.msra.mxu0 0.0
    %2834 = vmatprep.subr.mxu0 0.0
    %2835 = vmatpush1.msra.mxu0 0.0
    %2836 = vmatprep.subr.mxu0 0.0
    %2837 = vmatpush1.msra.mxu0 0.0
    %2838 = vmatprep.subr.mxu0 0.0
    %2839 = vmatpush1.msra.mxu0 0.0
    %2840 = vmatprep.subr.mxu0 0.0
    %2841 = vmatpush1.msra.mxu0 0.0
    %2842 = vmatprep.subr.mxu0 %v2788
    %2843 = vmatpush1.msra.mxu0 %v2786
    %2844 = vmatprep.subr.mxu0 %v2784
    %2845 = vmatpush1.msra.mxu0 %v2782
    %2846 = vmatprep.subr.mxu0 %v2778
    %2847 = vmatpush1.msra.mxu0 %v2776
    %2848 = vmatprep.subr.mxu0 %v2774
    %2849 = vmatpush1.msra.mxu0 %v2772
    %2850 = vmatprep.subr.mxu0 0.0
    %2851 = vmatpush2.msra.mxu0 0.0
    %2852 = vmatprep.subr.mxu0 0.0
    %2853 = vmatpush2.msra.mxu0 0.0
    %2854 = vmatprep.subr.mxu0 0.0
    %2855 = vmatpush2.msra.mxu0 0.0
    %2856 = vmatprep.subr.mxu0 0.0
    %2857 = vmatpush2.msra.mxu0 0.0
    %2858 = vmatprep.subr.mxu0 0.0
    %2859 = vmatpush2.msra.mxu0 0.0
    %2860 = vmatprep.subr.mxu0 0.0
    %2861 = vmatpush2.msra.mxu0 0.0
    %2862 = vmatprep.subr.mxu0 0.0
    %2863 = vmatpush2.msra.mxu0 0.0
    %2864 = vmatprep.subr.mxu0 0.0
    %2865 = vmatpush2.msra.mxu0 0.0
    %2866 = vmatprep.subr.mxu0 0.0
    %2867 = vmatpush2.msra.mxu0 0.0
    %2868 = vmatprep.subr.mxu0 0.0
    %2869 = vmatpush2.msra.mxu0 0.0
    %2870 = vmatprep.subr.mxu0 0.0
    %2871 = vmatpush2.msra.mxu0 0.0
    %2872 = vmatprep.subr.mxu0 0.0
    %2873 = vmatpush2.msra.mxu0 0.0
    %2874 = vmatprep.subr.mxu0 0.0
    %2875 = vmatpush2.msra.mxu0 0.0
    %2876 = vmatprep.subr.mxu0 0.0
    %2877 = vmatpush2.msra.mxu0 0.0
    %2878 = vmatprep.subr.mxu0 0.0
    %2879 = vmatpush2.msra.mxu0 0.0
    %2880 = vmatprep.subr.mxu0 0.0
    %2881 = vmatpush2.msra.mxu0 0.0
    %2882 = vmatprep.mubr.f32.mxu0 0.0
    %2883 = vmatmul.mubr.f32.gmra.mxu0 %v2814
    %v2884 = vpop.f32.mrf.mxu0
    %v2885 = vadd.f32 0.0, %v2884
    %v2886 = vpop.f32.mrf.mxu0
    %v2887 = vadd.f32 0.0, %v2886
    %2888 = vmatprep.mubr.f32.mxu0 0.0
    %2889 = vmatmul.mubr.f32.gmra.mxu0 %v2816
    %v2890 = vpop.f32.mrf.mxu0
    %v2891 = vadd.f32 0.0, %v2890
    %v2892 = vpop.f32.mrf.mxu0
    %v2893 = vadd.f32 0.0, %v2892
    %2894 = vdwg.mxu0
    %v2895 = vmax.f32 %v2885, %v2887
    %2896 = vmax.xlane.f32.xlu0 %v2895
    %v2897 = vpop.xlane.xlu0 %2896
    %v2898 = vmax.f32 %v2891, %v2893
    %2899 = vmax.xlane.f32.xlu0 %v2898
    %v2900 = vpop.xlane.xlu0 %2899
    %v2901 = vsub.f32 %v2885, %v2897
    %v2902 = vsub.f32 %v2887, %v2897
    %v2903 = vsub.f32 %v2891, %v2900
    %v2904 = vsub.f32 %v2893, %v2900
    %v2905 = vmul.f32 %v2901, 1.442695
    %v2906 = vpow.pop %v2905
    %v2907 = vmul.f32 %v2902, 1.442695
    %v2908 = vpow.pop %v2907
    %v2909 = vmul.f32 %v2903, 1.442695
    %v2910 = vpow.pop %v2909
    %v2911 = vmul.f32 %v2904, 1.442695
    %v2912 = vpow.pop %v2911
    %v2913 = vadd.f32 %v2906, %v2908
    %2914 = vadd.xlane.f32.xlu0 %v2913
    %v2915 = vpop.xlane.xlu0 %2914
    %v2916 = vadd.f32 %v2910, %v2912
    %2917 = vadd.xlane.f32.xlu0 %v2916
    %v2918 = vpop.xlane.xlu0 %2917
    %v2919 = vrcp.pop %v2915
    %v2920 = vrcp.pop %v2918
    %v2921 = vmul.f32 %v2906, %v2919
    %v2922 = vmul.f32 %v2908, %v2919
    %v2923 = vmul.f32 %v2910, %v2920
    %v2924 = vmul.f32 %v2912, %v2920
    %2925 = vmatprep.subr.mxu0 0.0
    %2926 = vmatpush1.xpose.msra.mxu0 0.0
    %2927 = vmatprep.subr.mxu0 0.0
    %2928 = vmatpush1.xpose.msra.mxu0 0.0
    %2929 = vmatprep.subr.mxu0 0.0
    %2930 = vmatpush1.xpose.msra.mxu0 0.0
    %2931 = vmatprep.subr.mxu0 0.0
    %2932 = vmatpush1.xpose.msra.mxu0 0.0
    %2933 = vmatprep.subr.mxu0 0.0
    %2934 = vmatpush1.xpose.msra.mxu0 0.0
    %2935 = vmatprep.subr.mxu0 0.0
    %2936 = vmatpush1.xpose.msra.mxu0 0.0
    %2937 = vmatprep.subr.mxu0 0.0
    %2938 = vmatpush1.xpose.msra.mxu0 0.0
    %2939 = vmatprep.subr.mxu0 0.0
    %2940 = vmatpush1.xpose.msra.mxu0 0.0
    %2941 = vmatprep.subr.mxu0 0.0
    %2942 = vmatpush1.xpose.msra.mxu0 0.0
    %2943 = vmatprep.subr.mxu0 0.0
    %2944 = vmatpush1.xpose.msra.mxu0 0.0
    %2945 = vmatprep.subr.mxu0 0.0
    %2946 = vmatpush1.xpose.msra.mxu0 0.0
    %2947 = vmatprep.subr.mxu0 0.0
    %2948 = vmatpush1.xpose.msra.mxu0 0.0
    %2949 = vmatprep.subr.mxu0 %v2808
    %2950 = vmatpush1.xpose.msra.mxu0 %v2806
    %2951 = vmatprep.subr.mxu0 %v2804
    %2952 = vmatpush1.xpose.msra.mxu0 %v2802
    %2953 = vmatprep.subr.mxu0 %v2798
    %2954 = vmatpush1.xpose.msra.mxu0 %v2796
    %2955 = vmatprep.subr.mxu0 %v2794
    %2956 = vmatpush1.xpose.msra.mxu0 %v2792
    %2957 = vmatprep.subr.mxu0 0.0
    %2958 = vmatpush2.xpose.msra.mxu0 0.0
    %2959 = vmatprep.subr.mxu0 0.0
    %2960 = vmatpush2.xpose.msra.mxu0 0.0
    %2961 = vmatprep.subr.mxu0 0.0
    %2962 = vmatpush2.xpose.msra.mxu0 0.0
    %2963 = vmatprep.subr.mxu0 0.0
    %2964 = vmatpush2.xpose.msra.mxu0 0.0
    %2965 = vmatprep.subr.mxu0 0.0
    %2966 = vmatpush2.xpose.msra.mxu0 0.0
    %2967 = vmatprep.subr.mxu0 0.0
    %2968 = vmatpush2.xpose.msra.mxu0 0.0
    %2969 = vmatprep.subr.mxu0 0.0
    %2970 = vmatpush2.xpose.msra.mxu0 0.0
    %2971 = vmatprep.subr.mxu0 0.0
    %2972 = vmatpush2.xpose.msra.mxu0 0.0
    %2973 = vmatprep.subr.mxu0 0.0
    %2974 = vmatpush2.xpose.msra.mxu0 0.0
    %2975 = vmatprep.subr.mxu0 0.0
    %2976 = vmatpush2.xpose.msra.mxu0 0.0
    %2977 = vmatprep.subr.mxu0 0.0
    %2978 = vmatpush2.xpose.msra.mxu0 0.0
    %2979 = vmatprep.subr.mxu0 0.0
    %2980 = vmatpush2.xpose.msra.mxu0 0.0
    %2981 = vmatprep.subr.mxu0 0.0
    %2982 = vmatpush2.xpose.msra.mxu0 0.0
    %2983 = vmatprep.subr.mxu0 0.0
    %2984 = vmatpush2.xpose.msra.mxu0 0.0
    %2985 = vmatprep.subr.mxu0 0.0
    %2986 = vmatpush2.xpose.msra.mxu0 0.0
    %2987 = vmatprep.subr.mxu0 0.0
    %2988 = vmatpush2.xpose.msra.mxu0 0.0
    %2989 = vmatprep.mubr.f32.mxu0 %v2922
    %2990 = vmatmul.mubr.f32.gmra.mxu0 %v2921
    %v2991 = vpop.f32.mrf.mxu0
    %v2992 = vadd.f32 0.0, %v2991
    %v2993 = vpop.f32.mrf.mxu0
    %2994 = vmatprep.mubr.f32.mxu0 %v2924
    %2995 = vmatmul.mubr.f32.gmra.mxu0 %v2923
    %v2996 = vpop.f32.mrf.mxu0
    %v2997 = vadd.f32 0.0, %v2996
    %v2998 = vpop.f32.mrf.mxu0
    %2999 = vdwg.mxu0
    %3000 = vmatprep.subr.bf16.mxu0 0
    %3001 = vmatpush1.bf16.msra.mxu0 0
    %3002 = vmatprep.subr.bf16.mxu0 0
    %3003 = vmatpush1.bf16.msra.mxu0 0
    %3004 = vmatprep.subr.bf16.mxu0 0
    %3005 = vmatpush1.bf16.msra.mxu0 0
    %3006 = vmatprep.subr.bf16.mxu0 0
    %3007 = vmatpush1.bf16.msra.mxu0 0
    %3008 = vmatprep.subr.bf16.mxu0 0
    %3009 = vmatpush1.bf16.msra.mxu0 0
    %3010 = vmatprep.subr.bf16.mxu0 0
    %3011 = vmatpush1.bf16.msra.mxu0 0
    %3012 = vmatprep.subr.bf16.mxu0 0
    %3013 = vmatpush1.bf16.msra.mxu0 0
    %3014 = vmatprep.subr.bf16.mxu0 %v532
    %3015 = vmatpush1.bf16.msra.mxu0 %v529
    %3016 = vmatprep.subr.bf16.mxu0 0
    %3017 = vmatpush2.bf16.msra.mxu0 0
    %3018 = vmatprep.subr.bf16.mxu0 0
    %3019 = vmatpush2.bf16.msra.mxu0 0
    %3020 = vmatprep.subr.bf16.mxu0 0
    %3021 = vmatpush2.bf16.msra.mxu0 0
    %3022 = vmatprep.subr.bf16.mxu0 0
    %3023 = vmatpush2.bf16.msra.mxu0 0
    %3024 = vmatprep.subr.bf16.mxu0 0
    %3025 = vmatpush2.bf16.msra.mxu0 0
    %3026 = vmatprep.subr.bf16.mxu0 0
    %3027 = vmatpush2.bf16.msra.mxu0 0
    %3028 = vmatprep.subr.bf16.mxu0 0
    %3029 = vmatpush2.bf16.msra.mxu0 0
    %3030 = vmatprep.subr.bf16.mxu0 0
    %3031 = vmatpush2.bf16.msra.mxu0 0
    %3032 = vmatprep.mubr.bf16.mxu0 0
    %3033 = vmatmul.mubr.bf16.gmra.mxu0 %v2726
    %v3034 = vpop.f32.mrf.mxu0
    %v3035 = vadd.f32 %v2689, %v3034
    %v3036 = vpop.f32.mrf.mxu0
    %v3037 = vadd.f32 %v2690, %v3036
    %v3038 = vpop.f32.mrf.mxu0
    %v3039 = vadd.f32 %v2691, %v3038
    %v3040 = vpop.f32.mrf.mxu0
    %v3041 = vadd.f32 %v2692, %v3040
    %3042 = vmatprep.mubr.bf16.mxu0 0
    %3043 = vmatmul.mubr.bf16.gmra.mxu0 %v2729
    %v3044 = vpop.f32.mrf.mxu0
    %v3045 = vadd.f32 %v2693, %v3044
    %v3046 = vpop.f32.mrf.mxu0
    %v3047 = vadd.f32 %v2694, %v3046
    %v3048 = vpop.f32.mrf.mxu0
    %v3049 = vadd.f32 %v2695, %v3048
    %v3050 = vpop.f32.mrf.mxu0
    %v3051 = vadd.f32 %v2696, %v3050
    %3052 = vmatprep.mubr.bf16.mxu0 0
    %3053 = vmatmul.mubr.bf16.gmra.mxu0 %v2732
    %v3054 = vpop.f32.mrf.mxu0
    %v3055 = vadd.f32 %v2697, %v3054
    %v3056 = vpop.f32.mrf.mxu0
    %v3057 = vadd.f32 %v2698, %v3056
    %v3058 = vpop.f32.mrf.mxu0
    %v3059 = vadd.f32 %v2699, %v3058
    %v3060 = vpop.f32.mrf.mxu0
    %v3061 = vadd.f32 %v2700, %v3060
    %3062 = vmatprep.mubr.bf16.mxu0 0
    %3063 = vmatmul.mubr.bf16.gmra.mxu0 %v2735
    %v3064 = vpop.f32.mrf.mxu0
    %v3065 = vadd.f32 %v2701, %v3064
    %v3066 = vpop.f32.mrf.mxu0
    %v3067 = vadd.f32 %v2702, %v3066
    %v3068 = vpop.f32.mrf.mxu0
    %v3069 = vadd.f32 %v2703, %v3068
    %v3070 = vpop.f32.mrf.mxu0
    %v3071 = vadd.f32 %v2704, %v3070
    %3072 = vdwg.mxu0
    %3073 = vrot.lane.b32.xlu0 %v139, 64
    %v3074 = vpop.permute.xlu0 %3073
    %3075 = vrot.lane.b32.xlu0 %v142, 64
    %v3076 = vpop.permute.xlu0 %3075
    %v3077 = vsel %vm83, %v3074, 0
    %v3079 = vsel %vm83, %v3076, 0
    %3081 = vmatprep.subr.mxu0 0.0
    %3082 = vmatpush1.msra.mxu0 0.0
    %3083 = vmatprep.subr.mxu0 0.0
    %3084 = vmatpush1.msra.mxu0 0.0
    %3085 = vmatprep.subr.mxu0 0.0
    %3086 = vmatpush1.msra.mxu0 0.0
    %3087 = vmatprep.subr.mxu0 0.0
    %3088 = vmatpush1.msra.mxu0 0.0
    %3089 = vmatprep.subr.mxu0 0.0
    %3090 = vmatpush1.msra.mxu0 0.0
    %3091 = vmatprep.subr.mxu0 0.0
    %3092 = vmatpush1.msra.mxu0 0.0
    %3093 = vmatprep.subr.mxu0 0.0
    %3094 = vmatpush1.msra.mxu0 0.0
    %3095 = vmatprep.subr.mxu0 0.0
    %3096 = vmatpush1.msra.mxu0 0.0
    %3097 = vmatprep.subr.mxu0 0.0
    %3098 = vmatpush1.msra.mxu0 0.0
    %3099 = vmatprep.subr.mxu0 0.0
    %3100 = vmatpush1.msra.mxu0 0.0
    %3101 = vmatprep.subr.mxu0 0.0
    %3102 = vmatpush1.msra.mxu0 0.0
    %3103 = vmatprep.subr.mxu0 0.0
    %3104 = vmatpush1.msra.mxu0 0.0
    %3105 = vmatprep.subr.mxu0 %v3051
    %3106 = vmatpush1.msra.mxu0 %v3049
    %3107 = vmatprep.subr.mxu0 %v3047
    %3108 = vmatpush1.msra.mxu0 %v3045
    %3109 = vmatprep.subr.mxu0 %v3041
    %3110 = vmatpush1.msra.mxu0 %v3039
    %3111 = vmatprep.subr.mxu0 %v3037
    %3112 = vmatpush1.msra.mxu0 %v3035
    %3113 = vmatprep.subr.mxu0 0.0
    %3114 = vmatpush2.msra.mxu0 0.0
    %3115 = vmatprep.subr.mxu0 0.0
    %3116 = vmatpush2.msra.mxu0 0.0
    %3117 = vmatprep.subr.mxu0 0.0
    %3118 = vmatpush2.msra.mxu0 0.0
    %3119 = vmatprep.subr.mxu0 0.0
    %3120 = vmatpush2.msra.mxu0 0.0
    %3121 = vmatprep.subr.mxu0 0.0
    %3122 = vmatpush2.msra.mxu0 0.0
    %3123 = vmatprep.subr.mxu0 0.0
    %3124 = vmatpush2.msra.mxu0 0.0
    %3125 = vmatprep.subr.mxu0 0.0
    %3126 = vmatpush2.msra.mxu0 0.0
    %3127 = vmatprep.subr.mxu0 0.0
    %3128 = vmatpush2.msra.mxu0 0.0
    %3129 = vmatprep.subr.mxu0 0.0
    %3130 = vmatpush2.msra.mxu0 0.0
    %3131 = vmatprep.subr.mxu0 0.0
    %3132 = vmatpush2.msra.mxu0 0.0
    %3133 = vmatprep.subr.mxu0 0.0
    %3134 = vmatpush2.msra.mxu0 0.0
    %3135 = vmatprep.subr.mxu0 0.0
    %3136 = vmatpush2.msra.mxu0 0.0
    %3137 = vmatprep.subr.mxu0 0.0
    %3138 = vmatpush2.msra.mxu0 0.0
    %3139 = vmatprep.subr.mxu0 0.0
    %3140 = vmatpush2.msra.mxu0 0.0
    %3141 = vmatprep.subr.mxu0 0.0
    %3142 = vmatpush2.msra.mxu0 0.0
    %3143 = vmatprep.subr.mxu0 0.0
    %3144 = vmatpush2.msra.mxu0 0.0
    %3145 = vmatprep.mubr.f32.mxu0 0.0
    %3146 = vmatmul.mubr.f32.gmra.mxu0 %v3077
    %v3147 = vpop.f32.mrf.mxu0
    %v3148 = vadd.f32 0.0, %v3147
    %v3149 = vpop.f32.mrf.mxu0
    %v3150 = vadd.f32 0.0, %v3149
    %3151 = vmatprep.mubr.f32.mxu0 0.0
    %3152 = vmatmul.mubr.f32.gmra.mxu0 %v3079
    %v3153 = vpop.f32.mrf.mxu0
    %v3154 = vadd.f32 0.0, %v3153
    %v3155 = vpop.f32.mrf.mxu0
    %v3156 = vadd.f32 0.0, %v3155
    %3157 = vdwg.mxu0
    %v3158 = vmax.f32 %v3148, %v3150
    %3159 = vmax.xlane.f32.xlu0 %v3158
    %v3160 = vpop.xlane.xlu0 %3159
    %v3161 = vmax.f32 %v3154, %v3156
    %3162 = vmax.xlane.f32.xlu0 %v3161
    %v3163 = vpop.xlane.xlu0 %3162
    %v3164 = vsub.f32 %v3148, %v3160
    %v3165 = vsub.f32 %v3150, %v3160
    %v3166 = vsub.f32 %v3154, %v3163
    %v3167 = vsub.f32 %v3156, %v3163
    %v3168 = vmul.f32 %v3164, 1.442695
    %v3169 = vpow.pop %v3168
    %v3170 = vmul.f32 %v3165, 1.442695
    %v3171 = vpow.pop %v3170
    %v3172 = vmul.f32 %v3166, 1.442695
    %v3173 = vpow.pop %v3172
    %v3174 = vmul.f32 %v3167, 1.442695
    %v3175 = vpow.pop %v3174
    %v3176 = vadd.f32 %v3169, %v3171
    %3177 = vadd.xlane.f32.xlu0 %v3176
    %v3178 = vpop.xlane.xlu0 %3177
    %v3179 = vadd.f32 %v3173, %v3175
    %3180 = vadd.xlane.f32.xlu0 %v3179
    %v3181 = vpop.xlane.xlu0 %3180
    %v3182 = vrcp.pop %v3178
    %v3183 = vrcp.pop %v3181
    %v3184 = vmul.f32 %v3169, %v3182
    %v3185 = vmul.f32 %v3171, %v3182
    %v3186 = vmul.f32 %v3173, %v3183
    %v3187 = vmul.f32 %v3175, %v3183
    %3188 = vmatprep.subr.mxu0 0.0
    %3189 = vmatpush1.xpose.msra.mxu0 0.0
    %3190 = vmatprep.subr.mxu0 0.0
    %3191 = vmatpush1.xpose.msra.mxu0 0.0
    %3192 = vmatprep.subr.mxu0 0.0
    %3193 = vmatpush1.xpose.msra.mxu0 0.0
    %3194 = vmatprep.subr.mxu0 0.0
    %3195 = vmatpush1.xpose.msra.mxu0 0.0
    %3196 = vmatprep.subr.mxu0 0.0
    %3197 = vmatpush1.xpose.msra.mxu0 0.0
    %3198 = vmatprep.subr.mxu0 0.0
    %3199 = vmatpush1.xpose.msra.mxu0 0.0
    %3200 = vmatprep.subr.mxu0 0.0
    %3201 = vmatpush1.xpose.msra.mxu0 0.0
    %3202 = vmatprep.subr.mxu0 0.0
    %3203 = vmatpush1.xpose.msra.mxu0 0.0
    %3204 = vmatprep.subr.mxu0 0.0
    %3205 = vmatpush1.xpose.msra.mxu0 0.0
    %3206 = vmatprep.subr.mxu0 0.0
    %3207 = vmatpush1.xpose.msra.mxu0 0.0
    %3208 = vmatprep.subr.mxu0 0.0
    %3209 = vmatpush1.xpose.msra.mxu0 0.0
    %3210 = vmatprep.subr.mxu0 0.0
    %3211 = vmatpush1.xpose.msra.mxu0 0.0
    %3212 = vmatprep.subr.mxu0 %v3071
    %3213 = vmatpush1.xpose.msra.mxu0 %v3069
    %3214 = vmatprep.subr.mxu0 %v3067
    %3215 = vmatpush1.xpose.msra.mxu0 %v3065
    %3216 = vmatprep.subr.mxu0 %v3061
    %3217 = vmatpush1.xpose.msra.mxu0 %v3059
    %3218 = vmatprep.subr.mxu0 %v3057
    %3219 = vmatpush1.xpose.msra.mxu0 %v3055
    %3220 = vmatprep.subr.mxu0 0.0
    %3221 = vmatpush2.xpose.msra.mxu0 0.0
    %3222 = vmatprep.subr.mxu0 0.0
    %3223 = vmatpush2.xpose.msra.mxu0 0.0
    %3224 = vmatprep.subr.mxu0 0.0
    %3225 = vmatpush2.xpose.msra.mxu0 0.0
    %3226 = vmatprep.subr.mxu0 0.0
    %3227 = vmatpush2.xpose.msra.mxu0 0.0
    %3228 = vmatprep.subr.mxu0 0.0
    %3229 = vmatpush2.xpose.msra.mxu0 0.0
    %3230 = vmatprep.subr.mxu0 0.0
    %3231 = vmatpush2.xpose.msra.mxu0 0.0
    %3232 = vmatprep.subr.mxu0 0.0
    %3233 = vmatpush2.xpose.msra.mxu0 0.0
    %3234 = vmatprep.subr.mxu0 0.0
    %3235 = vmatpush2.xpose.msra.mxu0 0.0
    %3236 = vmatprep.subr.mxu0 0.0
    %3237 = vmatpush2.xpose.msra.mxu0 0.0
    %3238 = vmatprep.subr.mxu0 0.0
    %3239 = vmatpush2.xpose.msra.mxu0 0.0
    %3240 = vmatprep.subr.mxu0 0.0
    %3241 = vmatpush2.xpose.msra.mxu0 0.0
    %3242 = vmatprep.subr.mxu0 0.0
    %3243 = vmatpush2.xpose.msra.mxu0 0.0
    %3244 = vmatprep.subr.mxu0 0.0
    %3245 = vmatpush2.xpose.msra.mxu0 0.0
    %3246 = vmatprep.subr.mxu0 0.0
    %3247 = vmatpush2.xpose.msra.mxu0 0.0
    %3248 = vmatprep.subr.mxu0 0.0
    %3249 = vmatpush2.xpose.msra.mxu0 0.0
    %3250 = vmatprep.subr.mxu0 0.0
    %3251 = vmatpush2.xpose.msra.mxu0 0.0
    %3252 = vmatprep.mubr.f32.mxu0 %v3185
    %3253 = vmatmul.mubr.f32.gmra.mxu0 %v3184
    %v3254 = vpop.f32.mrf.mxu0
    %v3255 = vadd.f32 0.0, %v3254
    %v3256 = vpop.f32.mrf.mxu0
    %3257 = vmatprep.mubr.f32.mxu0 %v3187
    %3258 = vmatmul.mubr.f32.gmra.mxu0 %v3186
    %v3259 = vpop.f32.mrf.mxu0
    %v3260 = vadd.f32 0.0, %v3259
    %v3261 = vpop.f32.mrf.mxu0
    %3262 = vdwg.mxu0
    %3263 = vmatprep.subr.bf16.mxu0 0
    %3264 = vmatpush1.bf16.msra.mxu0 0
    %3265 = vmatprep.subr.bf16.mxu0 0
    %3266 = vmatpush1.bf16.msra.mxu0 0
    %3267 = vmatprep.subr.bf16.mxu0 0
    %3268 = vmatpush1.bf16.msra.mxu0 0
    %3269 = vmatprep.subr.bf16.mxu0 0
    %3270 = vmatpush1.bf16.msra.mxu0 0
    %3271 = vmatprep.subr.bf16.mxu0 0
    %3272 = vmatpush1.bf16.msra.mxu0 0
    %3273 = vmatprep.subr.bf16.mxu0 0
    %3274 = vmatpush1.bf16.msra.mxu0 0
    %3275 = vmatprep.subr.bf16.mxu0 0
    %3276 = vmatpush1.bf16.msra.mxu0 0
    %3277 = vmatprep.subr.bf16.mxu0 %v808
    %3278 = vmatpush1.bf16.msra.mxu0 %v805
    %3279 = vmatprep.subr.bf16.mxu0 0
    %3280 = vmatpush2.bf16.msra.mxu0 0
    %3281 = vmatprep.subr.bf16.mxu0 0
    %3282 = vmatpush2.bf16.msra.mxu0 0
    %3283 = vmatprep.subr.bf16.mxu0 0
    %3284 = vmatpush2.bf16.msra.mxu0 0
    %3285 = vmatprep.subr.bf16.mxu0 0
    %3286 = vmatpush2.bf16.msra.mxu0 0
    %3287 = vmatprep.subr.bf16.mxu0 0
    %3288 = vmatpush2.bf16.msra.mxu0 0
    %3289 = vmatprep.subr.bf16.mxu0 0
    %3290 = vmatpush2.bf16.msra.mxu0 0
    %3291 = vmatprep.subr.bf16.mxu0 0
    %3292 = vmatpush2.bf16.msra.mxu0 0
    %3293 = vmatprep.subr.bf16.mxu0 0
    %3294 = vmatpush2.bf16.msra.mxu0 0
    %3295 = vmatprep.mubr.bf16.mxu0 0
    %3296 = vmatmul.mubr.bf16.gmra.mxu0 %v2726
    %v3297 = vpop.f32.mrf.mxu0
    %v3298 = vadd.f32 %v2689, %v3297
    %v3299 = vpop.f32.mrf.mxu0
    %v3300 = vadd.f32 %v2690, %v3299
    %v3301 = vpop.f32.mrf.mxu0
    %v3302 = vadd.f32 %v2691, %v3301
    %v3303 = vpop.f32.mrf.mxu0
    %v3304 = vadd.f32 %v2692, %v3303
    %3305 = vmatprep.mubr.bf16.mxu0 0
    %3306 = vmatmul.mubr.bf16.gmra.mxu0 %v2729
    %v3307 = vpop.f32.mrf.mxu0
    %v3308 = vadd.f32 %v2693, %v3307
    %v3309 = vpop.f32.mrf.mxu0
    %v3310 = vadd.f32 %v2694, %v3309
    %v3311 = vpop.f32.mrf.mxu0
    %v3312 = vadd.f32 %v2695, %v3311
    %v3313 = vpop.f32.mrf.mxu0
    %v3314 = vadd.f32 %v2696, %v3313
    %3315 = vmatprep.mubr.bf16.mxu0 0
    %3316 = vmatmul.mubr.bf16.gmra.mxu0 %v2732
    %v3317 = vpop.f32.mrf.mxu0
    %v3318 = vadd.f32 %v2697, %v3317
    %v3319 = vpop.f32.mrf.mxu0
    %v3320 = vadd.f32 %v2698, %v3319
    %v3321 = vpop.f32.mrf.mxu0
    %v3322 = vadd.f32 %v2699, %v3321
    %v3323 = vpop.f32.mrf.mxu0
    %v3324 = vadd.f32 %v2700, %v3323
    %3325 = vmatprep.mubr.bf16.mxu0 0
    %3326 = vmatmul.mubr.bf16.gmra.mxu0 %v2735
    %v3327 = vpop.f32.mrf.mxu0
    %v3328 = vadd.f32 %v2701, %v3327
    %v3329 = vpop.f32.mrf.mxu0
    %v3330 = vadd.f32 %v2702, %v3329
    %v3331 = vpop.f32.mrf.mxu0
    %v3332 = vadd.f32 %v2703, %v3331
    %v3333 = vpop.f32.mrf.mxu0
    %v3334 = vadd.f32 %v2704, %v3333
    %3335 = vdwg.mxu0
    %3336 = vrot.lane.b32.xlu0 %v147, 64
    %v3337 = vpop.permute.xlu0 %3336
    %3338 = vrot.lane.b32.xlu0 %v150, 64
    %v3339 = vpop.permute.xlu0 %3338
    %v3340 = vsel %vm83, %v3337, 0
    %v3342 = vsel %vm83, %v3339, 0
    %3344 = vmatprep.subr.mxu0 0.0
    %3345 = vmatpush1.msra.mxu0 0.0
    %3346 = vmatprep.subr.mxu0 0.0
    %3347 = vmatpush1.msra.mxu0 0.0
    %3348 = vmatprep.subr.mxu0 0.0
    %3349 = vmatpush1.msra.mxu0 0.0
    %3350 = vmatprep.subr.mxu0 0.0
    %3351 = vmatpush1.msra.mxu0 0.0
    %3352 = vmatprep.subr.mxu0 0.0
    %3353 = vmatpush1.msra.mxu0 0.0
    %3354 = vmatprep.subr.mxu0 0.0
    %3355 = vmatpush1.msra.mxu0 0.0
    %3356 = vmatprep.subr.mxu0 0.0
    %3357 = vmatpush1.msra.mxu0 0.0
    %3358 = vmatprep.subr.mxu0 0.0
    %3359 = vmatpush1.msra.mxu0 0.0
    %3360 = vmatprep.subr.mxu0 0.0
    %3361 = vmatpush1.msra.mxu0 0.0
    %3362 = vmatprep.subr.mxu0 0.0
    %3363 = vmatpush1.msra.mxu0 0.0
    %3364 = vmatprep.subr.mxu0 0.0
    %3365 = vmatpush1.msra.mxu0 0.0
    %3366 = vmatprep.subr.mxu0 0.0
    %3367 = vmatpush1.msra.mxu0 0.0
    %3368 = vmatprep.subr.mxu0 %v3314
    %3369 = vmatpush1.msra.mxu0 %v3312
    %3370 = vmatprep.subr.mxu0 %v3310
    %3371 = vmatpush1.msra.mxu0 %v3308
    %3372 = vmatprep.subr.mxu0 %v3304
    %3373 = vmatpush1.msra.mxu0 %v3302
    %3374 = vmatprep.subr.mxu0 %v3300
    %3375 = vmatpush1.msra.mxu0 %v3298
    %3376 = vmatprep.subr.mxu0 0.0
    %3377 = vmatpush2.msra.mxu0 0.0
    %3378 = vmatprep.subr.mxu0 0.0
    %3379 = vmatpush2.msra.mxu0 0.0
    %3380 = vmatprep.subr.mxu0 0.0
    %3381 = vmatpush2.msra.mxu0 0.0
    %3382 = vmatprep.subr.mxu0 0.0
    %3383 = vmatpush2.msra.mxu0 0.0
    %3384 = vmatprep.subr.mxu0 0.0
    %3385 = vmatpush2.msra.mxu0 0.0
    %3386 = vmatprep.subr.mxu0 0.0
    %3387 = vmatpush2.msra.mxu0 0.0
    %3388 = vmatprep.subr.mxu0 0.0
    %3389 = vmatpush2.msra.mxu0 0.0
    %3390 = vmatprep.subr.mxu0 0.0
    %3391 = vmatpush2.msra.mxu0 0.0
    %3392 = vmatprep.subr.mxu0 0.0
    %3393 = vmatpush2.msra.mxu0 0.0
    %3394 = vmatprep.subr.mxu0 0.0
    %3395 = vmatpush2.msra.mxu0 0.0
    %3396 = vmatprep.subr.mxu0 0.0
    %3397 = vmatpush2.msra.mxu0 0.0
    %3398 = vmatprep.subr.mxu0 0.0
    %3399 = vmatpush2.msra.mxu0 0.0
    %3400 = vmatprep.subr.mxu0 0.0
    %3401 = vmatpush2.msra.mxu0 0.0
    %3402 = vmatprep.subr.mxu0 0.0
    %3403 = vmatpush2.msra.mxu0 0.0
    %3404 = vmatprep.subr.mxu0 0.0
    %3405 = vmatpush2.msra.mxu0 0.0
    %3406 = vmatprep.subr.mxu0 0.0
    %3407 = vmatpush2.msra.mxu0 0.0
    %3408 = vmatprep.mubr.f32.mxu0 0.0
    %3409 = vmatmul.mubr.f32.gmra.mxu0 %v3340
    %v3410 = vpop.f32.mrf.mxu0
    %v3411 = vadd.f32 0.0, %v3410
    %v3412 = vpop.f32.mrf.mxu0
    %v3413 = vadd.f32 0.0, %v3412
    %3414 = vmatprep.mubr.f32.mxu0 0.0
    %3415 = vmatmul.mubr.f32.gmra.mxu0 %v3342
    %v3416 = vpop.f32.mrf.mxu0
    %v3417 = vadd.f32 0.0, %v3416
    %v3418 = vpop.f32.mrf.mxu0
    %v3419 = vadd.f32 0.0, %v3418
    %3420 = vdwg.mxu0
    %v3421 = vmax.f32 %v3411, %v3413
    %3422 = vmax.xlane.f32.xlu0 %v3421
    %v3423 = vpop.xlane.xlu0 %3422
    %v3424 = vmax.f32 %v3417, %v3419
    %3425 = vmax.xlane.f32.xlu0 %v3424
    %v3426 = vpop.xlane.xlu0 %3425
    %v3427 = vsub.f32 %v3411, %v3423
    %v3428 = vsub.f32 %v3413, %v3423
    %v3429 = vsub.f32 %v3417, %v3426
    %v3430 = vsub.f32 %v3419, %v3426
    %v3431 = vmul.f32 %v3427, 1.442695
    %v3432 = vpow.pop %v3431
    %v3433 = vmul.f32 %v3428, 1.442695
    %v3434 = vpow.pop %v3433
    %v3435 = vmul.f32 %v3429, 1.442695
    %v3436 = vpow.pop %v3435
    %v3437 = vmul.f32 %v3430, 1.442695
    %v3438 = vpow.pop %v3437
    %v3439 = vadd.f32 %v3432, %v3434
    %3440 = vadd.xlane.f32.xlu0 %v3439
    %v3441 = vpop.xlane.xlu0 %3440
    %v3442 = vadd.f32 %v3436, %v3438
    %3443 = vadd.xlane.f32.xlu0 %v3442
    %v3444 = vpop.xlane.xlu0 %3443
    %v3445 = vrcp.pop %v3441
    %v3446 = vrcp.pop %v3444
    %v3447 = vmul.f32 %v3432, %v3445
    %v3448 = vmul.f32 %v3434, %v3445
    %v3449 = vmul.f32 %v3436, %v3446
    %v3450 = vmul.f32 %v3438, %v3446
    %3451 = vmatprep.subr.mxu0 0.0
    %3452 = vmatpush1.xpose.msra.mxu0 0.0
    %3453 = vmatprep.subr.mxu0 0.0
    %3454 = vmatpush1.xpose.msra.mxu0 0.0
    %3455 = vmatprep.subr.mxu0 0.0
    %3456 = vmatpush1.xpose.msra.mxu0 0.0
    %3457 = vmatprep.subr.mxu0 0.0
    %3458 = vmatpush1.xpose.msra.mxu0 0.0
    %3459 = vmatprep.subr.mxu0 0.0
    %3460 = vmatpush1.xpose.msra.mxu0 0.0
    %3461 = vmatprep.subr.mxu0 0.0
    %3462 = vmatpush1.xpose.msra.mxu0 0.0
    %3463 = vmatprep.subr.mxu0 0.0
    %3464 = vmatpush1.xpose.msra.mxu0 0.0
    %3465 = vmatprep.subr.mxu0 0.0
    %3466 = vmatpush1.xpose.msra.mxu0 0.0
    %3467 = vmatprep.subr.mxu0 0.0
    %3468 = vmatpush1.xpose.msra.mxu0 0.0
    %3469 = vmatprep.subr.mxu0 0.0
    %3470 = vmatpush1.xpose.msra.mxu0 0.0
    %3471 = vmatprep.subr.mxu0 0.0
    %3472 = vmatpush1.xpose.msra.mxu0 0.0
    %3473 = vmatprep.subr.mxu0 0.0
    %3474 = vmatpush1.xpose.msra.mxu0 0.0
    %3475 = vmatprep.subr.mxu0 %v3334
    %3476 = vmatpush1.xpose.msra.mxu0 %v3332
    %3477 = vmatprep.subr.mxu0 %v3330
    %3478 = vmatpush1.xpose.msra.mxu0 %v3328
    %3479 = vmatprep.subr.mxu0 %v3324
    %3480 = vmatpush1.xpose.msra.mxu0 %v3322
    %3481 = vmatprep.subr.mxu0 %v3320
    %3482 = vmatpush1.xpose.msra.mxu0 %v3318
    %3483 = vmatprep.subr.mxu0 0.0
    %3484 = vmatpush2.xpose.msra.mxu0 0.0
    %3485 = vmatprep.subr.mxu0 0.0
    %3486 = vmatpush2.xpose.msra.mxu0 0.0
    %3487 = vmatprep.subr.mxu0 0.0
    %3488 = vmatpush2.xpose.msra.mxu0 0.0
    %3489 = vmatprep.subr.mxu0 0.0
    %3490 = vmatpush2.xpose.msra.mxu0 0.0
    %3491 = vmatprep.subr.mxu0 0.0
    %3492 = vmatpush2.xpose.msra.mxu0 0.0
    %3493 = vmatprep.subr.mxu0 0.0
    %3494 = vmatpush2.xpose.msra.mxu0 0.0
    %3495 = vmatprep.subr.mxu0 0.0
    %3496 = vmatpush2.xpose.msra.mxu0 0.0
    %3497 = vmatprep.subr.mxu0 0.0
    %3498 = vmatpush2.xpose.msra.mxu0 0.0
    %3499 = vmatprep.subr.mxu0 0.0
    %3500 = vmatpush2.xpose.msra.mxu0 0.0
    %3501 = vmatprep.subr.mxu0 0.0
    %3502 = vmatpush2.xpose.msra.mxu0 0.0
    %3503 = vmatprep.subr.mxu0 0.0
    %3504 = vmatpush2.xpose.msra.mxu0 0.0
    %3505 = vmatprep.subr.mxu0 0.0
    %3506 = vmatpush2.xpose.msra.mxu0 0.0
    %3507 = vmatprep.subr.mxu0 0.0
    %3508 = vmatpush2.xpose.msra.mxu0 0.0
    %3509 = vmatprep.subr.mxu0 0.0
    %3510 = vmatpush2.xpose.msra.mxu0 0.0
    %3511 = vmatprep.subr.mxu0 0.0
    %3512 = vmatpush2.xpose.msra.mxu0 0.0
    %3513 = vmatprep.subr.mxu0 0.0
    %3514 = vmatpush2.xpose.msra.mxu0 0.0
    %3515 = vmatprep.mubr.f32.mxu0 %v3448
    %3516 = vmatmul.mubr.f32.gmra.mxu0 %v3447
    %v3517 = vpop.f32.mrf.mxu0
    %v3518 = vadd.f32 0.0, %v3517
    %v3519 = vpop.f32.mrf.mxu0
    %3520 = vmatprep.mubr.f32.mxu0 %v3450
    %3521 = vmatmul.mubr.f32.gmra.mxu0 %v3449
    %v3522 = vpop.f32.mrf.mxu0
    %v3523 = vadd.f32 0.0, %v3522
    %v3524 = vpop.f32.mrf.mxu0
    %3525 = vdwg.mxu0
    %3526 = vmatprep.subr.bf16.mxu0 0
    %3527 = vmatpush1.bf16.msra.mxu0 0
    %3528 = vmatprep.subr.bf16.mxu0 0
    %3529 = vmatpush1.bf16.msra.mxu0 0
    %3530 = vmatprep.subr.bf16.mxu0 0
    %3531 = vmatpush1.bf16.msra.mxu0 0
    %3532 = vmatprep.subr.bf16.mxu0 0
    %3533 = vmatpush1.bf16.msra.mxu0 0
    %3534 = vmatprep.subr.bf16.mxu0 0
    %3535 = vmatpush1.bf16.msra.mxu0 0
    %3536 = vmatprep.subr.bf16.mxu0 0
    %3537 = vmatpush1.bf16.msra.mxu0 0
    %3538 = vmatprep.subr.bf16.mxu0 0
    %3539 = vmatpush1.bf16.msra.mxu0 0
    %3540 = vmatprep.subr.bf16.mxu0 %v1084
    %3541 = vmatpush1.bf16.msra.mxu0 %v1081
    %3542 = vmatprep.subr.bf16.mxu0 0
    %3543 = vmatpush2.bf16.msra.mxu0 0
    %3544 = vmatprep.subr.bf16.mxu0 0
    %3545 = vmatpush2.bf16.msra.mxu0 0
    %3546 = vmatprep.subr.bf16.mxu0 0
    %3547 = vmatpush2.bf16.msra.mxu0 0
    %3548 = vmatprep.subr.bf16.mxu0 0
    %3549 = vmatpush2.bf16.msra.mxu0 0
    %3550 = vmatprep.subr.bf16.mxu0 0
    %3551 = vmatpush2.bf16.msra.mxu0 0
    %3552 = vmatprep.subr.bf16.mxu0 0
    %3553 = vmatpush2.bf16.msra.mxu0 0
    %3554 = vmatprep.subr.bf16.mxu0 0
    %3555 = vmatpush2.bf16.msra.mxu0 0
    %3556 = vmatprep.subr.bf16.mxu0 0
    %3557 = vmatpush2.bf16.msra.mxu0 0
    %3558 = vmatprep.mubr.bf16.mxu0 0
    %3559 = vmatmul.mubr.bf16.gmra.mxu0 %v2726
    %v3560 = vpop.f32.mrf.mxu0
    %v3561 = vadd.f32 %v2689, %v3560
    %v3562 = vpop.f32.mrf.mxu0
    %v3563 = vadd.f32 %v2690, %v3562
    %v3564 = vpop.f32.mrf.mxu0
    %v3565 = vadd.f32 %v2691, %v3564
    %v3566 = vpop.f32.mrf.mxu0
    %v3567 = vadd.f32 %v2692, %v3566
    %3568 = vmatprep.mubr.bf16.mxu0 0
    %3569 = vmatmul.mubr.bf16.gmra.mxu0 %v2729
    %v3570 = vpop.f32.mrf.mxu0
    %v3571 = vadd.f32 %v2693, %v3570
    %v3572 = vpop.f32.mrf.mxu0
    %v3573 = vadd.f32 %v2694, %v3572
    %v3574 = vpop.f32.mrf.mxu0
    %v3575 = vadd.f32 %v2695, %v3574
    %v3576 = vpop.f32.mrf.mxu0
    %v3577 = vadd.f32 %v2696, %v3576
    %3578 = vmatprep.mubr.bf16.mxu0 0
    %3579 = vmatmul.mubr.bf16.gmra.mxu0 %v2732
    %v3580 = vpop.f32.mrf.mxu0
    %v3581 = vadd.f32 %v2697, %v3580
    %v3582 = vpop.f32.mrf.mxu0
    %v3583 = vadd.f32 %v2698, %v3582
    %v3584 = vpop.f32.mrf.mxu0
    %v3585 = vadd.f32 %v2699, %v3584
    %v3586 = vpop.f32.mrf.mxu0
    %v3587 = vadd.f32 %v2700, %v3586
    %3588 = vmatprep.mubr.bf16.mxu0 0
    %3589 = vmatmul.mubr.bf16.gmra.mxu0 %v2735
    %v3590 = vpop.f32.mrf.mxu0
    %v3591 = vadd.f32 %v2701, %v3590
    %v3592 = vpop.f32.mrf.mxu0
    %v3593 = vadd.f32 %v2702, %v3592
    %v3594 = vpop.f32.mrf.mxu0
    %v3595 = vadd.f32 %v2703, %v3594
    %v3596 = vpop.f32.mrf.mxu0
    %v3597 = vadd.f32 %v2704, %v3596
    %3598 = vdwg.mxu0
    %3599 = vrot.lane.b32.xlu0 %v155, 64
    %v3600 = vpop.permute.xlu0 %3599
    %3601 = vrot.lane.b32.xlu0 %v158, 64
    %v3602 = vpop.permute.xlu0 %3601
    %v3603 = vsel %vm83, %v3600, 0
    %v3605 = vsel %vm83, %v3602, 0
    %3607 = vmatprep.subr.mxu0 0.0
    %3608 = vmatpush1.msra.mxu0 0.0
    %3609 = vmatprep.subr.mxu0 0.0
    %3610 = vmatpush1.msra.mxu0 0.0
    %3611 = vmatprep.subr.mxu0 0.0
    %3612 = vmatpush1.msra.mxu0 0.0
    %3613 = vmatprep.subr.mxu0 0.0
    %3614 = vmatpush1.msra.mxu0 0.0
    %3615 = vmatprep.subr.mxu0 0.0
    %3616 = vmatpush1.msra.mxu0 0.0
    %3617 = vmatprep.subr.mxu0 0.0
    %3618 = vmatpush1.msra.mxu0 0.0
    %3619 = vmatprep.subr.mxu0 0.0
    %3620 = vmatpush1.msra.mxu0 0.0
    %3621 = vmatprep.subr.mxu0 0.0
    %3622 = vmatpush1.msra.mxu0 0.0
    %3623 = vmatprep.subr.mxu0 0.0
    %3624 = vmatpush1.msra.mxu0 0.0
    %3625 = vmatprep.subr.mxu0 0.0
    %3626 = vmatpush1.msra.mxu0 0.0
    %3627 = vmatprep.subr.mxu0 0.0
    %3628 = vmatpush1.msra.mxu0 0.0
    %3629 = vmatprep.subr.mxu0 0.0
    %3630 = vmatpush1.msra.mxu0 0.0
    %3631 = vmatprep.subr.mxu0 %v3577
    %3632 = vmatpush1.msra.mxu0 %v3575
    %3633 = vmatprep.subr.mxu0 %v3573
    %3634 = vmatpush1.msra.mxu0 %v3571
    %3635 = vmatprep.subr.mxu0 %v3567
    %3636 = vmatpush1.msra.mxu0 %v3565
    %3637 = vmatprep.subr.mxu0 %v3563
    %3638 = vmatpush1.msra.mxu0 %v3561
    %3639 = vmatprep.subr.mxu0 0.0
    %3640 = vmatpush2.msra.mxu0 0.0
    %3641 = vmatprep.subr.mxu0 0.0
    %3642 = vmatpush2.msra.mxu0 0.0
    %3643 = vmatprep.subr.mxu0 0.0
    %3644 = vmatpush2.msra.mxu0 0.0
    %3645 = vmatprep.subr.mxu0 0.0
    %3646 = vmatpush2.msra.mxu0 0.0
    %3647 = vmatprep.subr.mxu0 0.0
    %3648 = vmatpush2.msra.mxu0 0.0
    %3649 = vmatprep.subr.mxu0 0.0
    %3650 = vmatpush2.msra.mxu0 0.0
    %3651 = vmatprep.subr.mxu0 0.0
    %3652 = vmatpush2.msra.mxu0 0.0
    %3653 = vmatprep.subr.mxu0 0.0
    %3654 = vmatpush2.msra.mxu0 0.0
    %3655 = vmatprep.subr.mxu0 0.0
    %3656 = vmatpush2.msra.mxu0 0.0
    %3657 = vmatprep.subr.mxu0 0.0
    %3658 = vmatpush2.msra.mxu0 0.0
    %3659 = vmatprep.subr.mxu0 0.0
    %3660 = vmatpush2.msra.mxu0 0.0
    %3661 = vmatprep.subr.mxu0 0.0
    %3662 = vmatpush2.msra.mxu0 0.0
    %3663 = vmatprep.subr.mxu0 0.0
    %3664 = vmatpush2.msra.mxu0 0.0
    %3665 = vmatprep.subr.mxu0 0.0
    %3666 = vmatpush2.msra.mxu0 0.0
    %3667 = vmatprep.subr.mxu0 0.0
    %3668 = vmatpush2.msra.mxu0 0.0
    %3669 = vmatprep.subr.mxu0 0.0
    %3670 = vmatpush2.msra.mxu0 0.0
    %3671 = vmatprep.mubr.f32.mxu0 0.0
    %3672 = vmatmul.mubr.f32.gmra.mxu0 %v3603
    %v3673 = vpop.f32.mrf.mxu0
    %v3674 = vadd.f32 0.0, %v3673
    %v3675 = vpop.f32.mrf.mxu0
    %v3676 = vadd.f32 0.0, %v3675
    %3677 = vmatprep.mubr.f32.mxu0 0.0
    %3678 = vmatmul.mubr.f32.gmra.mxu0 %v3605
    %v3679 = vpop.f32.mrf.mxu0
    %v3680 = vadd.f32 0.0, %v3679
    %v3681 = vpop.f32.mrf.mxu0
    %v3682 = vadd.f32 0.0, %v3681
    %3683 = vdwg.mxu0
    %v3684 = vmax.f32 %v3674, %v3676
    %3685 = vmax.xlane.f32.xlu0 %v3684
    %v3686 = vpop.xlane.xlu0 %3685
    %v3687 = vmax.f32 %v3680, %v3682
    %3688 = vmax.xlane.f32.xlu0 %v3687
    %v3689 = vpop.xlane.xlu0 %3688
    %v3690 = vsub.f32 %v3674, %v3686
    %v3691 = vsub.f32 %v3676, %v3686
    %v3692 = vsub.f32 %v3680, %v3689
    %v3693 = vsub.f32 %v3682, %v3689
    %v3694 = vmul.f32 %v3690, 1.442695
    %v3695 = vpow.pop %v3694
    %v3696 = vmul.f32 %v3691, 1.442695
    %v3697 = vpow.pop %v3696
    %v3698 = vmul.f32 %v3692, 1.442695
    %v3699 = vpow.pop %v3698
    %v3700 = vmul.f32 %v3693, 1.442695
    %v3701 = vpow.pop %v3700
    %v3702 = vadd.f32 %v3695, %v3697
    %3703 = vadd.xlane.f32.xlu0 %v3702
    %v3704 = vpop.xlane.xlu0 %3703
    %v3705 = vadd.f32 %v3699, %v3701
    %3706 = vadd.xlane.f32.xlu0 %v3705
    %v3707 = vpop.xlane.xlu0 %3706
    %v3708 = vrcp.pop %v3704
    %v3709 = vrcp.pop %v3707
    %v3710 = vmul.f32 %v3695, %v3708
    %v3711 = vmul.f32 %v3697, %v3708
    %v3712 = vmul.f32 %v3699, %v3709
    %v3713 = vmul.f32 %v3701, %v3709
    %3714 = vmatprep.subr.mxu0 0.0
    %3715 = vmatpush1.xpose.msra.mxu0 0.0
    %3716 = vmatprep.subr.mxu0 0.0
    %3717 = vmatpush1.xpose.msra.mxu0 0.0
    %3718 = vmatprep.subr.mxu0 0.0
    %3719 = vmatpush1.xpose.msra.mxu0 0.0
    %3720 = vmatprep.subr.mxu0 0.0
    %3721 = vmatpush1.xpose.msra.mxu0 0.0
    %3722 = vmatprep.subr.mxu0 0.0
    %3723 = vmatpush1.xpose.msra.mxu0 0.0
    %3724 = vmatprep.subr.mxu0 0.0
    %3725 = vmatpush1.xpose.msra.mxu0 0.0
    %3726 = vmatprep.subr.mxu0 0.0
    %3727 = vmatpush1.xpose.msra.mxu0 0.0
    %3728 = vmatprep.subr.mxu0 0.0
    %3729 = vmatpush1.xpose.msra.mxu0 0.0
    %3730 = vmatprep.subr.mxu0 0.0
    %3731 = vmatpush1.xpose.msra.mxu0 0.0
    %3732 = vmatprep.subr.mxu0 0.0
    %3733 = vmatpush1.xpose.msra.mxu0 0.0
    %3734 = vmatprep.subr.mxu0 0.0
    %3735 = vmatpush1.xpose.msra.mxu0 0.0
    %3736 = vmatprep.subr.mxu0 0.0
    %3737 = vmatpush1.xpose.msra.mxu0 0.0
    %3738 = vmatprep.subr.mxu0 %v3597
    %3739 = vmatpush1.xpose.msra.mxu0 %v3595
    %3740 = vmatprep.subr.mxu0 %v3593
    %3741 = vmatpush1.xpose.msra.mxu0 %v3591
    %3742 = vmatprep.subr.mxu0 %v3587
    %3743 = vmatpush1.xpose.msra.mxu0 %v3585
    %3744 = vmatprep.subr.mxu0 %v3583
    %3745 = vmatpush1.xpose.msra.mxu0 %v3581
    %3746 = vmatprep.subr.mxu0 0.0
    %3747 = vmatpush2.xpose.msra.mxu0 0.0
    %3748 = vmatprep.subr.mxu0 0.0
    %3749 = vmatpush2.xpose.msra.mxu0 0.0
    %3750 = vmatprep.subr.mxu0 0.0
    %3751 = vmatpush2.xpose.msra.mxu0 0.0
    %3752 = vmatprep.subr.mxu0 0.0
    %3753 = vmatpush2.xpose.msra.mxu0 0.0
    %3754 = vmatprep.subr.mxu0 0.0
    %3755 = vmatpush2.xpose.msra.mxu0 0.0
    %3756 = vmatprep.subr.mxu0 0.0
    %3757 = vmatpush2.xpose.msra.mxu0 0.0
    %3758 = vmatprep.subr.mxu0 0.0
    %3759 = vmatpush2.xpose.msra.mxu0 0.0
    %3760 = vmatprep.subr.mxu0 0.0
    %3761 = vmatpush2.xpose.msra.mxu0 0.0
    %3762 = vmatprep.subr.mxu0 0.0
    %3763 = vmatpush2.xpose.msra.mxu0 0.0
    %3764 = vmatprep.subr.mxu0 0.0
    %3765 = vmatpush2.xpose.msra.mxu0 0.0
    %3766 = vmatprep.subr.mxu0 0.0
    %3767 = vmatpush2.xpose.msra.mxu0 0.0
    %3768 = vmatprep.subr.mxu0 0.0
    %3769 = vmatpush2.xpose.msra.mxu0 0.0
    %3770 = vmatprep.subr.mxu0 0.0
    %3771 = vmatpush2.xpose.msra.mxu0 0.0
    %3772 = vmatprep.subr.mxu0 0.0
    %3773 = vmatpush2.xpose.msra.mxu0 0.0
    %3774 = vmatprep.subr.mxu0 0.0
    %3775 = vmatpush2.xpose.msra.mxu0 0.0
    %3776 = vmatprep.subr.mxu0 0.0
    %3777 = vmatpush2.xpose.msra.mxu0 0.0
    %3778 = vmatprep.mubr.f32.mxu0 %v3711
    %3779 = vmatmul.mubr.f32.gmra.mxu0 %v3710
    %v3780 = vpop.f32.mrf.mxu0
    %v3781 = vadd.f32 0.0, %v3780
    %v3782 = vpop.f32.mrf.mxu0
    %3783 = vmatprep.mubr.f32.mxu0 %v3713
    %3784 = vmatmul.mubr.f32.gmra.mxu0 %v3712
    %v3785 = vpop.f32.mrf.mxu0
    %v3786 = vadd.f32 0.0, %v3785
    %v3787 = vpop.f32.mrf.mxu0
    %3788 = vdwg.mxu0
    %v3789 = vpack.c.bf16 %v2997, %v2992
    %v3790 = vpack.c.bf16 %v3260, %v3255
    %v3791 = vpack.c.bf16 %v3523, %v3518
    %v3792 = vpack.c.bf16 %v3786, %v3781
    %v3797 = vunpack.c.l.b16 %v2677
    %v3798 = vunpack.c.l.b16 %v2678
    %v3799 = vunpack.c.l.b16 %v2679
    %v3800 = vunpack.c.l.b16 %v2680
    %v3801 = vpack.c.b16 %v3798, %v3797
    %v3802 = vpack.c.b16 %v3800, %v3799
    %v3806 = vsel %vm83, %v3789, 0
    %v3809 = vsel %vm83, %v3790, 0
    %v3812 = vsel %vm83, %v3791, 0
    %v3815 = vsel %vm83, %v3792, 0
    %3817 = vmatprep.subr.bf16.mxu0 0
    %3818 = vmatpush1.bf16.msra.mxu0 0
    %3819 = vmatprep.subr.bf16.mxu0 0
    %3820 = vmatpush1.bf16.msra.mxu0 0
    %3821 = vmatprep.subr.bf16.mxu0 0
    %3822 = vmatpush1.bf16.msra.mxu0 0
    %3823 = vmatprep.subr.bf16.mxu0 0
    %3824 = vmatpush1.bf16.msra.mxu0 0
    %3825 = vmatprep.subr.bf16.mxu0 0
    %3826 = vmatpush1.bf16.msra.mxu0 0
    %3827 = vmatprep.subr.bf16.mxu0 0
    %3828 = vmatpush1.bf16.msra.mxu0 0
    %3829 = vmatprep.subr.bf16.mxu0 0
    %3830 = vmatpush1.bf16.msra.mxu0 %v3802
    %3831 = vmatprep.subr.bf16.mxu0 0
    %3832 = vmatpush1.bf16.msra.mxu0 %v3801
    %3833 = vmatprep.subr.bf16.mxu0 0
    %3834 = vmatpush2.bf16.msra.mxu0 0
    %3835 = vmatprep.subr.bf16.mxu0 0
    %3836 = vmatpush2.bf16.msra.mxu0 0
    %3837 = vmatprep.subr.bf16.mxu0 0
    %3838 = vmatpush2.bf16.msra.mxu0 0
    %3839 = vmatprep.subr.bf16.mxu0 0
    %3840 = vmatpush2.bf16.msra.mxu0 0
    %3841 = vmatprep.subr.bf16.mxu0 0
    %3842 = vmatpush2.bf16.msra.mxu0 0
    %3843 = vmatprep.subr.bf16.mxu0 0
    %3844 = vmatpush2.bf16.msra.mxu0 0
    %3845 = vmatprep.subr.bf16.mxu0 0
    %3846 = vmatpush2.bf16.msra.mxu0 0
    %3847 = vmatprep.subr.bf16.mxu0 0
    %3848 = vmatpush2.bf16.msra.mxu0 0
    %3849 = vmatprep.mubr.bf16.mxu0 0
    %3850 = vmatmul.mubr.bf16.gmra.mxu0 %v3806
    %v3851 = vpop.f32.mrf.mxu0
    %v3852 = vadd.f32 0.0, %v3851
    %v3853 = vpop.f32.mrf.mxu0
    %v3854 = vpop.f32.mrf.mxu0
    %v3855 = vadd.f32 0.0, %v3854
    %v3856 = vpop.f32.mrf.mxu0
    %3857 = vmatprep.mubr.bf16.mxu0 0
    %3858 = vmatmul.mubr.bf16.gmra.mxu0 %v3809
    %v3859 = vpop.f32.mrf.mxu0
    %v3860 = vadd.f32 0.0, %v3859
    %v3861 = vpop.f32.mrf.mxu0
    %v3862 = vpop.f32.mrf.mxu0
    %v3863 = vadd.f32 0.0, %v3862
    %v3864 = vpop.f32.mrf.mxu0
    %3865 = vmatprep.mubr.bf16.mxu0 0
    %3866 = vmatmul.mubr.bf16.gmra.mxu0 %v3812
    %v3867 = vpop.f32.mrf.mxu0
    %v3868 = vadd.f32 0.0, %v3867
    %v3869 = vpop.f32.mrf.mxu0
    %v3870 = vpop.f32.mrf.mxu0
    %v3871 = vadd.f32 0.0, %v3870
    %v3872 = vpop.f32.mrf.mxu0
    %3873 = vmatprep.mubr.bf16.mxu0 0
    %3874 = vmatmul.mubr.bf16.gmra.mxu0 %v3815
    %v3875 = vpop.f32.mrf.mxu0
    %v3876 = vadd.f32 0.0, %v3875
    %v3877 = vpop.f32.mrf.mxu0
    %v3878 = vpop.f32.mrf.mxu0
    %v3879 = vadd.f32 0.0, %v3878
    %v3880 = vpop.f32.mrf.mxu0
    %3881 = vdwg.mxu0
    %v3882 = vadd.f32 %v2661, %v3852
    %v3883 = vadd.f32 %v2662, %v3855
    %v3884 = vadd.f32 %v2663, %v3860
    %v3885 = vadd.f32 %v2664, %v3863
    %v3886 = vadd.f32 %v2665, %v3868
    %v3887 = vadd.f32 %v2666, %v3871
    %v3888 = vadd.f32 %v2667, %v3876
    %v3889 = vadd.f32 %v2668, %v3879
    %v3890 = vld [vmem:[%s3 + $0x78] sm:$0xf]
    %v3891 = vld [vmem:[%s3 + $0x7c] sm:$0xf]
    %v3892 = vld [vmem:[%s3 + $0x80] sm:$0xf]
    %v3893 = vld [vmem:[%s3 + $0x84] sm:$0xf]
    %v3894 = vld [vmem:[%s3 + $0x88] sm:$0xf]
    %v3895 = vld [vmem:[%s3 + $0x8c] sm:$0xf]
    %v3896 = vld [vmem:[%s3 + $0x90] sm:$0xf]
    %v3897 = vld [vmem:[%s3 + $0x94] sm:$0xf]
    %v3898 = vld [vmem:[%s3 + $0xc8] sm:$0xf]
    %v3899 = vld [vmem:[%s3 + $0xcc] sm:$0xf]
    %v3900 = vld [vmem:[%s3 + $0xd0] sm:$0xf]
    %v3901 = vld [vmem:[%s3 + $0xd4] sm:$0xf]
    %v3902 = vld [vmem:[%s2 + $0xc0] sm:$0xff]
    %v3903 = vld [vmem:[%s2 + $0xc8] sm:$0xff]
    %v3904 = vld [vmem:[%s2 + $0xd0] sm:$0xff]
    %v3905 = vld [vmem:[%s2 + $0xd8] sm:$0xff]
    %v3906 = vld [vmem:[%s2 + $0xe0] sm:$0xff]
    %v3907 = vld [vmem:[%s2 + $0xe8] sm:$0xff]
    %v3908 = vld [vmem:[%s2 + $0xf0] sm:$0xff]
    %v3909 = vld [vmem:[%s2 + $0xf8] sm:$0xff]
    %v3910 = vunpack.c.l.bf16 %v3902
    %v3911 = vunpack.c.h.bf16 %v3902
    %v3912 = vunpack.c.l.bf16 %v3903
    %v3913 = vunpack.c.h.bf16 %v3903
    %v3914 = vunpack.c.l.bf16 %v3904
    %v3915 = vunpack.c.h.bf16 %v3904
    %v3916 = vunpack.c.l.bf16 %v3905
    %v3917 = vunpack.c.h.bf16 %v3905
    %v3918 = vunpack.c.l.bf16 %v3906
    %v3919 = vunpack.c.h.bf16 %v3906
    %v3920 = vunpack.c.l.bf16 %v3907
    %v3921 = vunpack.c.h.bf16 %v3907
    %v3922 = vunpack.c.l.bf16 %v3908
    %v3923 = vunpack.c.h.bf16 %v3908
    %v3924 = vunpack.c.l.bf16 %v3909
    %v3925 = vunpack.c.h.bf16 %v3909
    %v3934 = vunpack.c.l.b16 %v3890
    %v3935 = vunpack.c.l.b16 %v3891
    %v3936 = vunpack.c.l.b16 %v3892
    %v3937 = vunpack.c.l.b16 %v3893
    %v3938 = vunpack.c.l.b16 %v3894
    %v3939 = vunpack.c.l.b16 %v3895
    %v3940 = vunpack.c.l.b16 %v3896
    %v3941 = vunpack.c.l.b16 %v3897
    %v3942 = vpack.c.b16 %v3935, %v3934
    %v3943 = vpack.c.b16 %v3937, %v3936
    %v3944 = vpack.c.b16 %v3939, %v3938
    %v3945 = vpack.c.b16 %v3941, %v3940
    %v3947 = vsel %vm238, %v3942, 0
    %v3950 = vsel %vm238, %v3943, 0
    %v3953 = vsel %vm238, %v3944, 0
    %v3956 = vsel %vm238, %v3945, 0
    %3958 = vmatprep.subr.bf16.mxu0 0
    %3959 = vmatpush1.bf16.msra.mxu0 0
    %3960 = vmatprep.subr.bf16.mxu0 0
    %3961 = vmatpush1.bf16.msra.mxu0 0
    %3962 = vmatprep.subr.bf16.mxu0 0
    %3963 = vmatpush1.bf16.msra.mxu0 0
    %3964 = vmatprep.subr.bf16.mxu0 0
    %3965 = vmatpush1.bf16.msra.mxu0 0
    %3966 = vmatprep.subr.bf16.mxu0 0
    %3967 = vmatpush1.bf16.msra.mxu0 0
    %3968 = vmatprep.subr.bf16.mxu0 0
    %3969 = vmatpush1.bf16.msra.mxu0 0
    %3970 = vmatprep.subr.bf16.mxu0 0
    %3971 = vmatpush1.bf16.msra.mxu0 0
    %3972 = vmatprep.subr.bf16.mxu0 %v256
    %3973 = vmatpush1.bf16.msra.mxu0 %v253
    %3974 = vmatprep.subr.bf16.mxu0 0
    %3975 = vmatpush2.bf16.msra.mxu0 0
    %3976 = vmatprep.subr.bf16.mxu0 0
    %3977 = vmatpush2.bf16.msra.mxu0 0
    %3978 = vmatprep.subr.bf16.mxu0 0
    %3979 = vmatpush2.bf16.msra.mxu0 0
    %3980 = vmatprep.subr.bf16.mxu0 0
    %3981 = vmatpush2.bf16.msra.mxu0 0
    %3982 = vmatprep.subr.bf16.mxu0 0
    %3983 = vmatpush2.bf16.msra.mxu0 0
    %3984 = vmatprep.subr.bf16.mxu0 0
    %3985 = vmatpush2.bf16.msra.mxu0 0
    %3986 = vmatprep.subr.bf16.mxu0 0
    %3987 = vmatpush2.bf16.msra.mxu0 0
    %3988 = vmatprep.subr.bf16.mxu0 0
    %3989 = vmatpush2.bf16.msra.mxu0 0
    %3990 = vmatprep.mubr.bf16.mxu0 0
    %3991 = vmatmul.mubr.bf16.gmra.mxu0 %v3947
    %v3992 = vpop.f32.mrf.mxu0
    %v3993 = vadd.f32 %v3910, %v3992
    %v3994 = vpop.f32.mrf.mxu0
    %v3995 = vadd.f32 %v3911, %v3994
    %v3996 = vpop.f32.mrf.mxu0
    %v3997 = vadd.f32 %v3912, %v3996
    %v3998 = vpop.f32.mrf.mxu0
    %v3999 = vadd.f32 %v3913, %v3998
    %4000 = vmatprep.mubr.bf16.mxu0 0
    %4001 = vmatmul.mubr.bf16.gmra.mxu0 %v3950
    %v4002 = vpop.f32.mrf.mxu0
    %v4003 = vadd.f32 %v3914, %v4002
    %v4004 = vpop.f32.mrf.mxu0
    %v4005 = vadd.f32 %v3915, %v4004
    %v4006 = vpop.f32.mrf.mxu0
    %v4007 = vadd.f32 %v3916, %v4006
    %v4008 = vpop.f32.mrf.mxu0
    %v4009 = vadd.f32 %v3917, %v4008
    %4010 = vmatprep.mubr.bf16.mxu0 0
    %4011 = vmatmul.mubr.bf16.gmra.mxu0 %v3953
    %v4012 = vpop.f32.mrf.mxu0
    %v4013 = vadd.f32 %v3918, %v4012
    %v4014 = vpop.f32.mrf.mxu0
    %v4015 = vadd.f32 %v3919, %v4014
    %v4016 = vpop.f32.mrf.mxu0
    %v4017 = vadd.f32 %v3920, %v4016
    %v4018 = vpop.f32.mrf.mxu0
    %v4019 = vadd.f32 %v3921, %v4018
    %4020 = vmatprep.mubr.bf16.mxu0 0
    %4021 = vmatmul.mubr.bf16.gmra.mxu0 %v3956
    %v4022 = vpop.f32.mrf.mxu0
    %v4023 = vadd.f32 %v3922, %v4022
    %v4024 = vpop.f32.mrf.mxu0
    %v4025 = vadd.f32 %v3923, %v4024
    %v4026 = vpop.f32.mrf.mxu0
    %v4027 = vadd.f32 %v3924, %v4026
    %v4028 = vpop.f32.mrf.mxu0
    %v4029 = vadd.f32 %v3925, %v4028
    %4030 = vdwg.mxu0
    %4031 = vrot.lane.b32.xlu0 %v131, 32
    %v4032 = vpop.permute.xlu0 %4031
    %4033 = vrot.lane.b32.xlu0 %v134, 32
    %v4034 = vpop.permute.xlu0 %4033
    %v4035 = vsel %vm83, %v4032, 0
    %v4037 = vsel %vm83, %v4034, 0
    %4039 = vmatprep.subr.mxu0 0.0
    %4040 = vmatpush1.msra.mxu0 0.0
    %4041 = vmatprep.subr.mxu0 0.0
    %4042 = vmatpush1.msra.mxu0 0.0
    %4043 = vmatprep.subr.mxu0 0.0
    %4044 = vmatpush1.msra.mxu0 0.0
    %4045 = vmatprep.subr.mxu0 0.0
    %4046 = vmatpush1.msra.mxu0 0.0
    %4047 = vmatprep.subr.mxu0 0.0
    %4048 = vmatpush1.msra.mxu0 0.0
    %4049 = vmatprep.subr.mxu0 0.0
    %4050 = vmatpush1.msra.mxu0 0.0
    %4051 = vmatprep.subr.mxu0 0.0
    %4052 = vmatpush1.msra.mxu0 0.0
    %4053 = vmatprep.subr.mxu0 0.0
    %4054 = vmatpush1.msra.mxu0 0.0
    %4055 = vmatprep.subr.mxu0 0.0
    %4056 = vmatpush1.msra.mxu0 0.0
    %4057 = vmatprep.subr.mxu0 0.0
    %4058 = vmatpush1.msra.mxu0 0.0
    %4059 = vmatprep.subr.mxu0 0.0
    %4060 = vmatpush1.msra.mxu0 0.0
    %4061 = vmatprep.subr.mxu0 0.0
    %4062 = vmatpush1.msra.mxu0 0.0
    %4063 = vmatprep.subr.mxu0 %v4009
    %4064 = vmatpush1.msra.mxu0 %v4007
    %4065 = vmatprep.subr.mxu0 %v4005
    %4066 = vmatpush1.msra.mxu0 %v4003
    %4067 = vmatprep.subr.mxu0 %v3999
    %4068 = vmatpush1.msra.mxu0 %v3997
    %4069 = vmatprep.subr.mxu0 %v3995
    %4070 = vmatpush1.msra.mxu0 %v3993
    %4071 = vmatprep.subr.mxu0 0.0
    %4072 = vmatpush2.msra.mxu0 0.0
    %4073 = vmatprep.subr.mxu0 0.0
    %4074 = vmatpush2.msra.mxu0 0.0
    %4075 = vmatprep.subr.mxu0 0.0
    %4076 = vmatpush2.msra.mxu0 0.0
    %4077 = vmatprep.subr.mxu0 0.0
    %4078 = vmatpush2.msra.mxu0 0.0
    %4079 = vmatprep.subr.mxu0 0.0
    %4080 = vmatpush2.msra.mxu0 0.0
    %4081 = vmatprep.subr.mxu0 0.0
    %4082 = vmatpush2.msra.mxu0 0.0
    %4083 = vmatprep.subr.mxu0 0.0
    %4084 = vmatpush2.msra.mxu0 0.0
    %4085 = vmatprep.subr.mxu0 0.0
    %4086 = vmatpush2.msra.mxu0 0.0
    %4087 = vmatprep.subr.mxu0 0.0
    %4088 = vmatpush2.msra.mxu0 0.0
    %4089 = vmatprep.subr.mxu0 0.0
    %4090 = vmatpush2.msra.mxu0 0.0
    %4091 = vmatprep.subr.mxu0 0.0
    %4092 = vmatpush2.msra.mxu0 0.0
    %4093 = vmatprep.subr.mxu0 0.0
    %4094 = vmatpush2.msra.mxu0 0.0
    %4095 = vmatprep.subr.mxu0 0.0
    %4096 = vmatpush2.msra.mxu0 0.0
    %4097 = vmatprep.subr.mxu0 0.0
    %4098 = vmatpush2.msra.mxu0 0.0
    %4099 = vmatprep.subr.mxu0 0.0
    %4100 = vmatpush2.msra.mxu0 0.0
    %4101 = vmatprep.subr.mxu0 0.0
    %4102 = vmatpush2.msra.mxu0 0.0
    %4103 = vmatprep.mubr.f32.mxu0 0.0
    %4104 = vmatmul.mubr.f32.gmra.mxu0 %v4035
    %v4105 = vpop.f32.mrf.mxu0
    %v4106 = vadd.f32 0.0, %v4105
    %v4107 = vpop.f32.mrf.mxu0
    %v4108 = vadd.f32 0.0, %v4107
    %4109 = vmatprep.mubr.f32.mxu0 0.0
    %4110 = vmatmul.mubr.f32.gmra.mxu0 %v4037
    %v4111 = vpop.f32.mrf.mxu0
    %v4112 = vadd.f32 0.0, %v4111
    %v4113 = vpop.f32.mrf.mxu0
    %v4114 = vadd.f32 0.0, %v4113
    %4115 = vdwg.mxu0
    %v4116 = vmax.f32 %v4106, %v4108
    %4117 = vmax.xlane.f32.xlu0 %v4116
    %v4118 = vpop.xlane.xlu0 %4117
    %v4119 = vmax.f32 %v4112, %v4114
    %4120 = vmax.xlane.f32.xlu0 %v4119
    %v4121 = vpop.xlane.xlu0 %4120
    %v4122 = vsub.f32 %v4106, %v4118
    %v4123 = vsub.f32 %v4108, %v4118
    %v4124 = vsub.f32 %v4112, %v4121
    %v4125 = vsub.f32 %v4114, %v4121
    %v4126 = vmul.f32 %v4122, 1.442695
    %v4127 = vpow.pop %v4126
    %v4128 = vmul.f32 %v4123, 1.442695
    %v4129 = vpow.pop %v4128
    %v4130 = vmul.f32 %v4124, 1.442695
    %v4131 = vpow.pop %v4130
    %v4132 = vmul.f32 %v4125, 1.442695
    %v4133 = vpow.pop %v4132
    %v4134 = vadd.f32 %v4127, %v4129
    %4135 = vadd.xlane.f32.xlu0 %v4134
    %v4136 = vpop.xlane.xlu0 %4135
    %v4137 = vadd.f32 %v4131, %v4133
    %4138 = vadd.xlane.f32.xlu0 %v4137
    %v4139 = vpop.xlane.xlu0 %4138
    %v4140 = vrcp.pop %v4136
    %v4141 = vrcp.pop %v4139
    %v4142 = vmul.f32 %v4127, %v4140
    %v4143 = vmul.f32 %v4129, %v4140
    %v4144 = vmul.f32 %v4131, %v4141
    %v4145 = vmul.f32 %v4133, %v4141
    %4146 = vmatprep.subr.mxu0 0.0
    %4147 = vmatpush1.xpose.msra.mxu0 0.0
    %4148 = vmatprep.subr.mxu0 0.0
    %4149 = vmatpush1.xpose.msra.mxu0 0.0
    %4150 = vmatprep.subr.mxu0 0.0
    %4151 = vmatpush1.xpose.msra.mxu0 0.0
    %4152 = vmatprep.subr.mxu0 0.0
    %4153 = vmatpush1.xpose.msra.mxu0 0.0
    %4154 = vmatprep.subr.mxu0 0.0
    %4155 = vmatpush1.xpose.msra.mxu0 0.0
    %4156 = vmatprep.subr.mxu0 0.0
    %4157 = vmatpush1.xpose.msra.mxu0 0.0
    %4158 = vmatprep.subr.mxu0 0.0
    %4159 = vmatpush1.xpose.msra.mxu0 0.0
    %4160 = vmatprep.subr.mxu0 0.0
    %4161 = vmatpush1.xpose.msra.mxu0 0.0
    %4162 = vmatprep.subr.mxu0 0.0
    %4163 = vmatpush1.xpose.msra.mxu0 0.0
    %4164 = vmatprep.subr.mxu0 0.0
    %4165 = vmatpush1.xpose.msra.mxu0 0.0
    %4166 = vmatprep.subr.mxu0 0.0
    %4167 = vmatpush1.xpose.msra.mxu0 0.0
    %4168 = vmatprep.subr.mxu0 0.0
    %4169 = vmatpush1.xpose.msra.mxu0 0.0
    %4170 = vmatprep.subr.mxu0 %v4029
    %4171 = vmatpush1.xpose.msra.mxu0 %v4027
    %4172 = vmatprep.subr.mxu0 %v4025
    %4173 = vmatpush1.xpose.msra.mxu0 %v4023
    %4174 = vmatprep.subr.mxu0 %v4019
    %4175 = vmatpush1.xpose.msra.mxu0 %v4017
    %4176 = vmatprep.subr.mxu0 %v4015
    %4177 = vmatpush1.xpose.msra.mxu0 %v4013
    %4178 = vmatprep.subr.mxu0 0.0
    %4179 = vmatpush2.xpose.msra.mxu0 0.0
    %4180 = vmatprep.subr.mxu0 0.0
    %4181 = vmatpush2.xpose.msra.mxu0 0.0
    %4182 = vmatprep.subr.mxu0 0.0
    %4183 = vmatpush2.xpose.msra.mxu0 0.0
    %4184 = vmatprep.subr.mxu0 0.0
    %4185 = vmatpush2.xpose.msra.mxu0 0.0
    %4186 = vmatprep.subr.mxu0 0.0
    %4187 = vmatpush2.xpose.msra.mxu0 0.0
    %4188 = vmatprep.subr.mxu0 0.0
    %4189 = vmatpush2.xpose.msra.mxu0 0.0
    %4190 = vmatprep.subr.mxu0 0.0
    %4191 = vmatpush2.xpose.msra.mxu0 0.0
    %4192 = vmatprep.subr.mxu0 0.0
    %4193 = vmatpush2.xpose.msra.mxu0 0.0
    %4194 = vmatprep.subr.mxu0 0.0
    %4195 = vmatpush2.xpose.msra.mxu0 0.0
    %4196 = vmatprep.subr.mxu0 0.0
    %4197 = vmatpush2.xpose.msra.mxu0 0.0
    %4198 = vmatprep.subr.mxu0 0.0
    %4199 = vmatpush2.xpose.msra.mxu0 0.0
    %4200 = vmatprep.subr.mxu0 0.0
    %4201 = vmatpush2.xpose.msra.mxu0 0.0
    %4202 = vmatprep.subr.mxu0 0.0
    %4203 = vmatpush2.xpose.msra.mxu0 0.0
    %4204 = vmatprep.subr.mxu0 0.0
    %4205 = vmatpush2.xpose.msra.mxu0 0.0
    %4206 = vmatprep.subr.mxu0 0.0
    %4207 = vmatpush2.xpose.msra.mxu0 0.0
    %4208 = vmatprep.subr.mxu0 0.0
    %4209 = vmatpush2.xpose.msra.mxu0 0.0
    %4210 = vmatprep.mubr.f32.mxu0 %v4143
    %4211 = vmatmul.mubr.f32.gmra.mxu0 %v4142
    %v4212 = vpop.f32.mrf.mxu0
    %v4213 = vadd.f32 0.0, %v4212
    %v4214 = vpop.f32.mrf.mxu0
    %4215 = vmatprep.mubr.f32.mxu0 %v4145
    %4216 = vmatmul.mubr.f32.gmra.mxu0 %v4144
    %v4217 = vpop.f32.mrf.mxu0
    %v4218 = vadd.f32 0.0, %v4217
    %v4219 = vpop.f32.mrf.mxu0
    %4220 = vdwg.mxu0
    %4221 = vmatprep.subr.bf16.mxu0 0
    %4222 = vmatpush1.bf16.msra.mxu0 0
    %4223 = vmatprep.subr.bf16.mxu0 0
    %4224 = vmatpush1.bf16.msra.mxu0 0
    %4225 = vmatprep.subr.bf16.mxu0 0
    %4226 = vmatpush1.bf16.msra.mxu0 0
    %4227 = vmatprep.subr.bf16.mxu0 0
    %4228 = vmatpush1.bf16.msra.mxu0 0
    %4229 = vmatprep.subr.bf16.mxu0 0
    %4230 = vmatpush1.bf16.msra.mxu0 0
    %4231 = vmatprep.subr.bf16.mxu0 0
    %4232 = vmatpush1.bf16.msra.mxu0 0
    %4233 = vmatprep.subr.bf16.mxu0 0
    %4234 = vmatpush1.bf16.msra.mxu0 0
    %4235 = vmatprep.subr.bf16.mxu0 %v532
    %4236 = vmatpush1.bf16.msra.mxu0 %v529
    %4237 = vmatprep.subr.bf16.mxu0 0
    %4238 = vmatpush2.bf16.msra.mxu0 0
    %4239 = vmatprep.subr.bf16.mxu0 0
    %4240 = vmatpush2.bf16.msra.mxu0 0
    %4241 = vmatprep.subr.bf16.mxu0 0
    %4242 = vmatpush2.bf16.msra.mxu0 0
    %4243 = vmatprep.subr.bf16.mxu0 0
    %4244 = vmatpush2.bf16.msra.mxu0 0
    %4245 = vmatprep.subr.bf16.mxu0 0
    %4246 = vmatpush2.bf16.msra.mxu0 0
    %4247 = vmatprep.subr.bf16.mxu0 0
    %4248 = vmatpush2.bf16.msra.mxu0 0
    %4249 = vmatprep.subr.bf16.mxu0 0
    %4250 = vmatpush2.bf16.msra.mxu0 0
    %4251 = vmatprep.subr.bf16.mxu0 0
    %4252 = vmatpush2.bf16.msra.mxu0 0
    %4253 = vmatprep.mubr.bf16.mxu0 0
    %4254 = vmatmul.mubr.bf16.gmra.mxu0 %v3947
    %v4255 = vpop.f32.mrf.mxu0
    %v4256 = vadd.f32 %v3910, %v4255
    %v4257 = vpop.f32.mrf.mxu0
    %v4258 = vadd.f32 %v3911, %v4257
    %v4259 = vpop.f32.mrf.mxu0
    %v4260 = vadd.f32 %v3912, %v4259
    %v4261 = vpop.f32.mrf.mxu0
    %v4262 = vadd.f32 %v3913, %v4261
    %4263 = vmatprep.mubr.bf16.mxu0 0
    %4264 = vmatmul.mubr.bf16.gmra.mxu0 %v3950
    %v4265 = vpop.f32.mrf.mxu0
    %v4266 = vadd.f32 %v3914, %v4265
    %v4267 = vpop.f32.mrf.mxu0
    %v4268 = vadd.f32 %v3915, %v4267
    %v4269 = vpop.f32.mrf.mxu0
    %v4270 = vadd.f32 %v3916, %v4269
    %v4271 = vpop.f32.mrf.mxu0
    %v4272 = vadd.f32 %v3917, %v4271
    %4273 = vmatprep.mubr.bf16.mxu0 0
    %4274 = vmatmul.mubr.bf16.gmra.mxu0 %v3953
    %v4275 = vpop.f32.mrf.mxu0
    %v4276 = vadd.f32 %v3918, %v4275
    %v4277 = vpop.f32.mrf.mxu0
    %v4278 = vadd.f32 %v3919, %v4277
    %v4279 = vpop.f32.mrf.mxu0
    %v4280 = vadd.f32 %v3920, %v4279
    %v4281 = vpop.f32.mrf.mxu0
    %v4282 = vadd.f32 %v3921, %v4281
    %4283 = vmatprep.mubr.bf16.mxu0 0
    %4284 = vmatmul.mubr.bf16.gmra.mxu0 %v3956
    %v4285 = vpop.f32.mrf.mxu0
    %v4286 = vadd.f32 %v3922, %v4285
    %v4287 = vpop.f32.mrf.mxu0
    %v4288 = vadd.f32 %v3923, %v4287
    %v4289 = vpop.f32.mrf.mxu0
    %v4290 = vadd.f32 %v3924, %v4289
    %v4291 = vpop.f32.mrf.mxu0
    %v4292 = vadd.f32 %v3925, %v4291
    %4293 = vdwg.mxu0
    %4294 = vrot.lane.b32.xlu0 %v139, 32
    %v4295 = vpop.permute.xlu0 %4294
    %4296 = vrot.lane.b32.xlu0 %v142, 32
    %v4297 = vpop.permute.xlu0 %4296
    %v4298 = vsel %vm83, %v4295, 0
    %v4300 = vsel %vm83, %v4297, 0
    %4302 = vmatprep.subr.mxu0 0.0
    %4303 = vmatpush1.msra.mxu0 0.0
    %4304 = vmatprep.subr.mxu0 0.0
    %4305 = vmatpush1.msra.mxu0 0.0
    %4306 = vmatprep.subr.mxu0 0.0
    %4307 = vmatpush1.msra.mxu0 0.0
    %4308 = vmatprep.subr.mxu0 0.0
    %4309 = vmatpush1.msra.mxu0 0.0
    %4310 = vmatprep.subr.mxu0 0.0
    %4311 = vmatpush1.msra.mxu0 0.0
    %4312 = vmatprep.subr.mxu0 0.0
    %4313 = vmatpush1.msra.mxu0 0.0
    %4314 = vmatprep.subr.mxu0 0.0
    %4315 = vmatpush1.msra.mxu0 0.0
    %4316 = vmatprep.subr.mxu0 0.0
    %4317 = vmatpush1.msra.mxu0 0.0
    %4318 = vmatprep.subr.mxu0 0.0
    %4319 = vmatpush1.msra.mxu0 0.0
    %4320 = vmatprep.subr.mxu0 0.0
    %4321 = vmatpush1.msra.mxu0 0.0
    %4322 = vmatprep.subr.mxu0 0.0
    %4323 = vmatpush1.msra.mxu0 0.0
    %4324 = vmatprep.subr.mxu0 0.0
    %4325 = vmatpush1.msra.mxu0 0.0
    %4326 = vmatprep.subr.mxu0 %v4272
    %4327 = vmatpush1.msra.mxu0 %v4270
    %4328 = vmatprep.subr.mxu0 %v4268
    %4329 = vmatpush1.msra.mxu0 %v4266
    %4330 = vmatprep.subr.mxu0 %v4262
    %4331 = vmatpush1.msra.mxu0 %v4260
    %4332 = vmatprep.subr.mxu0 %v4258
    %4333 = vmatpush1.msra.mxu0 %v4256
    %4334 = vmatprep.subr.mxu0 0.0
    %4335 = vmatpush2.msra.mxu0 0.0
    %4336 = vmatprep.subr.mxu0 0.0
    %4337 = vmatpush2.msra.mxu0 0.0
    %4338 = vmatprep.subr.mxu0 0.0
    %4339 = vmatpush2.msra.mxu0 0.0
    %4340 = vmatprep.subr.mxu0 0.0
    %4341 = vmatpush2.msra.mxu0 0.0
    %4342 = vmatprep.subr.mxu0 0.0
    %4343 = vmatpush2.msra.mxu0 0.0
    %4344 = vmatprep.subr.mxu0 0.0
    %4345 = vmatpush2.msra.mxu0 0.0
    %4346 = vmatprep.subr.mxu0 0.0
    %4347 = vmatpush2.msra.mxu0 0.0
    %4348 = vmatprep.subr.mxu0 0.0
    %4349 = vmatpush2.msra.mxu0 0.0
    %4350 = vmatprep.subr.mxu0 0.0
    %4351 = vmatpush2.msra.mxu0 0.0
    %4352 = vmatprep.subr.mxu0 0.0
    %4353 = vmatpush2.msra.mxu0 0.0
    %4354 = vmatprep.subr.mxu0 0.0
    %4355 = vmatpush2.msra.mxu0 0.0
    %4356 = vmatprep.subr.mxu0 0.0
    %4357 = vmatpush2.msra.mxu0 0.0
    %4358 = vmatprep.subr.mxu0 0.0
    %4359 = vmatpush2.msra.mxu0 0.0
    %4360 = vmatprep.subr.mxu0 0.0
    %4361 = vmatpush2.msra.mxu0 0.0
    %4362 = vmatprep.subr.mxu0 0.0
    %4363 = vmatpush2.msra.mxu0 0.0
    %4364 = vmatprep.subr.mxu0 0.0
    %4365 = vmatpush2.msra.mxu0 0.0
    %4366 = vmatprep.mubr.f32.mxu0 0.0
    %4367 = vmatmul.mubr.f32.gmra.mxu0 %v4298
    %v4368 = vpop.f32.mrf.mxu0
    %v4369 = vadd.f32 0.0, %v4368
    %v4370 = vpop.f32.mrf.mxu0
    %v4371 = vadd.f32 0.0, %v4370
    %4372 = vmatprep.mubr.f32.mxu0 0.0
    %4373 = vmatmul.mubr.f32.gmra.mxu0 %v4300
    %v4374 = vpop.f32.mrf.mxu0
    %v4375 = vadd.f32 0.0, %v4374
    %v4376 = vpop.f32.mrf.mxu0
    %v4377 = vadd.f32 0.0, %v4376
    %4378 = vdwg.mxu0
    %v4379 = vmax.f32 %v4369, %v4371
    %4380 = vmax.xlane.f32.xlu0 %v4379
    %v4381 = vpop.xlane.xlu0 %4380
    %v4382 = vmax.f32 %v4375, %v4377
    %4383 = vmax.xlane.f32.xlu0 %v4382
    %v4384 = vpop.xlane.xlu0 %4383
    %v4385 = vsub.f32 %v4369, %v4381
    %v4386 = vsub.f32 %v4371, %v4381
    %v4387 = vsub.f32 %v4375, %v4384
    %v4388 = vsub.f32 %v4377, %v4384
    %v4389 = vmul.f32 %v4385, 1.442695
    %v4390 = vpow.pop %v4389
    %v4391 = vmul.f32 %v4386, 1.442695
    %v4392 = vpow.pop %v4391
    %v4393 = vmul.f32 %v4387, 1.442695
    %v4394 = vpow.pop %v4393
    %v4395 = vmul.f32 %v4388, 1.442695
    %v4396 = vpow.pop %v4395
    %v4397 = vadd.f32 %v4390, %v4392
    %4398 = vadd.xlane.f32.xlu0 %v4397
    %v4399 = vpop.xlane.xlu0 %4398
    %v4400 = vadd.f32 %v4394, %v4396
    %4401 = vadd.xlane.f32.xlu0 %v4400
    %v4402 = vpop.xlane.xlu0 %4401
    %v4403 = vrcp.pop %v4399
    %v4404 = vrcp.pop %v4402
    %v4405 = vmul.f32 %v4390, %v4403
    %v4406 = vmul.f32 %v4392, %v4403
    %v4407 = vmul.f32 %v4394, %v4404
    %v4408 = vmul.f32 %v4396, %v4404
    %4409 = vmatprep.subr.mxu0 0.0
    %4410 = vmatpush1.xpose.msra.mxu0 0.0
    %4411 = vmatprep.subr.mxu0 0.0
    %4412 = vmatpush1.xpose.msra.mxu0 0.0
    %4413 = vmatprep.subr.mxu0 0.0
    %4414 = vmatpush1.xpose.msra.mxu0 0.0
    %4415 = vmatprep.subr.mxu0 0.0
    %4416 = vmatpush1.xpose.msra.mxu0 0.0
    %4417 = vmatprep.subr.mxu0 0.0
    %4418 = vmatpush1.xpose.msra.mxu0 0.0
    %4419 = vmatprep.subr.mxu0 0.0
    %4420 = vmatpush1.xpose.msra.mxu0 0.0
    %4421 = vmatprep.subr.mxu0 0.0
    %4422 = vmatpush1.xpose.msra.mxu0 0.0
    %4423 = vmatprep.subr.mxu0 0.0
    %4424 = vmatpush1.xpose.msra.mxu0 0.0
    %4425 = vmatprep.subr.mxu0 0.0
    %4426 = vmatpush1.xpose.msra.mxu0 0.0
    %4427 = vmatprep.subr.mxu0 0.0
    %4428 = vmatpush1.xpose.msra.mxu0 0.0
    %4429 = vmatprep.subr.mxu0 0.0
    %4430 = vmatpush1.xpose.msra.mxu0 0.0
    %4431 = vmatprep.subr.mxu0 0.0
    %4432 = vmatpush1.xpose.msra.mxu0 0.0
    %4433 = vmatprep.subr.mxu0 %v4292
    %4434 = vmatpush1.xpose.msra.mxu0 %v4290
    %4435 = vmatprep.subr.mxu0 %v4288
    %4436 = vmatpush1.xpose.msra.mxu0 %v4286
    %4437 = vmatprep.subr.mxu0 %v4282
    %4438 = vmatpush1.xpose.msra.mxu0 %v4280
    %4439 = vmatprep.subr.mxu0 %v4278
    %4440 = vmatpush1.xpose.msra.mxu0 %v4276
    %4441 = vmatprep.subr.mxu0 0.0
    %4442 = vmatpush2.xpose.msra.mxu0 0.0
    %4443 = vmatprep.subr.mxu0 0.0
    %4444 = vmatpush2.xpose.msra.mxu0 0.0
    %4445 = vmatprep.subr.mxu0 0.0
    %4446 = vmatpush2.xpose.msra.mxu0 0.0
    %4447 = vmatprep.subr.mxu0 0.0
    %4448 = vmatpush2.xpose.msra.mxu0 0.0
    %4449 = vmatprep.subr.mxu0 0.0
    %4450 = vmatpush2.xpose.msra.mxu0 0.0
    %4451 = vmatprep.subr.mxu0 0.0
    %4452 = vmatpush2.xpose.msra.mxu0 0.0
    %4453 = vmatprep.subr.mxu0 0.0
    %4454 = vmatpush2.xpose.msra.mxu0 0.0
    %4455 = vmatprep.subr.mxu0 0.0
    %4456 = vmatpush2.xpose.msra.mxu0 0.0
    %4457 = vmatprep.subr.mxu0 0.0
    %4458 = vmatpush2.xpose.msra.mxu0 0.0
    %4459 = vmatprep.subr.mxu0 0.0
    %4460 = vmatpush2.xpose.msra.mxu0 0.0
    %4461 = vmatprep.subr.mxu0 0.0
    %4462 = vmatpush2.xpose.msra.mxu0 0.0
    %4463 = vmatprep.subr.mxu0 0.0
    %4464 = vmatpush2.xpose.msra.mxu0 0.0
    %4465 = vmatprep.subr.mxu0 0.0
    %4466 = vmatpush2.xpose.msra.mxu0 0.0
    %4467 = vmatprep.subr.mxu0 0.0
    %4468 = vmatpush2.xpose.msra.mxu0 0.0
    %4469 = vmatprep.subr.mxu0 0.0
    %4470 = vmatpush2.xpose.msra.mxu0 0.0
    %4471 = vmatprep.subr.mxu0 0.0
    %4472 = vmatpush2.xpose.msra.mxu0 0.0
    %4473 = vmatprep.mubr.f32.mxu0 %v4406
    %4474 = vmatmul.mubr.f32.gmra.mxu0 %v4405
    %v4475 = vpop.f32.mrf.mxu0
    %v4476 = vadd.f32 0.0, %v4475
    %v4477 = vpop.f32.mrf.mxu0
    %4478 = vmatprep.mubr.f32.mxu0 %v4408
    %4479 = vmatmul.mubr.f32.gmra.mxu0 %v4407
    %v4480 = vpop.f32.mrf.mxu0
    %v4481 = vadd.f32 0.0, %v4480
    %v4482 = vpop.f32.mrf.mxu0
    %4483 = vdwg.mxu0
    %4484 = vmatprep.subr.bf16.mxu0 0
    %4485 = vmatpush1.bf16.msra.mxu0 0
    %4486 = vmatprep.subr.bf16.mxu0 0
    %4487 = vmatpush1.bf16.msra.mxu0 0
    %4488 = vmatprep.subr.bf16.mxu0 0
    %4489 = vmatpush1.bf16.msra.mxu0 0
    %4490 = vmatprep.subr.bf16.mxu0 0
    %4491 = vmatpush1.bf16.msra.mxu0 0
    %4492 = vmatprep.subr.bf16.mxu0 0
    %4493 = vmatpush1.bf16.msra.mxu0 0
    %4494 = vmatprep.subr.bf16.mxu0 0
    %4495 = vmatpush1.bf16.msra.mxu0 0
    %4496 = vmatprep.subr.bf16.mxu0 0
    %4497 = vmatpush1.bf16.msra.mxu0 0
    %4498 = vmatprep.subr.bf16.mxu0 %v808
    %4499 = vmatpush1.bf16.msra.mxu0 %v805
    %4500 = vmatprep.subr.bf16.mxu0 0
    %4501 = vmatpush2.bf16.msra.mxu0 0
    %4502 = vmatprep.subr.bf16.mxu0 0
    %4503 = vmatpush2.bf16.msra.mxu0 0
    %4504 = vmatprep.subr.bf16.mxu0 0
    %4505 = vmatpush2.bf16.msra.mxu0 0
    %4506 = vmatprep.subr.bf16.mxu0 0
    %4507 = vmatpush2.bf16.msra.mxu0 0
    %4508 = vmatprep.subr.bf16.mxu0 0
    %4509 = vmatpush2.bf16.msra.mxu0 0
    %4510 = vmatprep.subr.bf16.mxu0 0
    %4511 = vmatpush2.bf16.msra.mxu0 0
    %4512 = vmatprep.subr.bf16.mxu0 0
    %4513 = vmatpush2.bf16.msra.mxu0 0
    %4514 = vmatprep.subr.bf16.mxu0 0
    %4515 = vmatpush2.bf16.msra.mxu0 0
    %4516 = vmatprep.mubr.bf16.mxu0 0
    %4517 = vmatmul.mubr.bf16.gmra.mxu0 %v3947
    %v4518 = vpop.f32.mrf.mxu0
    %v4519 = vadd.f32 %v3910, %v4518
    %v4520 = vpop.f32.mrf.mxu0
    %v4521 = vadd.f32 %v3911, %v4520
    %v4522 = vpop.f32.mrf.mxu0
    %v4523 = vadd.f32 %v3912, %v4522
    %v4524 = vpop.f32.mrf.mxu0
    %v4525 = vadd.f32 %v3913, %v4524
    %4526 = vmatprep.mubr.bf16.mxu0 0
    %4527 = vmatmul.mubr.bf16.gmra.mxu0 %v3950
    %v4528 = vpop.f32.mrf.mxu0
    %v4529 = vadd.f32 %v3914, %v4528
    %v4530 = vpop.f32.mrf.mxu0
    %v4531 = vadd.f32 %v3915, %v4530
    %v4532 = vpop.f32.mrf.mxu0
    %v4533 = vadd.f32 %v3916, %v4532
    %v4534 = vpop.f32.mrf.mxu0
    %v4535 = vadd.f32 %v3917, %v4534
    %4536 = vmatprep.mubr.bf16.mxu0 0
    %4537 = vmatmul.mubr.bf16.gmra.mxu0 %v3953
    %v4538 = vpop.f32.mrf.mxu0
    %v4539 = vadd.f32 %v3918, %v4538
    %v4540 = vpop.f32.mrf.mxu0
    %v4541 = vadd.f32 %v3919, %v4540
    %v4542 = vpop.f32.mrf.mxu0
    %v4543 = vadd.f32 %v3920, %v4542
    %v4544 = vpop.f32.mrf.mxu0
    %v4545 = vadd.f32 %v3921, %v4544
    %4546 = vmatprep.mubr.bf16.mxu0 0
    %4547 = vmatmul.mubr.bf16.gmra.mxu0 %v3956
    %v4548 = vpop.f32.mrf.mxu0
    %v4549 = vadd.f32 %v3922, %v4548
    %v4550 = vpop.f32.mrf.mxu0
    %v4551 = vadd.f32 %v3923, %v4550
    %v4552 = vpop.f32.mrf.mxu0
    %v4553 = vadd.f32 %v3924, %v4552
    %v4554 = vpop.f32.mrf.mxu0
    %v4555 = vadd.f32 %v3925, %v4554
    %4556 = vdwg.mxu0
    %4557 = vrot.lane.b32.xlu0 %v147, 32
    %v4558 = vpop.permute.xlu0 %4557
    %4559 = vrot.lane.b32.xlu0 %v150, 32
    %v4560 = vpop.permute.xlu0 %4559
    %v4561 = vsel %vm83, %v4558, 0
    %v4563 = vsel %vm83, %v4560, 0
    %4565 = vmatprep.subr.mxu0 0.0
    %4566 = vmatpush1.msra.mxu0 0.0
    %4567 = vmatprep.subr.mxu0 0.0
    %4568 = vmatpush1.msra.mxu0 0.0
    %4569 = vmatprep.subr.mxu0 0.0
    %4570 = vmatpush1.msra.mxu0 0.0
    %4571 = vmatprep.subr.mxu0 0.0
    %4572 = vmatpush1.msra.mxu0 0.0
    %4573 = vmatprep.subr.mxu0 0.0
    %4574 = vmatpush1.msra.mxu0 0.0
    %4575 = vmatprep.subr.mxu0 0.0
    %4576 = vmatpush1.msra.mxu0 0.0
    %4577 = vmatprep.subr.mxu0 0.0
    %4578 = vmatpush1.msra.mxu0 0.0
    %4579 = vmatprep.subr.mxu0 0.0
    %4580 = vmatpush1.msra.mxu0 0.0
    %4581 = vmatprep.subr.mxu0 0.0
    %4582 = vmatpush1.msra.mxu0 0.0
    %4583 = vmatprep.subr.mxu0 0.0
    %4584 = vmatpush1.msra.mxu0 0.0
    %4585 = vmatprep.subr.mxu0 0.0
    %4586 = vmatpush1.msra.mxu0 0.0
    %4587 = vmatprep.subr.mxu0 0.0
    %4588 = vmatpush1.msra.mxu0 0.0
    %4589 = vmatprep.subr.mxu0 %v4535
    %4590 = vmatpush1.msra.mxu0 %v4533
    %4591 = vmatprep.subr.mxu0 %v4531
    %4592 = vmatpush1.msra.mxu0 %v4529
    %4593 = vmatprep.subr.mxu0 %v4525
    %4594 = vmatpush1.msra.mxu0 %v4523
    %4595 = vmatprep.subr.mxu0 %v4521
    %4596 = vmatpush1.msra.mxu0 %v4519
    %4597 = vmatprep.subr.mxu0 0.0
    %4598 = vmatpush2.msra.mxu0 0.0
    %4599 = vmatprep.subr.mxu0 0.0
    %4600 = vmatpush2.msra.mxu0 0.0
    %4601 = vmatprep.subr.mxu0 0.0
    %4602 = vmatpush2.msra.mxu0 0.0
    %4603 = vmatprep.subr.mxu0 0.0
    %4604 = vmatpush2.msra.mxu0 0.0
    %4605 = vmatprep.subr.mxu0 0.0
    %4606 = vmatpush2.msra.mxu0 0.0
    %4607 = vmatprep.subr.mxu0 0.0
    %4608 = vmatpush2.msra.mxu0 0.0
    %4609 = vmatprep.subr.mxu0 0.0
    %4610 = vmatpush2.msra.mxu0 0.0
    %4611 = vmatprep.subr.mxu0 0.0
    %4612 = vmatpush2.msra.mxu0 0.0
    %4613 = vmatprep.subr.mxu0 0.0
    %4614 = vmatpush2.msra.mxu0 0.0
    %4615 = vmatprep.subr.mxu0 0.0
    %4616 = vmatpush2.msra.mxu0 0.0
    %4617 = vmatprep.subr.mxu0 0.0
    %4618 = vmatpush2.msra.mxu0 0.0
    %4619 = vmatprep.subr.mxu0 0.0
    %4620 = vmatpush2.msra.mxu0 0.0
    %4621 = vmatprep.subr.mxu0 0.0
    %4622 = vmatpush2.msra.mxu0 0.0
    %4623 = vmatprep.subr.mxu0 0.0
    %4624 = vmatpush2.msra.mxu0 0.0
    %4625 = vmatprep.subr.mxu0 0.0
    %4626 = vmatpush2.msra.mxu0 0.0
    %4627 = vmatprep.subr.mxu0 0.0
    %4628 = vmatpush2.msra.mxu0 0.0
    %4629 = vmatprep.mubr.f32.mxu0 0.0
    %4630 = vmatmul.mubr.f32.gmra.mxu0 %v4561
    %v4631 = vpop.f32.mrf.mxu0
    %v4632 = vadd.f32 0.0, %v4631
    %v4633 = vpop.f32.mrf.mxu0
    %v4634 = vadd.f32 0.0, %v4633
    %4635 = vmatprep.mubr.f32.mxu0 0.0
    %4636 = vmatmul.mubr.f32.gmra.mxu0 %v4563
    %v4637 = vpop.f32.mrf.mxu0
    %v4638 = vadd.f32 0.0, %v4637
    %v4639 = vpop.f32.mrf.mxu0
    %v4640 = vadd.f32 0.0, %v4639
    %4641 = vdwg.mxu0
    %v4642 = vmax.f32 %v4632, %v4634
    %4643 = vmax.xlane.f32.xlu0 %v4642
    %v4644 = vpop.xlane.xlu0 %4643
    %v4645 = vmax.f32 %v4638, %v4640
    %4646 = vmax.xlane.f32.xlu0 %v4645
    %v4647 = vpop.xlane.xlu0 %4646
    %v4648 = vsub.f32 %v4632, %v4644
    %v4649 = vsub.f32 %v4634, %v4644
    %v4650 = vsub.f32 %v4638, %v4647
    %v4651 = vsub.f32 %v4640, %v4647
    %v4652 = vmul.f32 %v4648, 1.442695
    %v4653 = vpow.pop %v4652
    %v4654 = vmul.f32 %v4649, 1.442695
    %v4655 = vpow.pop %v4654
    %v4656 = vmul.f32 %v4650, 1.442695
    %v4657 = vpow.pop %v4656
    %v4658 = vmul.f32 %v4651, 1.442695
    %v4659 = vpow.pop %v4658
    %v4660 = vadd.f32 %v4653, %v4655
    %4661 = vadd.xlane.f32.xlu0 %v4660
    %v4662 = vpop.xlane.xlu0 %4661
    %v4663 = vadd.f32 %v4657, %v4659
    %4664 = vadd.xlane.f32.xlu0 %v4663
    %v4665 = vpop.xlane.xlu0 %4664
    %v4666 = vrcp.pop %v4662
    %v4667 = vrcp.pop %v4665
    %v4668 = vmul.f32 %v4653, %v4666
    %v4669 = vmul.f32 %v4655, %v4666
    %v4670 = vmul.f32 %v4657, %v4667
    %v4671 = vmul.f32 %v4659, %v4667
    %4672 = vmatprep.subr.mxu0 0.0
    %4673 = vmatpush1.xpose.msra.mxu0 0.0
    %4674 = vmatprep.subr.mxu0 0.0
    %4675 = vmatpush1.xpose.msra.mxu0 0.0
    %4676 = vmatprep.subr.mxu0 0.0
    %4677 = vmatpush1.xpose.msra.mxu0 0.0
    %4678 = vmatprep.subr.mxu0 0.0
    %4679 = vmatpush1.xpose.msra.mxu0 0.0
    %4680 = vmatprep.subr.mxu0 0.0
    %4681 = vmatpush1.xpose.msra.mxu0 0.0
    %4682 = vmatprep.subr.mxu0 0.0
    %4683 = vmatpush1.xpose.msra.mxu0 0.0
    %4684 = vmatprep.subr.mxu0 0.0
    %4685 = vmatpush1.xpose.msra.mxu0 0.0
    %4686 = vmatprep.subr.mxu0 0.0
    %4687 = vmatpush1.xpose.msra.mxu0 0.0
    %4688 = vmatprep.subr.mxu0 0.0
    %4689 = vmatpush1.xpose.msra.mxu0 0.0
    %4690 = vmatprep.subr.mxu0 0.0
    %4691 = vmatpush1.xpose.msra.mxu0 0.0
    %4692 = vmatprep.subr.mxu0 0.0
    %4693 = vmatpush1.xpose.msra.mxu0 0.0
    %4694 = vmatprep.subr.mxu0 0.0
    %4695 = vmatpush1.xpose.msra.mxu0 0.0
    %4696 = vmatprep.subr.mxu0 %v4555
    %4697 = vmatpush1.xpose.msra.mxu0 %v4553
    %4698 = vmatprep.subr.mxu0 %v4551
    %4699 = vmatpush1.xpose.msra.mxu0 %v4549
    %4700 = vmatprep.subr.mxu0 %v4545
    %4701 = vmatpush1.xpose.msra.mxu0 %v4543
    %4702 = vmatprep.subr.mxu0 %v4541
    %4703 = vmatpush1.xpose.msra.mxu0 %v4539
    %4704 = vmatprep.subr.mxu0 0.0
    %4705 = vmatpush2.xpose.msra.mxu0 0.0
    %4706 = vmatprep.subr.mxu0 0.0
    %4707 = vmatpush2.xpose.msra.mxu0 0.0
    %4708 = vmatprep.subr.mxu0 0.0
    %4709 = vmatpush2.xpose.msra.mxu0 0.0
    %4710 = vmatprep.subr.mxu0 0.0
    %4711 = vmatpush2.xpose.msra.mxu0 0.0
    %4712 = vmatprep.subr.mxu0 0.0
    %4713 = vmatpush2.xpose.msra.mxu0 0.0
    %4714 = vmatprep.subr.mxu0 0.0
    %4715 = vmatpush2.xpose.msra.mxu0 0.0
    %4716 = vmatprep.subr.mxu0 0.0
    %4717 = vmatpush2.xpose.msra.mxu0 0.0
    %4718 = vmatprep.subr.mxu0 0.0
    %4719 = vmatpush2.xpose.msra.mxu0 0.0
    %4720 = vmatprep.subr.mxu0 0.0
    %4721 = vmatpush2.xpose.msra.mxu0 0.0
    %4722 = vmatprep.subr.mxu0 0.0
    %4723 = vmatpush2.xpose.msra.mxu0 0.0
    %4724 = vmatprep.subr.mxu0 0.0
    %4725 = vmatpush2.xpose.msra.mxu0 0.0
    %4726 = vmatprep.subr.mxu0 0.0
    %4727 = vmatpush2.xpose.msra.mxu0 0.0
    %4728 = vmatprep.subr.mxu0 0.0
    %4729 = vmatpush2.xpose.msra.mxu0 0.0
    %4730 = vmatprep.subr.mxu0 0.0
    %4731 = vmatpush2.xpose.msra.mxu0 0.0
    %4732 = vmatprep.subr.mxu0 0.0
    %4733 = vmatpush2.xpose.msra.mxu0 0.0
    %4734 = vmatprep.subr.mxu0 0.0
    %4735 = vmatpush2.xpose.msra.mxu0 0.0
    %4736 = vmatprep.mubr.f32.mxu0 %v4669
    %4737 = vmatmul.mubr.f32.gmra.mxu0 %v4668
    %v4738 = vpop.f32.mrf.mxu0
    %v4739 = vadd.f32 0.0, %v4738
    %v4740 = vpop.f32.mrf.mxu0
    %4741 = vmatprep.mubr.f32.mxu0 %v4671
    %4742 = vmatmul.mubr.f32.gmra.mxu0 %v4670
    %v4743 = vpop.f32.mrf.mxu0
    %v4744 = vadd.f32 0.0, %v4743
    %v4745 = vpop.f32.mrf.mxu0
    %4746 = vdwg.mxu0
    %4747 = vmatprep.subr.bf16.mxu0 0
    %4748 = vmatpush1.bf16.msra.mxu0 0
    %4749 = vmatprep.subr.bf16.mxu0 0
    %4750 = vmatpush1.bf16.msra.mxu0 0
    %4751 = vmatprep.subr.bf16.mxu0 0
    %4752 = vmatpush1.bf16.msra.mxu0 0
    %4753 = vmatprep.subr.bf16.mxu0 0
    %4754 = vmatpush1.bf16.msra.mxu0 0
    %4755 = vmatprep.subr.bf16.mxu0 0
    %4756 = vmatpush1.bf16.msra.mxu0 0
    %4757 = vmatprep.subr.bf16.mxu0 0
    %4758 = vmatpush1.bf16.msra.mxu0 0
    %4759 = vmatprep.subr.bf16.mxu0 0
    %4760 = vmatpush1.bf16.msra.mxu0 0
    %4761 = vmatprep.subr.bf16.mxu0 %v1084
    %4762 = vmatpush1.bf16.msra.mxu0 %v1081
    %4763 = vmatprep.subr.bf16.mxu0 0
    %4764 = vmatpush2.bf16.msra.mxu0 0
    %4765 = vmatprep.subr.bf16.mxu0 0
    %4766 = vmatpush2.bf16.msra.mxu0 0
    %4767 = vmatprep.subr.bf16.mxu0 0
    %4768 = vmatpush2.bf16.msra.mxu0 0
    %4769 = vmatprep.subr.bf16.mxu0 0
    %4770 = vmatpush2.bf16.msra.mxu0 0
    %4771 = vmatprep.subr.bf16.mxu0 0
    %4772 = vmatpush2.bf16.msra.mxu0 0
    %4773 = vmatprep.subr.bf16.mxu0 0
    %4774 = vmatpush2.bf16.msra.mxu0 0
    %4775 = vmatprep.subr.bf16.mxu0 0
    %4776 = vmatpush2.bf16.msra.mxu0 0
    %4777 = vmatprep.subr.bf16.mxu0 0
    %4778 = vmatpush2.bf16.msra.mxu0 0
    %4779 = vmatprep.mubr.bf16.mxu0 0
    %4780 = vmatmul.mubr.bf16.gmra.mxu0 %v3947
    %v4781 = vpop.f32.mrf.mxu0
    %v4782 = vadd.f32 %v3910, %v4781
    %v4783 = vpop.f32.mrf.mxu0
    %v4784 = vadd.f32 %v3911, %v4783
    %v4785 = vpop.f32.mrf.mxu0
    %v4786 = vadd.f32 %v3912, %v4785
    %v4787 = vpop.f32.mrf.mxu0
    %v4788 = vadd.f32 %v3913, %v4787
    %4789 = vmatprep.mubr.bf16.mxu0 0
    %4790 = vmatmul.mubr.bf16.gmra.mxu0 %v3950
    %v4791 = vpop.f32.mrf.mxu0
    %v4792 = vadd.f32 %v3914, %v4791
    %v4793 = vpop.f32.mrf.mxu0
    %v4794 = vadd.f32 %v3915, %v4793
    %v4795 = vpop.f32.mrf.mxu0
    %v4796 = vadd.f32 %v3916, %v4795
    %v4797 = vpop.f32.mrf.mxu0
    %v4798 = vadd.f32 %v3917, %v4797
    %4799 = vmatprep.mubr.bf16.mxu0 0
    %4800 = vmatmul.mubr.bf16.gmra.mxu0 %v3953
    %v4801 = vpop.f32.mrf.mxu0
    %v4802 = vadd.f32 %v3918, %v4801
    %v4803 = vpop.f32.mrf.mxu0
    %v4804 = vadd.f32 %v3919, %v4803
    %v4805 = vpop.f32.mrf.mxu0
    %v4806 = vadd.f32 %v3920, %v4805
    %v4807 = vpop.f32.mrf.mxu0
    %v4808 = vadd.f32 %v3921, %v4807
    %4809 = vmatprep.mubr.bf16.mxu0 0
    %4810 = vmatmul.mubr.bf16.gmra.mxu0 %v3956
    %v4811 = vpop.f32.mrf.mxu0
    %v4812 = vadd.f32 %v3922, %v4811
    %v4813 = vpop.f32.mrf.mxu0
    %v4814 = vadd.f32 %v3923, %v4813
    %v4815 = vpop.f32.mrf.mxu0
    %v4816 = vadd.f32 %v3924, %v4815
    %v4817 = vpop.f32.mrf.mxu0
    %v4818 = vadd.f32 %v3925, %v4817
    %4819 = vdwg.mxu0
    %4820 = vrot.lane.b32.xlu0 %v155, 32
    %v4821 = vpop.permute.xlu0 %4820
    %4822 = vrot.lane.b32.xlu0 %v158, 32
    %v4823 = vpop.permute.xlu0 %4822
    %v4824 = vsel %vm83, %v4821, 0
    %v4826 = vsel %vm83, %v4823, 0
    %4828 = vmatprep.subr.mxu0 0.0
    %4829 = vmatpush1.msra.mxu0 0.0
    %4830 = vmatprep.subr.mxu0 0.0
    %4831 = vmatpush1.msra.mxu0 0.0
    %4832 = vmatprep.subr.mxu0 0.0
    %4833 = vmatpush1.msra.mxu0 0.0
    %4834 = vmatprep.subr.mxu0 0.0
    %4835 = vmatpush1.msra.mxu0 0.0
    %4836 = vmatprep.subr.mxu0 0.0
    %4837 = vmatpush1.msra.mxu0 0.0
    %4838 = vmatprep.subr.mxu0 0.0
    %4839 = vmatpush1.msra.mxu0 0.0
    %4840 = vmatprep.subr.mxu0 0.0
    %4841 = vmatpush1.msra.mxu0 0.0
    %4842 = vmatprep.subr.mxu0 0.0
    %4843 = vmatpush1.msra.mxu0 0.0
    %4844 = vmatprep.subr.mxu0 0.0
    %4845 = vmatpush1.msra.mxu0 0.0
    %4846 = vmatprep.subr.mxu0 0.0
    %4847 = vmatpush1.msra.mxu0 0.0
    %4848 = vmatprep.subr.mxu0 0.0
    %4849 = vmatpush1.msra.mxu0 0.0
    %4850 = vmatprep.subr.mxu0 0.0
    %4851 = vmatpush1.msra.mxu0 0.0
    %4852 = vmatprep.subr.mxu0 %v4798
    %4853 = vmatpush1.msra.mxu0 %v4796
    %4854 = vmatprep.subr.mxu0 %v4794
    %4855 = vmatpush1.msra.mxu0 %v4792
    %4856 = vmatprep.subr.mxu0 %v4788
    %4857 = vmatpush1.msra.mxu0 %v4786
    %4858 = vmatprep.subr.mxu0 %v4784
    %4859 = vmatpush1.msra.mxu0 %v4782
    %4860 = vmatprep.subr.mxu0 0.0
    %4861 = vmatpush2.msra.mxu0 0.0
    %4862 = vmatprep.subr.mxu0 0.0
    %4863 = vmatpush2.msra.mxu0 0.0
    %4864 = vmatprep.subr.mxu0 0.0
    %4865 = vmatpush2.msra.mxu0 0.0
    %4866 = vmatprep.subr.mxu0 0.0
    %4867 = vmatpush2.msra.mxu0 0.0
    %4868 = vmatprep.subr.mxu0 0.0
    %4869 = vmatpush2.msra.mxu0 0.0
    %4870 = vmatprep.subr.mxu0 0.0
    %4871 = vmatpush2.msra.mxu0 0.0
    %4872 = vmatprep.subr.mxu0 0.0
    %4873 = vmatpush2.msra.mxu0 0.0
    %4874 = vmatprep.subr.mxu0 0.0
    %4875 = vmatpush2.msra.mxu0 0.0
    %4876 = vmatprep.subr.mxu0 0.0
    %4877 = vmatpush2.msra.mxu0 0.0
    %4878 = vmatprep.subr.mxu0 0.0
    %4879 = vmatpush2.msra.mxu0 0.0
    %4880 = vmatprep.subr.mxu0 0.0
    %4881 = vmatpush2.msra.mxu0 0.0
    %4882 = vmatprep.subr.mxu0 0.0
    %4883 = vmatpush2.msra.mxu0 0.0
    %4884 = vmatprep.subr.mxu0 0.0
    %4885 = vmatpush2.msra.mxu0 0.0
    %4886 = vmatprep.subr.mxu0 0.0
    %4887 = vmatpush2.msra.mxu0 0.0
    %4888 = vmatprep.subr.mxu0 0.0
    %4889 = vmatpush2.msra.mxu0 0.0
    %4890 = vmatprep.subr.mxu0 0.0
    %4891 = vmatpush2.msra.mxu0 0.0
    %4892 = vmatprep.mubr.f32.mxu0 0.0
    %4893 = vmatmul.mubr.f32.gmra.mxu0 %v4824
    %v4894 = vpop.f32.mrf.mxu0
    %v4895 = vadd.f32 0.0, %v4894
    %v4896 = vpop.f32.mrf.mxu0
    %v4897 = vadd.f32 0.0, %v4896
    %4898 = vmatprep.mubr.f32.mxu0 0.0
    %4899 = vmatmul.mubr.f32.gmra.mxu0 %v4826
    %v4900 = vpop.f32.mrf.mxu0
    %v4901 = vadd.f32 0.0, %v4900
    %v4902 = vpop.f32.mrf.mxu0
    %v4903 = vadd.f32 0.0, %v4902
    %4904 = vdwg.mxu0
    %v4905 = vmax.f32 %v4895, %v4897
    %4906 = vmax.xlane.f32.xlu0 %v4905
    %v4907 = vpop.xlane.xlu0 %4906
    %v4908 = vmax.f32 %v4901, %v4903
    %4909 = vmax.xlane.f32.xlu0 %v4908
    %v4910 = vpop.xlane.xlu0 %4909
    %v4911 = vsub.f32 %v4895, %v4907
    %v4912 = vsub.f32 %v4897, %v4907
    %v4913 = vsub.f32 %v4901, %v4910
    %v4914 = vsub.f32 %v4903, %v4910
    %v4915 = vmul.f32 %v4911, 1.442695
    %v4916 = vpow.pop %v4915
    %v4917 = vmul.f32 %v4912, 1.442695
    %v4918 = vpow.pop %v4917
    %v4919 = vmul.f32 %v4913, 1.442695
    %v4920 = vpow.pop %v4919
    %v4921 = vmul.f32 %v4914, 1.442695
    %v4922 = vpow.pop %v4921
    %v4923 = vadd.f32 %v4916, %v4918
    %4924 = vadd.xlane.f32.xlu0 %v4923
    %v4925 = vpop.xlane.xlu0 %4924
    %v4926 = vadd.f32 %v4920, %v4922
    %4927 = vadd.xlane.f32.xlu0 %v4926
    %v4928 = vpop.xlane.xlu0 %4927
    %v4929 = vrcp.pop %v4925
    %v4930 = vrcp.pop %v4928
    %v4931 = vmul.f32 %v4916, %v4929
    %v4932 = vmul.f32 %v4918, %v4929
    %v4933 = vmul.f32 %v4920, %v4930
    %v4934 = vmul.f32 %v4922, %v4930
    %4935 = vmatprep.subr.mxu0 0.0
    %4936 = vmatpush1.xpose.msra.mxu0 0.0
    %4937 = vmatprep.subr.mxu0 0.0
    %4938 = vmatpush1.xpose.msra.mxu0 0.0
    %4939 = vmatprep.subr.mxu0 0.0
    %4940 = vmatpush1.xpose.msra.mxu0 0.0
    %4941 = vmatprep.subr.mxu0 0.0
    %4942 = vmatpush1.xpose.msra.mxu0 0.0
    %4943 = vmatprep.subr.mxu0 0.0
    %4944 = vmatpush1.xpose.msra.mxu0 0.0
    %4945 = vmatprep.subr.mxu0 0.0
    %4946 = vmatpush1.xpose.msra.mxu0 0.0
    %4947 = vmatprep.subr.mxu0 0.0
    %4948 = vmatpush1.xpose.msra.mxu0 0.0
    %4949 = vmatprep.subr.mxu0 0.0
    %4950 = vmatpush1.xpose.msra.mxu0 0.0
    %4951 = vmatprep.subr.mxu0 0.0
    %4952 = vmatpush1.xpose.msra.mxu0 0.0
    %4953 = vmatprep.subr.mxu0 0.0
    %4954 = vmatpush1.xpose.msra.mxu0 0.0
    %4955 = vmatprep.subr.mxu0 0.0
    %4956 = vmatpush1.xpose.msra.mxu0 0.0
    %4957 = vmatprep.subr.mxu0 0.0
    %4958 = vmatpush1.xpose.msra.mxu0 0.0
    %4959 = vmatprep.subr.mxu0 %v4818
    %4960 = vmatpush1.xpose.msra.mxu0 %v4816
    %4961 = vmatprep.subr.mxu0 %v4814
    %4962 = vmatpush1.xpose.msra.mxu0 %v4812
    %4963 = vmatprep.subr.mxu0 %v4808
    %4964 = vmatpush1.xpose.msra.mxu0 %v4806
    %4965 = vmatprep.subr.mxu0 %v4804
    %4966 = vmatpush1.xpose.msra.mxu0 %v4802
    %4967 = vmatprep.subr.mxu0 0.0
    %4968 = vmatpush2.xpose.msra.mxu0 0.0
    %4969 = vmatprep.subr.mxu0 0.0
    %4970 = vmatpush2.xpose.msra.mxu0 0.0
    %4971 = vmatprep.subr.mxu0 0.0
    %4972 = vmatpush2.xpose.msra.mxu0 0.0
    %4973 = vmatprep.subr.mxu0 0.0
    %4974 = vmatpush2.xpose.msra.mxu0 0.0
    %4975 = vmatprep.subr.mxu0 0.0
    %4976 = vmatpush2.xpose.msra.mxu0 0.0
    %4977 = vmatprep.subr.mxu0 0.0
    %4978 = vmatpush2.xpose.msra.mxu0 0.0
    %4979 = vmatprep.subr.mxu0 0.0
    %4980 = vmatpush2.xpose.msra.mxu0 0.0
    %4981 = vmatprep.subr.mxu0 0.0
    %4982 = vmatpush2.xpose.msra.mxu0 0.0
    %4983 = vmatprep.subr.mxu0 0.0
    %4984 = vmatpush2.xpose.msra.mxu0 0.0
    %4985 = vmatprep.subr.mxu0 0.0
    %4986 = vmatpush2.xpose.msra.mxu0 0.0
    %4987 = vmatprep.subr.mxu0 0.0
    %4988 = vmatpush2.xpose.msra.mxu0 0.0
    %4989 = vmatprep.subr.mxu0 0.0
    %4990 = vmatpush2.xpose.msra.mxu0 0.0
    %4991 = vmatprep.subr.mxu0 0.0
    %4992 = vmatpush2.xpose.msra.mxu0 0.0
    %4993 = vmatprep.subr.mxu0 0.0
    %4994 = vmatpush2.xpose.msra.mxu0 0.0
    %4995 = vmatprep.subr.mxu0 0.0
    %4996 = vmatpush2.xpose.msra.mxu0 0.0
    %4997 = vmatprep.subr.mxu0 0.0
    %4998 = vmatpush2.xpose.msra.mxu0 0.0
    %4999 = vmatprep.mubr.f32.mxu0 %v4932
    %5000 = vmatmul.mubr.f32.gmra.mxu0 %v4931
    %v5001 = vpop.f32.mrf.mxu0
    %v5002 = vadd.f32 0.0, %v5001
    %v5003 = vpop.f32.mrf.mxu0
    %5004 = vmatprep.mubr.f32.mxu0 %v4934
    %5005 = vmatmul.mubr.f32.gmra.mxu0 %v4933
    %v5006 = vpop.f32.mrf.mxu0
    %v5007 = vadd.f32 0.0, %v5006
    %v5008 = vpop.f32.mrf.mxu0
    %5009 = vdwg.mxu0
    %v5010 = vpack.c.bf16 %v4218, %v4213
    %v5011 = vpack.c.bf16 %v4481, %v4476
    %v5012 = vpack.c.bf16 %v4744, %v4739
    %v5013 = vpack.c.bf16 %v5007, %v5002
    %v5018 = vunpack.c.l.b16 %v3898
    %v5019 = vunpack.c.l.b16 %v3899
    %v5020 = vunpack.c.l.b16 %v3900
    %v5021 = vunpack.c.l.b16 %v3901
    %v5022 = vpack.c.b16 %v5019, %v5018
    %v5023 = vpack.c.b16 %v5021, %v5020
    %v5027 = vsel %vm83, %v5010, 0
    %v5030 = vsel %vm83, %v5011, 0
    %v5033 = vsel %vm83, %v5012, 0
    %v5036 = vsel %vm83, %v5013, 0
    %5038 = vmatprep.subr.bf16.mxu0 0
    %5039 = vmatpush1.bf16.msra.mxu0 0
    %5040 = vmatprep.subr.bf16.mxu0 0
    %5041 = vmatpush1.bf16.msra.mxu0 0
    %5042 = vmatprep.subr.bf16.mxu0 0
    %5043 = vmatpush1.bf16.msra.mxu0 0
    %5044 = vmatprep.subr.bf16.mxu0 0
    %5045 = vmatpush1.bf16.msra.mxu0 0
    %5046 = vmatprep.subr.bf16.mxu0 0
    %5047 = vmatpush1.bf16.msra.mxu0 0
    %5048 = vmatprep.subr.bf16.mxu0 0
    %5049 = vmatpush1.bf16.msra.mxu0 0
    %5050 = vmatprep.subr.bf16.mxu0 0
    %5051 = vmatpush1.bf16.msra.mxu0 %v5023
    %5052 = vmatprep.subr.bf16.mxu0 0
    %5053 = vmatpush1.bf16.msra.mxu0 %v5022
    %5054 = vmatprep.subr.bf16.mxu0 0
    %5055 = vmatpush2.bf16.msra.mxu0 0
    %5056 = vmatprep.subr.bf16.mxu0 0
    %5057 = vmatpush2.bf16.msra.mxu0 0
    %5058 = vmatprep.subr.bf16.mxu0 0
    %5059 = vmatpush2.bf16.msra.mxu0 0
    %5060 = vmatprep.subr.bf16.mxu0 0
    %5061 = vmatpush2.bf16.msra.mxu0 0
    %5062 = vmatprep.subr.bf16.mxu0 0
    %5063 = vmatpush2.bf16.msra.mxu0 0
    %5064 = vmatprep.subr.bf16.mxu0 0
    %5065 = vmatpush2.bf16.msra.mxu0 0
    %5066 = vmatprep.subr.bf16.mxu0 0
    %5067 = vmatpush2.bf16.msra.mxu0 0
    %5068 = vmatprep.subr.bf16.mxu0 0
    %5069 = vmatpush2.bf16.msra.mxu0 0
    %5070 = vmatprep.mubr.bf16.mxu0 0
    %5071 = vmatmul.mubr.bf16.gmra.mxu0 %v5027
    %v5072 = vpop.f32.mrf.mxu0
    %v5073 = vadd.f32 0.0, %v5072
    %v5074 = vpop.f32.mrf.mxu0
    %v5075 = vpop.f32.mrf.mxu0
    %v5076 = vadd.f32 0.0, %v5075
    %v5077 = vpop.f32.mrf.mxu0
    %5078 = vmatprep.mubr.bf16.mxu0 0
    %5079 = vmatmul.mubr.bf16.gmra.mxu0 %v5030
    %v5080 = vpop.f32.mrf.mxu0
    %v5081 = vadd.f32 0.0, %v5080
    %v5082 = vpop.f32.mrf.mxu0
    %v5083 = vpop.f32.mrf.mxu0
    %v5084 = vadd.f32 0.0, %v5083
    %v5085 = vpop.f32.mrf.mxu0
    %5086 = vmatprep.mubr.bf16.mxu0 0
    %5087 = vmatmul.mubr.bf16.gmra.mxu0 %v5033
    %v5088 = vpop.f32.mrf.mxu0
    %v5089 = vadd.f32 0.0, %v5088
    %v5090 = vpop.f32.mrf.mxu0
    %v5091 = vpop.f32.mrf.mxu0
    %v5092 = vadd.f32 0.0, %v5091
    %v5093 = vpop.f32.mrf.mxu0
    %5094 = vmatprep.mubr.bf16.mxu0 0
    %5095 = vmatmul.mubr.bf16.gmra.mxu0 %v5036
    %v5096 = vpop.f32.mrf.mxu0
    %v5097 = vadd.f32 0.0, %v5096
    %v5098 = vpop.f32.mrf.mxu0
    %v5099 = vpop.f32.mrf.mxu0
    %v5100 = vadd.f32 0.0, %v5099
    %v5101 = vpop.f32.mrf.mxu0
    %5102 = vdwg.mxu0
    %v5103 = vadd.f32 %v3882, %v5073
    %v5104 = vadd.f32 %v3883, %v5076
    %v5105 = vadd.f32 %v3884, %v5081
    %v5106 = vadd.f32 %v3885, %v5084
    %v5107 = vadd.f32 %v3886, %v5089
    %v5108 = vadd.f32 %v3887, %v5092
    %v5109 = vadd.f32 %v3888, %v5097
    %v5110 = vadd.f32 %v3889, %v5100
    %v5111 = vpack.c.bf16 %v5104, %v5103
    %v5112 = vpack.c.bf16 %v5106, %v5105
    %v5113 = vpack.c.bf16 %v5108, %v5107
    %v5114 = vpack.c.bf16 %v5110, %v5109
    %v5115 = vlaneseq
    %v5116 = vshrl.u32 %v5115, 7
    %v5117 = vsub.s32 0, %v5116
    %v5118 = vrot.slane %v45, %v5117
    %v5123 = vunpack.c.l.b16 %v40
    %v5124 = vunpack.c.l.b16 %v41
    %v5125 = vunpack.c.l.b16 %v42
    %v5126 = vunpack.c.l.b16 %v43
    %v5127 = vpack.c.b16 %v5124, %v5123
    %v5128 = vpack.c.b16 %v5126, %v5125
    %v5132 = vsel %vm83, %v5111, 0
    %v5135 = vsel %vm83, %v5112, 0
    %v5138 = vsel %vm83, %v5113, 0
    %v5141 = vsel %vm83, %v5114, 0
    %5143 = vmatprep.subr.bf16.mxu0 0
    %5144 = vmatpush1.bf16.msra.mxu0 0
    %5145 = vmatprep.subr.bf16.mxu0 0
    %5146 = vmatpush1.bf16.msra.mxu0 0
    %5147 = vmatprep.subr.bf16.mxu0 0
    %5148 = vmatpush1.bf16.msra.mxu0 0
    %5149 = vmatprep.subr.bf16.mxu0 0
    %5150 = vmatpush1.bf16.msra.mxu0 0
    %5151 = vmatprep.subr.bf16.mxu0 0
    %5152 = vmatpush1.bf16.msra.mxu0 0
    %5153 = vmatprep.subr.bf16.mxu0 0
    %5154 = vmatpush1.bf16.msra.mxu0 0
    %5155 = vmatprep.subr.bf16.mxu0 0
    %5156 = vmatpush1.bf16.msra.mxu0 %v5128
    %5157 = vmatprep.subr.bf16.mxu0 0
    %5158 = vmatpush1.bf16.msra.mxu0 %v5127
    %5159 = vmatprep.subr.bf16.mxu0 0
    %5160 = vmatpush2.bf16.msra.mxu0 0
    %5161 = vmatprep.subr.bf16.mxu0 0
    %5162 = vmatpush2.bf16.msra.mxu0 0
    %5163 = vmatprep.subr.bf16.mxu0 0
    %5164 = vmatpush2.bf16.msra.mxu0 0
    %5165 = vmatprep.subr.bf16.mxu0 0
    %5166 = vmatpush2.bf16.msra.mxu0 0
    %5167 = vmatprep.subr.bf16.mxu0 0
    %5168 = vmatpush2.bf16.msra.mxu0 0
    %5169 = vmatprep.subr.bf16.mxu0 0
    %5170 = vmatpush2.bf16.msra.mxu0 0
    %5171 = vmatprep.subr.bf16.mxu0 0
    %5172 = vmatpush2.bf16.msra.mxu0 0
    %5173 = vmatprep.subr.bf16.mxu0 0
    %5174 = vmatpush2.bf16.msra.mxu0 0
    %5175 = vmatprep.mubr.bf16.mxu0 0
    %5176 = vmatmul.mubr.bf16.gmra.mxu0 %v5132
    %v5177 = vpop.f32.mrf.mxu0
    %v5178 = vadd.f32 %v5118, %v5177
    %v5179 = vpop.f32.mrf.mxu0
    %v5180 = vpop.f32.mrf.mxu0
    %v5181 = vadd.f32 %v5118, %v5180
    %v5182 = vpop.f32.mrf.mxu0
    %5183 = vmatprep.mubr.bf16.mxu0 0
    %5184 = vmatmul.mubr.bf16.gmra.mxu0 %v5135
    %v5185 = vpop.f32.mrf.mxu0
    %v5186 = vadd.f32 %v5118, %v5185
    %v5187 = vpop.f32.mrf.mxu0
    %v5188 = vpop.f32.mrf.mxu0
    %v5189 = vadd.f32 %v5118, %v5188
    %v5190 = vpop.f32.mrf.mxu0
    %5191 = vmatprep.mubr.bf16.mxu0 0
    %5192 = vmatmul.mubr.bf16.gmra.mxu0 %v5138
    %v5193 = vpop.f32.mrf.mxu0
    %v5194 = vadd.f32 %v5118, %v5193
    %v5195 = vpop.f32.mrf.mxu0
    %v5196 = vpop.f32.mrf.mxu0
    %v5197 = vadd.f32 %v5118, %v5196
    %v5198 = vpop.f32.mrf.mxu0
    %5199 = vmatprep.mubr.bf16.mxu0 0
    %5200 = vmatmul.mubr.bf16.gmra.mxu0 %v5141
    %v5201 = vpop.f32.mrf.mxu0
    %v5202 = vadd.f32 %v5118, %v5201
    %v5203 = vpop.f32.mrf.mxu0
    %v5204 = vpop.f32.mrf.mxu0
    %v5205 = vadd.f32 %v5118, %v5204
    %v5206 = vpop.f32.mrf.mxu0
    %5207 = vdwg.mxu0
    %v5208 = vmax.f32 %v5178, 0.0
    %v5209 = vmax.f32 %v5181, 0.0
    %v5210 = vmax.f32 %v5186, 0.0
    %v5211 = vmax.f32 %v5189, 0.0
    %v5212 = vmax.f32 %v5194, 0.0
    %v5213 = vmax.f32 %v5197, 0.0
    %v5214 = vmax.f32 %v5202, 0.0
    %v5215 = vmax.f32 %v5205, 0.0
    %vm5216 = vcmask 130048
    %v5217 = vsel %vm5216, %v5208, 0.0
    %5218 = vadd.xlane.f32.xlu0 %v5217
    %v5219 = vpop.xlane.xlu0 %5218
    %v5220 = vsel %vm5216, %v5209, 0.0
    %5221 = vadd.xlane.f32.xlu0 %v5220
    %v5222 = vpop.xlane.xlu0 %5221
    %v5223 = vsel %vm5216, %v5210, 0.0
    %5224 = vadd.xlane.f32.xlu0 %v5223
    %v5225 = vpop.xlane.xlu0 %5224
    %v5226 = vsel %vm5216, %v5211, 0.0
    %5227 = vadd.xlane.f32.xlu0 %v5226
    %v5228 = vpop.xlane.xlu0 %5227
    %v5229 = vsel %vm5216, %v5212, 0.0
    %5230 = vadd.xlane.f32.xlu0 %v5229
    %v5231 = vpop.xlane.xlu0 %5230
    %v5232 = vsel %vm5216, %v5213, 0.0
    %5233 = vadd.xlane.f32.xlu0 %v5232
    %v5234 = vpop.xlane.xlu0 %5233
    %v5235 = vsel %vm5216, %v5214, 0.0
    %5236 = vadd.xlane.f32.xlu0 %v5235
    %v5237 = vpop.xlane.xlu0 %5236
    %v5238 = vsel %vm5216, %v5215, 0.0
    %5239 = vadd.xlane.f32.xlu0 %v5238
    %v5240 = vpop.xlane.xlu0 %5239
    %v5241 = vrcp.pop 16.0
    %v5242 = vmul.f32 %v5219, %v5241
    %v5243 = vmul.f32 %v5222, %v5241
    %v5244 = vmul.f32 %v5225, %v5241
    %v5245 = vmul.f32 %v5228, %v5241
    %v5246 = vmul.f32 %v5231, %v5241
    %v5247 = vmul.f32 %v5234, %v5241
    %v5248 = vmul.f32 %v5237, %v5241
    %v5249 = vmul.f32 %v5240, %v5241
    %v5250 = vsub.f32 %v5208, %v5242
    %v5251 = vsub.f32 %v5209, %v5243
    %v5252 = vsub.f32 %v5210, %v5244
    %v5253 = vsub.f32 %v5211, %v5245
    %v5254 = vsub.f32 %v5212, %v5246
    %v5255 = vsub.f32 %v5213, %v5247
    %v5256 = vsub.f32 %v5214, %v5248
    %v5257 = vsub.f32 %v5215, %v5249
    %v5258 = vmul.f32 %v5250, %v5250
    %v5259 = vmul.f32 %v5251, %v5251
    %v5260 = vmul.f32 %v5252, %v5252
    %v5261 = vmul.f32 %v5253, %v5253
    %v5262 = vmul.f32 %v5254, %v5254
    %v5263 = vmul.f32 %v5255, %v5255
    %v5264 = vmul.f32 %v5256, %v5256
    %v5265 = vmul.f32 %v5257, %v5257
    %v5266 = vsel %vm5216, %v5258, 0.0
    %5267 = vadd.xlane.f32.xlu0 %v5266
    %v5268 = vpop.xlane.xlu0 %5267
    %v5269 = vsel %vm5216, %v5259, 0.0
    %5270 = vadd.xlane.f32.xlu0 %v5269
    %v5271 = vpop.xlane.xlu0 %5270
    %v5272 = vsel %vm5216, %v5260, 0.0
    %5273 = vadd.xlane.f32.xlu0 %v5272
    %v5274 = vpop.xlane.xlu0 %5273
    %v5275 = vsel %vm5216, %v5261, 0.0
    %5276 = vadd.xlane.f32.xlu0 %v5275
    %v5277 = vpop.xlane.xlu0 %5276
    %v5278 = vsel %vm5216, %v5262, 0.0
    %5279 = vadd.xlane.f32.xlu0 %v5278
    %v5280 = vpop.xlane.xlu0 %5279
    %v5281 = vsel %vm5216, %v5263, 0.0
    %5282 = vadd.xlane.f32.xlu0 %v5281
    %v5283 = vpop.xlane.xlu0 %5282
    %v5284 = vsel %vm5216, %v5264, 0.0
    %5285 = vadd.xlane.f32.xlu0 %v5284
    %v5286 = vpop.xlane.xlu0 %5285
    %v5287 = vsel %vm5216, %v5265, 0.0
    %5288 = vadd.xlane.f32.xlu0 %v5287
    %v5289 = vpop.xlane.xlu0 %5288
    %v5290 = vmul.f32 %v5268, %v5241
    %v5291 = vmul.f32 %v5271, %v5241
    %v5292 = vmul.f32 %v5274, %v5241
    %v5293 = vmul.f32 %v5277, %v5241
    %v5294 = vmul.f32 %v5280, %v5241
    %v5295 = vmul.f32 %v5283, %v5241
    %v5296 = vmul.f32 %v5286, %v5241
    %v5297 = vmul.f32 %v5289, %v5241
    %v5298 = vadd.f32 %v5290, 1e-05
    %v5299 = vadd.f32 %v5291, 1e-05
    %v5300 = vadd.f32 %v5292, 1e-05
    %v5301 = vadd.f32 %v5293, 1e-05
    %v5302 = vadd.f32 %v5294, 1e-05
    %v5303 = vadd.f32 %v5295, 1e-05
    %v5304 = vadd.f32 %v5296, 1e-05
    %v5305 = vadd.f32 %v5297, 1e-05
    %v5306 = vrsqrt.pop %v5298
    %v5307 = vrsqrt.pop %v5299
    %v5308 = vrsqrt.pop %v5300
    %v5309 = vrsqrt.pop %v5301
    %v5310 = vrsqrt.pop %v5302
    %v5311 = vrsqrt.pop %v5303
    %v5312 = vrsqrt.pop %v5304
    %v5313 = vrsqrt.pop %v5305
    %v5314 = vmul.f32 %v5250, %v5306
    %v5315 = vmul.f32 %v5251, %v5307
    %v5316 = vmul.f32 %v5252, %v5308
    %v5317 = vmul.f32 %v5253, %v5309
    %v5318 = vmul.f32 %v5254, %v5310
    %v5319 = vmul.f32 %v5255, %v5311
    %v5320 = vmul.f32 %v5256, %v5312
    %v5321 = vmul.f32 %v5257, %v5313
    %v5322 = vlaneseq
    %v5323 = vshrl.u32 %v5322, 7
    %v5324 = vsub.s32 1, %v5323
    %v5325 = vrot.slane %v45, %v5324
    %v5326 = vmul.f32 %v5314, %v5325
    %v5327 = vmul.f32 %v5315, %v5325
    %v5328 = vmul.f32 %v5316, %v5325
    %v5329 = vmul.f32 %v5317, %v5325
    %v5330 = vmul.f32 %v5318, %v5325
    %v5331 = vmul.f32 %v5319, %v5325
    %v5332 = vmul.f32 %v5320, %v5325
    %v5333 = vmul.f32 %v5321, %v5325
    %v5334 = vlaneseq
    %v5335 = vshrl.u32 %v5334, 7
    %v5336 = vsub.s32 2, %v5335
    %v5337 = vrot.slane %v45, %v5336
    %v5338 = vadd.f32 %v5326, %v5337
    %v5339 = vadd.f32 %v5327, %v5337
    %v5340 = vadd.f32 %v5328, %v5337
    %v5341 = vadd.f32 %v5329, %v5337
    %v5342 = vadd.f32 %v5330, %v5337
    %v5343 = vadd.f32 %v5331, %v5337
    %v5344 = vadd.f32 %v5332, %v5337
    %v5345 = vadd.f32 %v5333, %v5337
    %v5346 = vpack.c.bf16 %v5339, %v5338
    %v5347 = vpack.c.bf16 %v5341, %v5340
    %v5348 = vpack.c.bf16 %v5343, %v5342
    %v5349 = vpack.c.bf16 %v5345, %v5344
    %v5350 = vlaneseq
    %v5351 = vshrl.u32 %v5350, 7
    %v5352 = vsub.s32 0, %v5351
    %v5353 = vrot.slane %v49, %v5352
    %v5356 = vunpack.c.l.b16 %v46
    %v5357 = vunpack.c.l.b16 %v47
    %v5358 = vpack.c.b16 %v5357, %v5356
    %v5361 = vsel %vm5216, %v5346, 0
    %v5364 = vsel %vm5216, %v5347, 0
    %v5367 = vsel %vm5216, %v5348, 0
    %v5370 = vsel %vm5216, %v5349, 0
    %5372 = vmatprep.subr.bf16.mxu0 0
    %5373 = vmatpush1.bf16.msra.mxu0 0
    %5374 = vmatprep.subr.bf16.mxu0 0
    %5375 = vmatpush1.bf16.msra.mxu0 0
    %5376 = vmatprep.subr.bf16.mxu0 0
    %5377 = vmatpush1.bf16.msra.mxu0 0
    %5378 = vmatprep.subr.bf16.mxu0 0
    %5379 = vmatpush1.bf16.msra.mxu0 0
    %5380 = vmatprep.subr.bf16.mxu0 0
    %5381 = vmatpush1.bf16.msra.mxu0 0
    %5382 = vmatprep.subr.bf16.mxu0 0
    %5383 = vmatpush1.bf16.msra.mxu0 0
    %5384 = vmatprep.subr.bf16.mxu0 0
    %5385 = vmatpush1.bf16.msra.mxu0 0
    %5386 = vmatprep.subr.bf16.mxu0 0
    %5387 = vmatpush1.bf16.msra.mxu0 %v5358
    %5388 = vmatprep.subr.bf16.mxu0 0
    %5389 = vmatpush2.bf16.msra.mxu0 0
    %5390 = vmatprep.subr.bf16.mxu0 0
    %5391 = vmatpush2.bf16.msra.mxu0 0
    %5392 = vmatprep.subr.bf16.mxu0 0
    %5393 = vmatpush2.bf16.msra.mxu0 0
    %5394 = vmatprep.subr.bf16.mxu0 0
    %5395 = vmatpush2.bf16.msra.mxu0 0
    %5396 = vmatprep.subr.bf16.mxu0 0
    %5397 = vmatpush2.bf16.msra.mxu0 0
    %5398 = vmatprep.subr.bf16.mxu0 0
    %5399 = vmatpush2.bf16.msra.mxu0 0
    %5400 = vmatprep.subr.bf16.mxu0 0
    %5401 = vmatpush2.bf16.msra.mxu0 0
    %5402 = vmatprep.subr.bf16.mxu0 0
    %5403 = vmatpush2.bf16.msra.mxu0 0
    %5404 = vmatprep.mubr.bf16.mxu0 0
    %5405 = vmatmul.mubr.bf16.gmra.mxu0 %v5361
    %v5406 = vpop.f32.mrf.mxu0
    %v5407 = vadd.f32 %v5353, %v5406
    %v5408 = vpop.f32.mrf.mxu0
    %v5409 = vpop.f32.mrf.mxu0
    %v5410 = vadd.f32 %v5353, %v5409
    %v5411 = vpop.f32.mrf.mxu0
    %5412 = vmatprep.mubr.bf16.mxu0 0
    %5413 = vmatmul.mubr.bf16.gmra.mxu0 %v5364
    %v5414 = vpop.f32.mrf.mxu0
    %v5415 = vadd.f32 %v5353, %v5414
    %v5416 = vpop.f32.mrf.mxu0
    %v5417 = vpop.f32.mrf.mxu0
    %v5418 = vadd.f32 %v5353, %v5417
    %v5419 = vpop.f32.mrf.mxu0
    %5420 = vmatprep.mubr.bf16.mxu0 0
    %5421 = vmatmul.mubr.bf16.gmra.mxu0 %v5367
    %v5422 = vpop.f32.mrf.mxu0
    %v5423 = vadd.f32 %v5353, %v5422
    %v5424 = vpop.f32.mrf.mxu0
    %v5425 = vpop.f32.mrf.mxu0
    %v5426 = vadd.f32 %v5353, %v5425
    %v5427 = vpop.f32.mrf.mxu0
    %5428 = vmatprep.mubr.bf16.mxu0 0
    %5429 = vmatmul.mubr.bf16.gmra.mxu0 %v5370
    %v5430 = vpop.f32.mrf.mxu0
    %v5431 = vadd.f32 %v5353, %v5430
    %v5432 = vpop.f32.mrf.mxu0
    %v5433 = vpop.f32.mrf.mxu0
    %v5434 = vadd.f32 %v5353, %v5433
    %v5435 = vpop.f32.mrf.mxu0
    %5436 = vdwg.mxu0
    %v5437 = vmax.f32 %v5407, 0.0
    %v5438 = vmax.f32 %v5410, 0.0
    %v5439 = vmax.f32 %v5415, 0.0
    %v5440 = vmax.f32 %v5418, 0.0
    %v5441 = vmax.f32 %v5423, 0.0
    %v5442 = vmax.f32 %v5426, 0.0
    %v5443 = vmax.f32 %v5431, 0.0
    %v5444 = vmax.f32 %v5434, 0.0
    %vm5445 = vcmask 64512
    %v5446 = vsel %vm5445, %v5437, 0.0
    %5447 = vadd.xlane.f32.xlu0 %v5446
    %v5448 = vpop.xlane.xlu0 %5447
    %v5449 = vsel %vm5445, %v5438, 0.0
    %5450 = vadd.xlane.f32.xlu0 %v5449
    %v5451 = vpop.xlane.xlu0 %5450
    %v5452 = vsel %vm5445, %v5439, 0.0
    %5453 = vadd.xlane.f32.xlu0 %v5452
    %v5454 = vpop.xlane.xlu0 %5453
    %v5455 = vsel %vm5445, %v5440, 0.0
    %5456 = vadd.xlane.f32.xlu0 %v5455
    %v5457 = vpop.xlane.xlu0 %5456
    %v5458 = vsel %vm5445, %v5441, 0.0
    %5459 = vadd.xlane.f32.xlu0 %v5458
    %v5460 = vpop.xlane.xlu0 %5459
    %v5461 = vsel %vm5445, %v5442, 0.0
    %5462 = vadd.xlane.f32.xlu0 %v5461
    %v5463 = vpop.xlane.xlu0 %5462
    %v5464 = vsel %vm5445, %v5443, 0.0
    %5465 = vadd.xlane.f32.xlu0 %v5464
    %v5466 = vpop.xlane.xlu0 %5465
    %v5467 = vsel %vm5445, %v5444, 0.0
    %5468 = vadd.xlane.f32.xlu0 %v5467
    %v5469 = vpop.xlane.xlu0 %5468
    %v5470 = vrcp.pop 8.0
    %v5471 = vmul.f32 %v5448, %v5470
    %v5472 = vmul.f32 %v5451, %v5470
    %v5473 = vmul.f32 %v5454, %v5470
    %v5474 = vmul.f32 %v5457, %v5470
    %v5475 = vmul.f32 %v5460, %v5470
    %v5476 = vmul.f32 %v5463, %v5470
    %v5477 = vmul.f32 %v5466, %v5470
    %v5478 = vmul.f32 %v5469, %v5470
    %v5479 = vsub.f32 %v5437, %v5471
    %v5480 = vsub.f32 %v5438, %v5472
    %v5481 = vsub.f32 %v5439, %v5473
    %v5482 = vsub.f32 %v5440, %v5474
    %v5483 = vsub.f32 %v5441, %v5475
    %v5484 = vsub.f32 %v5442, %v5476
    %v5485 = vsub.f32 %v5443, %v5477
    %v5486 = vsub.f32 %v5444, %v5478
    %v5487 = vmul.f32 %v5479, %v5479
    %v5488 = vmul.f32 %v5480, %v5480
    %v5489 = vmul.f32 %v5481, %v5481
    %v5490 = vmul.f32 %v5482, %v5482
    %v5491 = vmul.f32 %v5483, %v5483
    %v5492 = vmul.f32 %v5484, %v5484
    %v5493 = vmul.f32 %v5485, %v5485
    %v5494 = vmul.f32 %v5486, %v5486
    %v5495 = vsel %vm5445, %v5487, 0.0
    %5496 = vadd.xlane.f32.xlu0 %v5495
    %v5497 = vpop.xlane.xlu0 %5496
    %v5498 = vsel %vm5445, %v5488, 0.0
    %5499 = vadd.xlane.f32.xlu0 %v5498
    %v5500 = vpop.xlane.xlu0 %5499
    %v5501 = vsel %vm5445, %v5489, 0.0
    %5502 = vadd.xlane.f32.xlu0 %v5501
    %v5503 = vpop.xlane.xlu0 %5502
    %v5504 = vsel %vm5445, %v5490, 0.0
    %5505 = vadd.xlane.f32.xlu0 %v5504
    %v5506 = vpop.xlane.xlu0 %5505
    %v5507 = vsel %vm5445, %v5491, 0.0
    %5508 = vadd.xlane.f32.xlu0 %v5507
    %v5509 = vpop.xlane.xlu0 %5508
    %v5510 = vsel %vm5445, %v5492, 0.0
    %5511 = vadd.xlane.f32.xlu0 %v5510
    %v5512 = vpop.xlane.xlu0 %5511
    %v5513 = vsel %vm5445, %v5493, 0.0
    %5514 = vadd.xlane.f32.xlu0 %v5513
    %v5515 = vpop.xlane.xlu0 %5514
    %v5516 = vsel %vm5445, %v5494, 0.0
    %5517 = vadd.xlane.f32.xlu0 %v5516
    %v5518 = vpop.xlane.xlu0 %5517
    %v5519 = vmul.f32 %v5497, %v5470
    %v5520 = vmul.f32 %v5500, %v5470
    %v5521 = vmul.f32 %v5503, %v5470
    %v5522 = vmul.f32 %v5506, %v5470
    %v5523 = vmul.f32 %v5509, %v5470
    %v5524 = vmul.f32 %v5512, %v5470
    %v5525 = vmul.f32 %v5515, %v5470
    %v5526 = vmul.f32 %v5518, %v5470
    %v5527 = vadd.f32 %v5519, 1e-05
    %v5528 = vadd.f32 %v5520, 1e-05
    %v5529 = vadd.f32 %v5521, 1e-05
    %v5530 = vadd.f32 %v5522, 1e-05
    %v5531 = vadd.f32 %v5523, 1e-05
    %v5532 = vadd.f32 %v5524, 1e-05
    %v5533 = vadd.f32 %v5525, 1e-05
    %v5534 = vadd.f32 %v5526, 1e-05
    %v5535 = vrsqrt.pop %v5527
    %v5536 = vrsqrt.pop %v5528
    %v5537 = vrsqrt.pop %v5529
    %v5538 = vrsqrt.pop %v5530
    %v5539 = vrsqrt.pop %v5531
    %v5540 = vrsqrt.pop %v5532
    %v5541 = vrsqrt.pop %v5533
    %v5542 = vrsqrt.pop %v5534
    %v5543 = vmul.f32 %v5479, %v5535
    %v5544 = vmul.f32 %v5480, %v5536
    %v5545 = vmul.f32 %v5481, %v5537
    %v5546 = vmul.f32 %v5482, %v5538
    %v5547 = vmul.f32 %v5483, %v5539
    %v5548 = vmul.f32 %v5484, %v5540
    %v5549 = vmul.f32 %v5485, %v5541
    %v5550 = vmul.f32 %v5486, %v5542
    %v5551 = vlaneseq
    %v5552 = vshrl.u32 %v5551, 7
    %v5553 = vsub.s32 1, %v5552
    %v5554 = vrot.slane %v49, %v5553
    %v5555 = vmul.f32 %v5543, %v5554
    %v5556 = vmul.f32 %v5544, %v5554
    %v5557 = vmul.f32 %v5545, %v5554
    %v5558 = vmul.f32 %v5546, %v5554
    %v5559 = vmul.f32 %v5547, %v5554
    %v5560 = vmul.f32 %v5548, %v5554
    %v5561 = vmul.f32 %v5549, %v5554
    %v5562 = vmul.f32 %v5550, %v5554
    %v5563 = vlaneseq
    %v5564 = vshrl.u32 %v5563, 7
    %v5565 = vsub.s32 2, %v5564
    %v5566 = vrot.slane %v49, %v5565
    %v5567 = vadd.f32 %v5555, %v5566
    %v5568 = vadd.f32 %v5556, %v5566
    %v5569 = vadd.f32 %v5557, %v5566
    %v5570 = vadd.f32 %v5558, %v5566
    %v5571 = vadd.f32 %v5559, %v5566
    %v5572 = vadd.f32 %v5560, %v5566
    %v5573 = vadd.f32 %v5561, %v5566
    %v5574 = vadd.f32 %v5562, %v5566
    %v5575 = vpack.c.bf16 %v5568, %v5567
    %v5576 = vpack.c.bf16 %v5570, %v5569
    %v5577 = vpack.c.bf16 %v5572, %v5571
    %v5578 = vpack.c.bf16 %v5574, %v5573
    %v5579 = vlaneseq
    %v5580 = vshrl.u32 %v5579, 7
    %v5581 = vsub.s32 0, %v5580
    %v5582 = vrot.slane %v52, %v5581
    %v5584 = vsel %vm5445, %v5575, 0
    %v5587 = vsel %vm5445, %v5576, 0
    %v5590 = vsel %vm5445, %v5577, 0
    %v5593 = vsel %vm5445, %v5578, 0
    %vm5595 = vcmask 1043456
    %v5597 = vsel %vm5595, %v50, 0
    %5599 = vmatprep.subr.bf16.mxu0 0
    %5600 = vmatpush1.bf16.msra.mxu0 0
    %5601 = vmatprep.subr.bf16.mxu0 0
    %5602 = vmatpush1.bf16.msra.mxu0 0
    %5603 = vmatprep.subr.bf16.mxu0 0
    %5604 = vmatpush1.bf16.msra.mxu0 0
    %5605 = vmatprep.subr.bf16.mxu0 0
    %5606 = vmatpush1.bf16.msra.mxu0 0
    %5607 = vmatprep.subr.bf16.mxu0 0
    %5608 = vmatpush1.bf16.msra.mxu0 0
    %5609 = vmatprep.subr.bf16.mxu0 0
    %5610 = vmatpush1.bf16.msra.mxu0 0
    %5611 = vmatprep.subr.bf16.mxu0 0
    %5612 = vmatpush1.bf16.msra.mxu0 0
    %5613 = vmatprep.subr.bf16.mxu0 0
    %5614 = vmatpush1.bf16.msra.mxu0 %v5597
    %5615 = vmatprep.subr.bf16.mxu0 0
    %5616 = vmatpush2.bf16.msra.mxu0 0
    %5617 = vmatprep.subr.bf16.mxu0 0
    %5618 = vmatpush2.bf16.msra.mxu0 0
    %5619 = vmatprep.subr.bf16.mxu0 0
    %5620 = vmatpush2.bf16.msra.mxu0 0
    %5621 = vmatprep.subr.bf16.mxu0 0
    %5622 = vmatpush2.bf16.msra.mxu0 0
    %5623 = vmatprep.subr.bf16.mxu0 0
    %5624 = vmatpush2.bf16.msra.mxu0 0
    %5625 = vmatprep.subr.bf16.mxu0 0
    %5626 = vmatpush2.bf16.msra.mxu0 0
    %5627 = vmatprep.subr.bf16.mxu0 0
    %5628 = vmatpush2.bf16.msra.mxu0 0
    %5629 = vmatprep.subr.bf16.mxu0 0
    %5630 = vmatpush2.bf16.msra.mxu0 0
    %5631 = vmatprep.mubr.bf16.mxu0 0
    %5632 = vmatmul.mubr.bf16.gmra.mxu0 %v5584
    %v5633 = vpop.f32.mrf.mxu0
    %v5634 = vadd.f32 %v5582, %v5633
    %v5635 = vpop.f32.mrf.mxu0
    %v5636 = vpop.f32.mrf.mxu0
    %v5637 = vadd.f32 %v5582, %v5636
    %v5638 = vpop.f32.mrf.mxu0
    %5639 = vmatprep.mubr.bf16.mxu0 0
    %5640 = vmatmul.mubr.bf16.gmra.mxu0 %v5587
    %v5641 = vpop.f32.mrf.mxu0
    %v5642 = vadd.f32 %v5582, %v5641
    %v5643 = vpop.f32.mrf.mxu0
    %v5644 = vpop.f32.mrf.mxu0
    %v5645 = vadd.f32 %v5582, %v5644
    %v5646 = vpop.f32.mrf.mxu0
    %5647 = vmatprep.mubr.bf16.mxu0 0
    %5648 = vmatmul.mubr.bf16.gmra.mxu0 %v5590
    %v5649 = vpop.f32.mrf.mxu0
    %v5650 = vadd.f32 %v5582, %v5649
    %v5651 = vpop.f32.mrf.mxu0
    %v5652 = vpop.f32.mrf.mxu0
    %v5653 = vadd.f32 %v5582, %v5652
    %v5654 = vpop.f32.mrf.mxu0
    %5655 = vmatprep.mubr.bf16.mxu0 0
    %5656 = vmatmul.mubr.bf16.gmra.mxu0 %v5593
    %v5657 = vpop.f32.mrf.mxu0
    %v5658 = vadd.f32 %v5582, %v5657
    %v5659 = vpop.f32.mrf.mxu0
    %v5660 = vpop.f32.mrf.mxu0
    %v5661 = vadd.f32 %v5582, %v5660
    %v5662 = vpop.f32.mrf.mxu0
    %5663 = vdwg.mxu0
    %v5664 = vxor.u32 %v5634, 2147483648
    %v5665 = vxor.u32 %v5637, 2147483648
    %v5666 = vxor.u32 %v5642, 2147483648
    %v5667 = vxor.u32 %v5645, 2147483648
    %v5668 = vxor.u32 %v5650, 2147483648
    %v5669 = vxor.u32 %v5653, 2147483648
    %v5670 = vxor.u32 %v5658, 2147483648
    %v5671 = vxor.u32 %v5661, 2147483648
    %v5672 = vmul.f32 %v5664, 1.442695
    %v5673 = vpow.pop %v5672
    %v5674 = vmul.f32 %v5665, 1.442695
    %v5675 = vpow.pop %v5674
    %v5676 = vmul.f32 %v5666, 1.442695
    %v5677 = vpow.pop %v5676
    %v5678 = vmul.f32 %v5667, 1.442695
    %v5679 = vpow.pop %v5678
    %v5680 = vmul.f32 %v5668, 1.442695
    %v5681 = vpow.pop %v5680
    %v5682 = vmul.f32 %v5669, 1.442695
    %v5683 = vpow.pop %v5682
    %v5684 = vmul.f32 %v5670, 1.442695
    %v5685 = vpow.pop %v5684
    %v5686 = vmul.f32 %v5671, 1.442695
    %v5687 = vpow.pop %v5686
    %v5688 = vadd.f32 %v5673, 1.0
    %v5689 = vadd.f32 %v5675, 1.0
    %v5690 = vadd.f32 %v5677, 1.0
    %v5691 = vadd.f32 %v5679, 1.0
    %v5692 = vadd.f32 %v5681, 1.0
    %v5693 = vadd.f32 %v5683, 1.0
    %v5694 = vadd.f32 %v5685, 1.0
    %v5695 = vadd.f32 %v5687, 1.0
    %v5696 = vrcp.pop %v5688
    %v5697 = vmul.f32 1.0, %v5696
    %v5698 = vrcp.pop %v5689
    %v5699 = vmul.f32 1.0, %v5698
    %v5700 = vrcp.pop %v5690
    %v5701 = vmul.f32 1.0, %v5700
    %v5702 = vrcp.pop %v5691
    %v5703 = vmul.f32 1.0, %v5702
    %v5704 = vrcp.pop %v5692
    %v5705 = vmul.f32 1.0, %v5704
    %v5706 = vrcp.pop %v5693
    %v5707 = vmul.f32 1.0, %v5706
    %v5708 = vrcp.pop %v5694
    %v5709 = vmul.f32 1.0, %v5708
    %v5710 = vrcp.pop %v5695
    %v5711 = vmul.f32 1.0, %v5710
    %5713 = vset.pattern.permute.xlu0 0
    %5714 = vperm.xlu0 %5713, %v5697
    %v5715 = vpop.permute.xlu0 %5714
    %5718 = vset.pattern.permute.xlu0 0
    %5719 = vperm.xlu0 %5718, %v5699
    %v5720 = vpop.permute.xlu0 %5719
    %5723 = vset.pattern.permute.xlu0 0
    %5724 = vperm.xlu0 %5723, %v5701
    %v5725 = vpop.permute.xlu0 %5724
    %5728 = vset.pattern.permute.xlu0 0
    %5729 = vperm.xlu0 %5728, %v5703
    %v5730 = vpop.permute.xlu0 %5729
    %5733 = vset.pattern.permute.xlu0 0
    %5734 = vperm.xlu0 %5733, %v5705
    %v5735 = vpop.permute.xlu0 %5734
    %5738 = vset.pattern.permute.xlu0 0
    %5739 = vperm.xlu0 %5738, %v5707
    %v5740 = vpop.permute.xlu0 %5739
    %5743 = vset.pattern.permute.xlu0 0
    %5744 = vperm.xlu0 %5743, %v5709
    %v5745 = vpop.permute.xlu0 %5744
    %5748 = vset.pattern.permute.xlu0 0
    %5749 = vperm.xlu0 %5748, %v5711
    %v5750 = vpop.permute.xlu0 %5749
    %v5752 = vsel %vm83, %v5103, %v5715
    %v5753 = vsel %vm83, %v5104, %v5720
    %v5754 = vsel %vm83, %v5105, %v5725
    %v5755 = vsel %vm83, %v5106, %v5730
    %v5756 = vsel %vm83, %v5107, %v5735
    %v5757 = vsel %vm83, %v5108, %v5740
    %v5758 = vsel %vm83, %v5109, %v5745
    %v5759 = vsel %vm83, %v5110, %v5750
    %5760 = vst [vmem:[%s4] sm:$0xff] %v5752
    %5761 = vst [vmem:[%s4 + $0x8] sm:$0xff] %v5753
    %5762 = vst [vmem:[%s4 + $0x10] sm:$0xff] %v5754
    %5763 = vst [vmem:[%s4 + $0x18] sm:$0xff] %v5755
    %5764 = vst [vmem:[%s4 + $0x20] sm:$0xff] %v5756
    %5765 = vst [vmem:[%s4 + $0x28] sm:$0xff] %v5757
    %5766 = vst [vmem:[%s4 + $0x30] sm:$0xff] %v5758
    %5767 = vst [vmem:[%s4 + $0x38] sm:$0xff] %v5759
    // Predicated region
    $region22: #{forward.1} parent=1 // pred_check
      _
    $region23: #{forward.1} parent=1 // pred_check_branch
      %5769 = sbr.rel (0) target = $region25
    $region24: #{forward.1} parent=1 // pred_region
      _
    $region25: #{forward.1} parent=1 // pred_fallthru
      _
    // Predicated region
    $region26: #{forward.1} parent=1 // pred_check
      _
    $region27: #{forward.1} parent=1 // pred_check_branch
      %5771 = sbr.rel (0) target = $region29
    $region28: #{forward.1} parent=1 // pred_region
      _
    $region29: #{forward.1} parent=1 // pred_fallthru
      _
    %5772 = vsyncpa [#allocation3], 1

</llo_original>
